<compile_context>
chip_gen: v5e
topology: v5e:2x2
jax: 0.10.0
libtpu: 0.0.40
codegen_flags: <defaults>
</compile_context>

<pallas_src>
import jax
import jax.numpy as jnp
from jax.experimental import pallas as pl
from jax.experimental.pallas import tpu as pltpu


def _round_up(x, m):
    return (x + m - 1) // m * m


# ----------------------------------------------------------------------------
# Fused Pallas kernel: the whole MLP for one batch tile.
#   refs = (x_ref, w1, b1, w2, b2, ..., w6, b6, o_ref)
#   x is bf16, weights are pre-transposed (in, out) bf16, biases are (1, out)
#   f32.  All matmuls accumulate in f32 on the MXU.
# ----------------------------------------------------------------------------
def _fused_mlp_kernel(x_ref, *refs):
    o_ref = refs[-1]
    wb = refs[:-1]
    n_layers = len(wb) // 2

    h = x_ref[...]                               # (B_tile, in) bf16
    for l in range(n_layers):
        w = wb[2 * l][...]                       # (in, out) bf16
        b = wb[2 * l + 1][...]                   # (1, out)  f32
        y = jnp.dot(h, w, preferred_element_type=jnp.float32) + b
        if l < n_layers - 1:
            h = jnp.maximum(y, 0.0).astype(jnp.bfloat16)   # ReLU
        else:
            o_ref[...] = jax.nn.sigmoid(y).astype(o_ref.dtype)


def _fused_forward(x_padded, params_padded, b_tile, *, single_buffer_weights):
    """x_padded: (B_pad, in_pad) bf16, B_pad a multiple of b_tile."""
    b_pad, in_pad = x_padded.shape
    out_pad = params_padded[-1][0].shape[1]
    grid = (b_pad // b_tile,)

    # Weights/biases use the same block for every batch tile -> VMEM resident.
    # Single-buffer them (constant block index => no need for double buffers).
    w_kwargs = {"pipeline_mode": pl.Buffered(1)} if single_buffer_weights else {}

    in_specs = [pl.BlockSpec((b_tile, in_pad), lambda i: (i, 0))]
    flat_inputs = [x_padded]
    for w, b in params_padded:
        di, do = w.shape
        in_specs.append(pl.BlockSpec((di, do), lambda i: (0, 0), **w_kwargs))
        in_specs.append(pl.BlockSpec((1, do), lambda i: (0, 0), **w_kwargs))
        flat_inputs.append(w)
        flat_inputs.append(b.reshape(1, do))

    flops = 2 * b_pad * sum(int(w.shape[0]) * int(w.shape[1])
                            for w, _ in params_padded)
    bytes_accessed = (
        x_padded.size * x_padded.dtype.itemsize      # bf16 input
        + b_pad * out_pad * 4                        # f32 logits out
        + sum(int(w.size) * w.dtype.itemsize + int(b.size) * 4
              for w, b in params_padded))
    cost = pl.CostEstimate(flops=flops,
                           transcendentals=b_pad * out_pad,
                           bytes_accessed=bytes_accessed)

    return pl.pallas_call(
        _fused_mlp_kernel,
        out_shape=jax.ShapeDtypeStruct((b_pad, out_pad), jnp.float32),
        grid=grid,
        in_specs=in_specs,
        out_specs=pl.BlockSpec((b_tile, out_pad), lambda i: (i, 0)),
        compiler_params=pltpu.CompilerParams(
            dimension_semantics=("parallel",),   # batch tiles across TCs (v7x)
            vmem_limit_bytes=32 << 20,           # fits v5e/v6e/v7x scoped VMEM
        ),
        cost_estimate=cost,
    )(*flat_inputs)


# ----------------------------------------------------------------------------
# Chip-aware batch tiling
# ----------------------------------------------------------------------------
def _tpu_tile_policy():
    """(tile_cap, min_grid) — 256-row tiles for 256-wide MXUs (v6e/v7x),
    128 for v5e and older; v7x additionally wants grid >= 2 for megacore."""
    cap, min_grid = 256, 1
    try:
        kind = jax.devices()[0].device_kind.lower()
    except Exception:
        return cap, min_grid
    if any(v in kind for v in ("v2", "v3", "v4", "v5")):
        cap = 128
    if "v7" in kind:
        min_grid = 2
    return cap, min_grid


def _choose_batch_tiling(batch, tile_cap, min_grid):
    """Pick (b_tile, b_pad): b_tile divides b_pad, minimal padded rows first,
    then the largest tile.  Tiles are multiples of 16 (bf16-sublane friendly)."""
    if batch <= 8:
        return 8, 8                              # single full-array block
    base = _round_up(batch, 16)
    best_key, best = None, (16, base)
    for t in range(16, tile_cap + 1, 16):
        b_pad = _round_up(base, t)
        grid = b_pad // t
        if min_grid > 1 and base >= min_grid * 16 and grid < min_grid:
            continue                             # keep both v7x cores busy
        key = (b_pad, -t)
        if best_key is None or key < best_key:
            best_key, best = key, (t, b_pad)
    return best


# ----------------------------------------------------------------------------
# Parameter init (deterministic, PyTorch-Linear-style uniform bounds) + padding
# ----------------------------------------------------------------------------
def init_params(key, input_dim=32 * 32, num_classes=43):
    """True-shaped f32 params, weights pre-transposed to (in, out)."""
    dims = [input_dim, 1024, 512, 248, 128, 64, num_classes]
    params = []
    for i in range(len(dims) - 1):
        fan_in, fan_out = dims[i], dims[i + 1]
        key, kw, kb = jax.random.split(key, 3)
        bound = 1.0 / (fan_in ** 0.5)
        w_t = jax.random.uniform(kw, (fan_in, fan_out), jnp.float32, -bound, bound)
        b = jax.random.uniform(kb, (fan_out,), jnp.float32, -bound, bound)
        params.append((w_t, b))
    return params


def pad_params(params):
    """Zero-pad every feature dim up to a multiple of 128, cast weights to bf16.

    Zero padding is exact: padded output columns get ReLU(0 + 0) = 0 and the
    corresponding (zero) weight rows of the next layer contribute nothing.
    """
    padded = []
    for w_t, b in params:
        di, do = w_t.shape
        di_p, do_p = _round_up(di, 128), _round_up(do, 128)
        w_p = (jnp.zeros((di_p, do_p), jnp.float32)
               .at[:di, :do].set(w_t).astype(jnp.bfloat16))
        b_p = jnp.zeros((do_p,), jnp.float32).at[:do].set(b)
        padded.append((w_p, b_p))
    return padded


# ----------------------------------------------------------------------------
# Forward pass (mirrors FullyConnectedNet.forward)
# ----------------------------------------------------------------------------
def fully_connected_net(params_padded, x, num_classes=43):
    # torch.flatten(x, start_dim=1); feed the MXU bf16 directly.
    batch = x.shape[0]
    h = x.reshape(batch, -1).astype(jnp.bfloat16)

    # Pad feature dim to lane multiple (no-op for 32*32 = 1024).
    in_dim = h.shape[1]
    in_pad = _round_up(in_dim, 128)
    if in_pad != in_dim:
        h = jnp.pad(h, ((0, 0), (0, in_pad - in_dim)))

    # Chip-aware batch tile / padding.
    tile_cap, min_grid = _tpu_tile_policy()
    b_tile, b_pad = _choose_batch_tiling(batch, tile_cap, min_grid)
    if b_pad != batch:
        h = jnp.pad(h, ((0, b_pad - batch), (0, 0)))

    try:
        out = _fused_forward(h, params_padded, b_tile, single_buffer_weights=True)
        out = jax.block_until_ready(out)
    except Exception:
        # Fallback if this JAX build rejects pipeline_mode=pl.Buffered(1).
        out = _fused_forward(h, params_padded, b_tile, single_buffer_weights=False)

    out = out[:batch, :num_classes]

    # torch.squeeze(x, dim=1): only squeezes if dim 1 has size 1
    if out.shape[1] == 1:
        out = jnp.squeeze(out, axis=1)
    return out


# Pure-JAX f32 reference for a correctness check.
def reference_forward(params, x):
    batch = x.shape[0]
    h = x.reshape(batch, -1).astype(jnp.float32)
    for w_t, b in params[:-1]:
        h = jnp.maximum(h @ w_t + b, 0.0)
    w_t, b = params[-1]
    h = jax.nn.sigmoid(h @ w_t + b)
    if h.shape[1] == 1:
        h = jnp.squeeze(h, axis=1)
    return h


if __name__ == "__main__":
    key = jax.random.PRNGKey(0)
    k_params, k_x = jax.random.split(key)

    params = init_params(k_params)            # true shapes, f32
    params_padded = pad_params(params)        # lane-padded, bf16 weights

    # small NCHW input consistent with input_dim = 32*32
    x = jax.random.normal(k_x, (2, 1, 32, 32), dtype=jnp.float32)

    out = fully_connected_net(params_padded, x)
    out = jax.block_until_ready(out)

    assert out.shape == (2, 43), out.shape
    assert bool(jnp.all((out >= 0.0) & (out <= 1.0)))

    ref = reference_forward(params, x)
    assert bool(jnp.allclose(out, ref, atol=5e-2)), float(jnp.max(jnp.abs(out - ref)))

    print("KERNEL_OK")
</pallas_src>

<mosaic_0001>
module attributes {stable_mosaic.version = 11 : i64} {
  func.func @_fused_mlp_kernel(%arg0: i32, %arg1: memref<8x1024xbf16, #tpu.memory_space<vmem>>, %arg2: memref<1024x1024xbf16, #tpu.memory_space<vmem>>, %arg3: memref<1x1024xf32, #tpu.memory_space<vmem>>, %arg4: memref<1024x512xbf16, #tpu.memory_space<vmem>>, %arg5: memref<1x512xf32, #tpu.memory_space<vmem>>, %arg6: memref<512x256xbf16, #tpu.memory_space<vmem>>, %arg7: memref<1x256xf32, #tpu.memory_space<vmem>>, %arg8: memref<256x128xbf16, #tpu.memory_space<vmem>>, %arg9: memref<1x128xf32, #tpu.memory_space<vmem>>, %arg10: memref<128x128xbf16, #tpu.memory_space<vmem>>, %arg11: memref<1x128xf32, #tpu.memory_space<vmem>>, %arg12: memref<128x128xbf16, #tpu.memory_space<vmem>>, %arg13: memref<1x128xf32, #tpu.memory_space<vmem>>, %arg14: memref<8x128xf32, #tpu.memory_space<vmem>>) attributes {dimension_semantics = [#tpu.dimension_semantics<parallel>], iteration_bounds = array<i64: 1>, scalar_prefetch = 0 : i64, scratch_operands = 0 : i64, tpu.core_type = #tpu.core_type<tc>, window_params = [{transform_indices = @transform_0, window_bounds = array<i64: 8, 1024>}, {pipeline_mode = #tpu.pipeline_mode<synchronous>, transform_indices = @transform_1, window_bounds = array<i64: 1024, 1024>}, {pipeline_mode = #tpu.pipeline_mode<synchronous>, transform_indices = @transform_2, window_bounds = array<i64: 1, 1024>}, {pipeline_mode = #tpu.pipeline_mode<synchronous>, transform_indices = @transform_3, window_bounds = array<i64: 1024, 512>}, {pipeline_mode = #tpu.pipeline_mode<synchronous>, transform_indices = @transform_4, window_bounds = array<i64: 1, 512>}, {pipeline_mode = #tpu.pipeline_mode<synchronous>, transform_indices = @transform_5, window_bounds = array<i64: 512, 256>}, {pipeline_mode = #tpu.pipeline_mode<synchronous>, transform_indices = @transform_6, window_bounds = array<i64: 1, 256>}, {pipeline_mode = #tpu.pipeline_mode<synchronous>, transform_indices = @transform_7, window_bounds = array<i64: 256, 128>}, {pipeline_mode = #tpu.pipeline_mode<synchronous>, transform_indices = @transform_8, window_bounds = array<i64: 1, 128>}, {pipeline_mode = #tpu.pipeline_mode<synchronous>, transform_indices = @transform_9, window_bounds = array<i64: 128, 128>}, {pipeline_mode = #tpu.pipeline_mode<synchronous>, transform_indices = @transform_10, window_bounds = array<i64: 1, 128>}, {pipeline_mode = #tpu.pipeline_mode<synchronous>, transform_indices = @transform_11, window_bounds = array<i64: 128, 128>}, {pipeline_mode = #tpu.pipeline_mode<synchronous>, transform_indices = @transform_12, window_bounds = array<i64: 1, 128>}, {transform_indices = @transform_13, window_bounds = array<i64: 8, 128>}]} {
    %c0 = arith.constant 0 : index
    %c0_0 = arith.constant 0 : index
    %0 = vector.load %arg1[%c0, %c0_0] : memref<8x1024xbf16, #tpu.memory_space<vmem>>, vector<8x1024xbf16>
    %c0_1 = arith.constant 0 : index
    %c0_2 = arith.constant 0 : index
    %1 = vector.load %arg2[%c0_1, %c0_2] : memref<1024x1024xbf16, #tpu.memory_space<vmem>>, vector<1024x1024xbf16>
    %c0_3 = arith.constant 0 : index
    %c0_4 = arith.constant 0 : index
    %2 = vector.load %arg3[%c0_3, %c0_4] : memref<1x1024xf32, #tpu.memory_space<vmem>>, vector<1x1024xf32>
    %cst = arith.constant dense<0.000000e+00> : vector<8x1024xf32>
    %3 = tpu.matmul %0, %1, %cst {dimension_numbers = #tpu.dot_dimension_numbers<[1], [0], [0], [1], [0, 0, 1, 1], [], []>} : vector<8x1024xbf16>, vector<1024x1024xbf16>, vector<8x1024xf32> -> vector<8x1024xf32>
    %4 = vector.broadcast %2 : vector<1x1024xf32> to vector<8x1024xf32>
    %5 = arith.addf %3, %4 : vector<8x1024xf32>
    %cst_5 = arith.constant 0.000000e+00 : f32
    %6 = vector.broadcast %cst_5 : f32 to vector<8x1024xf32>
    %7 = arith.maximumf %5, %6 : vector<8x1024xf32>
    %8 = arith.truncf %7 : vector<8x1024xf32> to vector<8x1024xbf16>
    %c0_6 = arith.constant 0 : index
    %c0_7 = arith.constant 0 : index
    %9 = vector.load %arg4[%c0_6, %c0_7] : memref<1024x512xbf16, #tpu.memory_space<vmem>>, vector<1024x512xbf16>
    %c0_8 = arith.constant 0 : index
    %c0_9 = arith.constant 0 : index
    %10 = vector.load %arg5[%c0_8, %c0_9] : memref<1x512xf32, #tpu.memory_space<vmem>>, vector<1x512xf32>
    %cst_10 = arith.constant dense<0.000000e+00> : vector<8x512xf32>
    %11 = tpu.matmul %8, %9, %cst_10 {dimension_numbers = #tpu.dot_dimension_numbers<[1], [0], [0], [1], [0, 0, 1, 1], [], []>} : vector<8x1024xbf16>, vector<1024x512xbf16>, vector<8x512xf32> -> vector<8x512xf32>
    %12 = vector.broadcast %10 : vector<1x512xf32> to vector<8x512xf32>
    %13 = arith.addf %11, %12 : vector<8x512xf32>
    %cst_11 = arith.constant 0.000000e+00 : f32
    %14 = vector.broadcast %cst_11 : f32 to vector<8x512xf32>
    %15 = arith.maximumf %13, %14 : vector<8x512xf32>
    %16 = arith.truncf %15 : vector<8x512xf32> to vector<8x512xbf16>
    %c0_12 = arith.constant 0 : index
    %c0_13 = arith.constant 0 : index
    %17 = vector.load %arg6[%c0_12, %c0_13] : memref<512x256xbf16, #tpu.memory_space<vmem>>, vector<512x256xbf16>
    %c0_14 = arith.constant 0 : index
    %c0_15 = arith.constant 0 : index
    %18 = vector.load %arg7[%c0_14, %c0_15] : memref<1x256xf32, #tpu.memory_space<vmem>>, vector<1x256xf32>
    %cst_16 = arith.constant dense<0.000000e+00> : vector<8x256xf32>
    %19 = tpu.matmul %16, %17, %cst_16 {dimension_numbers = #tpu.dot_dimension_numbers<[1], [0], [0], [1], [0, 0, 1, 1], [], []>} : vector<8x512xbf16>, vector<512x256xbf16>, vector<8x256xf32> -> vector<8x256xf32>
    %20 = vector.broadcast %18 : vector<1x256xf32> to vector<8x256xf32>
    %21 = arith.addf %19, %20 : vector<8x256xf32>
    %cst_17 = arith.constant 0.000000e+00 : f32
    %22 = vector.broadcast %cst_17 : f32 to vector<8x256xf32>
    %23 = arith.maximumf %21, %22 : vector<8x256xf32>
    %24 = arith.truncf %23 : vector<8x256xf32> to vector<8x256xbf16>
    %c0_18 = arith.constant 0 : index
    %c0_19 = arith.constant 0 : index
    %25 = vector.load %arg8[%c0_18, %c0_19] : memref<256x128xbf16, #tpu.memory_space<vmem>>, vector<256x128xbf16>
    %c0_20 = arith.constant 0 : index
    %c0_21 = arith.constant 0 : index
    %26 = vector.load %arg9[%c0_20, %c0_21] : memref<1x128xf32, #tpu.memory_space<vmem>>, vector<1x128xf32>
    %cst_22 = arith.constant dense<0.000000e+00> : vector<8x128xf32>
    %27 = tpu.matmul %24, %25, %cst_22 {dimension_numbers = #tpu.dot_dimension_numbers<[1], [0], [0], [1], [0, 0, 1, 1], [], []>} : vector<8x256xbf16>, vector<256x128xbf16>, vector<8x128xf32> -> vector<8x128xf32>
    %28 = vector.broadcast %26 : vector<1x128xf32> to vector<8x128xf32>
    %29 = arith.addf %27, %28 : vector<8x128xf32>
    %cst_23 = arith.constant 0.000000e+00 : f32
    %30 = vector.broadcast %cst_23 : f32 to vector<8x128xf32>
    %31 = arith.maximumf %29, %30 : vector<8x128xf32>
    %32 = arith.truncf %31 : vector<8x128xf32> to vector<8x128xbf16>
    %c0_24 = arith.constant 0 : index
    %c0_25 = arith.constant 0 : index
    %33 = vector.load %arg10[%c0_24, %c0_25] : memref<128x128xbf16, #tpu.memory_space<vmem>>, vector<128x128xbf16>
    %c0_26 = arith.constant 0 : index
    %c0_27 = arith.constant 0 : index
    %34 = vector.load %arg11[%c0_26, %c0_27] : memref<1x128xf32, #tpu.memory_space<vmem>>, vector<1x128xf32>
    %cst_28 = arith.constant dense<0.000000e+00> : vector<8x128xf32>
    %35 = tpu.matmul %32, %33, %cst_28 {dimension_numbers = #tpu.dot_dimension_numbers<[1], [0], [0], [1], [0, 0, 1, 1], [], []>} : vector<8x128xbf16>, vector<128x128xbf16>, vector<8x128xf32> -> vector<8x128xf32>
    %36 = vector.broadcast %34 : vector<1x128xf32> to vector<8x128xf32>
    %37 = arith.addf %35, %36 : vector<8x128xf32>
    %cst_29 = arith.constant 0.000000e+00 : f32
    %38 = vector.broadcast %cst_29 : f32 to vector<8x128xf32>
    %39 = arith.maximumf %37, %38 : vector<8x128xf32>
    %40 = arith.truncf %39 : vector<8x128xf32> to vector<8x128xbf16>
    %c0_30 = arith.constant 0 : index
    %c0_31 = arith.constant 0 : index
    %41 = vector.load %arg12[%c0_30, %c0_31] : memref<128x128xbf16, #tpu.memory_space<vmem>>, vector<128x128xbf16>
    %c0_32 = arith.constant 0 : index
    %c0_33 = arith.constant 0 : index
    %42 = vector.load %arg13[%c0_32, %c0_33] : memref<1x128xf32, #tpu.memory_space<vmem>>, vector<1x128xf32>
    %cst_34 = arith.constant dense<0.000000e+00> : vector<8x128xf32>
    %43 = tpu.matmul %40, %41, %cst_34 {dimension_numbers = #tpu.dot_dimension_numbers<[1], [0], [0], [1], [0, 0, 1, 1], [], []>} : vector<8x128xbf16>, vector<128x128xbf16>, vector<8x128xf32> -> vector<8x128xf32>
    %44 = vector.broadcast %42 : vector<1x128xf32> to vector<8x128xf32>
    %45 = arith.addf %43, %44 : vector<8x128xf32>
    %46 = arith.negf %45 : vector<8x128xf32>
    %47 = math.exp %46 : vector<8x128xf32>
    %cst_35 = arith.constant 1.000000e+00 : f32
    %48 = vector.broadcast %cst_35 : f32 to vector<8x128xf32>
    %49 = arith.addf %48, %47 : vector<8x128xf32>
    %50 = arith.divf %48, %49 : vector<8x128xf32>
    %c0_36 = arith.constant 0 : index
    %c0_37 = arith.constant 0 : index
    %51 = vector.load %arg14[%c0_36, %c0_37] : memref<8x128xf32, #tpu.memory_space<vmem>>, vector<8x128xf32>
    tpu.vector_store %arg14[%c0_36, %c0_37], %50 {strides = array<i32>} : memref<8x128xf32, #tpu.memory_space<vmem>>, vector<8x128xf32>,
    return
  }
  func.func @transform_0(%arg0: i32) -> (i32, i32) {
    %c0_i32 = arith.constant 0 : i32
    %c0_i32_0 = arith.constant 0 : i32
    return %arg0, %c0_i32 : i32, i32
  }
  func.func @transform_1(%arg0: i32) -> (i32, i32) {
    %c0_i32 = arith.constant 0 : i32
    %c0_i32_0 = arith.constant 0 : i32
    %c0_i32_1 = arith.constant 0 : i32
    return %c0_i32, %c0_i32_0 : i32, i32
  }
  func.func @transform_2(%arg0: i32) -> (i32, i32) {
    %c0_i32 = arith.constant 0 : i32
    %c0_i32_0 = arith.constant 0 : i32
    %c0_i32_1 = arith.constant 0 : i32
    return %c0_i32, %c0_i32_0 : i32, i32
  }
  func.func @transform_3(%arg0: i32) -> (i32, i32) {
    %c0_i32 = arith.constant 0 : i32
    %c0_i32_0 = arith.constant 0 : i32
    %c0_i32_1 = arith.constant 0 : i32
    return %c0_i32, %c0_i32_0 : i32, i32
  }
  func.func @transform_4(%arg0: i32) -> (i32, i32) {
    %c0_i32 = arith.constant 0 : i32
    %c0_i32_0 = arith.constant 0 : i32
    %c0_i32_1 = arith.constant 0 : i32
    return %c0_i32, %c0_i32_0 : i32, i32
  }
  func.func @transform_5(%arg0: i32) -> (i32, i32) {
    %c0_i32 = arith.constant 0 : i32
    %c0_i32_0 = arith.constant 0 : i32
    %c0_i32_1 = arith.constant 0 : i32
    return %c0_i32, %c0_i32_0 : i32, i32
  }
  func.func @transform_6(%arg0: i32) -> (i32, i32) {
    %c0_i32 = arith.constant 0 : i32
    %c0_i32_0 = arith.constant 0 : i32
    %c0_i32_1 = arith.constant 0 : i32
    return %c0_i32, %c0_i32_0 : i32, i32
  }
  func.func @transform_7(%arg0: i32) -> (i32, i32) {
    %c0_i32 = arith.constant 0 : i32
    %c0_i32_0 = arith.constant 0 : i32
    %c0_i32_1 = arith.constant 0 : i32
    return %c0_i32, %c0_i32_0 : i32, i32
  }
  func.func @transform_8(%arg0: i32) -> (i32, i32) {
    %c0_i32 = arith.constant 0 : i32
    %c0_i32_0 = arith.constant 0 : i32
    %c0_i32_1 = arith.constant 0 : i32
    return %c0_i32, %c0_i32_0 : i32, i32
  }
  func.func @transform_9(%arg0: i32) -> (i32, i32) {
    %c0_i32 = arith.constant 0 : i32
    %c0_i32_0 = arith.constant 0 : i32
    %c0_i32_1 = arith.constant 0 : i32
    return %c0_i32, %c0_i32_0 : i32, i32
  }
  func.func @transform_10(%arg0: i32) -> (i32, i32) {
    %c0_i32 = arith.constant 0 : i32
    %c0_i32_0 = arith.constant 0 : i32
    %c0_i32_1 = arith.constant 0 : i32
    return %c0_i32, %c0_i32_0 : i32, i32
  }
  func.func @transform_11(%arg0: i32) -> (i32, i32) {
    %c0_i32 = arith.constant 0 : i32
    %c0_i32_0 = arith.constant 0 : i32
    %c0_i32_1 = arith.constant 0 : i32
    return %c0_i32, %c0_i32_0 : i32, i32
  }
  func.func @transform_12(%arg0: i32) -> (i32, i32) {
    %c0_i32 = arith.constant 0 : i32
    %c0_i32_0 = arith.constant 0 : i32
    %c0_i32_1 = arith.constant 0 : i32
    return %c0_i32, %c0_i32_0 : i32, i32
  }
  func.func @transform_13(%arg0: i32) -> (i32, i32) {
    %c0_i32 = arith.constant 0 : i32
    %c0_i32_0 = arith.constant 0 : i32
    return %arg0, %c0_i32 : i32, i32
  }
}

module attributes {stable_mosaic.version = 11 : i64} {
  func.func @_fused_mlp_kernel(%arg0: i32, %arg1: memref<8x1024xbf16, #tpu.memory_space<vmem>>, %arg2: memref<1024x1024xbf16, #tpu.memory_space<vmem>>, %arg3: memref<1x1024xf32, #tpu.memory_space<vmem>>, %arg4: memref<1024x512xbf16, #tpu.memory_space<vmem>>, %arg5: memref<1x512xf32, #tpu.memory_space<vmem>>, %arg6: memref<512x256xbf16, #tpu.memory_space<vmem>>, %arg7: memref<1x256xf32, #tpu.memory_space<vmem>>, %arg8: memref<256x128xbf16, #tpu.memory_space<vmem>>, %arg9: memref<1x128xf32, #tpu.memory_space<vmem>>, %arg10: memref<128x128xbf16, #tpu.memory_space<vmem>>, %arg11: memref<1x128xf32, #tpu.memory_space<vmem>>, %arg12: memref<128x128xbf16, #tpu.memory_space<vmem>>, %arg13: memref<1x128xf32, #tpu.memory_space<vmem>>, %arg14: memref<8x128xf32, #tpu.memory_space<vmem>>) attributes {dimension_semantics = [#tpu.dimension_semantics<parallel>], iteration_bounds = array<i64: 1>, scalar_prefetch = 0 : i64, scratch_operands = 0 : i64, tpu.core_type = #tpu.core_type<tc>, window_params = [{transform_indices = @transform_0, window_bounds = array<i64: 8, 1024>}, {pipeline_mode = #tpu.pipeline_mode<synchronous>, transform_indices = @transform_1, window_bounds = array<i64: 1024, 1024>}, {pipeline_mode = #tpu.pipeline_mode<synchronous>, transform_indices = @transform_2, window_bounds = array<i64: 1, 1024>}, {pipeline_mode = #tpu.pipeline_mode<synchronous>, transform_indices = @transform_3, window_bounds = array<i64: 1024, 512>}, {pipeline_mode = #tpu.pipeline_mode<synchronous>, transform_indices = @transform_4, window_bounds = array<i64: 1, 512>}, {pipeline_mode = #tpu.pipeline_mode<synchronous>, transform_indices = @transform_5, window_bounds = array<i64: 512, 256>}, {pipeline_mode = #tpu.pipeline_mode<synchronous>, transform_indices = @transform_6, window_bounds = array<i64: 1, 256>}, {pipeline_mode = #tpu.pipeline_mode<synchronous>, transform_indices = @transform_7, window_bounds = array<i64: 256, 128>}, {pipeline_mode = #tpu.pipeline_mode<synchronous>, transform_indices = @transform_8, window_bounds = array<i64: 1, 128>}, {pipeline_mode = #tpu.pipeline_mode<synchronous>, transform_indices = @transform_9, window_bounds = array<i64: 128, 128>}, {pipeline_mode = #tpu.pipeline_mode<synchronous>, transform_indices = @transform_10, window_bounds = array<i64: 1, 128>}, {pipeline_mode = #tpu.pipeline_mode<synchronous>, transform_indices = @transform_11, window_bounds = array<i64: 128, 128>}, {pipeline_mode = #tpu.pipeline_mode<synchronous>, transform_indices = @transform_12, window_bounds = array<i64: 1, 128>}, {transform_indices = @transform_13, window_bounds = array<i64: 8, 128>}]} {
    %c0 = arith.constant 0 : index
    %c0_0 = arith.constant 0 : index
    %0 = vector.load %arg1[%c0, %c0_0] : memref<8x1024xbf16, #tpu.memory_space<vmem>>, vector<8x1024xbf16>
    %c0_1 = arith.constant 0 : index
    %c0_2 = arith.constant 0 : index
    %1 = vector.load %arg2[%c0_1, %c0_2] : memref<1024x1024xbf16, #tpu.memory_space<vmem>>, vector<1024x1024xbf16>
    %c0_3 = arith.constant 0 : index
    %c0_4 = arith.constant 0 : index
    %2 = vector.load %arg3[%c0_3, %c0_4] : memref<1x1024xf32, #tpu.memory_space<vmem>>, vector<1x1024xf32>
    %cst = arith.constant dense<0.000000e+00> : vector<8x1024xf32>
    %3 = tpu.matmul %0, %1, %cst {dimension_numbers = #tpu.dot_dimension_numbers<[1], [0], [0], [1], [0, 0, 1, 1], [], []>} : vector<8x1024xbf16>, vector<1024x1024xbf16>, vector<8x1024xf32> -> vector<8x1024xf32>
    %4 = vector.broadcast %2 : vector<1x1024xf32> to vector<8x1024xf32>
    %5 = arith.addf %3, %4 : vector<8x1024xf32>
    %cst_5 = arith.constant 0.000000e+00 : f32
    %6 = vector.broadcast %cst_5 : f32 to vector<8x1024xf32>
    %7 = arith.maximumf %5, %6 : vector<8x1024xf32>
    %8 = arith.truncf %7 : vector<8x1024xf32> to vector<8x1024xbf16>
    %c0_6 = arith.constant 0 : index
    %c0_7 = arith.constant 0 : index
    %9 = vector.load %arg4[%c0_6, %c0_7] : memref<1024x512xbf16, #tpu.memory_space<vmem>>, vector<1024x512xbf16>
    %c0_8 = arith.constant 0 : index
    %c0_9 = arith.constant 0 : index
    %10 = vector.load %arg5[%c0_8, %c0_9] : memref<1x512xf32, #tpu.memory_space<vmem>>, vector<1x512xf32>
    %cst_10 = arith.constant dense<0.000000e+00> : vector<8x512xf32>
    %11 = tpu.matmul %8, %9, %cst_10 {dimension_numbers = #tpu.dot_dimension_numbers<[1], [0], [0], [1], [0, 0, 1, 1], [], []>} : vector<8x1024xbf16>, vector<1024x512xbf16>, vector<8x512xf32> -> vector<8x512xf32>
    %12 = vector.broadcast %10 : vector<1x512xf32> to vector<8x512xf32>
    %13 = arith.addf %11, %12 : vector<8x512xf32>
    %cst_11 = arith.constant 0.000000e+00 : f32
    %14 = vector.broadcast %cst_11 : f32 to vector<8x512xf32>
    %15 = arith.maximumf %13, %14 : vector<8x512xf32>
    %16 = arith.truncf %15 : vector<8x512xf32> to vector<8x512xbf16>
    %c0_12 = arith.constant 0 : index
    %c0_13 = arith.constant 0 : index
    %17 = vector.load %arg6[%c0_12, %c0_13] : memref<512x256xbf16, #tpu.memory_space<vmem>>, vector<512x256xbf16>
    %c0_14 = arith.constant 0 : index
    %c0_15 = arith.constant 0 : index
    %18 = vector.load %arg7[%c0_14, %c0_15] : memref<1x256xf32, #tpu.memory_space<vmem>>, vector<1x256xf32>
    %cst_16 = arith.constant dense<0.000000e+00> : vector<8x256xf32>
    %19 = tpu.matmul %16, %17, %cst_16 {dimension_numbers = #tpu.dot_dimension_numbers<[1], [0], [0], [1], [0, 0, 1, 1], [], []>} : vector<8x512xbf16>, vector<512x256xbf16>, vector<8x256xf32> -> vector<8x256xf32>
    %20 = vector.broadcast %18 : vector<1x256xf32> to vector<8x256xf32>
    %21 = arith.addf %19, %20 : vector<8x256xf32>
    %cst_17 = arith.constant 0.000000e+00 : f32
    %22 = vector.broadcast %cst_17 : f32 to vector<8x256xf32>
    %23 = arith.maximumf %21, %22 : vector<8x256xf32>
    %24 = arith.truncf %23 : vector<8x256xf32> to vector<8x256xbf16>
    %c0_18 = arith.constant 0 : index
    %c0_19 = arith.constant 0 : index
    %25 = vector.load %arg8[%c0_18, %c0_19] : memref<256x128xbf16, #tpu.memory_space<vmem>>, vector<256x128xbf16>
    %c0_20 = arith.constant 0 : index
    %c0_21 = arith.constant 0 : index
    %26 = vector.load %arg9[%c0_20, %c0_21] : memref<1x128xf32, #tpu.memory_space<vmem>>, vector<1x128xf32>
    %cst_22 = arith.constant dense<0.000000e+00> : vector<8x128xf32>
    %27 = tpu.matmul %24, %25, %cst_22 {dimension_numbers = #tpu.dot_dimension_numbers<[1], [0], [0], [1], [0, 0, 1, 1], [], []>} : vector<8x256xbf16>, vector<256x128xbf16>, vector<8x128xf32> -> vector<8x128xf32>
    %28 = vector.broadcast %26 : vector<1x128xf32> to vector<8x128xf32>
    %29 = arith.addf %27, %28 : vector<8x128xf32>
    %cst_23 = arith.constant 0.000000e+00 : f32
    %30 = vector.broadcast %cst_23 : f32 to vector<8x128xf32>
    %31 = arith.maximumf %29, %30 : vector<8x128xf32>
    %32 = arith.truncf %31 : vector<8x128xf32> to vector<8x128xbf16>
    %c0_24 = arith.constant 0 : index
    %c0_25 = arith.constant 0 : index
    %33 = vector.load %arg10[%c0_24, %c0_25] : memref<128x128xbf16, #tpu.memory_space<vmem>>, vector<128x128xbf16>
    %c0_26 = arith.constant 0 : index
    %c0_27 = arith.constant 0 : index
    %34 = vector.load %arg11[%c0_26, %c0_27] : memref<1x128xf32, #tpu.memory_space<vmem>>, vector<1x128xf32>
    %cst_28 = arith.constant dense<0.000000e+00> : vector<8x128xf32>
    %35 = tpu.matmul %32, %33, %cst_28 {dimension_numbers = #tpu.dot_dimension_numbers<[1], [0], [0], [1], [0, 0, 1, 1], [], []>} : vector<8x128xbf16>, vector<128x128xbf16>, vector<8x128xf32> -> vector<8x128xf32>
    %36 = vector.broadcast %34 : vector<1x128xf32> to vector<8x128xf32>
    %37 = arith.addf %35, %36 : vector<8x128xf32>
    %cst_29 = arith.constant 0.000000e+00 : f32
    %38 = vector.broadcast %cst_29 : f32 to vector<8x128xf32>
    %39 = arith.maximumf %37, %38 : vector<8x128xf32>
    %40 = arith.truncf %39 : vector<8x128xf32> to vector<8x128xbf16>
    %c0_30 = arith.constant 0 : index
    %c0_31 = arith.constant 0 : index
    %41 = vector.load %arg12[%c0_30, %c0_31] : memref<128x128xbf16, #tpu.memory_space<vmem>>, vector<128x128xbf16>
    %c0_32 = arith.constant 0 : index
    %c0_33 = arith.constant 0 : index
    %42 = vector.load %arg13[%c0_32, %c0_33] : memref<1x128xf32, #tpu.memory_space<vmem>>, vector<1x128xf32>
    %cst_34 = arith.constant dense<0.000000e+00> : vector<8x128xf32>
    %43 = tpu.matmul %40, %41, %cst_34 {dimension_numbers = #tpu.dot_dimension_numbers<[1], [0], [0], [1], [0, 0, 1, 1], [], []>} : vector<8x128xbf16>, vector<128x128xbf16>, vector<8x128xf32> -> vector<8x128xf32>
    %44 = vector.broadcast %42 : vector<1x128xf32> to vector<8x128xf32>
    %45 = arith.addf %43, %44 : vector<8x128xf32>
    %46 = arith.negf %45 : vector<8x128xf32>
    %47 = math.exp %46 : vector<8x128xf32>
    %cst_35 = arith.constant 1.000000e+00 : f32
    %48 = vector.broadcast %cst_35 : f32 to vector<8x128xf32>
    %49 = arith.addf %48, %47 : vector<8x128xf32>
    %50 = arith.divf %48, %49 : vector<8x128xf32>
    %c0_36 = arith.constant 0 : index
    %c0_37 = arith.constant 0 : index
    %51 = vector.load %arg14[%c0_36, %c0_37] : memref<8x128xf32, #tpu.memory_space<vmem>>, vector<8x128xf32>
    tpu.vector_store %arg14[%c0_36, %c0_37], %50 {strides = array<i32>} : memref<8x128xf32, #tpu.memory_space<vmem>>, vector<8x128xf32>,
    return
  }
  func.func @transform_0(%arg0: i32) -> (i32, i32) {
    %c0_i32 = arith.constant 0 : i32
    %c0_i32_0 = arith.constant 0 : i32
    return %arg0, %c0_i32 : i32, i32
  }
  func.func @transform_1(%arg0: i32) -> (i32, i32) {
    %c0_i32 = arith.constant 0 : i32
    %c0_i32_0 = arith.constant 0 : i32
    %c0_i32_1 = arith.constant 0 : i32
    return %c0_i32, %c0_i32_0 : i32, i32
  }
  func.func @transform_2(%arg0: i32) -> (i32, i32) {
    %c0_i32 = arith.constant 0 : i32
    %c0_i32_0 = arith.constant 0 : i32
    %c0_i32_1 = arith.constant 0 : i32
    return %c0_i32, %c0_i32_0 : i32, i32
  }
  func.func @transform_3(%arg0: i32) -> (i32, i32) {
    %c0_i32 = arith.constant 0 : i32
    %c0_i32_0 = arith.constant 0 : i32
    %c0_i32_1 = arith.constant 0 : i32
    return %c0_i32, %c0_i32_0 : i32, i32
  }
  func.func @transform_4(%arg0: i32) -> (i32, i32) {
    %c0_i32 = arith.constant 0 : i32
    %c0_i32_0 = arith.constant 0 : i32
    %c0_i32_1 = arith.constant 0 : i32
    return %c0_i32, %c0_i32_0 : i32, i32
  }
  func.func @transform_5(%arg0: i32) -> (i32, i32) {
    %c0_i32 = arith.constant 0 : i32
    %c0_i32_0 = arith.constant 0 : i32
    %c0_i32_1 = arith.constant 0 : i32
    return %c0_i32, %c0_i32_0 : i32, i32
  }
  func.func @transform_6(%arg0: i32) -> (i32, i32) {
    %c0_i32 = arith.constant 0 : i32
    %c0_i32_0 = arith.constant 0 : i32
    %c0_i32_1 = arith.constant 0 : i32
    return %c0_i32, %c0_i32_0 : i32, i32
  }
  func.func @transform_7(%arg0: i32) -> (i32, i32) {
    %c0_i32 = arith.constant 0 : i32
    %c0_i32_0 = arith.constant 0 : i32
    %c0_i32_1 = arith.constant 0 : i32
    return %c0_i32, %c0_i32_0 : i32, i32
  }
  func.func @transform_8(%arg0: i32) -> (i32, i32) {
    %c0_i32 = arith.constant 0 : i32
    %c0_i32_0 = arith.constant 0 : i32
    %c0_i32_1 = arith.constant 0 : i32
    return %c0_i32, %c0_i32_0 : i32, i32
  }
  func.func @transform_9(%arg0: i32) -> (i32, i32) {
    %c0_i32 = arith.constant 0 : i32
    %c0_i32_0 = arith.constant 0 : i32
    %c0_i32_1 = arith.constant 0 : i32
    return %c0_i32, %c0_i32_0 : i32, i32
  }
  func.func @transform_10(%arg0: i32) -> (i32, i32) {
    %c0_i32 = arith.constant 0 : i32
    %c0_i32_0 = arith.constant 0 : i32
    %c0_i32_1 = arith.constant 0 : i32
    return %c0_i32, %c0_i32_0 : i32, i32
  }
  func.func @transform_11(%arg0: i32) -> (i32, i32) {
    %c0_i32 = arith.constant 0 : i32
    %c0_i32_0 = arith.constant 0 : i32
    %c0_i32_1 = arith.constant 0 : i32
    return %c0_i32, %c0_i32_0 : i32, i32
  }
  func.func @transform_12(%arg0: i32) -> (i32, i32) {
    %c0_i32 = arith.constant 0 : i32
    %c0_i32_0 = arith.constant 0 : i32
    %c0_i32_1 = arith.constant 0 : i32
    return %c0_i32, %c0_i32_0 : i32, i32
  }
  func.func @transform_13(%arg0: i32) -> (i32, i32) {
    %c0_i32 = arith.constant 0 : i32
    %c0_i32_0 = arith.constant 0 : i32
    return %arg0, %c0_i32 : i32, i32
  }
}

</mosaic_0001>

<llo_original>
// kernel: tpu_custom_call.1
$region0: #{tpu_custom_call.1}
  #allocation0 [shape = 'u32[]', space=smem, size = 0x4, offset = 0x4, fixed_abs, tag = 'smem constant byte address 0x4 - core index']
  #allocation1 [shape = 'u32[72,128]{1,0:T(1,128)}', space=vmem, size = 0x9000, scoped, tag = 'internal scratch']
  %s0 = inlined_call_operand.hbm [shape: bf16[8,1024], index: 0, kind: input, shape index: {}]
  %s1 = inlined_call_operand.hbm [shape: bf16[1024,1024], index: 1, kind: input, shape index: {}]
  %s2 = inlined_call_operand.hbm [shape: f32[1,1024], index: 2, kind: input, shape index: {}]
  %s3 = inlined_call_operand.hbm [shape: bf16[1024,512], index: 3, kind: input, shape index: {}]
  %s4 = inlined_call_operand.hbm [shape: f32[1,512], index: 4, kind: input, shape index: {}]
  %s5 = inlined_call_operand.hbm [shape: bf16[512,256], index: 5, kind: input, shape index: {}]
  %s6 = inlined_call_operand.hbm [shape: f32[1,256], index: 6, kind: input, shape index: {}]
  %s7 = inlined_call_operand.hbm [shape: bf16[256,128], index: 7, kind: input, shape index: {}]
  %s8 = inlined_call_operand.hbm [shape: f32[1,128], index: 8, kind: input, shape index: {}]
  %s9 = inlined_call_operand.hbm [shape: bf16[128,128], index: 9, kind: input, shape index: {}]
  %s10 = inlined_call_operand.hbm [shape: f32[1,128], index: 10, kind: input, shape index: {}]
  %s11 = inlined_call_operand.hbm [shape: bf16[128,128], index: 11, kind: input, shape index: {}]
  %s12 = inlined_call_operand.hbm [shape: f32[1,128], index: 12, kind: input, shape index: {}]
  %s13 = inlined_call_operand.hbm [shape: f32[8,128], index: 13, kind: output, shape index: {}]
  %s14 = sld [smem:[#allocation0]]
  $region114: #{tpu_custom_call.1} parent=0
    _
  %s16 = ssub.s32 1, %s14
  %s17 = scalar_select 0, %s16, %s14
  $region1: #{tpu_custom_call.1} parent=0
    #allocation2 [shape = 'u8[16384]{0}', space=vmem, size = 0x4000, scoped, tag = 'input window, operand 0, single buffered']
    #allocation3 [shape = 's32[1]{0}', space=sflag, size = 0x4, scoped, tag = 'scoped memory for tpu_custom_call.1']
    #allocation4 [shape = 's32[1]{0}', space=sflag, size = 0x4, scoped, tag = 'scoped memory for tpu_custom_call.1']
    #allocation5 [shape = 'u8[2097152]{0}', space=vmem, size = 0x200000, scoped, tag = 'input window, operand 1, single buffered']
    #allocation6 [shape = 's32[1]{0}', space=sflag, size = 0x4, scoped, tag = 'scoped memory for tpu_custom_call.1']
    #allocation7 [shape = 'u8[4096]{0}', space=vmem, size = 0x1000, scoped, tag = 'input window, operand 2, single buffered']
    #allocation8 [shape = 'u8[1048576]{0}', space=vmem, size = 0x100000, scoped, tag = 'input window, operand 3, single buffered']
    #allocation9 [shape = 's32[1]{0}', space=sflag, size = 0x4, scoped, tag = 'scoped memory for tpu_custom_call.1']
    #allocation10 [shape = 'u8[2048]{0}', space=vmem, size = 0x800, scoped, tag = 'input window, operand 4, single buffered']
    #allocation11 [shape = 'u8[262144]{0}', space=vmem, size = 0x40000, scoped, tag = 'input window, operand 5, single buffered']
    #allocation12 [shape = 's32[1]{0}', space=sflag, size = 0x4, scoped, tag = 'scoped memory for tpu_custom_call.1']
    #allocation13 [shape = 'u8[1024]{0}', space=vmem, size = 0x400, scoped, tag = 'input window, operand 6, single buffered']
    #allocation14 [shape = 'u8[65536]{0}', space=vmem, size = 0x10000, scoped, tag = 'input window, operand 7, single buffered']
    #allocation15 [shape = 's32[1]{0}', space=sflag, size = 0x4, scoped, tag = 'scoped memory for tpu_custom_call.1']
    #allocation16 [shape = 'u8[512]{0}', space=vmem, size = 0x400, scoped, tag = 'input window, operand 8, single buffered']
    #allocation17 [shape = 'u8[32768]{0}', space=vmem, size = 0x8000, scoped, tag = 'input window, operand 9, single buffered']
    #allocation18 [shape = 's32[1]{0}', space=sflag, size = 0x4, scoped, tag = 'scoped memory for tpu_custom_call.1']
    #allocation19 [shape = 'u8[512]{0}', space=vmem, size = 0x400, scoped, tag = 'input window, operand 10, single buffered']
    #allocation20 [shape = 'u8[32768]{0}', space=vmem, size = 0x8000, scoped, tag = 'input window, operand 11, single buffered']
    #allocation21 [shape = 's32[1]{0}', space=sflag, size = 0x4, scoped, tag = 'scoped memory for tpu_custom_call.1']
    #allocation22 [shape = 'u8[512]{0}', space=vmem, size = 0x400, scoped, tag = 'input window, operand 12, single buffered']
    #allocation23 [shape = 'u8[4096]{0}', space=vmem, size = 0x1000, scoped, tag = 'output window, operand 0, single buffered']
    %18 = vsyncpa [#allocation3], 0
    %19 = vsyncpa [#allocation6], 0
    %20 = vsyncpa [#allocation9], 0
    %21 = vsyncpa [#allocation12], 0
    %22 = vsyncpa [#allocation15], 0
    %23 = vsyncpa [#allocation18], 0
    %24 = vsyncpa [#allocation21], 0
    %25 = vsyncpa [#allocation4], 0
    // Predicated region
    $region2: #{tpu_custom_call.1} parent=1 // pred_check
      _
    $region3: #{tpu_custom_call.1} parent=1 // pred_check_branch
      %27 = sbr.rel (0) target = $region5
    $region4: #{tpu_custom_call.1} parent=1 // pred_region
      %29 = vsyncadd [#allocation3], 0
      %s31 = sshll.u32 %s0, 4
      %s32 = int_to_ptr.hbm [resolvable:$true] %s31
      %s33 = sshll.u32 [#allocation2], 4
      %s34 = int_to_ptr.vmem [resolvable:$true] %s33
      %36 = dma.hbm_to_vmem [thread:$0]  %s32, 512, %s34, [#allocation3]
    $region5: #{tpu_custom_call.1} parent=1 // pred_fallthru
      _
    // Predicated region
    $region6: #{tpu_custom_call.1} parent=1 // pred_check
      _
    $region7: #{tpu_custom_call.1} parent=1 // pred_check_branch
      %38 = sbr.rel (0) target = $region9
    $region8: #{tpu_custom_call.1} parent=1 // pred_region
      %40 = vsyncadd [#allocation6], 0
      %s41 = sshll.u32 %s1, 4
      %s42 = int_to_ptr.hbm [resolvable:$true] %s41
      %s43 = sshll.u32 [#allocation5], 4
      %s44 = int_to_ptr.vmem [resolvable:$true] %s43
      %49 = dma.hbm_to_vmem [thread:$0]  %s42, 65536, %s44, [#allocation6], 512, 512, 32
    $region9: #{tpu_custom_call.1} parent=1 // pred_fallthru
      _
    // Predicated region
    $region10: #{tpu_custom_call.1} parent=1 // pred_check
      _
    $region11: #{tpu_custom_call.1} parent=1 // pred_check_branch
      %51 = sbr.rel (0) target = $region13
    $region12: #{tpu_custom_call.1} parent=1 // pred_region
      %53 = vsyncadd [#allocation6], 0
      %s55 = sshll.u32 %s2, 4
      %s56 = int_to_ptr.hbm [resolvable:$true] %s55
      %s57 = sshll.u32 [#allocation7], 4
      %s58 = int_to_ptr.vmem [resolvable:$true] %s57
      %60 = dma.hbm_to_vmem [thread:$0]  %s56, 128, %s58, [#allocation6]
    $region13: #{tpu_custom_call.1} parent=1 // pred_fallthru
      _
    // Predicated region
    $region14: #{tpu_custom_call.1} parent=1 // pred_check
      _
    $region15: #{tpu_custom_call.1} parent=1 // pred_check_branch
      %62 = sbr.rel (0) target = $region17
    $region16: #{tpu_custom_call.1} parent=1 // pred_region
      %64 = vsyncadd [#allocation9], 0
      %s65 = sshll.u32 %s3, 4
      %s66 = int_to_ptr.hbm [resolvable:$true] %s65
      %s67 = sshll.u32 [#allocation8], 4
      %s68 = int_to_ptr.vmem [resolvable:$true] %s67
      %73 = dma.hbm_to_vmem [thread:$0]  %s66, 32768, %s68, [#allocation9], 256, 256, 16
    $region17: #{tpu_custom_call.1} parent=1 // pred_fallthru
      _
    // Predicated region
    $region18: #{tpu_custom_call.1} parent=1 // pred_check
      _
    $region19: #{tpu_custom_call.1} parent=1 // pred_check_branch
      %75 = sbr.rel (0) target = $region21
    $region20: #{tpu_custom_call.1} parent=1 // pred_region
      %77 = vsyncadd [#allocation9], 0
      %s79 = sshll.u32 %s4, 4
      %s80 = int_to_ptr.hbm [resolvable:$true] %s79
      %s81 = sshll.u32 [#allocation10], 4
      %s82 = int_to_ptr.vmem [resolvable:$true] %s81
      %84 = dma.hbm_to_vmem [thread:$0]  %s80, 64, %s82, [#allocation9]
    $region21: #{tpu_custom_call.1} parent=1 // pred_fallthru
      _
    // Predicated region
    $region22: #{tpu_custom_call.1} parent=1 // pred_check
      _
    $region23: #{tpu_custom_call.1} parent=1 // pred_check_branch
      %86 = sbr.rel (0) target = $region25
    $region24: #{tpu_custom_call.1} parent=1 // pred_region
      %88 = vsyncadd [#allocation12], 0
      %s89 = sshll.u32 %s5, 4
      %s90 = int_to_ptr.hbm [resolvable:$true] %s89
      %s91 = sshll.u32 [#allocation11], 4
      %s92 = int_to_ptr.vmem [resolvable:$true] %s91
      %97 = dma.hbm_to_vmem [thread:$0]  %s90, 8192, %s92, [#allocation12], 128, 128, 8
    $region25: #{tpu_custom_call.1} parent=1 // pred_fallthru
      _
    // Predicated region
    $region26: #{tpu_custom_call.1} parent=1 // pred_check
      _
    $region27: #{tpu_custom_call.1} parent=1 // pred_check_branch
      %99 = sbr.rel (0) target = $region29
    $region28: #{tpu_custom_call.1} parent=1 // pred_region
      %101 = vsyncadd [#allocation12], 0
      %s103 = sshll.u32 %s6, 4
      %s104 = int_to_ptr.hbm [resolvable:$true] %s103
      %s105 = sshll.u32 [#allocation13], 4
      %s106 = int_to_ptr.vmem [resolvable:$true] %s105
      %108 = dma.hbm_to_vmem [thread:$0]  %s104, 32, %s106, [#allocation12]
    $region29: #{tpu_custom_call.1} parent=1 // pred_fallthru
      _
    // Predicated region
    $region30: #{tpu_custom_call.1} parent=1 // pred_check
      _
    $region31: #{tpu_custom_call.1} parent=1 // pred_check_branch
      %110 = sbr.rel (0) target = $region33
    $region32: #{tpu_custom_call.1} parent=1 // pred_region
      %112 = vsyncadd [#allocation15], 0
      %s113 = sshll.u32 %s7, 4
      %s114 = int_to_ptr.hbm [resolvable:$true] %s113
      %s115 = sshll.u32 [#allocation14], 4
      %s116 = int_to_ptr.vmem [resolvable:$true] %s115
      %121 = dma.hbm_to_vmem [thread:$0]  %s114, 2048, %s116, [#allocation15], 64, 64, 4
    $region33: #{tpu_custom_call.1} parent=1 // pred_fallthru
      _
    // Predicated region
    $region34: #{tpu_custom_call.1} parent=1 // pred_check
      _
    $region35: #{tpu_custom_call.1} parent=1 // pred_check_branch
      %123 = sbr.rel (0) target = $region37
    $region36: #{tpu_custom_call.1} parent=1 // pred_region
      %125 = vsyncadd [#allocation15], 0
      %s127 = sshll.u32 %s8, 4
      %s128 = int_to_ptr.hbm [resolvable:$true] %s127
      %s129 = sshll.u32 [#allocation16], 4
      %s130 = int_to_ptr.vmem [resolvable:$true] %s129
      %132 = dma.hbm_to_vmem [thread:$0]  %s128, 16, %s130, [#allocation15]
    $region37: #{tpu_custom_call.1} parent=1 // pred_fallthru
      _
    // Predicated region
    $region38: #{tpu_custom_call.1} parent=1 // pred_check
      _
    $region39: #{tpu_custom_call.1} parent=1 // pred_check_branch
      %134 = sbr.rel (0) target = $region41
    $region40: #{tpu_custom_call.1} parent=1 // pred_region
      %136 = vsyncadd [#allocation18], 0
      %s137 = sshll.u32 %s9, 4
      %s138 = int_to_ptr.hbm [resolvable:$true] %s137
      %s139 = sshll.u32 [#allocation17], 4
      %s140 = int_to_ptr.vmem [resolvable:$true] %s139
      %145 = dma.hbm_to_vmem [thread:$0]  %s138, 1024, %s140, [#allocation18], 64, 64, 4
    $region41: #{tpu_custom_call.1} parent=1 // pred_fallthru
      _
    // Predicated region
    $region42: #{tpu_custom_call.1} parent=1 // pred_check
      _
    $region43: #{tpu_custom_call.1} parent=1 // pred_check_branch
      %147 = sbr.rel (0) target = $region45
    $region44: #{tpu_custom_call.1} parent=1 // pred_region
      %149 = vsyncadd [#allocation18], 0
      %s151 = sshll.u32 %s10, 4
      %s152 = int_to_ptr.hbm [resolvable:$true] %s151
      %s153 = sshll.u32 [#allocation19], 4
      %s154 = int_to_ptr.vmem [resolvable:$true] %s153
      %156 = dma.hbm_to_vmem [thread:$0]  %s152, 16, %s154, [#allocation18]
    $region45: #{tpu_custom_call.1} parent=1 // pred_fallthru
      _
    // Predicated region
    $region46: #{tpu_custom_call.1} parent=1 // pred_check
      _
    $region47: #{tpu_custom_call.1} parent=1 // pred_check_branch
      %158 = sbr.rel (0) target = $region49
    $region48: #{tpu_custom_call.1} parent=1 // pred_region
      %160 = vsyncadd [#allocation21], 0
      %s161 = sshll.u32 %s11, 4
      %s162 = int_to_ptr.hbm [resolvable:$true] %s161
      %s163 = sshll.u32 [#allocation20], 4
      %s164 = int_to_ptr.vmem [resolvable:$true] %s163
      %169 = dma.hbm_to_vmem [thread:$0]  %s162, 1024, %s164, [#allocation21], 64, 64, 4
    $region49: #{tpu_custom_call.1} parent=1 // pred_fallthru
      _
    // Predicated region
    $region50: #{tpu_custom_call.1} parent=1 // pred_check
      _
    $region51: #{tpu_custom_call.1} parent=1 // pred_check_branch
      %171 = sbr.rel (0) target = $region53
    $region52: #{tpu_custom_call.1} parent=1 // pred_region
      %173 = vsyncadd [#allocation21], 0
      %s175 = sshll.u32 %s12, 4
      %s176 = int_to_ptr.hbm [resolvable:$true] %s175
      %s177 = sshll.u32 [#allocation22], 4
      %s178 = int_to_ptr.vmem [resolvable:$true] %s177
      %180 = dma.hbm_to_vmem [thread:$0]  %s176, 16, %s178, [#allocation21]
    $region53: #{tpu_custom_call.1} parent=1 // pred_fallthru
      _
    // Predicated region
    $region54: #{tpu_custom_call.1} parent=1 // pred_check
      _
    $region55: #{tpu_custom_call.1} parent=1 // pred_check_branch
      %182 = sbr.rel (0) target = $region57
    $region56: #{tpu_custom_call.1} parent=1 // pred_region
      %184 = dma.done [#allocation3], 512
    $region57: #{tpu_custom_call.1} parent=1 // pred_fallthru
      _
    // Predicated region
    $region58: #{tpu_custom_call.1} parent=1 // pred_check
      _
    $region59: #{tpu_custom_call.1} parent=1 // pred_check_branch
      %186 = sbr.rel (0) target = $region61
    $region60: #{tpu_custom_call.1} parent=1 // pred_region
      %188 = dma.done [#allocation6], 65536
    $region61: #{tpu_custom_call.1} parent=1 // pred_fallthru
      _
    // Predicated region
    $region62: #{tpu_custom_call.1} parent=1 // pred_check
      _
    $region63: #{tpu_custom_call.1} parent=1 // pred_check_branch
      %190 = sbr.rel (0) target = $region65
    $region64: #{tpu_custom_call.1} parent=1 // pred_region
      %192 = dma.done [#allocation6], 128
    $region65: #{tpu_custom_call.1} parent=1 // pred_fallthru
      _
    // Predicated region
    $region66: #{tpu_custom_call.1} parent=1 // pred_check
      _
    $region67: #{tpu_custom_call.1} parent=1 // pred_check_branch
      %194 = sbr.rel (0) target = $region69
    $region68: #{tpu_custom_call.1} parent=1 // pred_region
      %196 = dma.done [#allocation9], 32768
    $region69: #{tpu_custom_call.1} parent=1 // pred_fallthru
      _
    // Predicated region
    $region70: #{tpu_custom_call.1} parent=1 // pred_check
      _
    $region71: #{tpu_custom_call.1} parent=1 // pred_check_branch
      %198 = sbr.rel (0) target = $region73
    $region72: #{tpu_custom_call.1} parent=1 // pred_region
      %200 = dma.done [#allocation9], 64
    $region73: #{tpu_custom_call.1} parent=1 // pred_fallthru
      _
    // Predicated region
    $region74: #{tpu_custom_call.1} parent=1 // pred_check
      _
    $region75: #{tpu_custom_call.1} parent=1 // pred_check_branch
      %202 = sbr.rel (0) target = $region77
    $region76: #{tpu_custom_call.1} parent=1 // pred_region
      %204 = dma.done [#allocation12], 8192
    $region77: #{tpu_custom_call.1} parent=1 // pred_fallthru
      _
    // Predicated region
    $region78: #{tpu_custom_call.1} parent=1 // pred_check
      _
    $region79: #{tpu_custom_call.1} parent=1 // pred_check_branch
      %206 = sbr.rel (0) target = $region81
    $region80: #{tpu_custom_call.1} parent=1 // pred_region
      %208 = dma.done [#allocation12], 32
    $region81: #{tpu_custom_call.1} parent=1 // pred_fallthru
      _
    // Predicated region
    $region82: #{tpu_custom_call.1} parent=1 // pred_check
      _
    $region83: #{tpu_custom_call.1} parent=1 // pred_check_branch
      %210 = sbr.rel (0) target = $region85
    $region84: #{tpu_custom_call.1} parent=1 // pred_region
      %212 = dma.done [#allocation15], 2048
    $region85: #{tpu_custom_call.1} parent=1 // pred_fallthru
      _
    // Predicated region
    $region86: #{tpu_custom_call.1} parent=1 // pred_check
      _
    $region87: #{tpu_custom_call.1} parent=1 // pred_check_branch
      %214 = sbr.rel (0) target = $region89
    $region88: #{tpu_custom_call.1} parent=1 // pred_region
      %216 = dma.done [#allocation15], 16
    $region89: #{tpu_custom_call.1} parent=1 // pred_fallthru
      _
    // Predicated region
    $region90: #{tpu_custom_call.1} parent=1 // pred_check
      _
    $region91: #{tpu_custom_call.1} parent=1 // pred_check_branch
      %218 = sbr.rel (0) target = $region93
    $region92: #{tpu_custom_call.1} parent=1 // pred_region
      %220 = dma.done [#allocation18], 1024
    $region93: #{tpu_custom_call.1} parent=1 // pred_fallthru
      _
    // Predicated region
    $region94: #{tpu_custom_call.1} parent=1 // pred_check
      _
    $region95: #{tpu_custom_call.1} parent=1 // pred_check_branch
      %222 = sbr.rel (0) target = $region97
    $region96: #{tpu_custom_call.1} parent=1 // pred_region
      %224 = dma.done [#allocation18], 16
    $region97: #{tpu_custom_call.1} parent=1 // pred_fallthru
      _
    // Predicated region
    $region98: #{tpu_custom_call.1} parent=1 // pred_check
      _
    $region99: #{tpu_custom_call.1} parent=1 // pred_check_branch
      %226 = sbr.rel (0) target = $region101
    $region100: #{tpu_custom_call.1} parent=1 // pred_region
      %228 = dma.done [#allocation21], 1024
    $region101: #{tpu_custom_call.1} parent=1 // pred_fallthru
      _
    // Predicated region
    $region102: #{tpu_custom_call.1} parent=1 // pred_check
      _
    $region103: #{tpu_custom_call.1} parent=1 // pred_check_branch
      %230 = sbr.rel (0) target = $region105
    $region104: #{tpu_custom_call.1} parent=1 // pred_region
      %232 = dma.done [#allocation21], 16
    $region105: #{tpu_custom_call.1} parent=1 // pred_fallthru
      _
    %v233 = vld [vmem:[#allocation2] sm:$0xff]
    %v234 = vld [vmem:[#allocation2 + $0x8] sm:$0xff]
    %v235 = vld [vmem:[#allocation2 + $0x10] sm:$0xff]
    %v236 = vld [vmem:[#allocation2 + $0x18] sm:$0xff]
    %v237 = vld [vmem:[#allocation5] sm:$0xff]
    %v238 = vld [vmem:[#allocation5 + $0x8] sm:$0xff]
    %v239 = vld [vmem:[#allocation5 + $0x10] sm:$0xff]
    %v240 = vld [vmem:[#allocation5 + $0x18] sm:$0xff]
    %v241 = vld [vmem:[#allocation5 + $0x20] sm:$0xff]
    %v242 = vld [vmem:[#allocation5 + $0x28] sm:$0xff]
    %v243 = vld [vmem:[#allocation5 + $0x30] sm:$0xff]
    %v244 = vld [vmem:[#allocation5 + $0x38] sm:$0xff]
    %v245 = vld [vmem:[#allocation5 + $0x40] sm:$0xff]
    %v246 = vld [vmem:[#allocation5 + $0x48] sm:$0xff]
    %v247 = vld [vmem:[#allocation5 + $0x50] sm:$0xff]
    %v248 = vld [vmem:[#allocation5 + $0x58] sm:$0xff]
    %v249 = vld [vmem:[#allocation5 + $0x60] sm:$0xff]
    %v250 = vld [vmem:[#allocation5 + $0x68] sm:$0xff]
    %v251 = vld [vmem:[#allocation5 + $0x70] sm:$0xff]
    %v252 = vld [vmem:[#allocation5 + $0x78] sm:$0xff]
    %v253 = vld [vmem:[#allocation5 + $0x80] sm:$0xff]
    %v254 = vld [vmem:[#allocation5 + $0x88] sm:$0xff]
    %v255 = vld [vmem:[#allocation5 + $0x90] sm:$0xff]
    %v256 = vld [vmem:[#allocation5 + $0x98] sm:$0xff]
    %v257 = vld [vmem:[#allocation5 + $0xa0] sm:$0xff]
    %v258 = vld [vmem:[#allocation5 + $0xa8] sm:$0xff]
    %v259 = vld [vmem:[#allocation5 + $0xb0] sm:$0xff]
    %v260 = vld [vmem:[#allocation5 + $0xb8] sm:$0xff]
    %v261 = vld [vmem:[#allocation5 + $0xc0] sm:$0xff]
    %v262 = vld [vmem:[#allocation5 + $0xc8] sm:$0xff]
    %v263 = vld [vmem:[#allocation5 + $0xd0] sm:$0xff]
    %v264 = vld [vmem:[#allocation5 + $0xd8] sm:$0xff]
    %v265 = vld [vmem:[#allocation5 + $0xe0] sm:$0xff]
    %v266 = vld [vmem:[#allocation5 + $0xe8] sm:$0xff]
    %v267 = vld [vmem:[#allocation5 + $0xf0] sm:$0xff]
    %v268 = vld [vmem:[#allocation5 + $0xf8] sm:$0xff]
    %v269 = vld [vmem:[#allocation5 + $0x100] sm:$0xff]
    %v270 = vld [vmem:[#allocation5 + $0x108] sm:$0xff]
    %v271 = vld [vmem:[#allocation5 + $0x110] sm:$0xff]
    %v272 = vld [vmem:[#allocation5 + $0x118] sm:$0xff]
    %v273 = vld [vmem:[#allocation5 + $0x120] sm:$0xff]
    %v274 = vld [vmem:[#allocation5 + $0x128] sm:$0xff]
    %v275 = vld [vmem:[#allocation5 + $0x130] sm:$0xff]
    %v276 = vld [vmem:[#allocation5 + $0x138] sm:$0xff]
    %v277 = vld [vmem:[#allocation5 + $0x140] sm:$0xff]
    %v278 = vld [vmem:[#allocation5 + $0x148] sm:$0xff]
    %v279 = vld [vmem:[#allocation5 + $0x150] sm:$0xff]
    %v280 = vld [vmem:[#allocation5 + $0x158] sm:$0xff]
    %v281 = vld [vmem:[#allocation5 + $0x160] sm:$0xff]
    %v282 = vld [vmem:[#allocation5 + $0x168] sm:$0xff]
    %v283 = vld [vmem:[#allocation5 + $0x170] sm:$0xff]
    %v284 = vld [vmem:[#allocation5 + $0x178] sm:$0xff]
    %v285 = vld [vmem:[#allocation5 + $0x180] sm:$0xff]
    %v286 = vld [vmem:[#allocation5 + $0x188] sm:$0xff]
    %v287 = vld [vmem:[#allocation5 + $0x190] sm:$0xff]
    %v288 = vld [vmem:[#allocation5 + $0x198] sm:$0xff]
    %v289 = vld [vmem:[#allocation5 + $0x1a0] sm:$0xff]
    %v290 = vld [vmem:[#allocation5 + $0x1a8] sm:$0xff]
    %v291 = vld [vmem:[#allocation5 + $0x1b0] sm:$0xff]
    %v292 = vld [vmem:[#allocation5 + $0x1b8] sm:$0xff]
    %v293 = vld [vmem:[#allocation5 + $0x1c0] sm:$0xff]
    %v294 = vld [vmem:[#allocation5 + $0x1c8] sm:$0xff]
    %v295 = vld [vmem:[#allocation5 + $0x1d0] sm:$0xff]
    %v296 = vld [vmem:[#allocation5 + $0x1d8] sm:$0xff]
    %v297 = vld [vmem:[#allocation5 + $0x1e0] sm:$0xff]
    %v298 = vld [vmem:[#allocation5 + $0x1e8] sm:$0xff]
    %v299 = vld [vmem:[#allocation5 + $0x1f0] sm:$0xff]
    %v300 = vld [vmem:[#allocation5 + $0x1f8] sm:$0xff]
    %v301 = vld [vmem:[#allocation5 + $0x200] sm:$0xff]
    %v302 = vld [vmem:[#allocation5 + $0x208] sm:$0xff]
    %v303 = vld [vmem:[#allocation5 + $0x210] sm:$0xff]
    %v304 = vld [vmem:[#allocation5 + $0x218] sm:$0xff]
    %v305 = vld [vmem:[#allocation5 + $0x220] sm:$0xff]
    %v306 = vld [vmem:[#allocation5 + $0x228] sm:$0xff]
    %v307 = vld [vmem:[#allocation5 + $0x230] sm:$0xff]
    %v308 = vld [vmem:[#allocation5 + $0x238] sm:$0xff]
    %v309 = vld [vmem:[#allocation5 + $0x240] sm:$0xff]
    %v310 = vld [vmem:[#allocation5 + $0x248] sm:$0xff]
    %v311 = vld [vmem:[#allocation5 + $0x250] sm:$0xff]
    %v312 = vld [vmem:[#allocation5 + $0x258] sm:$0xff]
    %v313 = vld [vmem:[#allocation5 + $0x260] sm:$0xff]
    %v314 = vld [vmem:[#allocation5 + $0x268] sm:$0xff]
    %v315 = vld [vmem:[#allocation5 + $0x270] sm:$0xff]
    %v316 = vld [vmem:[#allocation5 + $0x278] sm:$0xff]
    %v317 = vld [vmem:[#allocation5 + $0x280] sm:$0xff]
    %v318 = vld [vmem:[#allocation5 + $0x288] sm:$0xff]
    %v319 = vld [vmem:[#allocation5 + $0x290] sm:$0xff]
    %v320 = vld [vmem:[#allocation5 + $0x298] sm:$0xff]
    %v321 = vld [vmem:[#allocation5 + $0x2a0] sm:$0xff]
    %v322 = vld [vmem:[#allocation5 + $0x2a8] sm:$0xff]
    %v323 = vld [vmem:[#allocation5 + $0x2b0] sm:$0xff]
    %v324 = vld [vmem:[#allocation5 + $0x2b8] sm:$0xff]
    %v325 = vld [vmem:[#allocation5 + $0x2c0] sm:$0xff]
    %v326 = vld [vmem:[#allocation5 + $0x2c8] sm:$0xff]
    %v327 = vld [vmem:[#allocation5 + $0x2d0] sm:$0xff]
    %v328 = vld [vmem:[#allocation5 + $0x2d8] sm:$0xff]
    %v329 = vld [vmem:[#allocation5 + $0x2e0] sm:$0xff]
    %v330 = vld [vmem:[#allocation5 + $0x2e8] sm:$0xff]
    %v331 = vld [vmem:[#allocation5 + $0x2f0] sm:$0xff]
    %v332 = vld [vmem:[#allocation5 + $0x2f8] sm:$0xff]
    %v333 = vld [vmem:[#allocation5 + $0x300] sm:$0xff]
    %v334 = vld [vmem:[#allocation5 + $0x308] sm:$0xff]
    %v335 = vld [vmem:[#allocation5 + $0x310] sm:$0xff]
    %v336 = vld [vmem:[#allocation5 + $0x318] sm:$0xff]
    %v337 = vld [vmem:[#allocation5 + $0x320] sm:$0xff]
    %v338 = vld [vmem:[#allocation5 + $0x328] sm:$0xff]
    %v339 = vld [vmem:[#allocation5 + $0x330] sm:$0xff]
    %v340 = vld [vmem:[#allocation5 + $0x338] sm:$0xff]
    %v341 = vld [vmem:[#allocation5 + $0x340] sm:$0xff]
    %v342 = vld [vmem:[#allocation5 + $0x348] sm:$0xff]
    %v343 = vld [vmem:[#allocation5 + $0x350] sm:$0xff]
    %v344 = vld [vmem:[#allocation5 + $0x358] sm:$0xff]
    %v345 = vld [vmem:[#allocation5 + $0x360] sm:$0xff]
    %v346 = vld [vmem:[#allocation5 + $0x368] sm:$0xff]
    %v347 = vld [vmem:[#allocation5 + $0x370] sm:$0xff]
    %v348 = vld [vmem:[#allocation5 + $0x378] sm:$0xff]
    %v349 = vld [vmem:[#allocation5 + $0x380] sm:$0xff]
    %v350 = vld [vmem:[#allocation5 + $0x388] sm:$0xff]
    %v351 = vld [vmem:[#allocation5 + $0x390] sm:$0xff]
    %v352 = vld [vmem:[#allocation5 + $0x398] sm:$0xff]
    %v353 = vld [vmem:[#allocation5 + $0x3a0] sm:$0xff]
    %v354 = vld [vmem:[#allocation5 + $0x3a8] sm:$0xff]
    %v355 = vld [vmem:[#allocation5 + $0x3b0] sm:$0xff]
    %v356 = vld [vmem:[#allocation5 + $0x3b8] sm:$0xff]
    %v357 = vld [vmem:[#allocation5 + $0x3c0] sm:$0xff]
    %v358 = vld [vmem:[#allocation5 + $0x3c8] sm:$0xff]
    %v359 = vld [vmem:[#allocation5 + $0x3d0] sm:$0xff]
    %v360 = vld [vmem:[#allocation5 + $0x3d8] sm:$0xff]
    %v361 = vld [vmem:[#allocation5 + $0x3e0] sm:$0xff]
    %v362 = vld [vmem:[#allocation5 + $0x3e8] sm:$0xff]
    %v363 = vld [vmem:[#allocation5 + $0x3f0] sm:$0xff]
    %v364 = vld [vmem:[#allocation5 + $0x3f8] sm:$0xff]
    %v365 = vld [vmem:[#allocation5 + $0x400] sm:$0xff]
    %v366 = vld [vmem:[#allocation5 + $0x408] sm:$0xff]
    %v367 = vld [vmem:[#allocation5 + $0x410] sm:$0xff]
    %v368 = vld [vmem:[#allocation5 + $0x418] sm:$0xff]
    %v369 = vld [vmem:[#allocation5 + $0x420] sm:$0xff]
    %v370 = vld [vmem:[#allocation5 + $0x428] sm:$0xff]
    %v371 = vld [vmem:[#allocation5 + $0x430] sm:$0xff]
    %v372 = vld [vmem:[#allocation5 + $0x438] sm:$0xff]
    %v373 = vld [vmem:[#allocation5 + $0x440] sm:$0xff]
    %v374 = vld [vmem:[#allocation5 + $0x448] sm:$0xff]
    %v375 = vld [vmem:[#allocation5 + $0x450] sm:$0xff]
    %v376 = vld [vmem:[#allocation5 + $0x458] sm:$0xff]
    %v377 = vld [vmem:[#allocation5 + $0x460] sm:$0xff]
    %v378 = vld [vmem:[#allocation5 + $0x468] sm:$0xff]
    %v379 = vld [vmem:[#allocation5 + $0x470] sm:$0xff]
    %v380 = vld [vmem:[#allocation5 + $0x478] sm:$0xff]
    %v381 = vld [vmem:[#allocation5 + $0x480] sm:$0xff]
    %v382 = vld [vmem:[#allocation5 + $0x488] sm:$0xff]
    %v383 = vld [vmem:[#allocation5 + $0x490] sm:$0xff]
    %v384 = vld [vmem:[#allocation5 + $0x498] sm:$0xff]
    %v385 = vld [vmem:[#allocation5 + $0x4a0] sm:$0xff]
    %v386 = vld [vmem:[#allocation5 + $0x4a8] sm:$0xff]
    %v387 = vld [vmem:[#allocation5 + $0x4b0] sm:$0xff]
    %v388 = vld [vmem:[#allocation5 + $0x4b8] sm:$0xff]
    %v389 = vld [vmem:[#allocation5 + $0x4c0] sm:$0xff]
    %v390 = vld [vmem:[#allocation5 + $0x4c8] sm:$0xff]
    %v391 = vld [vmem:[#allocation5 + $0x4d0] sm:$0xff]
    %v392 = vld [vmem:[#allocation5 + $0x4d8] sm:$0xff]
    %v393 = vld [vmem:[#allocation5 + $0x4e0] sm:$0xff]
    %v394 = vld [vmem:[#allocation5 + $0x4e8] sm:$0xff]
    %v395 = vld [vmem:[#allocation5 + $0x4f0] sm:$0xff]
    %v396 = vld [vmem:[#allocation5 + $0x4f8] sm:$0xff]
    %v397 = vld [vmem:[#allocation5 + $0x500] sm:$0xff]
    %v398 = vld [vmem:[#allocation5 + $0x508] sm:$0xff]
    %v399 = vld [vmem:[#allocation5 + $0x510] sm:$0xff]
    %v400 = vld [vmem:[#allocation5 + $0x518] sm:$0xff]
    %v401 = vld [vmem:[#allocation5 + $0x520] sm:$0xff]
    %v402 = vld [vmem:[#allocation5 + $0x528] sm:$0xff]
    %v403 = vld [vmem:[#allocation5 + $0x530] sm:$0xff]
    %v404 = vld [vmem:[#allocation5 + $0x538] sm:$0xff]
    %v405 = vld [vmem:[#allocation5 + $0x540] sm:$0xff]
    %v406 = vld [vmem:[#allocation5 + $0x548] sm:$0xff]
    %v407 = vld [vmem:[#allocation5 + $0x550] sm:$0xff]
    %v408 = vld [vmem:[#allocation5 + $0x558] sm:$0xff]
    %v409 = vld [vmem:[#allocation5 + $0x560] sm:$0xff]
    %v410 = vld [vmem:[#allocation5 + $0x568] sm:$0xff]
    %v411 = vld [vmem:[#allocation5 + $0x570] sm:$0xff]
    %v412 = vld [vmem:[#allocation5 + $0x578] sm:$0xff]
    %v413 = vld [vmem:[#allocation5 + $0x580] sm:$0xff]
    %v414 = vld [vmem:[#allocation5 + $0x588] sm:$0xff]
    %v415 = vld [vmem:[#allocation5 + $0x590] sm:$0xff]
    %v416 = vld [vmem:[#allocation5 + $0x598] sm:$0xff]
    %v417 = vld [vmem:[#allocation5 + $0x5a0] sm:$0xff]
    %v418 = vld [vmem:[#allocation5 + $0x5a8] sm:$0xff]
    %v419 = vld [vmem:[#allocation5 + $0x5b0] sm:$0xff]
    %v420 = vld [vmem:[#allocation5 + $0x5b8] sm:$0xff]
    %v421 = vld [vmem:[#allocation5 + $0x5c0] sm:$0xff]
    %v422 = vld [vmem:[#allocation5 + $0x5c8] sm:$0xff]
    %v423 = vld [vmem:[#allocation5 + $0x5d0] sm:$0xff]
    %v424 = vld [vmem:[#allocation5 + $0x5d8] sm:$0xff]
    %v425 = vld [vmem:[#allocation5 + $0x5e0] sm:$0xff]
    %v426 = vld [vmem:[#allocation5 + $0x5e8] sm:$0xff]
    %v427 = vld [vmem:[#allocation5 + $0x5f0] sm:$0xff]
    %v428 = vld [vmem:[#allocation5 + $0x5f8] sm:$0xff]
    %v429 = vld [vmem:[#allocation5 + $0x600] sm:$0xff]
    %v430 = vld [vmem:[#allocation5 + $0x608] sm:$0xff]
    %v431 = vld [vmem:[#allocation5 + $0x610] sm:$0xff]
    %v432 = vld [vmem:[#allocation5 + $0x618] sm:$0xff]
    %v433 = vld [vmem:[#allocation5 + $0x620] sm:$0xff]
    %v434 = vld [vmem:[#allocation5 + $0x628] sm:$0xff]
    %v435 = vld [vmem:[#allocation5 + $0x630] sm:$0xff]
    %v436 = vld [vmem:[#allocation5 + $0x638] sm:$0xff]
    %v437 = vld [vmem:[#allocation5 + $0x640] sm:$0xff]
    %v438 = vld [vmem:[#allocation5 + $0x648] sm:$0xff]
    %v439 = vld [vmem:[#allocation5 + $0x650] sm:$0xff]
    %v440 = vld [vmem:[#allocation5 + $0x658] sm:$0xff]
    %v441 = vld [vmem:[#allocation5 + $0x660] sm:$0xff]
    %v442 = vld [vmem:[#allocation5 + $0x668] sm:$0xff]
    %v443 = vld [vmem:[#allocation5 + $0x670] sm:$0xff]
    %v444 = vld [vmem:[#allocation5 + $0x678] sm:$0xff]
    %v445 = vld [vmem:[#allocation5 + $0x680] sm:$0xff]
    %v446 = vld [vmem:[#allocation5 + $0x688] sm:$0xff]
    %v447 = vld [vmem:[#allocation5 + $0x690] sm:$0xff]
    %v448 = vld [vmem:[#allocation5 + $0x698] sm:$0xff]
    %v449 = vld [vmem:[#allocation5 + $0x6a0] sm:$0xff]
    %v450 = vld [vmem:[#allocation5 + $0x6a8] sm:$0xff]
    %v451 = vld [vmem:[#allocation5 + $0x6b0] sm:$0xff]
    %v452 = vld [vmem:[#allocation5 + $0x6b8] sm:$0xff]
    %v453 = vld [vmem:[#allocation5 + $0x6c0] sm:$0xff]
    %v454 = vld [vmem:[#allocation5 + $0x6c8] sm:$0xff]
    %v455 = vld [vmem:[#allocation5 + $0x6d0] sm:$0xff]
    %v456 = vld [vmem:[#allocation5 + $0x6d8] sm:$0xff]
    %v457 = vld [vmem:[#allocation5 + $0x6e0] sm:$0xff]
    %v458 = vld [vmem:[#allocation5 + $0x6e8] sm:$0xff]
    %v459 = vld [vmem:[#allocation5 + $0x6f0] sm:$0xff]
    %v460 = vld [vmem:[#allocation5 + $0x6f8] sm:$0xff]
    %v461 = vld [vmem:[#allocation5 + $0x700] sm:$0xff]
    %v462 = vld [vmem:[#allocation5 + $0x708] sm:$0xff]
    %v463 = vld [vmem:[#allocation5 + $0x710] sm:$0xff]
    %v464 = vld [vmem:[#allocation5 + $0x718] sm:$0xff]
    %v465 = vld [vmem:[#allocation5 + $0x720] sm:$0xff]
    %v466 = vld [vmem:[#allocation5 + $0x728] sm:$0xff]
    %v467 = vld [vmem:[#allocation5 + $0x730] sm:$0xff]
    %v468 = vld [vmem:[#allocation5 + $0x738] sm:$0xff]
    %v469 = vld [vmem:[#allocation5 + $0x740] sm:$0xff]
    %v470 = vld [vmem:[#allocation5 + $0x748] sm:$0xff]
    %v471 = vld [vmem:[#allocation5 + $0x750] sm:$0xff]
    %v472 = vld [vmem:[#allocation5 + $0x758] sm:$0xff]
    %v473 = vld [vmem:[#allocation5 + $0x760] sm:$0xff]
    %v474 = vld [vmem:[#allocation5 + $0x768] sm:$0xff]
    %v475 = vld [vmem:[#allocation5 + $0x770] sm:$0xff]
    %v476 = vld [vmem:[#allocation5 + $0x778] sm:$0xff]
    %v477 = vld [vmem:[#allocation5 + $0x780] sm:$0xff]
    %v478 = vld [vmem:[#allocation5 + $0x788] sm:$0xff]
    %v479 = vld [vmem:[#allocation5 + $0x790] sm:$0xff]
    %v480 = vld [vmem:[#allocation5 + $0x798] sm:$0xff]
    %v481 = vld [vmem:[#allocation5 + $0x7a0] sm:$0xff]
    %v482 = vld [vmem:[#allocation5 + $0x7a8] sm:$0xff]
    %v483 = vld [vmem:[#allocation5 + $0x7b0] sm:$0xff]
    %v484 = vld [vmem:[#allocation5 + $0x7b8] sm:$0xff]
    %v485 = vld [vmem:[#allocation5 + $0x7c0] sm:$0xff]
    %v486 = vld [vmem:[#allocation5 + $0x7c8] sm:$0xff]
    %v487 = vld [vmem:[#allocation5 + $0x7d0] sm:$0xff]
    %v488 = vld [vmem:[#allocation5 + $0x7d8] sm:$0xff]
    %v489 = vld [vmem:[#allocation5 + $0x7e0] sm:$0xff]
    %v490 = vld [vmem:[#allocation5 + $0x7e8] sm:$0xff]
    %v491 = vld [vmem:[#allocation5 + $0x7f0] sm:$0xff]
    %v492 = vld [vmem:[#allocation5 + $0x7f8] sm:$0xff]
    %v493 = vld [vmem:[#allocation5 + $0x800] sm:$0xff]
    %v494 = vld [vmem:[#allocation5 + $0x808] sm:$0xff]
    %v495 = vld [vmem:[#allocation5 + $0x810] sm:$0xff]
    %v496 = vld [vmem:[#allocation5 + $0x818] sm:$0xff]
    %v497 = vld [vmem:[#allocation5 + $0x820] sm:$0xff]
    %v498 = vld [vmem:[#allocation5 + $0x828] sm:$0xff]
    %v499 = vld [vmem:[#allocation5 + $0x830] sm:$0xff]
    %v500 = vld [vmem:[#allocation5 + $0x838] sm:$0xff]
    %v501 = vld [vmem:[#allocation5 + $0x840] sm:$0xff]
    %v502 = vld [vmem:[#allocation5 + $0x848] sm:$0xff]
    %v503 = vld [vmem:[#allocation5 + $0x850] sm:$0xff]
    %v504 = vld [vmem:[#allocation5 + $0x858] sm:$0xff]
    %v505 = vld [vmem:[#allocation5 + $0x860] sm:$0xff]
    %v506 = vld [vmem:[#allocation5 + $0x868] sm:$0xff]
    %v507 = vld [vmem:[#allocation5 + $0x870] sm:$0xff]
    %v508 = vld [vmem:[#allocation5 + $0x878] sm:$0xff]
    %v509 = vld [vmem:[#allocation5 + $0x880] sm:$0xff]
    %v510 = vld [vmem:[#allocation5 + $0x888] sm:$0xff]
    %v511 = vld [vmem:[#allocation5 + $0x890] sm:$0xff]
    %v512 = vld [vmem:[#allocation5 + $0x898] sm:$0xff]
    %v513 = vld [vmem:[#allocation5 + $0x8a0] sm:$0xff]
    %v514 = vld [vmem:[#allocation5 + $0x8a8] sm:$0xff]
    %v515 = vld [vmem:[#allocation5 + $0x8b0] sm:$0xff]
    %v516 = vld [vmem:[#allocation5 + $0x8b8] sm:$0xff]
    %v517 = vld [vmem:[#allocation5 + $0x8c0] sm:$0xff]
    %v518 = vld [vmem:[#allocation5 + $0x8c8] sm:$0xff]
    %v519 = vld [vmem:[#allocation5 + $0x8d0] sm:$0xff]
    %v520 = vld [vmem:[#allocation5 + $0x8d8] sm:$0xff]
    %v521 = vld [vmem:[#allocation5 + $0x8e0] sm:$0xff]
    %v522 = vld [vmem:[#allocation5 + $0x8e8] sm:$0xff]
    %v523 = vld [vmem:[#allocation5 + $0x8f0] sm:$0xff]
    %v524 = vld [vmem:[#allocation5 + $0x8f8] sm:$0xff]
    %v525 = vld [vmem:[#allocation5 + $0x900] sm:$0xff]
    %v526 = vld [vmem:[#allocation5 + $0x908] sm:$0xff]
    %v527 = vld [vmem:[#allocation5 + $0x910] sm:$0xff]
    %v528 = vld [vmem:[#allocation5 + $0x918] sm:$0xff]
    %v529 = vld [vmem:[#allocation5 + $0x920] sm:$0xff]
    %v530 = vld [vmem:[#allocation5 + $0x928] sm:$0xff]
    %v531 = vld [vmem:[#allocation5 + $0x930] sm:$0xff]
    %v532 = vld [vmem:[#allocation5 + $0x938] sm:$0xff]
    %v533 = vld [vmem:[#allocation5 + $0x940] sm:$0xff]
    %v534 = vld [vmem:[#allocation5 + $0x948] sm:$0xff]
    %v535 = vld [vmem:[#allocation5 + $0x950] sm:$0xff]
    %v536 = vld [vmem:[#allocation5 + $0x958] sm:$0xff]
    %v537 = vld [vmem:[#allocation5 + $0x960] sm:$0xff]
    %v538 = vld [vmem:[#allocation5 + $0x968] sm:$0xff]
    %v539 = vld [vmem:[#allocation5 + $0x970] sm:$0xff]
    %v540 = vld [vmem:[#allocation5 + $0x978] sm:$0xff]
    %v541 = vld [vmem:[#allocation5 + $0x980] sm:$0xff]
    %v542 = vld [vmem:[#allocation5 + $0x988] sm:$0xff]
    %v543 = vld [vmem:[#allocation5 + $0x990] sm:$0xff]
    %v544 = vld [vmem:[#allocation5 + $0x998] sm:$0xff]
    %v545 = vld [vmem:[#allocation5 + $0x9a0] sm:$0xff]
    %v546 = vld [vmem:[#allocation5 + $0x9a8] sm:$0xff]
    %v547 = vld [vmem:[#allocation5 + $0x9b0] sm:$0xff]
    %v548 = vld [vmem:[#allocation5 + $0x9b8] sm:$0xff]
    %v549 = vld [vmem:[#allocation5 + $0x9c0] sm:$0xff]
    %v550 = vld [vmem:[#allocation5 + $0x9c8] sm:$0xff]
    %v551 = vld [vmem:[#allocation5 + $0x9d0] sm:$0xff]
    %v552 = vld [vmem:[#allocation5 + $0x9d8] sm:$0xff]
    %v553 = vld [vmem:[#allocation5 + $0x9e0] sm:$0xff]
    %v554 = vld [vmem:[#allocation5 + $0x9e8] sm:$0xff]
    %v555 = vld [vmem:[#allocation5 + $0x9f0] sm:$0xff]
    %v556 = vld [vmem:[#allocation5 + $0x9f8] sm:$0xff]
    %v557 = vld [vmem:[#allocation5 + $0xa00] sm:$0xff]
    %v558 = vld [vmem:[#allocation5 + $0xa08] sm:$0xff]
    %v559 = vld [vmem:[#allocation5 + $0xa10] sm:$0xff]
    %v560 = vld [vmem:[#allocation5 + $0xa18] sm:$0xff]
    %v561 = vld [vmem:[#allocation5 + $0xa20] sm:$0xff]
    %v562 = vld [vmem:[#allocation5 + $0xa28] sm:$0xff]
    %v563 = vld [vmem:[#allocation5 + $0xa30] sm:$0xff]
    %v564 = vld [vmem:[#allocation5 + $0xa38] sm:$0xff]
    %v565 = vld [vmem:[#allocation5 + $0xa40] sm:$0xff]
    %v566 = vld [vmem:[#allocation5 + $0xa48] sm:$0xff]
    %v567 = vld [vmem:[#allocation5 + $0xa50] sm:$0xff]
    %v568 = vld [vmem:[#allocation5 + $0xa58] sm:$0xff]
    %v569 = vld [vmem:[#allocation5 + $0xa60] sm:$0xff]
    %v570 = vld [vmem:[#allocation5 + $0xa68] sm:$0xff]
    %v571 = vld [vmem:[#allocation5 + $0xa70] sm:$0xff]
    %v572 = vld [vmem:[#allocation5 + $0xa78] sm:$0xff]
    %v573 = vld [vmem:[#allocation5 + $0xa80] sm:$0xff]
    %v574 = vld [vmem:[#allocation5 + $0xa88] sm:$0xff]
    %v575 = vld [vmem:[#allocation5 + $0xa90] sm:$0xff]
    %v576 = vld [vmem:[#allocation5 + $0xa98] sm:$0xff]
    %v577 = vld [vmem:[#allocation5 + $0xaa0] sm:$0xff]
    %v578 = vld [vmem:[#allocation5 + $0xaa8] sm:$0xff]
    %v579 = vld [vmem:[#allocation5 + $0xab0] sm:$0xff]
    %v580 = vld [vmem:[#allocation5 + $0xab8] sm:$0xff]
    %v581 = vld [vmem:[#allocation5 + $0xac0] sm:$0xff]
    %v582 = vld [vmem:[#allocation5 + $0xac8] sm:$0xff]
    %v583 = vld [vmem:[#allocation5 + $0xad0] sm:$0xff]
    %v584 = vld [vmem:[#allocation5 + $0xad8] sm:$0xff]
    %v585 = vld [vmem:[#allocation5 + $0xae0] sm:$0xff]
    %v586 = vld [vmem:[#allocation5 + $0xae8] sm:$0xff]
    %v587 = vld [vmem:[#allocation5 + $0xaf0] sm:$0xff]
    %v588 = vld [vmem:[#allocation5 + $0xaf8] sm:$0xff]
    %v589 = vld [vmem:[#allocation5 + $0xb00] sm:$0xff]
    %v590 = vld [vmem:[#allocation5 + $0xb08] sm:$0xff]
    %v591 = vld [vmem:[#allocation5 + $0xb10] sm:$0xff]
    %v592 = vld [vmem:[#allocation5 + $0xb18] sm:$0xff]
    %v593 = vld [vmem:[#allocation5 + $0xb20] sm:$0xff]
    %v594 = vld [vmem:[#allocation5 + $0xb28] sm:$0xff]
    %v595 = vld [vmem:[#allocation5 + $0xb30] sm:$0xff]
    %v596 = vld [vmem:[#allocation5 + $0xb38] sm:$0xff]
    %v597 = vld [vmem:[#allocation5 + $0xb40] sm:$0xff]
    %v598 = vld [vmem:[#allocation5 + $0xb48] sm:$0xff]
    %v599 = vld [vmem:[#allocation5 + $0xb50] sm:$0xff]
    %v600 = vld [vmem:[#allocation5 + $0xb58] sm:$0xff]
    %v601 = vld [vmem:[#allocation5 + $0xb60] sm:$0xff]
    %v602 = vld [vmem:[#allocation5 + $0xb68] sm:$0xff]
    %v603 = vld [vmem:[#allocation5 + $0xb70] sm:$0xff]
    %v604 = vld [vmem:[#allocation5 + $0xb78] sm:$0xff]
    %v605 = vld [vmem:[#allocation5 + $0xb80] sm:$0xff]
    %v606 = vld [vmem:[#allocation5 + $0xb88] sm:$0xff]
    %v607 = vld [vmem:[#allocation5 + $0xb90] sm:$0xff]
    %v608 = vld [vmem:[#allocation5 + $0xb98] sm:$0xff]
    %v609 = vld [vmem:[#allocation5 + $0xba0] sm:$0xff]
    %v610 = vld [vmem:[#allocation5 + $0xba8] sm:$0xff]
    %v611 = vld [vmem:[#allocation5 + $0xbb0] sm:$0xff]
    %v612 = vld [vmem:[#allocation5 + $0xbb8] sm:$0xff]
    %v613 = vld [vmem:[#allocation5 + $0xbc0] sm:$0xff]
    %v614 = vld [vmem:[#allocation5 + $0xbc8] sm:$0xff]
    %v615 = vld [vmem:[#allocation5 + $0xbd0] sm:$0xff]
    %v616 = vld [vmem:[#allocation5 + $0xbd8] sm:$0xff]
    %v617 = vld [vmem:[#allocation5 + $0xbe0] sm:$0xff]
    %v618 = vld [vmem:[#allocation5 + $0xbe8] sm:$0xff]
    %v619 = vld [vmem:[#allocation5 + $0xbf0] sm:$0xff]
    %v620 = vld [vmem:[#allocation5 + $0xbf8] sm:$0xff]
    %v621 = vld [vmem:[#allocation5 + $0xc00] sm:$0xff]
    %v622 = vld [vmem:[#allocation5 + $0xc08] sm:$0xff]
    %v623 = vld [vmem:[#allocation5 + $0xc10] sm:$0xff]
    %v624 = vld [vmem:[#allocation5 + $0xc18] sm:$0xff]
    %v625 = vld [vmem:[#allocation5 + $0xc20] sm:$0xff]
    %v626 = vld [vmem:[#allocation5 + $0xc28] sm:$0xff]
    %v627 = vld [vmem:[#allocation5 + $0xc30] sm:$0xff]
    %v628 = vld [vmem:[#allocation5 + $0xc38] sm:$0xff]
    %v629 = vld [vmem:[#allocation5 + $0xc40] sm:$0xff]
    %v630 = vld [vmem:[#allocation5 + $0xc48] sm:$0xff]
    %v631 = vld [vmem:[#allocation5 + $0xc50] sm:$0xff]
    %v632 = vld [vmem:[#allocation5 + $0xc58] sm:$0xff]
    %v633 = vld [vmem:[#allocation5 + $0xc60] sm:$0xff]
    %v634 = vld [vmem:[#allocation5 + $0xc68] sm:$0xff]
    %v635 = vld [vmem:[#allocation5 + $0xc70] sm:$0xff]
    %v636 = vld [vmem:[#allocation5 + $0xc78] sm:$0xff]
    %v637 = vld [vmem:[#allocation5 + $0xc80] sm:$0xff]
    %v638 = vld [vmem:[#allocation5 + $0xc88] sm:$0xff]
    %v639 = vld [vmem:[#allocation5 + $0xc90] sm:$0xff]
    %v640 = vld [vmem:[#allocation5 + $0xc98] sm:$0xff]
    %v641 = vld [vmem:[#allocation5 + $0xca0] sm:$0xff]
    %v642 = vld [vmem:[#allocation5 + $0xca8] sm:$0xff]
    %v643 = vld [vmem:[#allocation5 + $0xcb0] sm:$0xff]
    %v644 = vld [vmem:[#allocation5 + $0xcb8] sm:$0xff]
    %v645 = vld [vmem:[#allocation5 + $0xcc0] sm:$0xff]
    %v646 = vld [vmem:[#allocation5 + $0xcc8] sm:$0xff]
    %v647 = vld [vmem:[#allocation5 + $0xcd0] sm:$0xff]
    %v648 = vld [vmem:[#allocation5 + $0xcd8] sm:$0xff]
    %v649 = vld [vmem:[#allocation5 + $0xce0] sm:$0xff]
    %v650 = vld [vmem:[#allocation5 + $0xce8] sm:$0xff]
    %v651 = vld [vmem:[#allocation5 + $0xcf0] sm:$0xff]
    %v652 = vld [vmem:[#allocation5 + $0xcf8] sm:$0xff]
    %v653 = vld [vmem:[#allocation5 + $0xd00] sm:$0xff]
    %v654 = vld [vmem:[#allocation5 + $0xd08] sm:$0xff]
    %v655 = vld [vmem:[#allocation5 + $0xd10] sm:$0xff]
    %v656 = vld [vmem:[#allocation5 + $0xd18] sm:$0xff]
    %v657 = vld [vmem:[#allocation5 + $0xd20] sm:$0xff]
    %v658 = vld [vmem:[#allocation5 + $0xd28] sm:$0xff]
    %v659 = vld [vmem:[#allocation5 + $0xd30] sm:$0xff]
    %v660 = vld [vmem:[#allocation5 + $0xd38] sm:$0xff]
    %v661 = vld [vmem:[#allocation5 + $0xd40] sm:$0xff]
    %v662 = vld [vmem:[#allocation5 + $0xd48] sm:$0xff]
    %v663 = vld [vmem:[#allocation5 + $0xd50] sm:$0xff]
    %v664 = vld [vmem:[#allocation5 + $0xd58] sm:$0xff]
    %v665 = vld [vmem:[#allocation5 + $0xd60] sm:$0xff]
    %v666 = vld [vmem:[#allocation5 + $0xd68] sm:$0xff]
    %v667 = vld [vmem:[#allocation5 + $0xd70] sm:$0xff]
    %v668 = vld [vmem:[#allocation5 + $0xd78] sm:$0xff]
    %v669 = vld [vmem:[#allocation5 + $0xd80] sm:$0xff]
    %v670 = vld [vmem:[#allocation5 + $0xd88] sm:$0xff]
    %v671 = vld [vmem:[#allocation5 + $0xd90] sm:$0xff]
    %v672 = vld [vmem:[#allocation5 + $0xd98] sm:$0xff]
    %v673 = vld [vmem:[#allocation5 + $0xda0] sm:$0xff]
    %v674 = vld [vmem:[#allocation5 + $0xda8] sm:$0xff]
    %v675 = vld [vmem:[#allocation5 + $0xdb0] sm:$0xff]
    %v676 = vld [vmem:[#allocation5 + $0xdb8] sm:$0xff]
    %v677 = vld [vmem:[#allocation5 + $0xdc0] sm:$0xff]
    %v678 = vld [vmem:[#allocation5 + $0xdc8] sm:$0xff]
    %v679 = vld [vmem:[#allocation5 + $0xdd0] sm:$0xff]
    %v680 = vld [vmem:[#allocation5 + $0xdd8] sm:$0xff]
    %v681 = vld [vmem:[#allocation5 + $0xde0] sm:$0xff]
    %v682 = vld [vmem:[#allocation5 + $0xde8] sm:$0xff]
    %v683 = vld [vmem:[#allocation5 + $0xdf0] sm:$0xff]
    %v684 = vld [vmem:[#allocation5 + $0xdf8] sm:$0xff]
    %v685 = vld [vmem:[#allocation5 + $0xe00] sm:$0xff]
    %v686 = vld [vmem:[#allocation5 + $0xe08] sm:$0xff]
    %v687 = vld [vmem:[#allocation5 + $0xe10] sm:$0xff]
    %v688 = vld [vmem:[#allocation5 + $0xe18] sm:$0xff]
    %v689 = vld [vmem:[#allocation5 + $0xe20] sm:$0xff]
    %v690 = vld [vmem:[#allocation5 + $0xe28] sm:$0xff]
    %v691 = vld [vmem:[#allocation5 + $0xe30] sm:$0xff]
    %v692 = vld [vmem:[#allocation5 + $0xe38] sm:$0xff]
    %v693 = vld [vmem:[#allocation5 + $0xe40] sm:$0xff]
    %v694 = vld [vmem:[#allocation5 + $0xe48] sm:$0xff]
    %v695 = vld [vmem:[#allocation5 + $0xe50] sm:$0xff]
    %v696 = vld [vmem:[#allocation5 + $0xe58] sm:$0xff]
    %v697 = vld [vmem:[#allocation5 + $0xe60] sm:$0xff]
    %v698 = vld [vmem:[#allocation5 + $0xe68] sm:$0xff]
    %v699 = vld [vmem:[#allocation5 + $0xe70] sm:$0xff]
    %v700 = vld [vmem:[#allocation5 + $0xe78] sm:$0xff]
    %v701 = vld [vmem:[#allocation5 + $0xe80] sm:$0xff]
    %v702 = vld [vmem:[#allocation5 + $0xe88] sm:$0xff]
    %v703 = vld [vmem:[#allocation5 + $0xe90] sm:$0xff]
    %v704 = vld [vmem:[#allocation5 + $0xe98] sm:$0xff]
    %v705 = vld [vmem:[#allocation5 + $0xea0] sm:$0xff]
    %v706 = vld [vmem:[#allocation5 + $0xea8] sm:$0xff]
    %v707 = vld [vmem:[#allocation5 + $0xeb0] sm:$0xff]
    %v708 = vld [vmem:[#allocation5 + $0xeb8] sm:$0xff]
    %v709 = vld [vmem:[#allocation5 + $0xec0] sm:$0xff]
    %v710 = vld [vmem:[#allocation5 + $0xec8] sm:$0xff]
    %v711 = vld [vmem:[#allocation5 + $0xed0] sm:$0xff]
    %v712 = vld [vmem:[#allocation5 + $0xed8] sm:$0xff]
    %v713 = vld [vmem:[#allocation5 + $0xee0] sm:$0xff]
    %v714 = vld [vmem:[#allocation5 + $0xee8] sm:$0xff]
    %v715 = vld [vmem:[#allocation5 + $0xef0] sm:$0xff]
    %v716 = vld [vmem:[#allocation5 + $0xef8] sm:$0xff]
    %v717 = vld [vmem:[#allocation5 + $0xf00] sm:$0xff]
    %v718 = vld [vmem:[#allocation5 + $0xf08] sm:$0xff]
    %v719 = vld [vmem:[#allocation5 + $0xf10] sm:$0xff]
    %v720 = vld [vmem:[#allocation5 + $0xf18] sm:$0xff]
    %v721 = vld [vmem:[#allocation5 + $0xf20] sm:$0xff]
    %v722 = vld [vmem:[#allocation5 + $0xf28] sm:$0xff]
    %v723 = vld [vmem:[#allocation5 + $0xf30] sm:$0xff]
    %v724 = vld [vmem:[#allocation5 + $0xf38] sm:$0xff]
    %v725 = vld [vmem:[#allocation5 + $0xf40] sm:$0xff]
    %v726 = vld [vmem:[#allocation5 + $0xf48] sm:$0xff]
    %v727 = vld [vmem:[#allocation5 + $0xf50] sm:$0xff]
    %v728 = vld [vmem:[#allocation5 + $0xf58] sm:$0xff]
    %v729 = vld [vmem:[#allocation5 + $0xf60] sm:$0xff]
    %v730 = vld [vmem:[#allocation5 + $0xf68] sm:$0xff]
    %v731 = vld [vmem:[#allocation5 + $0xf70] sm:$0xff]
    %v732 = vld [vmem:[#allocation5 + $0xf78] sm:$0xff]
    %v733 = vld [vmem:[#allocation5 + $0xf80] sm:$0xff]
    %v734 = vld [vmem:[#allocation5 + $0xf88] sm:$0xff]
    %v735 = vld [vmem:[#allocation5 + $0xf90] sm:$0xff]
    %v736 = vld [vmem:[#allocation5 + $0xf98] sm:$0xff]
    %v737 = vld [vmem:[#allocation5 + $0xfa0] sm:$0xff]
    %v738 = vld [vmem:[#allocation5 + $0xfa8] sm:$0xff]
    %v739 = vld [vmem:[#allocation5 + $0xfb0] sm:$0xff]
    %v740 = vld [vmem:[#allocation5 + $0xfb8] sm:$0xff]
    %v741 = vld [vmem:[#allocation5 + $0xfc0] sm:$0xff]
    %v742 = vld [vmem:[#allocation5 + $0xfc8] sm:$0xff]
    %v743 = vld [vmem:[#allocation5 + $0xfd0] sm:$0xff]
    %v744 = vld [vmem:[#allocation5 + $0xfd8] sm:$0xff]
    %v745 = vld [vmem:[#allocation5 + $0xfe0] sm:$0xff]
    %v746 = vld [vmem:[#allocation5 + $0xfe8] sm:$0xff]
    %v747 = vld [vmem:[#allocation5 + $0xff0] sm:$0xff]
    %v748 = vld [vmem:[#allocation5 + $0xff8] sm:$0xff]
    %v749 = vld [vmem:[#allocation7] sm:$0xff]
    %v751 = vperm.slane %v749, 0
    %v752 = vperm.slane %v749, 1
    %v753 = vperm.slane %v749, 2
    %v754 = vperm.slane %v749, 3
    %v755 = vperm.slane %v749, 4
    %v756 = vperm.slane %v749, 5
    %v757 = vperm.slane %v749, 6
    %v758 = vperm.slane %v749, 7
    %v771 = vunpack.c.l.b16 %v233
    %v772 = vunpack.c.h.b16 %v233
    %v773 = vunpack.c.l.b16 %v234
    %v774 = vunpack.c.h.b16 %v234
    %v775 = vunpack.c.l.b16 %v235
    %v776 = vunpack.c.h.b16 %v235
    %v777 = vunpack.c.l.b16 %v236
    %v778 = vunpack.c.h.b16 %v236
    %v779 = vpack.c.b16 %v771, %v771
    %v780 = vpack.c.b16 %v772, %v772
    %v781 = vpack.c.b16 %v773, %v773
    %v782 = vpack.c.b16 %v774, %v774
    %v783 = vpack.c.b16 %v775, %v775
    %v784 = vpack.c.b16 %v776, %v776
    %v785 = vpack.c.b16 %v777, %v777
    %v786 = vpack.c.b16 %v778, %v778
    %v1307 = vunpack.c.l.b16 %v237
    %v1308 = vunpack.c.h.b16 %v237
    %v1309 = vunpack.c.l.b16 %v238
    %v1310 = vunpack.c.h.b16 %v238
    %v1311 = vunpack.c.l.b16 %v239
    %v1312 = vunpack.c.h.b16 %v239
    %v1313 = vunpack.c.l.b16 %v240
    %v1314 = vunpack.c.h.b16 %v240
    %v1315 = vunpack.c.l.b16 %v241
    %v1316 = vunpack.c.h.b16 %v241
    %v1317 = vunpack.c.l.b16 %v242
    %v1318 = vunpack.c.h.b16 %v242
    %v1319 = vunpack.c.l.b16 %v243
    %v1320 = vunpack.c.h.b16 %v243
    %v1321 = vunpack.c.l.b16 %v244
    %v1322 = vunpack.c.h.b16 %v244
    %v1323 = vunpack.c.l.b16 %v245
    %v1324 = vunpack.c.h.b16 %v245
    %v1325 = vunpack.c.l.b16 %v246
    %v1326 = vunpack.c.h.b16 %v246
    %v1327 = vunpack.c.l.b16 %v247
    %v1328 = vunpack.c.h.b16 %v247
    %v1329 = vunpack.c.l.b16 %v248
    %v1330 = vunpack.c.h.b16 %v248
    %v1331 = vunpack.c.l.b16 %v249
    %v1332 = vunpack.c.h.b16 %v249
    %v1333 = vunpack.c.l.b16 %v250
    %v1334 = vunpack.c.h.b16 %v250
    %v1335 = vunpack.c.l.b16 %v251
    %v1336 = vunpack.c.h.b16 %v251
    %v1337 = vunpack.c.l.b16 %v252
    %v1338 = vunpack.c.h.b16 %v252
    %v1339 = vunpack.c.l.b16 %v253
    %v1340 = vunpack.c.h.b16 %v253
    %v1341 = vunpack.c.l.b16 %v254
    %v1342 = vunpack.c.h.b16 %v254
    %v1343 = vunpack.c.l.b16 %v255
    %v1344 = vunpack.c.h.b16 %v255
    %v1345 = vunpack.c.l.b16 %v256
    %v1346 = vunpack.c.h.b16 %v256
    %v1347 = vunpack.c.l.b16 %v257
    %v1348 = vunpack.c.h.b16 %v257
    %v1349 = vunpack.c.l.b16 %v258
    %v1350 = vunpack.c.h.b16 %v258
    %v1351 = vunpack.c.l.b16 %v259
    %v1352 = vunpack.c.h.b16 %v259
    %v1353 = vunpack.c.l.b16 %v260
    %v1354 = vunpack.c.h.b16 %v260
    %v1355 = vunpack.c.l.b16 %v261
    %v1356 = vunpack.c.h.b16 %v261
    %v1357 = vunpack.c.l.b16 %v262
    %v1358 = vunpack.c.h.b16 %v262
    %v1359 = vunpack.c.l.b16 %v263
    %v1360 = vunpack.c.h.b16 %v263
    %v1361 = vunpack.c.l.b16 %v264
    %v1362 = vunpack.c.h.b16 %v264
    %v1363 = vunpack.c.l.b16 %v265
    %v1364 = vunpack.c.h.b16 %v265
    %v1365 = vunpack.c.l.b16 %v266
    %v1366 = vunpack.c.h.b16 %v266
    %v1367 = vunpack.c.l.b16 %v267
    %v1368 = vunpack.c.h.b16 %v267
    %v1369 = vunpack.c.l.b16 %v268
    %v1370 = vunpack.c.h.b16 %v268
    %v1371 = vunpack.c.l.b16 %v269
    %v1372 = vunpack.c.h.b16 %v269
    %v1373 = vunpack.c.l.b16 %v270
    %v1374 = vunpack.c.h.b16 %v270
    %v1375 = vunpack.c.l.b16 %v271
    %v1376 = vunpack.c.h.b16 %v271
    %v1377 = vunpack.c.l.b16 %v272
    %v1378 = vunpack.c.h.b16 %v272
    %v1379 = vunpack.c.l.b16 %v273
    %v1380 = vunpack.c.h.b16 %v273
    %v1381 = vunpack.c.l.b16 %v274
    %v1382 = vunpack.c.h.b16 %v274
    %v1383 = vunpack.c.l.b16 %v275
    %v1384 = vunpack.c.h.b16 %v275
    %v1385 = vunpack.c.l.b16 %v276
    %v1386 = vunpack.c.h.b16 %v276
    %v1387 = vunpack.c.l.b16 %v277
    %v1388 = vunpack.c.h.b16 %v277
    %v1389 = vunpack.c.l.b16 %v278
    %v1390 = vunpack.c.h.b16 %v278
    %v1391 = vunpack.c.l.b16 %v279
    %v1392 = vunpack.c.h.b16 %v279
    %v1393 = vunpack.c.l.b16 %v280
    %v1394 = vunpack.c.h.b16 %v280
    %v1395 = vunpack.c.l.b16 %v281
    %v1396 = vunpack.c.h.b16 %v281
    %v1397 = vunpack.c.l.b16 %v282
    %v1398 = vunpack.c.h.b16 %v282
    %v1399 = vunpack.c.l.b16 %v283
    %v1400 = vunpack.c.h.b16 %v283
    %v1401 = vunpack.c.l.b16 %v284
    %v1402 = vunpack.c.h.b16 %v284
    %v1403 = vunpack.c.l.b16 %v285
    %v1404 = vunpack.c.h.b16 %v285
    %v1405 = vunpack.c.l.b16 %v286
    %v1406 = vunpack.c.h.b16 %v286
    %v1407 = vunpack.c.l.b16 %v287
    %v1408 = vunpack.c.h.b16 %v287
    %v1409 = vunpack.c.l.b16 %v288
    %v1410 = vunpack.c.h.b16 %v288
    %v1411 = vunpack.c.l.b16 %v289
    %v1412 = vunpack.c.h.b16 %v289
    %v1413 = vunpack.c.l.b16 %v290
    %v1414 = vunpack.c.h.b16 %v290
    %v1415 = vunpack.c.l.b16 %v291
    %v1416 = vunpack.c.h.b16 %v291
    %v1417 = vunpack.c.l.b16 %v292
    %v1418 = vunpack.c.h.b16 %v292
    %v1419 = vunpack.c.l.b16 %v293
    %v1420 = vunpack.c.h.b16 %v293
    %v1421 = vunpack.c.l.b16 %v294
    %v1422 = vunpack.c.h.b16 %v294
    %v1423 = vunpack.c.l.b16 %v295
    %v1424 = vunpack.c.h.b16 %v295
    %v1425 = vunpack.c.l.b16 %v296
    %v1426 = vunpack.c.h.b16 %v296
    %v1427 = vunpack.c.l.b16 %v297
    %v1428 = vunpack.c.h.b16 %v297
    %v1429 = vunpack.c.l.b16 %v298
    %v1430 = vunpack.c.h.b16 %v298
    %v1431 = vunpack.c.l.b16 %v299
    %v1432 = vunpack.c.h.b16 %v299
    %v1433 = vunpack.c.l.b16 %v300
    %v1434 = vunpack.c.h.b16 %v300
    %v1435 = vunpack.c.l.b16 %v301
    %v1436 = vunpack.c.h.b16 %v301
    %v1437 = vunpack.c.l.b16 %v302
    %v1438 = vunpack.c.h.b16 %v302
    %v1439 = vunpack.c.l.b16 %v303
    %v1440 = vunpack.c.h.b16 %v303
    %v1441 = vunpack.c.l.b16 %v304
    %v1442 = vunpack.c.h.b16 %v304
    %v1443 = vunpack.c.l.b16 %v305
    %v1444 = vunpack.c.h.b16 %v305
    %v1445 = vunpack.c.l.b16 %v306
    %v1446 = vunpack.c.h.b16 %v306
    %v1447 = vunpack.c.l.b16 %v307
    %v1448 = vunpack.c.h.b16 %v307
    %v1449 = vunpack.c.l.b16 %v308
    %v1450 = vunpack.c.h.b16 %v308
    %v1451 = vunpack.c.l.b16 %v309
    %v1452 = vunpack.c.h.b16 %v309
    %v1453 = vunpack.c.l.b16 %v310
    %v1454 = vunpack.c.h.b16 %v310
    %v1455 = vunpack.c.l.b16 %v311
    %v1456 = vunpack.c.h.b16 %v311
    %v1457 = vunpack.c.l.b16 %v312
    %v1458 = vunpack.c.h.b16 %v312
    %v1459 = vunpack.c.l.b16 %v313
    %v1460 = vunpack.c.h.b16 %v313
    %v1461 = vunpack.c.l.b16 %v314
    %v1462 = vunpack.c.h.b16 %v314
    %v1463 = vunpack.c.l.b16 %v315
    %v1464 = vunpack.c.h.b16 %v315
    %v1465 = vunpack.c.l.b16 %v316
    %v1466 = vunpack.c.h.b16 %v316
    %v1467 = vunpack.c.l.b16 %v317
    %v1468 = vunpack.c.h.b16 %v317
    %v1469 = vunpack.c.l.b16 %v318
    %v1470 = vunpack.c.h.b16 %v318
    %v1471 = vunpack.c.l.b16 %v319
    %v1472 = vunpack.c.h.b16 %v319
    %v1473 = vunpack.c.l.b16 %v320
    %v1474 = vunpack.c.h.b16 %v320
    %v1475 = vunpack.c.l.b16 %v321
    %v1476 = vunpack.c.h.b16 %v321
    %v1477 = vunpack.c.l.b16 %v322
    %v1478 = vunpack.c.h.b16 %v322
    %v1479 = vunpack.c.l.b16 %v323
    %v1480 = vunpack.c.h.b16 %v323
    %v1481 = vunpack.c.l.b16 %v324
    %v1482 = vunpack.c.h.b16 %v324
    %v1483 = vunpack.c.l.b16 %v325
    %v1484 = vunpack.c.h.b16 %v325
    %v1485 = vunpack.c.l.b16 %v326
    %v1486 = vunpack.c.h.b16 %v326
    %v1487 = vunpack.c.l.b16 %v327
    %v1488 = vunpack.c.h.b16 %v327
    %v1489 = vunpack.c.l.b16 %v328
    %v1490 = vunpack.c.h.b16 %v328
    %v1491 = vunpack.c.l.b16 %v329
    %v1492 = vunpack.c.h.b16 %v329
    %v1493 = vunpack.c.l.b16 %v330
    %v1494 = vunpack.c.h.b16 %v330
    %v1495 = vunpack.c.l.b16 %v331
    %v1496 = vunpack.c.h.b16 %v331
    %v1497 = vunpack.c.l.b16 %v332
    %v1498 = vunpack.c.h.b16 %v332
    %v1499 = vunpack.c.l.b16 %v333
    %v1500 = vunpack.c.h.b16 %v333
    %v1501 = vunpack.c.l.b16 %v334
    %v1502 = vunpack.c.h.b16 %v334
    %v1503 = vunpack.c.l.b16 %v335
    %v1504 = vunpack.c.h.b16 %v335
    %v1505 = vunpack.c.l.b16 %v336
    %v1506 = vunpack.c.h.b16 %v336
    %v1507 = vunpack.c.l.b16 %v337
    %v1508 = vunpack.c.h.b16 %v337
    %v1509 = vunpack.c.l.b16 %v338
    %v1510 = vunpack.c.h.b16 %v338
    %v1511 = vunpack.c.l.b16 %v339
    %v1512 = vunpack.c.h.b16 %v339
    %v1513 = vunpack.c.l.b16 %v340
    %v1514 = vunpack.c.h.b16 %v340
    %v1515 = vunpack.c.l.b16 %v341
    %v1516 = vunpack.c.h.b16 %v341
    %v1517 = vunpack.c.l.b16 %v342
    %v1518 = vunpack.c.h.b16 %v342
    %v1519 = vunpack.c.l.b16 %v343
    %v1520 = vunpack.c.h.b16 %v343
    %v1521 = vunpack.c.l.b16 %v344
    %v1522 = vunpack.c.h.b16 %v344
    %v1523 = vunpack.c.l.b16 %v345
    %v1524 = vunpack.c.h.b16 %v345
    %v1525 = vunpack.c.l.b16 %v346
    %v1526 = vunpack.c.h.b16 %v346
    %v1527 = vunpack.c.l.b16 %v347
    %v1528 = vunpack.c.h.b16 %v347
    %v1529 = vunpack.c.l.b16 %v348
    %v1530 = vunpack.c.h.b16 %v348
    %v1531 = vunpack.c.l.b16 %v349
    %v1532 = vunpack.c.h.b16 %v349
    %v1533 = vunpack.c.l.b16 %v350
    %v1534 = vunpack.c.h.b16 %v350
    %v1535 = vunpack.c.l.b16 %v351
    %v1536 = vunpack.c.h.b16 %v351
    %v1537 = vunpack.c.l.b16 %v352
    %v1538 = vunpack.c.h.b16 %v352
    %v1539 = vunpack.c.l.b16 %v353
    %v1540 = vunpack.c.h.b16 %v353
    %v1541 = vunpack.c.l.b16 %v354
    %v1542 = vunpack.c.h.b16 %v354
    %v1543 = vunpack.c.l.b16 %v355
    %v1544 = vunpack.c.h.b16 %v355
    %v1545 = vunpack.c.l.b16 %v356
    %v1546 = vunpack.c.h.b16 %v356
    %v1547 = vunpack.c.l.b16 %v357
    %v1548 = vunpack.c.h.b16 %v357
    %v1549 = vunpack.c.l.b16 %v358
    %v1550 = vunpack.c.h.b16 %v358
    %v1551 = vunpack.c.l.b16 %v359
    %v1552 = vunpack.c.h.b16 %v359
    %v1553 = vunpack.c.l.b16 %v360
    %v1554 = vunpack.c.h.b16 %v360
    %v1555 = vunpack.c.l.b16 %v361
    %v1556 = vunpack.c.h.b16 %v361
    %v1557 = vunpack.c.l.b16 %v362
    %v1558 = vunpack.c.h.b16 %v362
    %v1559 = vunpack.c.l.b16 %v363
    %v1560 = vunpack.c.h.b16 %v363
    %v1561 = vunpack.c.l.b16 %v364
    %v1562 = vunpack.c.h.b16 %v364
    %v1563 = vunpack.c.l.b16 %v365
    %v1564 = vunpack.c.h.b16 %v365
    %v1565 = vunpack.c.l.b16 %v366
    %v1566 = vunpack.c.h.b16 %v366
    %v1567 = vunpack.c.l.b16 %v367
    %v1568 = vunpack.c.h.b16 %v367
    %v1569 = vunpack.c.l.b16 %v368
    %v1570 = vunpack.c.h.b16 %v368
    %v1571 = vunpack.c.l.b16 %v369
    %v1572 = vunpack.c.h.b16 %v369
    %v1573 = vunpack.c.l.b16 %v370
    %v1574 = vunpack.c.h.b16 %v370
    %v1575 = vunpack.c.l.b16 %v371
    %v1576 = vunpack.c.h.b16 %v371
    %v1577 = vunpack.c.l.b16 %v372
    %v1578 = vunpack.c.h.b16 %v372
    %v1579 = vunpack.c.l.b16 %v373
    %v1580 = vunpack.c.h.b16 %v373
    %v1581 = vunpack.c.l.b16 %v374
    %v1582 = vunpack.c.h.b16 %v374
    %v1583 = vunpack.c.l.b16 %v375
    %v1584 = vunpack.c.h.b16 %v375
    %v1585 = vunpack.c.l.b16 %v376
    %v1586 = vunpack.c.h.b16 %v376
    %v1587 = vunpack.c.l.b16 %v377
    %v1588 = vunpack.c.h.b16 %v377
    %v1589 = vunpack.c.l.b16 %v378
    %v1590 = vunpack.c.h.b16 %v378
    %v1591 = vunpack.c.l.b16 %v379
    %v1592 = vunpack.c.h.b16 %v379
    %v1593 = vunpack.c.l.b16 %v380
    %v1594 = vunpack.c.h.b16 %v380
    %v1595 = vunpack.c.l.b16 %v381
    %v1596 = vunpack.c.h.b16 %v381
    %v1597 = vunpack.c.l.b16 %v382
    %v1598 = vunpack.c.h.b16 %v382
    %v1599 = vunpack.c.l.b16 %v383
    %v1600 = vunpack.c.h.b16 %v383
    %v1601 = vunpack.c.l.b16 %v384
    %v1602 = vunpack.c.h.b16 %v384
    %v1603 = vunpack.c.l.b16 %v385
    %v1604 = vunpack.c.h.b16 %v385
    %v1605 = vunpack.c.l.b16 %v386
    %v1606 = vunpack.c.h.b16 %v386
    %v1607 = vunpack.c.l.b16 %v387
    %v1608 = vunpack.c.h.b16 %v387
    %v1609 = vunpack.c.l.b16 %v388
    %v1610 = vunpack.c.h.b16 %v388
    %v1611 = vunpack.c.l.b16 %v389
    %v1612 = vunpack.c.h.b16 %v389
    %v1613 = vunpack.c.l.b16 %v390
    %v1614 = vunpack.c.h.b16 %v390
    %v1615 = vunpack.c.l.b16 %v391
    %v1616 = vunpack.c.h.b16 %v391
    %v1617 = vunpack.c.l.b16 %v392
    %v1618 = vunpack.c.h.b16 %v392
    %v1619 = vunpack.c.l.b16 %v393
    %v1620 = vunpack.c.h.b16 %v393
    %v1621 = vunpack.c.l.b16 %v394
    %v1622 = vunpack.c.h.b16 %v394
    %v1623 = vunpack.c.l.b16 %v395
    %v1624 = vunpack.c.h.b16 %v395
    %v1625 = vunpack.c.l.b16 %v396
    %v1626 = vunpack.c.h.b16 %v396
    %v1627 = vunpack.c.l.b16 %v397
    %v1628 = vunpack.c.h.b16 %v397
    %v1629 = vunpack.c.l.b16 %v398
    %v1630 = vunpack.c.h.b16 %v398
    %v1631 = vunpack.c.l.b16 %v399
    %v1632 = vunpack.c.h.b16 %v399
    %v1633 = vunpack.c.l.b16 %v400
    %v1634 = vunpack.c.h.b16 %v400
    %v1635 = vunpack.c.l.b16 %v401
    %v1636 = vunpack.c.h.b16 %v401
    %v1637 = vunpack.c.l.b16 %v402
    %v1638 = vunpack.c.h.b16 %v402
    %v1639 = vunpack.c.l.b16 %v403
    %v1640 = vunpack.c.h.b16 %v403
    %v1641 = vunpack.c.l.b16 %v404
    %v1642 = vunpack.c.h.b16 %v404
    %v1643 = vunpack.c.l.b16 %v405
    %v1644 = vunpack.c.h.b16 %v405
    %v1645 = vunpack.c.l.b16 %v406
    %v1646 = vunpack.c.h.b16 %v406
    %v1647 = vunpack.c.l.b16 %v407
    %v1648 = vunpack.c.h.b16 %v407
    %v1649 = vunpack.c.l.b16 %v408
    %v1650 = vunpack.c.h.b16 %v408
    %v1651 = vunpack.c.l.b16 %v409
    %v1652 = vunpack.c.h.b16 %v409
    %v1653 = vunpack.c.l.b16 %v410
    %v1654 = vunpack.c.h.b16 %v410
    %v1655 = vunpack.c.l.b16 %v411
    %v1656 = vunpack.c.h.b16 %v411
    %v1657 = vunpack.c.l.b16 %v412
    %v1658 = vunpack.c.h.b16 %v412
    %v1659 = vunpack.c.l.b16 %v413
    %v1660 = vunpack.c.h.b16 %v413
    %v1661 = vunpack.c.l.b16 %v414
    %v1662 = vunpack.c.h.b16 %v414
    %v1663 = vunpack.c.l.b16 %v415
    %v1664 = vunpack.c.h.b16 %v415
    %v1665 = vunpack.c.l.b16 %v416
    %v1666 = vunpack.c.h.b16 %v416
    %v1667 = vunpack.c.l.b16 %v417
    %v1668 = vunpack.c.h.b16 %v417
    %v1669 = vunpack.c.l.b16 %v418
    %v1670 = vunpack.c.h.b16 %v418
    %v1671 = vunpack.c.l.b16 %v419
    %v1672 = vunpack.c.h.b16 %v419
    %v1673 = vunpack.c.l.b16 %v420
    %v1674 = vunpack.c.h.b16 %v420
    %v1675 = vunpack.c.l.b16 %v421
    %v1676 = vunpack.c.h.b16 %v421
    %v1677 = vunpack.c.l.b16 %v422
    %v1678 = vunpack.c.h.b16 %v422
    %v1679 = vunpack.c.l.b16 %v423
    %v1680 = vunpack.c.h.b16 %v423
    %v1681 = vunpack.c.l.b16 %v424
    %v1682 = vunpack.c.h.b16 %v424
    %v1683 = vunpack.c.l.b16 %v425
    %v1684 = vunpack.c.h.b16 %v425
    %v1685 = vunpack.c.l.b16 %v426
    %v1686 = vunpack.c.h.b16 %v426
    %v1687 = vunpack.c.l.b16 %v427
    %v1688 = vunpack.c.h.b16 %v427
    %v1689 = vunpack.c.l.b16 %v428
    %v1690 = vunpack.c.h.b16 %v428
    %v1691 = vunpack.c.l.b16 %v429
    %v1692 = vunpack.c.h.b16 %v429
    %v1693 = vunpack.c.l.b16 %v430
    %v1694 = vunpack.c.h.b16 %v430
    %v1695 = vunpack.c.l.b16 %v431
    %v1696 = vunpack.c.h.b16 %v431
    %v1697 = vunpack.c.l.b16 %v432
    %v1698 = vunpack.c.h.b16 %v432
    %v1699 = vunpack.c.l.b16 %v433
    %v1700 = vunpack.c.h.b16 %v433
    %v1701 = vunpack.c.l.b16 %v434
    %v1702 = vunpack.c.h.b16 %v434
    %v1703 = vunpack.c.l.b16 %v435
    %v1704 = vunpack.c.h.b16 %v435
    %v1705 = vunpack.c.l.b16 %v436
    %v1706 = vunpack.c.h.b16 %v436
    %v1707 = vunpack.c.l.b16 %v437
    %v1708 = vunpack.c.h.b16 %v437
    %v1709 = vunpack.c.l.b16 %v438
    %v1710 = vunpack.c.h.b16 %v438
    %v1711 = vunpack.c.l.b16 %v439
    %v1712 = vunpack.c.h.b16 %v439
    %v1713 = vunpack.c.l.b16 %v440
    %v1714 = vunpack.c.h.b16 %v440
    %v1715 = vunpack.c.l.b16 %v441
    %v1716 = vunpack.c.h.b16 %v441
    %v1717 = vunpack.c.l.b16 %v442
    %v1718 = vunpack.c.h.b16 %v442
    %v1719 = vunpack.c.l.b16 %v443
    %v1720 = vunpack.c.h.b16 %v443
    %v1721 = vunpack.c.l.b16 %v444
    %v1722 = vunpack.c.h.b16 %v444
    %v1723 = vunpack.c.l.b16 %v445
    %v1724 = vunpack.c.h.b16 %v445
    %v1725 = vunpack.c.l.b16 %v446
    %v1726 = vunpack.c.h.b16 %v446
    %v1727 = vunpack.c.l.b16 %v447
    %v1728 = vunpack.c.h.b16 %v447
    %v1729 = vunpack.c.l.b16 %v448
    %v1730 = vunpack.c.h.b16 %v448
    %v1731 = vunpack.c.l.b16 %v449
    %v1732 = vunpack.c.h.b16 %v449
    %v1733 = vunpack.c.l.b16 %v450
    %v1734 = vunpack.c.h.b16 %v450
    %v1735 = vunpack.c.l.b16 %v451
    %v1736 = vunpack.c.h.b16 %v451
    %v1737 = vunpack.c.l.b16 %v452
    %v1738 = vunpack.c.h.b16 %v452
    %v1739 = vunpack.c.l.b16 %v453
    %v1740 = vunpack.c.h.b16 %v453
    %v1741 = vunpack.c.l.b16 %v454
    %v1742 = vunpack.c.h.b16 %v454
    %v1743 = vunpack.c.l.b16 %v455
    %v1744 = vunpack.c.h.b16 %v455
    %v1745 = vunpack.c.l.b16 %v456
    %v1746 = vunpack.c.h.b16 %v456
    %v1747 = vunpack.c.l.b16 %v457
    %v1748 = vunpack.c.h.b16 %v457
    %v1749 = vunpack.c.l.b16 %v458
    %v1750 = vunpack.c.h.b16 %v458
    %v1751 = vunpack.c.l.b16 %v459
    %v1752 = vunpack.c.h.b16 %v459
    %v1753 = vunpack.c.l.b16 %v460
    %v1754 = vunpack.c.h.b16 %v460
    %v1755 = vunpack.c.l.b16 %v461
    %v1756 = vunpack.c.h.b16 %v461
    %v1757 = vunpack.c.l.b16 %v462
    %v1758 = vunpack.c.h.b16 %v462
    %v1759 = vunpack.c.l.b16 %v463
    %v1760 = vunpack.c.h.b16 %v463
    %v1761 = vunpack.c.l.b16 %v464
    %v1762 = vunpack.c.h.b16 %v464
    %v1763 = vunpack.c.l.b16 %v465
    %v1764 = vunpack.c.h.b16 %v465
    %v1765 = vunpack.c.l.b16 %v466
    %v1766 = vunpack.c.h.b16 %v466
    %v1767 = vunpack.c.l.b16 %v467
    %v1768 = vunpack.c.h.b16 %v467
    %v1769 = vunpack.c.l.b16 %v468
    %v1770 = vunpack.c.h.b16 %v468
    %v1771 = vunpack.c.l.b16 %v469
    %v1772 = vunpack.c.h.b16 %v469
    %v1773 = vunpack.c.l.b16 %v470
    %v1774 = vunpack.c.h.b16 %v470
    %v1775 = vunpack.c.l.b16 %v471
    %v1776 = vunpack.c.h.b16 %v471
    %v1777 = vunpack.c.l.b16 %v472
    %v1778 = vunpack.c.h.b16 %v472
    %v1779 = vunpack.c.l.b16 %v473
    %v1780 = vunpack.c.h.b16 %v473
    %v1781 = vunpack.c.l.b16 %v474
    %v1782 = vunpack.c.h.b16 %v474
    %v1783 = vunpack.c.l.b16 %v475
    %v1784 = vunpack.c.h.b16 %v475
    %v1785 = vunpack.c.l.b16 %v476
    %v1786 = vunpack.c.h.b16 %v476
    %v1787 = vunpack.c.l.b16 %v477
    %v1788 = vunpack.c.h.b16 %v477
    %v1789 = vunpack.c.l.b16 %v478
    %v1790 = vunpack.c.h.b16 %v478
    %v1791 = vunpack.c.l.b16 %v479
    %v1792 = vunpack.c.h.b16 %v479
    %v1793 = vunpack.c.l.b16 %v480
    %v1794 = vunpack.c.h.b16 %v480
    %v1795 = vunpack.c.l.b16 %v481
    %v1796 = vunpack.c.h.b16 %v481
    %v1797 = vunpack.c.l.b16 %v482
    %v1798 = vunpack.c.h.b16 %v482
    %v1799 = vunpack.c.l.b16 %v483
    %v1800 = vunpack.c.h.b16 %v483
    %v1801 = vunpack.c.l.b16 %v484
    %v1802 = vunpack.c.h.b16 %v484
    %v1803 = vunpack.c.l.b16 %v485
    %v1804 = vunpack.c.h.b16 %v485
    %v1805 = vunpack.c.l.b16 %v486
    %v1806 = vunpack.c.h.b16 %v486
    %v1807 = vunpack.c.l.b16 %v487
    %v1808 = vunpack.c.h.b16 %v487
    %v1809 = vunpack.c.l.b16 %v488
    %v1810 = vunpack.c.h.b16 %v488
    %v1811 = vunpack.c.l.b16 %v489
    %v1812 = vunpack.c.h.b16 %v489
    %v1813 = vunpack.c.l.b16 %v490
    %v1814 = vunpack.c.h.b16 %v490
    %v1815 = vunpack.c.l.b16 %v491
    %v1816 = vunpack.c.h.b16 %v491
    %v1817 = vunpack.c.l.b16 %v492
    %v1818 = vunpack.c.h.b16 %v492
    %v1819 = vunpack.c.l.b16 %v493
    %v1820 = vunpack.c.h.b16 %v493
    %v1821 = vunpack.c.l.b16 %v494
    %v1822 = vunpack.c.h.b16 %v494
    %v1823 = vunpack.c.l.b16 %v495
    %v1824 = vunpack.c.h.b16 %v495
    %v1825 = vunpack.c.l.b16 %v496
    %v1826 = vunpack.c.h.b16 %v496
    %v1827 = vunpack.c.l.b16 %v497
    %v1828 = vunpack.c.h.b16 %v497
    %v1829 = vunpack.c.l.b16 %v498
    %v1830 = vunpack.c.h.b16 %v498
    %v1831 = vunpack.c.l.b16 %v499
    %v1832 = vunpack.c.h.b16 %v499
    %v1833 = vunpack.c.l.b16 %v500
    %v1834 = vunpack.c.h.b16 %v500
    %v1835 = vunpack.c.l.b16 %v501
    %v1836 = vunpack.c.h.b16 %v501
    %v1837 = vunpack.c.l.b16 %v502
    %v1838 = vunpack.c.h.b16 %v502
    %v1839 = vunpack.c.l.b16 %v503
    %v1840 = vunpack.c.h.b16 %v503
    %v1841 = vunpack.c.l.b16 %v504
    %v1842 = vunpack.c.h.b16 %v504
    %v1843 = vunpack.c.l.b16 %v505
    %v1844 = vunpack.c.h.b16 %v505
    %v1845 = vunpack.c.l.b16 %v506
    %v1846 = vunpack.c.h.b16 %v506
    %v1847 = vunpack.c.l.b16 %v507
    %v1848 = vunpack.c.h.b16 %v507
    %v1849 = vunpack.c.l.b16 %v508
    %v1850 = vunpack.c.h.b16 %v508
    %v1851 = vunpack.c.l.b16 %v509
    %v1852 = vunpack.c.h.b16 %v509
    %v1853 = vunpack.c.l.b16 %v510
    %v1854 = vunpack.c.h.b16 %v510
    %v1855 = vunpack.c.l.b16 %v511
    %v1856 = vunpack.c.h.b16 %v511
    %v1857 = vunpack.c.l.b16 %v512
    %v1858 = vunpack.c.h.b16 %v512
    %v1859 = vunpack.c.l.b16 %v513
    %v1860 = vunpack.c.h.b16 %v513
    %v1861 = vunpack.c.l.b16 %v514
    %v1862 = vunpack.c.h.b16 %v514
    %v1863 = vunpack.c.l.b16 %v515
    %v1864 = vunpack.c.h.b16 %v515
    %v1865 = vunpack.c.l.b16 %v516
    %v1866 = vunpack.c.h.b16 %v516
    %v1867 = vunpack.c.l.b16 %v517
    %v1868 = vunpack.c.h.b16 %v517
    %v1869 = vunpack.c.l.b16 %v518
    %v1870 = vunpack.c.h.b16 %v518
    %v1871 = vunpack.c.l.b16 %v519
    %v1872 = vunpack.c.h.b16 %v519
    %v1873 = vunpack.c.l.b16 %v520
    %v1874 = vunpack.c.h.b16 %v520
    %v1875 = vunpack.c.l.b16 %v521
    %v1876 = vunpack.c.h.b16 %v521
    %v1877 = vunpack.c.l.b16 %v522
    %v1878 = vunpack.c.h.b16 %v522
    %v1879 = vunpack.c.l.b16 %v523
    %v1880 = vunpack.c.h.b16 %v523
    %v1881 = vunpack.c.l.b16 %v524
    %v1882 = vunpack.c.h.b16 %v524
    %v1883 = vunpack.c.l.b16 %v525
    %v1884 = vunpack.c.h.b16 %v525
    %v1885 = vunpack.c.l.b16 %v526
    %v1886 = vunpack.c.h.b16 %v526
    %v1887 = vunpack.c.l.b16 %v527
    %v1888 = vunpack.c.h.b16 %v527
    %v1889 = vunpack.c.l.b16 %v528
    %v1890 = vunpack.c.h.b16 %v528
    %v1891 = vunpack.c.l.b16 %v529
    %v1892 = vunpack.c.h.b16 %v529
    %v1893 = vunpack.c.l.b16 %v530
    %v1894 = vunpack.c.h.b16 %v530
    %v1895 = vunpack.c.l.b16 %v531
    %v1896 = vunpack.c.h.b16 %v531
    %v1897 = vunpack.c.l.b16 %v532
    %v1898 = vunpack.c.h.b16 %v532
    %v1899 = vunpack.c.l.b16 %v533
    %v1900 = vunpack.c.h.b16 %v533
    %v1901 = vunpack.c.l.b16 %v534
    %v1902 = vunpack.c.h.b16 %v534
    %v1903 = vunpack.c.l.b16 %v535
    %v1904 = vunpack.c.h.b16 %v535
    %v1905 = vunpack.c.l.b16 %v536
    %v1906 = vunpack.c.h.b16 %v536
    %v1907 = vunpack.c.l.b16 %v537
    %v1908 = vunpack.c.h.b16 %v537
    %v1909 = vunpack.c.l.b16 %v538
    %v1910 = vunpack.c.h.b16 %v538
    %v1911 = vunpack.c.l.b16 %v539
    %v1912 = vunpack.c.h.b16 %v539
    %v1913 = vunpack.c.l.b16 %v540
    %v1914 = vunpack.c.h.b16 %v540
    %v1915 = vunpack.c.l.b16 %v541
    %v1916 = vunpack.c.h.b16 %v541
    %v1917 = vunpack.c.l.b16 %v542
    %v1918 = vunpack.c.h.b16 %v542
    %v1919 = vunpack.c.l.b16 %v543
    %v1920 = vunpack.c.h.b16 %v543
    %v1921 = vunpack.c.l.b16 %v544
    %v1922 = vunpack.c.h.b16 %v544
    %v1923 = vunpack.c.l.b16 %v545
    %v1924 = vunpack.c.h.b16 %v545
    %v1925 = vunpack.c.l.b16 %v546
    %v1926 = vunpack.c.h.b16 %v546
    %v1927 = vunpack.c.l.b16 %v547
    %v1928 = vunpack.c.h.b16 %v547
    %v1929 = vunpack.c.l.b16 %v548
    %v1930 = vunpack.c.h.b16 %v548
    %v1931 = vunpack.c.l.b16 %v549
    %v1932 = vunpack.c.h.b16 %v549
    %v1933 = vunpack.c.l.b16 %v550
    %v1934 = vunpack.c.h.b16 %v550
    %v1935 = vunpack.c.l.b16 %v551
    %v1936 = vunpack.c.h.b16 %v551
    %v1937 = vunpack.c.l.b16 %v552
    %v1938 = vunpack.c.h.b16 %v552
    %v1939 = vunpack.c.l.b16 %v553
    %v1940 = vunpack.c.h.b16 %v553
    %v1941 = vunpack.c.l.b16 %v554
    %v1942 = vunpack.c.h.b16 %v554
    %v1943 = vunpack.c.l.b16 %v555
    %v1944 = vunpack.c.h.b16 %v555
    %v1945 = vunpack.c.l.b16 %v556
    %v1946 = vunpack.c.h.b16 %v556
    %v1947 = vunpack.c.l.b16 %v557
    %v1948 = vunpack.c.h.b16 %v557
    %v1949 = vunpack.c.l.b16 %v558
    %v1950 = vunpack.c.h.b16 %v558
    %v1951 = vunpack.c.l.b16 %v559
    %v1952 = vunpack.c.h.b16 %v559
    %v1953 = vunpack.c.l.b16 %v560
    %v1954 = vunpack.c.h.b16 %v560
    %v1955 = vunpack.c.l.b16 %v561
    %v1956 = vunpack.c.h.b16 %v561
    %v1957 = vunpack.c.l.b16 %v562
    %v1958 = vunpack.c.h.b16 %v562
    %v1959 = vunpack.c.l.b16 %v563
    %v1960 = vunpack.c.h.b16 %v563
    %v1961 = vunpack.c.l.b16 %v564
    %v1962 = vunpack.c.h.b16 %v564
    %v1963 = vunpack.c.l.b16 %v565
    %v1964 = vunpack.c.h.b16 %v565
    %v1965 = vunpack.c.l.b16 %v566
    %v1966 = vunpack.c.h.b16 %v566
    %v1967 = vunpack.c.l.b16 %v567
    %v1968 = vunpack.c.h.b16 %v567
    %v1969 = vunpack.c.l.b16 %v568
    %v1970 = vunpack.c.h.b16 %v568
    %v1971 = vunpack.c.l.b16 %v569
    %v1972 = vunpack.c.h.b16 %v569
    %v1973 = vunpack.c.l.b16 %v570
    %v1974 = vunpack.c.h.b16 %v570
    %v1975 = vunpack.c.l.b16 %v571
    %v1976 = vunpack.c.h.b16 %v571
    %v1977 = vunpack.c.l.b16 %v572
    %v1978 = vunpack.c.h.b16 %v572
    %v1979 = vunpack.c.l.b16 %v573
    %v1980 = vunpack.c.h.b16 %v573
    %v1981 = vunpack.c.l.b16 %v574
    %v1982 = vunpack.c.h.b16 %v574
    %v1983 = vunpack.c.l.b16 %v575
    %v1984 = vunpack.c.h.b16 %v575
    %v1985 = vunpack.c.l.b16 %v576
    %v1986 = vunpack.c.h.b16 %v576
    %v1987 = vunpack.c.l.b16 %v577
    %v1988 = vunpack.c.h.b16 %v577
    %v1989 = vunpack.c.l.b16 %v578
    %v1990 = vunpack.c.h.b16 %v578
    %v1991 = vunpack.c.l.b16 %v579
    %v1992 = vunpack.c.h.b16 %v579
    %v1993 = vunpack.c.l.b16 %v580
    %v1994 = vunpack.c.h.b16 %v580
    %v1995 = vunpack.c.l.b16 %v581
    %v1996 = vunpack.c.h.b16 %v581
    %v1997 = vunpack.c.l.b16 %v582
    %v1998 = vunpack.c.h.b16 %v582
    %v1999 = vunpack.c.l.b16 %v583
    %v2000 = vunpack.c.h.b16 %v583
    %v2001 = vunpack.c.l.b16 %v584
    %v2002 = vunpack.c.h.b16 %v584
    %v2003 = vunpack.c.l.b16 %v585
    %v2004 = vunpack.c.h.b16 %v585
    %v2005 = vunpack.c.l.b16 %v586
    %v2006 = vunpack.c.h.b16 %v586
    %v2007 = vunpack.c.l.b16 %v587
    %v2008 = vunpack.c.h.b16 %v587
    %v2009 = vunpack.c.l.b16 %v588
    %v2010 = vunpack.c.h.b16 %v588
    %v2011 = vunpack.c.l.b16 %v589
    %v2012 = vunpack.c.h.b16 %v589
    %v2013 = vunpack.c.l.b16 %v590
    %v2014 = vunpack.c.h.b16 %v590
    %v2015 = vunpack.c.l.b16 %v591
    %v2016 = vunpack.c.h.b16 %v591
    %v2017 = vunpack.c.l.b16 %v592
    %v2018 = vunpack.c.h.b16 %v592
    %v2019 = vunpack.c.l.b16 %v593
    %v2020 = vunpack.c.h.b16 %v593
    %v2021 = vunpack.c.l.b16 %v594
    %v2022 = vunpack.c.h.b16 %v594
    %v2023 = vunpack.c.l.b16 %v595
    %v2024 = vunpack.c.h.b16 %v595
    %v2025 = vunpack.c.l.b16 %v596
    %v2026 = vunpack.c.h.b16 %v596
    %v2027 = vunpack.c.l.b16 %v597
    %v2028 = vunpack.c.h.b16 %v597
    %v2029 = vunpack.c.l.b16 %v598
    %v2030 = vunpack.c.h.b16 %v598
    %v2031 = vunpack.c.l.b16 %v599
    %v2032 = vunpack.c.h.b16 %v599
    %v2033 = vunpack.c.l.b16 %v600
    %v2034 = vunpack.c.h.b16 %v600
    %v2035 = vunpack.c.l.b16 %v601
    %v2036 = vunpack.c.h.b16 %v601
    %v2037 = vunpack.c.l.b16 %v602
    %v2038 = vunpack.c.h.b16 %v602
    %v2039 = vunpack.c.l.b16 %v603
    %v2040 = vunpack.c.h.b16 %v603
    %v2041 = vunpack.c.l.b16 %v604
    %v2042 = vunpack.c.h.b16 %v604
    %v2043 = vunpack.c.l.b16 %v605
    %v2044 = vunpack.c.h.b16 %v605
    %v2045 = vunpack.c.l.b16 %v606
    %v2046 = vunpack.c.h.b16 %v606
    %v2047 = vunpack.c.l.b16 %v607
    %v2048 = vunpack.c.h.b16 %v607
    %v2049 = vunpack.c.l.b16 %v608
    %v2050 = vunpack.c.h.b16 %v608
    %v2051 = vunpack.c.l.b16 %v609
    %v2052 = vunpack.c.h.b16 %v609
    %v2053 = vunpack.c.l.b16 %v610
    %v2054 = vunpack.c.h.b16 %v610
    %v2055 = vunpack.c.l.b16 %v611
    %v2056 = vunpack.c.h.b16 %v611
    %v2057 = vunpack.c.l.b16 %v612
    %v2058 = vunpack.c.h.b16 %v612
    %v2059 = vunpack.c.l.b16 %v613
    %v2060 = vunpack.c.h.b16 %v613
    %v2061 = vunpack.c.l.b16 %v614
    %v2062 = vunpack.c.h.b16 %v614
    %v2063 = vunpack.c.l.b16 %v615
    %v2064 = vunpack.c.h.b16 %v615
    %v2065 = vunpack.c.l.b16 %v616
    %v2066 = vunpack.c.h.b16 %v616
    %v2067 = vunpack.c.l.b16 %v617
    %v2068 = vunpack.c.h.b16 %v617
    %v2069 = vunpack.c.l.b16 %v618
    %v2070 = vunpack.c.h.b16 %v618
    %v2071 = vunpack.c.l.b16 %v619
    %v2072 = vunpack.c.h.b16 %v619
    %v2073 = vunpack.c.l.b16 %v620
    %v2074 = vunpack.c.h.b16 %v620
    %v2075 = vunpack.c.l.b16 %v621
    %v2076 = vunpack.c.h.b16 %v621
    %v2077 = vunpack.c.l.b16 %v622
    %v2078 = vunpack.c.h.b16 %v622
    %v2079 = vunpack.c.l.b16 %v623
    %v2080 = vunpack.c.h.b16 %v623
    %v2081 = vunpack.c.l.b16 %v624
    %v2082 = vunpack.c.h.b16 %v624
    %v2083 = vunpack.c.l.b16 %v625
    %v2084 = vunpack.c.h.b16 %v625
    %v2085 = vunpack.c.l.b16 %v626
    %v2086 = vunpack.c.h.b16 %v626
    %v2087 = vunpack.c.l.b16 %v627
    %v2088 = vunpack.c.h.b16 %v627
    %v2089 = vunpack.c.l.b16 %v628
    %v2090 = vunpack.c.h.b16 %v628
    %v2091 = vunpack.c.l.b16 %v629
    %v2092 = vunpack.c.h.b16 %v629
    %v2093 = vunpack.c.l.b16 %v630
    %v2094 = vunpack.c.h.b16 %v630
    %v2095 = vunpack.c.l.b16 %v631
    %v2096 = vunpack.c.h.b16 %v631
    %v2097 = vunpack.c.l.b16 %v632
    %v2098 = vunpack.c.h.b16 %v632
    %v2099 = vunpack.c.l.b16 %v633
    %v2100 = vunpack.c.h.b16 %v633
    %v2101 = vunpack.c.l.b16 %v634
    %v2102 = vunpack.c.h.b16 %v634
    %v2103 = vunpack.c.l.b16 %v635
    %v2104 = vunpack.c.h.b16 %v635
    %v2105 = vunpack.c.l.b16 %v636
    %v2106 = vunpack.c.h.b16 %v636
    %v2107 = vunpack.c.l.b16 %v637
    %v2108 = vunpack.c.h.b16 %v637
    %v2109 = vunpack.c.l.b16 %v638
    %v2110 = vunpack.c.h.b16 %v638
    %v2111 = vunpack.c.l.b16 %v639
    %v2112 = vunpack.c.h.b16 %v639
    %v2113 = vunpack.c.l.b16 %v640
    %v2114 = vunpack.c.h.b16 %v640
    %v2115 = vunpack.c.l.b16 %v641
    %v2116 = vunpack.c.h.b16 %v641
    %v2117 = vunpack.c.l.b16 %v642
    %v2118 = vunpack.c.h.b16 %v642
    %v2119 = vunpack.c.l.b16 %v643
    %v2120 = vunpack.c.h.b16 %v643
    %v2121 = vunpack.c.l.b16 %v644
    %v2122 = vunpack.c.h.b16 %v644
    %v2123 = vunpack.c.l.b16 %v645
    %v2124 = vunpack.c.h.b16 %v645
    %v2125 = vunpack.c.l.b16 %v646
    %v2126 = vunpack.c.h.b16 %v646
    %v2127 = vunpack.c.l.b16 %v647
    %v2128 = vunpack.c.h.b16 %v647
    %v2129 = vunpack.c.l.b16 %v648
    %v2130 = vunpack.c.h.b16 %v648
    %v2131 = vunpack.c.l.b16 %v649
    %v2132 = vunpack.c.h.b16 %v649
    %v2133 = vunpack.c.l.b16 %v650
    %v2134 = vunpack.c.h.b16 %v650
    %v2135 = vunpack.c.l.b16 %v651
    %v2136 = vunpack.c.h.b16 %v651
    %v2137 = vunpack.c.l.b16 %v652
    %v2138 = vunpack.c.h.b16 %v652
    %v2139 = vunpack.c.l.b16 %v653
    %v2140 = vunpack.c.h.b16 %v653
    %v2141 = vunpack.c.l.b16 %v654
    %v2142 = vunpack.c.h.b16 %v654
    %v2143 = vunpack.c.l.b16 %v655
    %v2144 = vunpack.c.h.b16 %v655
    %v2145 = vunpack.c.l.b16 %v656
    %v2146 = vunpack.c.h.b16 %v656
    %v2147 = vunpack.c.l.b16 %v657
    %v2148 = vunpack.c.h.b16 %v657
    %v2149 = vunpack.c.l.b16 %v658
    %v2150 = vunpack.c.h.b16 %v658
    %v2151 = vunpack.c.l.b16 %v659
    %v2152 = vunpack.c.h.b16 %v659
    %v2153 = vunpack.c.l.b16 %v660
    %v2154 = vunpack.c.h.b16 %v660
    %v2155 = vunpack.c.l.b16 %v661
    %v2156 = vunpack.c.h.b16 %v661
    %v2157 = vunpack.c.l.b16 %v662
    %v2158 = vunpack.c.h.b16 %v662
    %v2159 = vunpack.c.l.b16 %v663
    %v2160 = vunpack.c.h.b16 %v663
    %v2161 = vunpack.c.l.b16 %v664
    %v2162 = vunpack.c.h.b16 %v664
    %v2163 = vunpack.c.l.b16 %v665
    %v2164 = vunpack.c.h.b16 %v665
    %v2165 = vunpack.c.l.b16 %v666
    %v2166 = vunpack.c.h.b16 %v666
    %v2167 = vunpack.c.l.b16 %v667
    %v2168 = vunpack.c.h.b16 %v667
    %v2169 = vunpack.c.l.b16 %v668
    %v2170 = vunpack.c.h.b16 %v668
    %v2171 = vunpack.c.l.b16 %v669
    %v2172 = vunpack.c.h.b16 %v669
    %v2173 = vunpack.c.l.b16 %v670
    %v2174 = vunpack.c.h.b16 %v670
    %v2175 = vunpack.c.l.b16 %v671
    %v2176 = vunpack.c.h.b16 %v671
    %v2177 = vunpack.c.l.b16 %v672
    %v2178 = vunpack.c.h.b16 %v672
    %v2179 = vunpack.c.l.b16 %v673
    %v2180 = vunpack.c.h.b16 %v673
    %v2181 = vunpack.c.l.b16 %v674
    %v2182 = vunpack.c.h.b16 %v674
    %v2183 = vunpack.c.l.b16 %v675
    %v2184 = vunpack.c.h.b16 %v675
    %v2185 = vunpack.c.l.b16 %v676
    %v2186 = vunpack.c.h.b16 %v676
    %v2187 = vunpack.c.l.b16 %v677
    %v2188 = vunpack.c.h.b16 %v677
    %v2189 = vunpack.c.l.b16 %v678
    %v2190 = vunpack.c.h.b16 %v678
    %v2191 = vunpack.c.l.b16 %v679
    %v2192 = vunpack.c.h.b16 %v679
    %v2193 = vunpack.c.l.b16 %v680
    %v2194 = vunpack.c.h.b16 %v680
    %v2195 = vunpack.c.l.b16 %v681
    %v2196 = vunpack.c.h.b16 %v681
    %v2197 = vunpack.c.l.b16 %v682
    %v2198 = vunpack.c.h.b16 %v682
    %v2199 = vunpack.c.l.b16 %v683
    %v2200 = vunpack.c.h.b16 %v683
    %v2201 = vunpack.c.l.b16 %v684
    %v2202 = vunpack.c.h.b16 %v684
    %v2203 = vunpack.c.l.b16 %v685
    %v2204 = vunpack.c.h.b16 %v685
    %v2205 = vunpack.c.l.b16 %v686
    %v2206 = vunpack.c.h.b16 %v686
    %v2207 = vunpack.c.l.b16 %v687
    %v2208 = vunpack.c.h.b16 %v687
    %v2209 = vunpack.c.l.b16 %v688
    %v2210 = vunpack.c.h.b16 %v688
    %v2211 = vunpack.c.l.b16 %v689
    %v2212 = vunpack.c.h.b16 %v689
    %v2213 = vunpack.c.l.b16 %v690
    %v2214 = vunpack.c.h.b16 %v690
    %v2215 = vunpack.c.l.b16 %v691
    %v2216 = vunpack.c.h.b16 %v691
    %v2217 = vunpack.c.l.b16 %v692
    %v2218 = vunpack.c.h.b16 %v692
    %v2219 = vunpack.c.l.b16 %v693
    %v2220 = vunpack.c.h.b16 %v693
    %v2221 = vunpack.c.l.b16 %v694
    %v2222 = vunpack.c.h.b16 %v694
    %v2223 = vunpack.c.l.b16 %v695
    %v2224 = vunpack.c.h.b16 %v695
    %v2225 = vunpack.c.l.b16 %v696
    %v2226 = vunpack.c.h.b16 %v696
    %v2227 = vunpack.c.l.b16 %v697
    %v2228 = vunpack.c.h.b16 %v697
    %v2229 = vunpack.c.l.b16 %v698
    %v2230 = vunpack.c.h.b16 %v698
    %v2231 = vunpack.c.l.b16 %v699
    %v2232 = vunpack.c.h.b16 %v699
    %v2233 = vunpack.c.l.b16 %v700
    %v2234 = vunpack.c.h.b16 %v700
    %v2235 = vunpack.c.l.b16 %v701
    %v2236 = vunpack.c.h.b16 %v701
    %v2237 = vunpack.c.l.b16 %v702
    %v2238 = vunpack.c.h.b16 %v702
    %v2239 = vunpack.c.l.b16 %v703
    %v2240 = vunpack.c.h.b16 %v703
    %v2241 = vunpack.c.l.b16 %v704
    %v2242 = vunpack.c.h.b16 %v704
    %v2243 = vunpack.c.l.b16 %v705
    %v2244 = vunpack.c.h.b16 %v705
    %v2245 = vunpack.c.l.b16 %v706
    %v2246 = vunpack.c.h.b16 %v706
    %v2247 = vunpack.c.l.b16 %v707
    %v2248 = vunpack.c.h.b16 %v707
    %v2249 = vunpack.c.l.b16 %v708
    %v2250 = vunpack.c.h.b16 %v708
    %v2251 = vunpack.c.l.b16 %v709
    %v2252 = vunpack.c.h.b16 %v709
    %v2253 = vunpack.c.l.b16 %v710
    %v2254 = vunpack.c.h.b16 %v710
    %v2255 = vunpack.c.l.b16 %v711
    %v2256 = vunpack.c.h.b16 %v711
    %v2257 = vunpack.c.l.b16 %v712
    %v2258 = vunpack.c.h.b16 %v712
    %v2259 = vunpack.c.l.b16 %v713
    %v2260 = vunpack.c.h.b16 %v713
    %v2261 = vunpack.c.l.b16 %v714
    %v2262 = vunpack.c.h.b16 %v714
    %v2263 = vunpack.c.l.b16 %v715
    %v2264 = vunpack.c.h.b16 %v715
    %v2265 = vunpack.c.l.b16 %v716
    %v2266 = vunpack.c.h.b16 %v716
    %v2267 = vunpack.c.l.b16 %v717
    %v2268 = vunpack.c.h.b16 %v717
    %v2269 = vunpack.c.l.b16 %v718
    %v2270 = vunpack.c.h.b16 %v718
    %v2271 = vunpack.c.l.b16 %v719
    %v2272 = vunpack.c.h.b16 %v719
    %v2273 = vunpack.c.l.b16 %v720
    %v2274 = vunpack.c.h.b16 %v720
    %v2275 = vunpack.c.l.b16 %v721
    %v2276 = vunpack.c.h.b16 %v721
    %v2277 = vunpack.c.l.b16 %v722
    %v2278 = vunpack.c.h.b16 %v722
    %v2279 = vunpack.c.l.b16 %v723
    %v2280 = vunpack.c.h.b16 %v723
    %v2281 = vunpack.c.l.b16 %v724
    %v2282 = vunpack.c.h.b16 %v724
    %v2283 = vunpack.c.l.b16 %v725
    %v2284 = vunpack.c.h.b16 %v725
    %v2285 = vunpack.c.l.b16 %v726
    %v2286 = vunpack.c.h.b16 %v726
    %v2287 = vunpack.c.l.b16 %v727
    %v2288 = vunpack.c.h.b16 %v727
    %v2289 = vunpack.c.l.b16 %v728
    %v2290 = vunpack.c.h.b16 %v728
    %v2291 = vunpack.c.l.b16 %v729
    %v2292 = vunpack.c.h.b16 %v729
    %v2293 = vunpack.c.l.b16 %v730
    %v2294 = vunpack.c.h.b16 %v730
    %v2295 = vunpack.c.l.b16 %v731
    %v2296 = vunpack.c.h.b16 %v731
    %v2297 = vunpack.c.l.b16 %v732
    %v2298 = vunpack.c.h.b16 %v732
    %v2299 = vunpack.c.l.b16 %v733
    %v2300 = vunpack.c.h.b16 %v733
    %v2301 = vunpack.c.l.b16 %v734
    %v2302 = vunpack.c.h.b16 %v734
    %v2303 = vunpack.c.l.b16 %v735
    %v2304 = vunpack.c.h.b16 %v735
    %v2305 = vunpack.c.l.b16 %v736
    %v2306 = vunpack.c.h.b16 %v736
    %v2307 = vunpack.c.l.b16 %v737
    %v2308 = vunpack.c.h.b16 %v737
    %v2309 = vunpack.c.l.b16 %v738
    %v2310 = vunpack.c.h.b16 %v738
    %v2311 = vunpack.c.l.b16 %v739
    %v2312 = vunpack.c.h.b16 %v739
    %v2313 = vunpack.c.l.b16 %v740
    %v2314 = vunpack.c.h.b16 %v740
    %v2315 = vunpack.c.l.b16 %v741
    %v2316 = vunpack.c.h.b16 %v741
    %v2317 = vunpack.c.l.b16 %v742
    %v2318 = vunpack.c.h.b16 %v742
    %v2319 = vunpack.c.l.b16 %v743
    %v2320 = vunpack.c.h.b16 %v743
    %v2321 = vunpack.c.l.b16 %v744
    %v2322 = vunpack.c.h.b16 %v744
    %v2323 = vunpack.c.l.b16 %v745
    %v2324 = vunpack.c.h.b16 %v745
    %v2325 = vunpack.c.l.b16 %v746
    %v2326 = vunpack.c.h.b16 %v746
    %v2327 = vunpack.c.l.b16 %v747
    %v2328 = vunpack.c.h.b16 %v747
    %v2329 = vunpack.c.l.b16 %v748
    %v2330 = vunpack.c.h.b16 %v748
    %v2331 = vpack.c.b16 %v1315, %v1307
    %v2332 = vpack.c.b16 %v1316, %v1308
    %v2333 = vpack.c.b16 %v1317, %v1309
    %v2334 = vpack.c.b16 %v1318, %v1310
    %v2335 = vpack.c.b16 %v1319, %v1311
    %v2336 = vpack.c.b16 %v1320, %v1312
    %v2337 = vpack.c.b16 %v1321, %v1313
    %v2338 = vpack.c.b16 %v1322, %v1314
    %v2339 = vpack.c.b16 %v1331, %v1323
    %v2340 = vpack.c.b16 %v1332, %v1324
    %v2341 = vpack.c.b16 %v1333, %v1325
    %v2342 = vpack.c.b16 %v1334, %v1326
    %v2343 = vpack.c.b16 %v1335, %v1327
    %v2344 = vpack.c.b16 %v1336, %v1328
    %v2345 = vpack.c.b16 %v1337, %v1329
    %v2346 = vpack.c.b16 %v1338, %v1330
    %v2347 = vpack.c.b16 %v1347, %v1339
    %v2348 = vpack.c.b16 %v1348, %v1340
    %v2349 = vpack.c.b16 %v1349, %v1341
    %v2350 = vpack.c.b16 %v1350, %v1342
    %v2351 = vpack.c.b16 %v1351, %v1343
    %v2352 = vpack.c.b16 %v1352, %v1344
    %v2353 = vpack.c.b16 %v1353, %v1345
    %v2354 = vpack.c.b16 %v1354, %v1346
    %v2355 = vpack.c.b16 %v1363, %v1355
    %v2356 = vpack.c.b16 %v1364, %v1356
    %v2357 = vpack.c.b16 %v1365, %v1357
    %v2358 = vpack.c.b16 %v1366, %v1358
    %v2359 = vpack.c.b16 %v1367, %v1359
    %v2360 = vpack.c.b16 %v1368, %v1360
    %v2361 = vpack.c.b16 %v1369, %v1361
    %v2362 = vpack.c.b16 %v1370, %v1362
    %v2363 = vpack.c.b16 %v1379, %v1371
    %v2364 = vpack.c.b16 %v1380, %v1372
    %v2365 = vpack.c.b16 %v1381, %v1373
    %v2366 = vpack.c.b16 %v1382, %v1374
    %v2367 = vpack.c.b16 %v1383, %v1375
    %v2368 = vpack.c.b16 %v1384, %v1376
    %v2369 = vpack.c.b16 %v1385, %v1377
    %v2370 = vpack.c.b16 %v1386, %v1378
    %v2371 = vpack.c.b16 %v1395, %v1387
    %v2372 = vpack.c.b16 %v1396, %v1388
    %v2373 = vpack.c.b16 %v1397, %v1389
    %v2374 = vpack.c.b16 %v1398, %v1390
    %v2375 = vpack.c.b16 %v1399, %v1391
    %v2376 = vpack.c.b16 %v1400, %v1392
    %v2377 = vpack.c.b16 %v1401, %v1393
    %v2378 = vpack.c.b16 %v1402, %v1394
    %v2379 = vpack.c.b16 %v1411, %v1403
    %v2380 = vpack.c.b16 %v1412, %v1404
    %v2381 = vpack.c.b16 %v1413, %v1405
    %v2382 = vpack.c.b16 %v1414, %v1406
    %v2383 = vpack.c.b16 %v1415, %v1407
    %v2384 = vpack.c.b16 %v1416, %v1408
    %v2385 = vpack.c.b16 %v1417, %v1409
    %v2386 = vpack.c.b16 %v1418, %v1410
    %v2387 = vpack.c.b16 %v1427, %v1419
    %v2388 = vpack.c.b16 %v1428, %v1420
    %v2389 = vpack.c.b16 %v1429, %v1421
    %v2390 = vpack.c.b16 %v1430, %v1422
    %v2391 = vpack.c.b16 %v1431, %v1423
    %v2392 = vpack.c.b16 %v1432, %v1424
    %v2393 = vpack.c.b16 %v1433, %v1425
    %v2394 = vpack.c.b16 %v1434, %v1426
    %v2395 = vpack.c.b16 %v1443, %v1435
    %v2396 = vpack.c.b16 %v1444, %v1436
    %v2397 = vpack.c.b16 %v1445, %v1437
    %v2398 = vpack.c.b16 %v1446, %v1438
    %v2399 = vpack.c.b16 %v1447, %v1439
    %v2400 = vpack.c.b16 %v1448, %v1440
    %v2401 = vpack.c.b16 %v1449, %v1441
    %v2402 = vpack.c.b16 %v1450, %v1442
    %v2403 = vpack.c.b16 %v1459, %v1451
    %v2404 = vpack.c.b16 %v1460, %v1452
    %v2405 = vpack.c.b16 %v1461, %v1453
    %v2406 = vpack.c.b16 %v1462, %v1454
    %v2407 = vpack.c.b16 %v1463, %v1455
    %v2408 = vpack.c.b16 %v1464, %v1456
    %v2409 = vpack.c.b16 %v1465, %v1457
    %v2410 = vpack.c.b16 %v1466, %v1458
    %v2411 = vpack.c.b16 %v1475, %v1467
    %v2412 = vpack.c.b16 %v1476, %v1468
    %v2413 = vpack.c.b16 %v1477, %v1469
    %v2414 = vpack.c.b16 %v1478, %v1470
    %v2415 = vpack.c.b16 %v1479, %v1471
    %v2416 = vpack.c.b16 %v1480, %v1472
    %v2417 = vpack.c.b16 %v1481, %v1473
    %v2418 = vpack.c.b16 %v1482, %v1474
    %v2419 = vpack.c.b16 %v1491, %v1483
    %v2420 = vpack.c.b16 %v1492, %v1484
    %v2421 = vpack.c.b16 %v1493, %v1485
    %v2422 = vpack.c.b16 %v1494, %v1486
    %v2423 = vpack.c.b16 %v1495, %v1487
    %v2424 = vpack.c.b16 %v1496, %v1488
    %v2425 = vpack.c.b16 %v1497, %v1489
    %v2426 = vpack.c.b16 %v1498, %v1490
    %v2427 = vpack.c.b16 %v1507, %v1499
    %v2428 = vpack.c.b16 %v1508, %v1500
    %v2429 = vpack.c.b16 %v1509, %v1501
    %v2430 = vpack.c.b16 %v1510, %v1502
    %v2431 = vpack.c.b16 %v1511, %v1503
    %v2432 = vpack.c.b16 %v1512, %v1504
    %v2433 = vpack.c.b16 %v1513, %v1505
    %v2434 = vpack.c.b16 %v1514, %v1506
    %v2435 = vpack.c.b16 %v1523, %v1515
    %v2436 = vpack.c.b16 %v1524, %v1516
    %v2437 = vpack.c.b16 %v1525, %v1517
    %v2438 = vpack.c.b16 %v1526, %v1518
    %v2439 = vpack.c.b16 %v1527, %v1519
    %v2440 = vpack.c.b16 %v1528, %v1520
    %v2441 = vpack.c.b16 %v1529, %v1521
    %v2442 = vpack.c.b16 %v1530, %v1522
    %v2443 = vpack.c.b16 %v1539, %v1531
    %v2444 = vpack.c.b16 %v1540, %v1532
    %v2445 = vpack.c.b16 %v1541, %v1533
    %v2446 = vpack.c.b16 %v1542, %v1534
    %v2447 = vpack.c.b16 %v1543, %v1535
    %v2448 = vpack.c.b16 %v1544, %v1536
    %v2449 = vpack.c.b16 %v1545, %v1537
    %v2450 = vpack.c.b16 %v1546, %v1538
    %v2451 = vpack.c.b16 %v1555, %v1547
    %v2452 = vpack.c.b16 %v1556, %v1548
    %v2453 = vpack.c.b16 %v1557, %v1549
    %v2454 = vpack.c.b16 %v1558, %v1550
    %v2455 = vpack.c.b16 %v1559, %v1551
    %v2456 = vpack.c.b16 %v1560, %v1552
    %v2457 = vpack.c.b16 %v1561, %v1553
    %v2458 = vpack.c.b16 %v1562, %v1554
    %v2459 = vpack.c.b16 %v1571, %v1563
    %v2460 = vpack.c.b16 %v1572, %v1564
    %v2461 = vpack.c.b16 %v1573, %v1565
    %v2462 = vpack.c.b16 %v1574, %v1566
    %v2463 = vpack.c.b16 %v1575, %v1567
    %v2464 = vpack.c.b16 %v1576, %v1568
    %v2465 = vpack.c.b16 %v1577, %v1569
    %v2466 = vpack.c.b16 %v1578, %v1570
    %v2467 = vpack.c.b16 %v1587, %v1579
    %v2468 = vpack.c.b16 %v1588, %v1580
    %v2469 = vpack.c.b16 %v1589, %v1581
    %v2470 = vpack.c.b16 %v1590, %v1582
    %v2471 = vpack.c.b16 %v1591, %v1583
    %v2472 = vpack.c.b16 %v1592, %v1584
    %v2473 = vpack.c.b16 %v1593, %v1585
    %v2474 = vpack.c.b16 %v1594, %v1586
    %v2475 = vpack.c.b16 %v1603, %v1595
    %v2476 = vpack.c.b16 %v1604, %v1596
    %v2477 = vpack.c.b16 %v1605, %v1597
    %v2478 = vpack.c.b16 %v1606, %v1598
    %v2479 = vpack.c.b16 %v1607, %v1599
    %v2480 = vpack.c.b16 %v1608, %v1600
    %v2481 = vpack.c.b16 %v1609, %v1601
    %v2482 = vpack.c.b16 %v1610, %v1602
    %v2483 = vpack.c.b16 %v1619, %v1611
    %v2484 = vpack.c.b16 %v1620, %v1612
    %v2485 = vpack.c.b16 %v1621, %v1613
    %v2486 = vpack.c.b16 %v1622, %v1614
    %v2487 = vpack.c.b16 %v1623, %v1615
    %v2488 = vpack.c.b16 %v1624, %v1616
    %v2489 = vpack.c.b16 %v1625, %v1617
    %v2490 = vpack.c.b16 %v1626, %v1618
    %v2491 = vpack.c.b16 %v1635, %v1627
    %v2492 = vpack.c.b16 %v1636, %v1628
    %v2493 = vpack.c.b16 %v1637, %v1629
    %v2494 = vpack.c.b16 %v1638, %v1630
    %v2495 = vpack.c.b16 %v1639, %v1631
    %v2496 = vpack.c.b16 %v1640, %v1632
    %v2497 = vpack.c.b16 %v1641, %v1633
    %v2498 = vpack.c.b16 %v1642, %v1634
    %v2499 = vpack.c.b16 %v1651, %v1643
    %v2500 = vpack.c.b16 %v1652, %v1644
    %v2501 = vpack.c.b16 %v1653, %v1645
    %v2502 = vpack.c.b16 %v1654, %v1646
    %v2503 = vpack.c.b16 %v1655, %v1647
    %v2504 = vpack.c.b16 %v1656, %v1648
    %v2505 = vpack.c.b16 %v1657, %v1649
    %v2506 = vpack.c.b16 %v1658, %v1650
    %v2507 = vpack.c.b16 %v1667, %v1659
    %v2508 = vpack.c.b16 %v1668, %v1660
    %v2509 = vpack.c.b16 %v1669, %v1661
    %v2510 = vpack.c.b16 %v1670, %v1662
    %v2511 = vpack.c.b16 %v1671, %v1663
    %v2512 = vpack.c.b16 %v1672, %v1664
    %v2513 = vpack.c.b16 %v1673, %v1665
    %v2514 = vpack.c.b16 %v1674, %v1666
    %v2515 = vpack.c.b16 %v1683, %v1675
    %v2516 = vpack.c.b16 %v1684, %v1676
    %v2517 = vpack.c.b16 %v1685, %v1677
    %v2518 = vpack.c.b16 %v1686, %v1678
    %v2519 = vpack.c.b16 %v1687, %v1679
    %v2520 = vpack.c.b16 %v1688, %v1680
    %v2521 = vpack.c.b16 %v1689, %v1681
    %v2522 = vpack.c.b16 %v1690, %v1682
    %v2523 = vpack.c.b16 %v1699, %v1691
    %v2524 = vpack.c.b16 %v1700, %v1692
    %v2525 = vpack.c.b16 %v1701, %v1693
    %v2526 = vpack.c.b16 %v1702, %v1694
    %v2527 = vpack.c.b16 %v1703, %v1695
    %v2528 = vpack.c.b16 %v1704, %v1696
    %v2529 = vpack.c.b16 %v1705, %v1697
    %v2530 = vpack.c.b16 %v1706, %v1698
    %v2531 = vpack.c.b16 %v1715, %v1707
    %v2532 = vpack.c.b16 %v1716, %v1708
    %v2533 = vpack.c.b16 %v1717, %v1709
    %v2534 = vpack.c.b16 %v1718, %v1710
    %v2535 = vpack.c.b16 %v1719, %v1711
    %v2536 = vpack.c.b16 %v1720, %v1712
    %v2537 = vpack.c.b16 %v1721, %v1713
    %v2538 = vpack.c.b16 %v1722, %v1714
    %v2539 = vpack.c.b16 %v1731, %v1723
    %v2540 = vpack.c.b16 %v1732, %v1724
    %v2541 = vpack.c.b16 %v1733, %v1725
    %v2542 = vpack.c.b16 %v1734, %v1726
    %v2543 = vpack.c.b16 %v1735, %v1727
    %v2544 = vpack.c.b16 %v1736, %v1728
    %v2545 = vpack.c.b16 %v1737, %v1729
    %v2546 = vpack.c.b16 %v1738, %v1730
    %v2547 = vpack.c.b16 %v1747, %v1739
    %v2548 = vpack.c.b16 %v1748, %v1740
    %v2549 = vpack.c.b16 %v1749, %v1741
    %v2550 = vpack.c.b16 %v1750, %v1742
    %v2551 = vpack.c.b16 %v1751, %v1743
    %v2552 = vpack.c.b16 %v1752, %v1744
    %v2553 = vpack.c.b16 %v1753, %v1745
    %v2554 = vpack.c.b16 %v1754, %v1746
    %v2555 = vpack.c.b16 %v1763, %v1755
    %v2556 = vpack.c.b16 %v1764, %v1756
    %v2557 = vpack.c.b16 %v1765, %v1757
    %v2558 = vpack.c.b16 %v1766, %v1758
    %v2559 = vpack.c.b16 %v1767, %v1759
    %v2560 = vpack.c.b16 %v1768, %v1760
    %v2561 = vpack.c.b16 %v1769, %v1761
    %v2562 = vpack.c.b16 %v1770, %v1762
    %v2563 = vpack.c.b16 %v1779, %v1771
    %v2564 = vpack.c.b16 %v1780, %v1772
    %v2565 = vpack.c.b16 %v1781, %v1773
    %v2566 = vpack.c.b16 %v1782, %v1774
    %v2567 = vpack.c.b16 %v1783, %v1775
    %v2568 = vpack.c.b16 %v1784, %v1776
    %v2569 = vpack.c.b16 %v1785, %v1777
    %v2570 = vpack.c.b16 %v1786, %v1778
    %v2571 = vpack.c.b16 %v1795, %v1787
    %v2572 = vpack.c.b16 %v1796, %v1788
    %v2573 = vpack.c.b16 %v1797, %v1789
    %v2574 = vpack.c.b16 %v1798, %v1790
    %v2575 = vpack.c.b16 %v1799, %v1791
    %v2576 = vpack.c.b16 %v1800, %v1792
    %v2577 = vpack.c.b16 %v1801, %v1793
    %v2578 = vpack.c.b16 %v1802, %v1794
    %v2579 = vpack.c.b16 %v1811, %v1803
    %v2580 = vpack.c.b16 %v1812, %v1804
    %v2581 = vpack.c.b16 %v1813, %v1805
    %v2582 = vpack.c.b16 %v1814, %v1806
    %v2583 = vpack.c.b16 %v1815, %v1807
    %v2584 = vpack.c.b16 %v1816, %v1808
    %v2585 = vpack.c.b16 %v1817, %v1809
    %v2586 = vpack.c.b16 %v1818, %v1810
    %v2587 = vpack.c.b16 %v1827, %v1819
    %v2588 = vpack.c.b16 %v1828, %v1820
    %v2589 = vpack.c.b16 %v1829, %v1821
    %v2590 = vpack.c.b16 %v1830, %v1822
    %v2591 = vpack.c.b16 %v1831, %v1823
    %v2592 = vpack.c.b16 %v1832, %v1824
    %v2593 = vpack.c.b16 %v1833, %v1825
    %v2594 = vpack.c.b16 %v1834, %v1826
    %v2595 = vpack.c.b16 %v1843, %v1835
    %v2596 = vpack.c.b16 %v1844, %v1836
    %v2597 = vpack.c.b16 %v1845, %v1837
    %v2598 = vpack.c.b16 %v1846, %v1838
    %v2599 = vpack.c.b16 %v1847, %v1839
    %v2600 = vpack.c.b16 %v1848, %v1840
    %v2601 = vpack.c.b16 %v1849, %v1841
    %v2602 = vpack.c.b16 %v1850, %v1842
    %v2603 = vpack.c.b16 %v1859, %v1851
    %v2604 = vpack.c.b16 %v1860, %v1852
    %v2605 = vpack.c.b16 %v1861, %v1853
    %v2606 = vpack.c.b16 %v1862, %v1854
    %v2607 = vpack.c.b16 %v1863, %v1855
    %v2608 = vpack.c.b16 %v1864, %v1856
    %v2609 = vpack.c.b16 %v1865, %v1857
    %v2610 = vpack.c.b16 %v1866, %v1858
    %v2611 = vpack.c.b16 %v1875, %v1867
    %v2612 = vpack.c.b16 %v1876, %v1868
    %v2613 = vpack.c.b16 %v1877, %v1869
    %v2614 = vpack.c.b16 %v1878, %v1870
    %v2615 = vpack.c.b16 %v1879, %v1871
    %v2616 = vpack.c.b16 %v1880, %v1872
    %v2617 = vpack.c.b16 %v1881, %v1873
    %v2618 = vpack.c.b16 %v1882, %v1874
    %v2619 = vpack.c.b16 %v1891, %v1883
    %v2620 = vpack.c.b16 %v1892, %v1884
    %v2621 = vpack.c.b16 %v1893, %v1885
    %v2622 = vpack.c.b16 %v1894, %v1886
    %v2623 = vpack.c.b16 %v1895, %v1887
    %v2624 = vpack.c.b16 %v1896, %v1888
    %v2625 = vpack.c.b16 %v1897, %v1889
    %v2626 = vpack.c.b16 %v1898, %v1890
    %v2627 = vpack.c.b16 %v1907, %v1899
    %v2628 = vpack.c.b16 %v1908, %v1900
    %v2629 = vpack.c.b16 %v1909, %v1901
    %v2630 = vpack.c.b16 %v1910, %v1902
    %v2631 = vpack.c.b16 %v1911, %v1903
    %v2632 = vpack.c.b16 %v1912, %v1904
    %v2633 = vpack.c.b16 %v1913, %v1905
    %v2634 = vpack.c.b16 %v1914, %v1906
    %v2635 = vpack.c.b16 %v1923, %v1915
    %v2636 = vpack.c.b16 %v1924, %v1916
    %v2637 = vpack.c.b16 %v1925, %v1917
    %v2638 = vpack.c.b16 %v1926, %v1918
    %v2639 = vpack.c.b16 %v1927, %v1919
    %v2640 = vpack.c.b16 %v1928, %v1920
    %v2641 = vpack.c.b16 %v1929, %v1921
    %v2642 = vpack.c.b16 %v1930, %v1922
    %v2643 = vpack.c.b16 %v1939, %v1931
    %v2644 = vpack.c.b16 %v1940, %v1932
    %v2645 = vpack.c.b16 %v1941, %v1933
    %v2646 = vpack.c.b16 %v1942, %v1934
    %v2647 = vpack.c.b16 %v1943, %v1935
    %v2648 = vpack.c.b16 %v1944, %v1936
    %v2649 = vpack.c.b16 %v1945, %v1937
    %v2650 = vpack.c.b16 %v1946, %v1938
    %v2651 = vpack.c.b16 %v1955, %v1947
    %v2652 = vpack.c.b16 %v1956, %v1948
    %v2653 = vpack.c.b16 %v1957, %v1949
    %v2654 = vpack.c.b16 %v1958, %v1950
    %v2655 = vpack.c.b16 %v1959, %v1951
    %v2656 = vpack.c.b16 %v1960, %v1952
    %v2657 = vpack.c.b16 %v1961, %v1953
    %v2658 = vpack.c.b16 %v1962, %v1954
    %v2659 = vpack.c.b16 %v1971, %v1963
    %v2660 = vpack.c.b16 %v1972, %v1964
    %v2661 = vpack.c.b16 %v1973, %v1965
    %v2662 = vpack.c.b16 %v1974, %v1966
    %v2663 = vpack.c.b16 %v1975, %v1967
    %v2664 = vpack.c.b16 %v1976, %v1968
    %v2665 = vpack.c.b16 %v1977, %v1969
    %v2666 = vpack.c.b16 %v1978, %v1970
    %v2667 = vpack.c.b16 %v1987, %v1979
    %v2668 = vpack.c.b16 %v1988, %v1980
    %v2669 = vpack.c.b16 %v1989, %v1981
    %v2670 = vpack.c.b16 %v1990, %v1982
    %v2671 = vpack.c.b16 %v1991, %v1983
    %v2672 = vpack.c.b16 %v1992, %v1984
    %v2673 = vpack.c.b16 %v1993, %v1985
    %v2674 = vpack.c.b16 %v1994, %v1986
    %v2675 = vpack.c.b16 %v2003, %v1995
    %v2676 = vpack.c.b16 %v2004, %v1996
    %v2677 = vpack.c.b16 %v2005, %v1997
    %v2678 = vpack.c.b16 %v2006, %v1998
    %v2679 = vpack.c.b16 %v2007, %v1999
    %v2680 = vpack.c.b16 %v2008, %v2000
    %v2681 = vpack.c.b16 %v2009, %v2001
    %v2682 = vpack.c.b16 %v2010, %v2002
    %v2683 = vpack.c.b16 %v2019, %v2011
    %v2684 = vpack.c.b16 %v2020, %v2012
    %v2685 = vpack.c.b16 %v2021, %v2013
    %v2686 = vpack.c.b16 %v2022, %v2014
    %v2687 = vpack.c.b16 %v2023, %v2015
    %v2688 = vpack.c.b16 %v2024, %v2016
    %v2689 = vpack.c.b16 %v2025, %v2017
    %v2690 = vpack.c.b16 %v2026, %v2018
    %v2691 = vpack.c.b16 %v2035, %v2027
    %v2692 = vpack.c.b16 %v2036, %v2028
    %v2693 = vpack.c.b16 %v2037, %v2029
    %v2694 = vpack.c.b16 %v2038, %v2030
    %v2695 = vpack.c.b16 %v2039, %v2031
    %v2696 = vpack.c.b16 %v2040, %v2032
    %v2697 = vpack.c.b16 %v2041, %v2033
    %v2698 = vpack.c.b16 %v2042, %v2034
    %v2699 = vpack.c.b16 %v2051, %v2043
    %v2700 = vpack.c.b16 %v2052, %v2044
    %v2701 = vpack.c.b16 %v2053, %v2045
    %v2702 = vpack.c.b16 %v2054, %v2046
    %v2703 = vpack.c.b16 %v2055, %v2047
    %v2704 = vpack.c.b16 %v2056, %v2048
    %v2705 = vpack.c.b16 %v2057, %v2049
    %v2706 = vpack.c.b16 %v2058, %v2050
    %v2707 = vpack.c.b16 %v2067, %v2059
    %v2708 = vpack.c.b16 %v2068, %v2060
    %v2709 = vpack.c.b16 %v2069, %v2061
    %v2710 = vpack.c.b16 %v2070, %v2062
    %v2711 = vpack.c.b16 %v2071, %v2063
    %v2712 = vpack.c.b16 %v2072, %v2064
    %v2713 = vpack.c.b16 %v2073, %v2065
    %v2714 = vpack.c.b16 %v2074, %v2066
    %v2715 = vpack.c.b16 %v2083, %v2075
    %v2716 = vpack.c.b16 %v2084, %v2076
    %v2717 = vpack.c.b16 %v2085, %v2077
    %v2718 = vpack.c.b16 %v2086, %v2078
    %v2719 = vpack.c.b16 %v2087, %v2079
    %v2720 = vpack.c.b16 %v2088, %v2080
    %v2721 = vpack.c.b16 %v2089, %v2081
    %v2722 = vpack.c.b16 %v2090, %v2082
    %v2723 = vpack.c.b16 %v2099, %v2091
    %v2724 = vpack.c.b16 %v2100, %v2092
    %v2725 = vpack.c.b16 %v2101, %v2093
    %v2726 = vpack.c.b16 %v2102, %v2094
    %v2727 = vpack.c.b16 %v2103, %v2095
    %v2728 = vpack.c.b16 %v2104, %v2096
    %v2729 = vpack.c.b16 %v2105, %v2097
    %v2730 = vpack.c.b16 %v2106, %v2098
    %v2731 = vpack.c.b16 %v2115, %v2107
    %v2732 = vpack.c.b16 %v2116, %v2108
    %v2733 = vpack.c.b16 %v2117, %v2109
    %v2734 = vpack.c.b16 %v2118, %v2110
    %v2735 = vpack.c.b16 %v2119, %v2111
    %v2736 = vpack.c.b16 %v2120, %v2112
    %v2737 = vpack.c.b16 %v2121, %v2113
    %v2738 = vpack.c.b16 %v2122, %v2114
    %v2739 = vpack.c.b16 %v2131, %v2123
    %v2740 = vpack.c.b16 %v2132, %v2124
    %v2741 = vpack.c.b16 %v2133, %v2125
    %v2742 = vpack.c.b16 %v2134, %v2126
    %v2743 = vpack.c.b16 %v2135, %v2127
    %v2744 = vpack.c.b16 %v2136, %v2128
    %v2745 = vpack.c.b16 %v2137, %v2129
    %v2746 = vpack.c.b16 %v2138, %v2130
    %v2747 = vpack.c.b16 %v2147, %v2139
    %v2748 = vpack.c.b16 %v2148, %v2140
    %v2749 = vpack.c.b16 %v2149, %v2141
    %v2750 = vpack.c.b16 %v2150, %v2142
    %v2751 = vpack.c.b16 %v2151, %v2143
    %v2752 = vpack.c.b16 %v2152, %v2144
    %v2753 = vpack.c.b16 %v2153, %v2145
    %v2754 = vpack.c.b16 %v2154, %v2146
    %v2755 = vpack.c.b16 %v2163, %v2155
    %v2756 = vpack.c.b16 %v2164, %v2156
    %v2757 = vpack.c.b16 %v2165, %v2157
    %v2758 = vpack.c.b16 %v2166, %v2158
    %v2759 = vpack.c.b16 %v2167, %v2159
    %v2760 = vpack.c.b16 %v2168, %v2160
    %v2761 = vpack.c.b16 %v2169, %v2161
    %v2762 = vpack.c.b16 %v2170, %v2162
    %v2763 = vpack.c.b16 %v2179, %v2171
    %v2764 = vpack.c.b16 %v2180, %v2172
    %v2765 = vpack.c.b16 %v2181, %v2173
    %v2766 = vpack.c.b16 %v2182, %v2174
    %v2767 = vpack.c.b16 %v2183, %v2175
    %v2768 = vpack.c.b16 %v2184, %v2176
    %v2769 = vpack.c.b16 %v2185, %v2177
    %v2770 = vpack.c.b16 %v2186, %v2178
    %v2771 = vpack.c.b16 %v2195, %v2187
    %v2772 = vpack.c.b16 %v2196, %v2188
    %v2773 = vpack.c.b16 %v2197, %v2189
    %v2774 = vpack.c.b16 %v2198, %v2190
    %v2775 = vpack.c.b16 %v2199, %v2191
    %v2776 = vpack.c.b16 %v2200, %v2192
    %v2777 = vpack.c.b16 %v2201, %v2193
    %v2778 = vpack.c.b16 %v2202, %v2194
    %v2779 = vpack.c.b16 %v2211, %v2203
    %v2780 = vpack.c.b16 %v2212, %v2204
    %v2781 = vpack.c.b16 %v2213, %v2205
    %v2782 = vpack.c.b16 %v2214, %v2206
    %v2783 = vpack.c.b16 %v2215, %v2207
    %v2784 = vpack.c.b16 %v2216, %v2208
    %v2785 = vpack.c.b16 %v2217, %v2209
    %v2786 = vpack.c.b16 %v2218, %v2210
    %v2787 = vpack.c.b16 %v2227, %v2219
    %v2788 = vpack.c.b16 %v2228, %v2220
    %v2789 = vpack.c.b16 %v2229, %v2221
    %v2790 = vpack.c.b16 %v2230, %v2222
    %v2791 = vpack.c.b16 %v2231, %v2223
    %v2792 = vpack.c.b16 %v2232, %v2224
    %v2793 = vpack.c.b16 %v2233, %v2225
    %v2794 = vpack.c.b16 %v2234, %v2226
    %v2795 = vpack.c.b16 %v2243, %v2235
    %v2796 = vpack.c.b16 %v2244, %v2236
    %v2797 = vpack.c.b16 %v2245, %v2237
    %v2798 = vpack.c.b16 %v2246, %v2238
    %v2799 = vpack.c.b16 %v2247, %v2239
    %v2800 = vpack.c.b16 %v2248, %v2240
    %v2801 = vpack.c.b16 %v2249, %v2241
    %v2802 = vpack.c.b16 %v2250, %v2242
    %v2803 = vpack.c.b16 %v2259, %v2251
    %v2804 = vpack.c.b16 %v2260, %v2252
    %v2805 = vpack.c.b16 %v2261, %v2253
    %v2806 = vpack.c.b16 %v2262, %v2254
    %v2807 = vpack.c.b16 %v2263, %v2255
    %v2808 = vpack.c.b16 %v2264, %v2256
    %v2809 = vpack.c.b16 %v2265, %v2257
    %v2810 = vpack.c.b16 %v2266, %v2258
    %v2811 = vpack.c.b16 %v2275, %v2267
    %v2812 = vpack.c.b16 %v2276, %v2268
    %v2813 = vpack.c.b16 %v2277, %v2269
    %v2814 = vpack.c.b16 %v2278, %v2270
    %v2815 = vpack.c.b16 %v2279, %v2271
    %v2816 = vpack.c.b16 %v2280, %v2272
    %v2817 = vpack.c.b16 %v2281, %v2273
    %v2818 = vpack.c.b16 %v2282, %v2274
    %v2819 = vpack.c.b16 %v2291, %v2283
    %v2820 = vpack.c.b16 %v2292, %v2284
    %v2821 = vpack.c.b16 %v2293, %v2285
    %v2822 = vpack.c.b16 %v2294, %v2286
    %v2823 = vpack.c.b16 %v2295, %v2287
    %v2824 = vpack.c.b16 %v2296, %v2288
    %v2825 = vpack.c.b16 %v2297, %v2289
    %v2826 = vpack.c.b16 %v2298, %v2290
    %v2827 = vpack.c.b16 %v2307, %v2299
    %v2828 = vpack.c.b16 %v2308, %v2300
    %v2829 = vpack.c.b16 %v2309, %v2301
    %v2830 = vpack.c.b16 %v2310, %v2302
    %v2831 = vpack.c.b16 %v2311, %v2303
    %v2832 = vpack.c.b16 %v2312, %v2304
    %v2833 = vpack.c.b16 %v2313, %v2305
    %v2834 = vpack.c.b16 %v2314, %v2306
    %v2835 = vpack.c.b16 %v2323, %v2315
    %v2836 = vpack.c.b16 %v2324, %v2316
    %v2837 = vpack.c.b16 %v2325, %v2317
    %v2838 = vpack.c.b16 %v2326, %v2318
    %v2839 = vpack.c.b16 %v2327, %v2319
    %v2840 = vpack.c.b16 %v2328, %v2320
    %v2841 = vpack.c.b16 %v2329, %v2321
    %v2842 = vpack.c.b16 %v2330, %v2322
    %3355 = vmatpush.bf16.msra.mxu0 %v2387
    %3356 = vmatpush.bf16.msra.mxu0 %v2379
    %3357 = vmatpush.bf16.msra.mxu0 %v2371
    %3358 = vmatpush.bf16.msra.mxu0 %v2363
    %3359 = vmatpush.bf16.msra.mxu0 %v2355
    %3360 = vmatpush.bf16.msra.mxu0 %v2347
    %3361 = vmatpush.bf16.msra.mxu0 %v2339
    %3362 = vmatpush.bf16.msra.mxu0 %v2331
    %3363 = vmatmul.bf16.gmra.mxu0 %v779
    %v3364 = vpop.f32.mrf.mxu0
    %v3365 = vadd.f32 %v751, %v3364
    %v3366 = vpop.f32.mrf.mxu0
    %3367 = vdwg.mxu0
    %3368 = vmatpush.bf16.msra.mxu0 %v2451
    %3369 = vmatpush.bf16.msra.mxu0 %v2443
    %3370 = vmatpush.bf16.msra.mxu0 %v2435
    %3371 = vmatpush.bf16.msra.mxu0 %v2427
    %3372 = vmatpush.bf16.msra.mxu0 %v2419
    %3373 = vmatpush.bf16.msra.mxu0 %v2411
    %3374 = vmatpush.bf16.msra.mxu0 %v2403
    %3375 = vmatpush.bf16.msra.mxu0 %v2395
    %3376 = vmatmul.bf16.gmra.mxu0 %v780
    %v3377 = vpop.f32.mrf.mxu0
    %v3378 = vadd.f32 %v3365, %v3377
    %v3379 = vpop.f32.mrf.mxu0
    %3380 = vdwg.mxu0
    %3381 = vmatpush.bf16.msra.mxu0 %v2515
    %3382 = vmatpush.bf16.msra.mxu0 %v2507
    %3383 = vmatpush.bf16.msra.mxu0 %v2499
    %3384 = vmatpush.bf16.msra.mxu0 %v2491
    %3385 = vmatpush.bf16.msra.mxu0 %v2483
    %3386 = vmatpush.bf16.msra.mxu0 %v2475
    %3387 = vmatpush.bf16.msra.mxu0 %v2467
    %3388 = vmatpush.bf16.msra.mxu0 %v2459
    %3389 = vmatmul.bf16.gmra.mxu0 %v781
    %v3390 = vpop.f32.mrf.mxu0
    %v3391 = vadd.f32 %v3378, %v3390
    %v3392 = vpop.f32.mrf.mxu0
    %3393 = vdwg.mxu0
    %3394 = vmatpush.bf16.msra.mxu0 %v2579
    %3395 = vmatpush.bf16.msra.mxu0 %v2571
    %3396 = vmatpush.bf16.msra.mxu0 %v2563
    %3397 = vmatpush.bf16.msra.mxu0 %v2555
    %3398 = vmatpush.bf16.msra.mxu0 %v2547
    %3399 = vmatpush.bf16.msra.mxu0 %v2539
    %3400 = vmatpush.bf16.msra.mxu0 %v2531
    %3401 = vmatpush.bf16.msra.mxu0 %v2523
    %3402 = vmatmul.bf16.gmra.mxu0 %v782
    %v3403 = vpop.f32.mrf.mxu0
    %v3404 = vadd.f32 %v3391, %v3403
    %v3405 = vpop.f32.mrf.mxu0
    %3406 = vdwg.mxu0
    %3407 = vmatpush.bf16.msra.mxu0 %v2643
    %3408 = vmatpush.bf16.msra.mxu0 %v2635
    %3409 = vmatpush.bf16.msra.mxu0 %v2627
    %3410 = vmatpush.bf16.msra.mxu0 %v2619
    %3411 = vmatpush.bf16.msra.mxu0 %v2611
    %3412 = vmatpush.bf16.msra.mxu0 %v2603
    %3413 = vmatpush.bf16.msra.mxu0 %v2595
    %3414 = vmatpush.bf16.msra.mxu0 %v2587
    %3415 = vmatmul.bf16.gmra.mxu0 %v783
    %v3416 = vpop.f32.mrf.mxu0
    %v3417 = vadd.f32 %v3404, %v3416
    %v3418 = vpop.f32.mrf.mxu0
    %3419 = vdwg.mxu0
    %3420 = vmatpush.bf16.msra.mxu0 %v2707
    %3421 = vmatpush.bf16.msra.mxu0 %v2699
    %3422 = vmatpush.bf16.msra.mxu0 %v2691
    %3423 = vmatpush.bf16.msra.mxu0 %v2683
    %3424 = vmatpush.bf16.msra.mxu0 %v2675
    %3425 = vmatpush.bf16.msra.mxu0 %v2667
    %3426 = vmatpush.bf16.msra.mxu0 %v2659
    %3427 = vmatpush.bf16.msra.mxu0 %v2651
    %3428 = vmatmul.bf16.gmra.mxu0 %v784
    %v3429 = vpop.f32.mrf.mxu0
    %v3430 = vadd.f32 %v3417, %v3429
    %v3431 = vpop.f32.mrf.mxu0
    %3432 = vdwg.mxu0
    %3433 = vmatpush.bf16.msra.mxu0 %v2771
    %3434 = vmatpush.bf16.msra.mxu0 %v2763
    %3435 = vmatpush.bf16.msra.mxu0 %v2755
    %3436 = vmatpush.bf16.msra.mxu0 %v2747
    %3437 = vmatpush.bf16.msra.mxu0 %v2739
    %3438 = vmatpush.bf16.msra.mxu0 %v2731
    %3439 = vmatpush.bf16.msra.mxu0 %v2723
    %3440 = vmatpush.bf16.msra.mxu0 %v2715
    %3441 = vmatmul.bf16.gmra.mxu0 %v785
    %v3442 = vpop.f32.mrf.mxu0
    %v3443 = vadd.f32 %v3430, %v3442
    %v3444 = vpop.f32.mrf.mxu0
    %3445 = vdwg.mxu0
    %3446 = vmatpush.bf16.msra.mxu0 %v2835
    %3447 = vmatpush.bf16.msra.mxu0 %v2827
    %3448 = vmatpush.bf16.msra.mxu0 %v2819
    %3449 = vmatpush.bf16.msra.mxu0 %v2811
    %3450 = vmatpush.bf16.msra.mxu0 %v2803
    %3451 = vmatpush.bf16.msra.mxu0 %v2795
    %3452 = vmatpush.bf16.msra.mxu0 %v2787
    %3453 = vmatpush.bf16.msra.mxu0 %v2779
    %3454 = vmatmul.bf16.gmra.mxu0 %v786
    %v3455 = vpop.f32.mrf.mxu0
    %v3456 = vadd.f32 %v3443, %v3455
    %v3457 = vpop.f32.mrf.mxu0
    %3458 = vdwg.mxu0
    %3459 = vmatpush.bf16.msra.mxu0 %v2388
    %3460 = vmatpush.bf16.msra.mxu0 %v2380
    %3461 = vmatpush.bf16.msra.mxu0 %v2372
    %3462 = vmatpush.bf16.msra.mxu0 %v2364
    %3463 = vmatpush.bf16.msra.mxu0 %v2356
    %3464 = vmatpush.bf16.msra.mxu0 %v2348
    %3465 = vmatpush.bf16.msra.mxu0 %v2340
    %3466 = vmatpush.bf16.msra.mxu0 %v2332
    %3467 = vmatmul.bf16.gmra.mxu0 %v779
    %v3468 = vpop.f32.mrf.mxu0
    %v3469 = vadd.f32 %v752, %v3468
    %v3470 = vpop.f32.mrf.mxu0
    %3471 = vdwg.mxu0
    %3472 = vmatpush.bf16.msra.mxu0 %v2452
    %3473 = vmatpush.bf16.msra.mxu0 %v2444
    %3474 = vmatpush.bf16.msra.mxu0 %v2436
    %3475 = vmatpush.bf16.msra.mxu0 %v2428
    %3476 = vmatpush.bf16.msra.mxu0 %v2420
    %3477 = vmatpush.bf16.msra.mxu0 %v2412
    %3478 = vmatpush.bf16.msra.mxu0 %v2404
    %3479 = vmatpush.bf16.msra.mxu0 %v2396
    %3480 = vmatmul.bf16.gmra.mxu0 %v780
    %v3481 = vpop.f32.mrf.mxu0
    %v3482 = vadd.f32 %v3469, %v3481
    %v3483 = vpop.f32.mrf.mxu0
    %3484 = vdwg.mxu0
    %3485 = vmatpush.bf16.msra.mxu0 %v2516
    %3486 = vmatpush.bf16.msra.mxu0 %v2508
    %3487 = vmatpush.bf16.msra.mxu0 %v2500
    %3488 = vmatpush.bf16.msra.mxu0 %v2492
    %3489 = vmatpush.bf16.msra.mxu0 %v2484
    %3490 = vmatpush.bf16.msra.mxu0 %v2476
    %3491 = vmatpush.bf16.msra.mxu0 %v2468
    %3492 = vmatpush.bf16.msra.mxu0 %v2460
    %3493 = vmatmul.bf16.gmra.mxu0 %v781
    %v3494 = vpop.f32.mrf.mxu0
    %v3495 = vadd.f32 %v3482, %v3494
    %v3496 = vpop.f32.mrf.mxu0
    %3497 = vdwg.mxu0
    %3498 = vmatpush.bf16.msra.mxu0 %v2580
    %3499 = vmatpush.bf16.msra.mxu0 %v2572
    %3500 = vmatpush.bf16.msra.mxu0 %v2564
    %3501 = vmatpush.bf16.msra.mxu0 %v2556
    %3502 = vmatpush.bf16.msra.mxu0 %v2548
    %3503 = vmatpush.bf16.msra.mxu0 %v2540
    %3504 = vmatpush.bf16.msra.mxu0 %v2532
    %3505 = vmatpush.bf16.msra.mxu0 %v2524
    %3506 = vmatmul.bf16.gmra.mxu0 %v782
    %v3507 = vpop.f32.mrf.mxu0
    %v3508 = vadd.f32 %v3495, %v3507
    %v3509 = vpop.f32.mrf.mxu0
    %3510 = vdwg.mxu0
    %3511 = vmatpush.bf16.msra.mxu0 %v2644
    %3512 = vmatpush.bf16.msra.mxu0 %v2636
    %3513 = vmatpush.bf16.msra.mxu0 %v2628
    %3514 = vmatpush.bf16.msra.mxu0 %v2620
    %3515 = vmatpush.bf16.msra.mxu0 %v2612
    %3516 = vmatpush.bf16.msra.mxu0 %v2604
    %3517 = vmatpush.bf16.msra.mxu0 %v2596
    %3518 = vmatpush.bf16.msra.mxu0 %v2588
    %3519 = vmatmul.bf16.gmra.mxu0 %v783
    %v3520 = vpop.f32.mrf.mxu0
    %v3521 = vadd.f32 %v3508, %v3520
    %v3522 = vpop.f32.mrf.mxu0
    %3523 = vdwg.mxu0
    %3524 = vmatpush.bf16.msra.mxu0 %v2708
    %3525 = vmatpush.bf16.msra.mxu0 %v2700
    %3526 = vmatpush.bf16.msra.mxu0 %v2692
    %3527 = vmatpush.bf16.msra.mxu0 %v2684
    %3528 = vmatpush.bf16.msra.mxu0 %v2676
    %3529 = vmatpush.bf16.msra.mxu0 %v2668
    %3530 = vmatpush.bf16.msra.mxu0 %v2660
    %3531 = vmatpush.bf16.msra.mxu0 %v2652
    %3532 = vmatmul.bf16.gmra.mxu0 %v784
    %v3533 = vpop.f32.mrf.mxu0
    %v3534 = vadd.f32 %v3521, %v3533
    %v3535 = vpop.f32.mrf.mxu0
    %3536 = vdwg.mxu0
    %3537 = vmatpush.bf16.msra.mxu0 %v2772
    %3538 = vmatpush.bf16.msra.mxu0 %v2764
    %3539 = vmatpush.bf16.msra.mxu0 %v2756
    %3540 = vmatpush.bf16.msra.mxu0 %v2748
    %3541 = vmatpush.bf16.msra.mxu0 %v2740
    %3542 = vmatpush.bf16.msra.mxu0 %v2732
    %3543 = vmatpush.bf16.msra.mxu0 %v2724
    %3544 = vmatpush.bf16.msra.mxu0 %v2716
    %3545 = vmatmul.bf16.gmra.mxu0 %v785
    %v3546 = vpop.f32.mrf.mxu0
    %v3547 = vadd.f32 %v3534, %v3546
    %v3548 = vpop.f32.mrf.mxu0
    %3549 = vdwg.mxu0
    %3550 = vmatpush.bf16.msra.mxu0 %v2836
    %3551 = vmatpush.bf16.msra.mxu0 %v2828
    %3552 = vmatpush.bf16.msra.mxu0 %v2820
    %3553 = vmatpush.bf16.msra.mxu0 %v2812
    %3554 = vmatpush.bf16.msra.mxu0 %v2804
    %3555 = vmatpush.bf16.msra.mxu0 %v2796
    %3556 = vmatpush.bf16.msra.mxu0 %v2788
    %3557 = vmatpush.bf16.msra.mxu0 %v2780
    %3558 = vmatmul.bf16.gmra.mxu0 %v786
    %v3559 = vpop.f32.mrf.mxu0
    %v3560 = vadd.f32 %v3547, %v3559
    %v3561 = vpop.f32.mrf.mxu0
    %3562 = vdwg.mxu0
    %3563 = vmatpush.bf16.msra.mxu0 %v2389
    %3564 = vmatpush.bf16.msra.mxu0 %v2381
    %3565 = vmatpush.bf16.msra.mxu0 %v2373
    %3566 = vmatpush.bf16.msra.mxu0 %v2365
    %3567 = vmatpush.bf16.msra.mxu0 %v2357
    %3568 = vmatpush.bf16.msra.mxu0 %v2349
    %3569 = vmatpush.bf16.msra.mxu0 %v2341
    %3570 = vmatpush.bf16.msra.mxu0 %v2333
    %3571 = vmatmul.bf16.gmra.mxu0 %v779
    %v3572 = vpop.f32.mrf.mxu0
    %v3573 = vadd.f32 %v753, %v3572
    %v3574 = vpop.f32.mrf.mxu0
    %3575 = vdwg.mxu0
    %3576 = vmatpush.bf16.msra.mxu0 %v2453
    %3577 = vmatpush.bf16.msra.mxu0 %v2445
    %3578 = vmatpush.bf16.msra.mxu0 %v2437
    %3579 = vmatpush.bf16.msra.mxu0 %v2429
    %3580 = vmatpush.bf16.msra.mxu0 %v2421
    %3581 = vmatpush.bf16.msra.mxu0 %v2413
    %3582 = vmatpush.bf16.msra.mxu0 %v2405
    %3583 = vmatpush.bf16.msra.mxu0 %v2397
    %3584 = vmatmul.bf16.gmra.mxu0 %v780
    %v3585 = vpop.f32.mrf.mxu0
    %v3586 = vadd.f32 %v3573, %v3585
    %v3587 = vpop.f32.mrf.mxu0
    %3588 = vdwg.mxu0
    %3589 = vmatpush.bf16.msra.mxu0 %v2517
    %3590 = vmatpush.bf16.msra.mxu0 %v2509
    %3591 = vmatpush.bf16.msra.mxu0 %v2501
    %3592 = vmatpush.bf16.msra.mxu0 %v2493
    %3593 = vmatpush.bf16.msra.mxu0 %v2485
    %3594 = vmatpush.bf16.msra.mxu0 %v2477
    %3595 = vmatpush.bf16.msra.mxu0 %v2469
    %3596 = vmatpush.bf16.msra.mxu0 %v2461
    %3597 = vmatmul.bf16.gmra.mxu0 %v781
    %v3598 = vpop.f32.mrf.mxu0
    %v3599 = vadd.f32 %v3586, %v3598
    %v3600 = vpop.f32.mrf.mxu0
    %3601 = vdwg.mxu0
    %3602 = vmatpush.bf16.msra.mxu0 %v2581
    %3603 = vmatpush.bf16.msra.mxu0 %v2573
    %3604 = vmatpush.bf16.msra.mxu0 %v2565
    %3605 = vmatpush.bf16.msra.mxu0 %v2557
    %3606 = vmatpush.bf16.msra.mxu0 %v2549
    %3607 = vmatpush.bf16.msra.mxu0 %v2541
    %3608 = vmatpush.bf16.msra.mxu0 %v2533
    %3609 = vmatpush.bf16.msra.mxu0 %v2525
    %3610 = vmatmul.bf16.gmra.mxu0 %v782
    %v3611 = vpop.f32.mrf.mxu0
    %v3612 = vadd.f32 %v3599, %v3611
    %v3613 = vpop.f32.mrf.mxu0
    %3614 = vdwg.mxu0
    %3615 = vmatpush.bf16.msra.mxu0 %v2645
    %3616 = vmatpush.bf16.msra.mxu0 %v2637
    %3617 = vmatpush.bf16.msra.mxu0 %v2629
    %3618 = vmatpush.bf16.msra.mxu0 %v2621
    %3619 = vmatpush.bf16.msra.mxu0 %v2613
    %3620 = vmatpush.bf16.msra.mxu0 %v2605
    %3621 = vmatpush.bf16.msra.mxu0 %v2597
    %3622 = vmatpush.bf16.msra.mxu0 %v2589
    %3623 = vmatmul.bf16.gmra.mxu0 %v783
    %v3624 = vpop.f32.mrf.mxu0
    %v3625 = vadd.f32 %v3612, %v3624
    %v3626 = vpop.f32.mrf.mxu0
    %3627 = vdwg.mxu0
    %3628 = vmatpush.bf16.msra.mxu0 %v2709
    %3629 = vmatpush.bf16.msra.mxu0 %v2701
    %3630 = vmatpush.bf16.msra.mxu0 %v2693
    %3631 = vmatpush.bf16.msra.mxu0 %v2685
    %3632 = vmatpush.bf16.msra.mxu0 %v2677
    %3633 = vmatpush.bf16.msra.mxu0 %v2669
    %3634 = vmatpush.bf16.msra.mxu0 %v2661
    %3635 = vmatpush.bf16.msra.mxu0 %v2653
    %3636 = vmatmul.bf16.gmra.mxu0 %v784
    %v3637 = vpop.f32.mrf.mxu0
    %v3638 = vadd.f32 %v3625, %v3637
    %v3639 = vpop.f32.mrf.mxu0
    %3640 = vdwg.mxu0
    %3641 = vmatpush.bf16.msra.mxu0 %v2773
    %3642 = vmatpush.bf16.msra.mxu0 %v2765
    %3643 = vmatpush.bf16.msra.mxu0 %v2757
    %3644 = vmatpush.bf16.msra.mxu0 %v2749
    %3645 = vmatpush.bf16.msra.mxu0 %v2741
    %3646 = vmatpush.bf16.msra.mxu0 %v2733
    %3647 = vmatpush.bf16.msra.mxu0 %v2725
    %3648 = vmatpush.bf16.msra.mxu0 %v2717
    %3649 = vmatmul.bf16.gmra.mxu0 %v785
    %v3650 = vpop.f32.mrf.mxu0
    %v3651 = vadd.f32 %v3638, %v3650
    %v3652 = vpop.f32.mrf.mxu0
    %3653 = vdwg.mxu0
    %3654 = vmatpush.bf16.msra.mxu0 %v2837
    %3655 = vmatpush.bf16.msra.mxu0 %v2829
    %3656 = vmatpush.bf16.msra.mxu0 %v2821
    %3657 = vmatpush.bf16.msra.mxu0 %v2813
    %3658 = vmatpush.bf16.msra.mxu0 %v2805
    %3659 = vmatpush.bf16.msra.mxu0 %v2797
    %3660 = vmatpush.bf16.msra.mxu0 %v2789
    %3661 = vmatpush.bf16.msra.mxu0 %v2781
    %3662 = vmatmul.bf16.gmra.mxu0 %v786
    %v3663 = vpop.f32.mrf.mxu0
    %v3664 = vadd.f32 %v3651, %v3663
    %v3665 = vpop.f32.mrf.mxu0
    %3666 = vdwg.mxu0
    %3667 = vmatpush.bf16.msra.mxu0 %v2390
    %3668 = vmatpush.bf16.msra.mxu0 %v2382
    %3669 = vmatpush.bf16.msra.mxu0 %v2374
    %3670 = vmatpush.bf16.msra.mxu0 %v2366
    %3671 = vmatpush.bf16.msra.mxu0 %v2358
    %3672 = vmatpush.bf16.msra.mxu0 %v2350
    %3673 = vmatpush.bf16.msra.mxu0 %v2342
    %3674 = vmatpush.bf16.msra.mxu0 %v2334
    %3675 = vmatmul.bf16.gmra.mxu0 %v779
    %v3676 = vpop.f32.mrf.mxu0
    %v3677 = vadd.f32 %v754, %v3676
    %v3678 = vpop.f32.mrf.mxu0
    %3679 = vdwg.mxu0
    %3680 = vmatpush.bf16.msra.mxu0 %v2454
    %3681 = vmatpush.bf16.msra.mxu0 %v2446
    %3682 = vmatpush.bf16.msra.mxu0 %v2438
    %3683 = vmatpush.bf16.msra.mxu0 %v2430
    %3684 = vmatpush.bf16.msra.mxu0 %v2422
    %3685 = vmatpush.bf16.msra.mxu0 %v2414
    %3686 = vmatpush.bf16.msra.mxu0 %v2406
    %3687 = vmatpush.bf16.msra.mxu0 %v2398
    %3688 = vmatmul.bf16.gmra.mxu0 %v780
    %v3689 = vpop.f32.mrf.mxu0
    %v3690 = vadd.f32 %v3677, %v3689
    %v3691 = vpop.f32.mrf.mxu0
    %3692 = vdwg.mxu0
    %3693 = vmatpush.bf16.msra.mxu0 %v2518
    %3694 = vmatpush.bf16.msra.mxu0 %v2510
    %3695 = vmatpush.bf16.msra.mxu0 %v2502
    %3696 = vmatpush.bf16.msra.mxu0 %v2494
    %3697 = vmatpush.bf16.msra.mxu0 %v2486
    %3698 = vmatpush.bf16.msra.mxu0 %v2478
    %3699 = vmatpush.bf16.msra.mxu0 %v2470
    %3700 = vmatpush.bf16.msra.mxu0 %v2462
    %3701 = vmatmul.bf16.gmra.mxu0 %v781
    %v3702 = vpop.f32.mrf.mxu0
    %v3703 = vadd.f32 %v3690, %v3702
    %v3704 = vpop.f32.mrf.mxu0
    %3705 = vdwg.mxu0
    %3706 = vmatpush.bf16.msra.mxu0 %v2582
    %3707 = vmatpush.bf16.msra.mxu0 %v2574
    %3708 = vmatpush.bf16.msra.mxu0 %v2566
    %3709 = vmatpush.bf16.msra.mxu0 %v2558
    %3710 = vmatpush.bf16.msra.mxu0 %v2550
    %3711 = vmatpush.bf16.msra.mxu0 %v2542
    %3712 = vmatpush.bf16.msra.mxu0 %v2534
    %3713 = vmatpush.bf16.msra.mxu0 %v2526
    %3714 = vmatmul.bf16.gmra.mxu0 %v782
    %v3715 = vpop.f32.mrf.mxu0
    %v3716 = vadd.f32 %v3703, %v3715
    %v3717 = vpop.f32.mrf.mxu0
    %3718 = vdwg.mxu0
    %3719 = vmatpush.bf16.msra.mxu0 %v2646
    %3720 = vmatpush.bf16.msra.mxu0 %v2638
    %3721 = vmatpush.bf16.msra.mxu0 %v2630
    %3722 = vmatpush.bf16.msra.mxu0 %v2622
    %3723 = vmatpush.bf16.msra.mxu0 %v2614
    %3724 = vmatpush.bf16.msra.mxu0 %v2606
    %3725 = vmatpush.bf16.msra.mxu0 %v2598
    %3726 = vmatpush.bf16.msra.mxu0 %v2590
    %3727 = vmatmul.bf16.gmra.mxu0 %v783
    %v3728 = vpop.f32.mrf.mxu0
    %v3729 = vadd.f32 %v3716, %v3728
    %v3730 = vpop.f32.mrf.mxu0
    %3731 = vdwg.mxu0
    %3732 = vmatpush.bf16.msra.mxu0 %v2710
    %3733 = vmatpush.bf16.msra.mxu0 %v2702
    %3734 = vmatpush.bf16.msra.mxu0 %v2694
    %3735 = vmatpush.bf16.msra.mxu0 %v2686
    %3736 = vmatpush.bf16.msra.mxu0 %v2678
    %3737 = vmatpush.bf16.msra.mxu0 %v2670
    %3738 = vmatpush.bf16.msra.mxu0 %v2662
    %3739 = vmatpush.bf16.msra.mxu0 %v2654
    %3740 = vmatmul.bf16.gmra.mxu0 %v784
    %v3741 = vpop.f32.mrf.mxu0
    %v3742 = vadd.f32 %v3729, %v3741
    %v3743 = vpop.f32.mrf.mxu0
    %3744 = vdwg.mxu0
    %3745 = vmatpush.bf16.msra.mxu0 %v2774
    %3746 = vmatpush.bf16.msra.mxu0 %v2766
    %3747 = vmatpush.bf16.msra.mxu0 %v2758
    %3748 = vmatpush.bf16.msra.mxu0 %v2750
    %3749 = vmatpush.bf16.msra.mxu0 %v2742
    %3750 = vmatpush.bf16.msra.mxu0 %v2734
    %3751 = vmatpush.bf16.msra.mxu0 %v2726
    %3752 = vmatpush.bf16.msra.mxu0 %v2718
    %3753 = vmatmul.bf16.gmra.mxu0 %v785
    %v3754 = vpop.f32.mrf.mxu0
    %v3755 = vadd.f32 %v3742, %v3754
    %v3756 = vpop.f32.mrf.mxu0
    %3757 = vdwg.mxu0
    %3758 = vmatpush.bf16.msra.mxu0 %v2838
    %3759 = vmatpush.bf16.msra.mxu0 %v2830
    %3760 = vmatpush.bf16.msra.mxu0 %v2822
    %3761 = vmatpush.bf16.msra.mxu0 %v2814
    %3762 = vmatpush.bf16.msra.mxu0 %v2806
    %3763 = vmatpush.bf16.msra.mxu0 %v2798
    %3764 = vmatpush.bf16.msra.mxu0 %v2790
    %3765 = vmatpush.bf16.msra.mxu0 %v2782
    %3766 = vmatmul.bf16.gmra.mxu0 %v786
    %v3767 = vpop.f32.mrf.mxu0
    %v3768 = vadd.f32 %v3755, %v3767
    %v3769 = vpop.f32.mrf.mxu0
    %3770 = vdwg.mxu0
    %3771 = vmatpush.bf16.msra.mxu0 %v2391
    %3772 = vmatpush.bf16.msra.mxu0 %v2383
    %3773 = vmatpush.bf16.msra.mxu0 %v2375
    %3774 = vmatpush.bf16.msra.mxu0 %v2367
    %3775 = vmatpush.bf16.msra.mxu0 %v2359
    %3776 = vmatpush.bf16.msra.mxu0 %v2351
    %3777 = vmatpush.bf16.msra.mxu0 %v2343
    %3778 = vmatpush.bf16.msra.mxu0 %v2335
    %3779 = vmatmul.bf16.gmra.mxu0 %v779
    %v3780 = vpop.f32.mrf.mxu0
    %v3781 = vadd.f32 %v755, %v3780
    %v3782 = vpop.f32.mrf.mxu0
    %3783 = vdwg.mxu0
    %3784 = vmatpush.bf16.msra.mxu0 %v2455
    %3785 = vmatpush.bf16.msra.mxu0 %v2447
    %3786 = vmatpush.bf16.msra.mxu0 %v2439
    %3787 = vmatpush.bf16.msra.mxu0 %v2431
    %3788 = vmatpush.bf16.msra.mxu0 %v2423
    %3789 = vmatpush.bf16.msra.mxu0 %v2415
    %3790 = vmatpush.bf16.msra.mxu0 %v2407
    %3791 = vmatpush.bf16.msra.mxu0 %v2399
    %3792 = vmatmul.bf16.gmra.mxu0 %v780
    %v3793 = vpop.f32.mrf.mxu0
    %v3794 = vadd.f32 %v3781, %v3793
    %v3795 = vpop.f32.mrf.mxu0
    %3796 = vdwg.mxu0
    %3797 = vmatpush.bf16.msra.mxu0 %v2519
    %3798 = vmatpush.bf16.msra.mxu0 %v2511
    %3799 = vmatpush.bf16.msra.mxu0 %v2503
    %3800 = vmatpush.bf16.msra.mxu0 %v2495
    %3801 = vmatpush.bf16.msra.mxu0 %v2487
    %3802 = vmatpush.bf16.msra.mxu0 %v2479
    %3803 = vmatpush.bf16.msra.mxu0 %v2471
    %3804 = vmatpush.bf16.msra.mxu0 %v2463
    %3805 = vmatmul.bf16.gmra.mxu0 %v781
    %v3806 = vpop.f32.mrf.mxu0
    %v3807 = vadd.f32 %v3794, %v3806
    %v3808 = vpop.f32.mrf.mxu0
    %3809 = vdwg.mxu0
    %3810 = vmatpush.bf16.msra.mxu0 %v2583
    %3811 = vmatpush.bf16.msra.mxu0 %v2575
    %3812 = vmatpush.bf16.msra.mxu0 %v2567
    %3813 = vmatpush.bf16.msra.mxu0 %v2559
    %3814 = vmatpush.bf16.msra.mxu0 %v2551
    %3815 = vmatpush.bf16.msra.mxu0 %v2543
    %3816 = vmatpush.bf16.msra.mxu0 %v2535
    %3817 = vmatpush.bf16.msra.mxu0 %v2527
    %3818 = vmatmul.bf16.gmra.mxu0 %v782
    %v3819 = vpop.f32.mrf.mxu0
    %v3820 = vadd.f32 %v3807, %v3819
    %v3821 = vpop.f32.mrf.mxu0
    %3822 = vdwg.mxu0
    %3823 = vmatpush.bf16.msra.mxu0 %v2647
    %3824 = vmatpush.bf16.msra.mxu0 %v2639
    %3825 = vmatpush.bf16.msra.mxu0 %v2631
    %3826 = vmatpush.bf16.msra.mxu0 %v2623
    %3827 = vmatpush.bf16.msra.mxu0 %v2615
    %3828 = vmatpush.bf16.msra.mxu0 %v2607
    %3829 = vmatpush.bf16.msra.mxu0 %v2599
    %3830 = vmatpush.bf16.msra.mxu0 %v2591
    %3831 = vmatmul.bf16.gmra.mxu0 %v783
    %v3832 = vpop.f32.mrf.mxu0
    %v3833 = vadd.f32 %v3820, %v3832
    %v3834 = vpop.f32.mrf.mxu0
    %3835 = vdwg.mxu0
    %3836 = vmatpush.bf16.msra.mxu0 %v2711
    %3837 = vmatpush.bf16.msra.mxu0 %v2703
    %3838 = vmatpush.bf16.msra.mxu0 %v2695
    %3839 = vmatpush.bf16.msra.mxu0 %v2687
    %3840 = vmatpush.bf16.msra.mxu0 %v2679
    %3841 = vmatpush.bf16.msra.mxu0 %v2671
    %3842 = vmatpush.bf16.msra.mxu0 %v2663
    %3843 = vmatpush.bf16.msra.mxu0 %v2655
    %3844 = vmatmul.bf16.gmra.mxu0 %v784
    %v3845 = vpop.f32.mrf.mxu0
    %v3846 = vadd.f32 %v3833, %v3845
    %v3847 = vpop.f32.mrf.mxu0
    %3848 = vdwg.mxu0
    %3849 = vmatpush.bf16.msra.mxu0 %v2775
    %3850 = vmatpush.bf16.msra.mxu0 %v2767
    %3851 = vmatpush.bf16.msra.mxu0 %v2759
    %3852 = vmatpush.bf16.msra.mxu0 %v2751
    %3853 = vmatpush.bf16.msra.mxu0 %v2743
    %3854 = vmatpush.bf16.msra.mxu0 %v2735
    %3855 = vmatpush.bf16.msra.mxu0 %v2727
    %3856 = vmatpush.bf16.msra.mxu0 %v2719
    %3857 = vmatmul.bf16.gmra.mxu0 %v785
    %v3858 = vpop.f32.mrf.mxu0
    %v3859 = vadd.f32 %v3846, %v3858
    %v3860 = vpop.f32.mrf.mxu0
    %3861 = vdwg.mxu0
    %3862 = vmatpush.bf16.msra.mxu0 %v2839
    %3863 = vmatpush.bf16.msra.mxu0 %v2831
    %3864 = vmatpush.bf16.msra.mxu0 %v2823
    %3865 = vmatpush.bf16.msra.mxu0 %v2815
    %3866 = vmatpush.bf16.msra.mxu0 %v2807
    %3867 = vmatpush.bf16.msra.mxu0 %v2799
    %3868 = vmatpush.bf16.msra.mxu0 %v2791
    %3869 = vmatpush.bf16.msra.mxu0 %v2783
    %3870 = vmatmul.bf16.gmra.mxu0 %v786
    %v3871 = vpop.f32.mrf.mxu0
    %v3872 = vadd.f32 %v3859, %v3871
    %v3873 = vpop.f32.mrf.mxu0
    %3874 = vdwg.mxu0
    %3875 = vmatpush.bf16.msra.mxu0 %v2392
    %3876 = vmatpush.bf16.msra.mxu0 %v2384
    %3877 = vmatpush.bf16.msra.mxu0 %v2376
    %3878 = vmatpush.bf16.msra.mxu0 %v2368
    %3879 = vmatpush.bf16.msra.mxu0 %v2360
    %3880 = vmatpush.bf16.msra.mxu0 %v2352
    %3881 = vmatpush.bf16.msra.mxu0 %v2344
    %3882 = vmatpush.bf16.msra.mxu0 %v2336
    %3883 = vmatmul.bf16.gmra.mxu0 %v779
    %v3884 = vpop.f32.mrf.mxu0
    %v3885 = vadd.f32 %v756, %v3884
    %v3886 = vpop.f32.mrf.mxu0
    %3887 = vdwg.mxu0
    %3888 = vmatpush.bf16.msra.mxu0 %v2456
    %3889 = vmatpush.bf16.msra.mxu0 %v2448
    %3890 = vmatpush.bf16.msra.mxu0 %v2440
    %3891 = vmatpush.bf16.msra.mxu0 %v2432
    %3892 = vmatpush.bf16.msra.mxu0 %v2424
    %3893 = vmatpush.bf16.msra.mxu0 %v2416
    %3894 = vmatpush.bf16.msra.mxu0 %v2408
    %3895 = vmatpush.bf16.msra.mxu0 %v2400
    %3896 = vmatmul.bf16.gmra.mxu0 %v780
    %v3897 = vpop.f32.mrf.mxu0
    %v3898 = vadd.f32 %v3885, %v3897
    %v3899 = vpop.f32.mrf.mxu0
    %3900 = vdwg.mxu0
    %3901 = vmatpush.bf16.msra.mxu0 %v2520
    %3902 = vmatpush.bf16.msra.mxu0 %v2512
    %3903 = vmatpush.bf16.msra.mxu0 %v2504
    %3904 = vmatpush.bf16.msra.mxu0 %v2496
    %3905 = vmatpush.bf16.msra.mxu0 %v2488
    %3906 = vmatpush.bf16.msra.mxu0 %v2480
    %3907 = vmatpush.bf16.msra.mxu0 %v2472
    %3908 = vmatpush.bf16.msra.mxu0 %v2464
    %3909 = vmatmul.bf16.gmra.mxu0 %v781
    %v3910 = vpop.f32.mrf.mxu0
    %v3911 = vadd.f32 %v3898, %v3910
    %v3912 = vpop.f32.mrf.mxu0
    %3913 = vdwg.mxu0
    %3914 = vmatpush.bf16.msra.mxu0 %v2584
    %3915 = vmatpush.bf16.msra.mxu0 %v2576
    %3916 = vmatpush.bf16.msra.mxu0 %v2568
    %3917 = vmatpush.bf16.msra.mxu0 %v2560
    %3918 = vmatpush.bf16.msra.mxu0 %v2552
    %3919 = vmatpush.bf16.msra.mxu0 %v2544
    %3920 = vmatpush.bf16.msra.mxu0 %v2536
    %3921 = vmatpush.bf16.msra.mxu0 %v2528
    %3922 = vmatmul.bf16.gmra.mxu0 %v782
    %v3923 = vpop.f32.mrf.mxu0
    %v3924 = vadd.f32 %v3911, %v3923
    %v3925 = vpop.f32.mrf.mxu0
    %3926 = vdwg.mxu0
    %3927 = vmatpush.bf16.msra.mxu0 %v2648
    %3928 = vmatpush.bf16.msra.mxu0 %v2640
    %3929 = vmatpush.bf16.msra.mxu0 %v2632
    %3930 = vmatpush.bf16.msra.mxu0 %v2624
    %3931 = vmatpush.bf16.msra.mxu0 %v2616
    %3932 = vmatpush.bf16.msra.mxu0 %v2608
    %3933 = vmatpush.bf16.msra.mxu0 %v2600
    %3934 = vmatpush.bf16.msra.mxu0 %v2592
    %3935 = vmatmul.bf16.gmra.mxu0 %v783
    %v3936 = vpop.f32.mrf.mxu0
    %v3937 = vadd.f32 %v3924, %v3936
    %v3938 = vpop.f32.mrf.mxu0
    %3939 = vdwg.mxu0
    %3940 = vmatpush.bf16.msra.mxu0 %v2712
    %3941 = vmatpush.bf16.msra.mxu0 %v2704
    %3942 = vmatpush.bf16.msra.mxu0 %v2696
    %3943 = vmatpush.bf16.msra.mxu0 %v2688
    %3944 = vmatpush.bf16.msra.mxu0 %v2680
    %3945 = vmatpush.bf16.msra.mxu0 %v2672
    %3946 = vmatpush.bf16.msra.mxu0 %v2664
    %3947 = vmatpush.bf16.msra.mxu0 %v2656
    %3948 = vmatmul.bf16.gmra.mxu0 %v784
    %v3949 = vpop.f32.mrf.mxu0
    %v3950 = vadd.f32 %v3937, %v3949
    %v3951 = vpop.f32.mrf.mxu0
    %3952 = vdwg.mxu0
    %3953 = vmatpush.bf16.msra.mxu0 %v2776
    %3954 = vmatpush.bf16.msra.mxu0 %v2768
    %3955 = vmatpush.bf16.msra.mxu0 %v2760
    %3956 = vmatpush.bf16.msra.mxu0 %v2752
    %3957 = vmatpush.bf16.msra.mxu0 %v2744
    %3958 = vmatpush.bf16.msra.mxu0 %v2736
    %3959 = vmatpush.bf16.msra.mxu0 %v2728
    %3960 = vmatpush.bf16.msra.mxu0 %v2720
    %3961 = vmatmul.bf16.gmra.mxu0 %v785
    %v3962 = vpop.f32.mrf.mxu0
    %v3963 = vadd.f32 %v3950, %v3962
    %v3964 = vpop.f32.mrf.mxu0
    %3965 = vdwg.mxu0
    %3966 = vmatpush.bf16.msra.mxu0 %v2840
    %3967 = vmatpush.bf16.msra.mxu0 %v2832
    %3968 = vmatpush.bf16.msra.mxu0 %v2824
    %3969 = vmatpush.bf16.msra.mxu0 %v2816
    %3970 = vmatpush.bf16.msra.mxu0 %v2808
    %3971 = vmatpush.bf16.msra.mxu0 %v2800
    %3972 = vmatpush.bf16.msra.mxu0 %v2792
    %3973 = vmatpush.bf16.msra.mxu0 %v2784
    %3974 = vmatmul.bf16.gmra.mxu0 %v786
    %v3975 = vpop.f32.mrf.mxu0
    %v3976 = vadd.f32 %v3963, %v3975
    %v3977 = vpop.f32.mrf.mxu0
    %3978 = vdwg.mxu0
    %3979 = vmatpush.bf16.msra.mxu0 %v2393
    %3980 = vmatpush.bf16.msra.mxu0 %v2385
    %3981 = vmatpush.bf16.msra.mxu0 %v2377
    %3982 = vmatpush.bf16.msra.mxu0 %v2369
    %3983 = vmatpush.bf16.msra.mxu0 %v2361
    %3984 = vmatpush.bf16.msra.mxu0 %v2353
    %3985 = vmatpush.bf16.msra.mxu0 %v2345
    %3986 = vmatpush.bf16.msra.mxu0 %v2337
    %3987 = vmatmul.bf16.gmra.mxu0 %v779
    %v3988 = vpop.f32.mrf.mxu0
    %v3989 = vadd.f32 %v757, %v3988
    %v3990 = vpop.f32.mrf.mxu0
    %3991 = vdwg.mxu0
    %3992 = vmatpush.bf16.msra.mxu0 %v2457
    %3993 = vmatpush.bf16.msra.mxu0 %v2449
    %3994 = vmatpush.bf16.msra.mxu0 %v2441
    %3995 = vmatpush.bf16.msra.mxu0 %v2433
    %3996 = vmatpush.bf16.msra.mxu0 %v2425
    %3997 = vmatpush.bf16.msra.mxu0 %v2417
    %3998 = vmatpush.bf16.msra.mxu0 %v2409
    %3999 = vmatpush.bf16.msra.mxu0 %v2401
    %4000 = vmatmul.bf16.gmra.mxu0 %v780
    %v4001 = vpop.f32.mrf.mxu0
    %v4002 = vadd.f32 %v3989, %v4001
    %v4003 = vpop.f32.mrf.mxu0
    %4004 = vdwg.mxu0
    %4005 = vmatpush.bf16.msra.mxu0 %v2521
    %4006 = vmatpush.bf16.msra.mxu0 %v2513
    %4007 = vmatpush.bf16.msra.mxu0 %v2505
    %4008 = vmatpush.bf16.msra.mxu0 %v2497
    %4009 = vmatpush.bf16.msra.mxu0 %v2489
    %4010 = vmatpush.bf16.msra.mxu0 %v2481
    %4011 = vmatpush.bf16.msra.mxu0 %v2473
    %4012 = vmatpush.bf16.msra.mxu0 %v2465
    %4013 = vmatmul.bf16.gmra.mxu0 %v781
    %v4014 = vpop.f32.mrf.mxu0
    %v4015 = vadd.f32 %v4002, %v4014
    %v4016 = vpop.f32.mrf.mxu0
    %4017 = vdwg.mxu0
    %4018 = vmatpush.bf16.msra.mxu0 %v2585
    %4019 = vmatpush.bf16.msra.mxu0 %v2577
    %4020 = vmatpush.bf16.msra.mxu0 %v2569
    %4021 = vmatpush.bf16.msra.mxu0 %v2561
    %4022 = vmatpush.bf16.msra.mxu0 %v2553
    %4023 = vmatpush.bf16.msra.mxu0 %v2545
    %4024 = vmatpush.bf16.msra.mxu0 %v2537
    %4025 = vmatpush.bf16.msra.mxu0 %v2529
    %4026 = vmatmul.bf16.gmra.mxu0 %v782
    %v4027 = vpop.f32.mrf.mxu0
    %v4028 = vadd.f32 %v4015, %v4027
    %v4029 = vpop.f32.mrf.mxu0
    %4030 = vdwg.mxu0
    %4031 = vmatpush.bf16.msra.mxu0 %v2649
    %4032 = vmatpush.bf16.msra.mxu0 %v2641
    %4033 = vmatpush.bf16.msra.mxu0 %v2633
    %4034 = vmatpush.bf16.msra.mxu0 %v2625
    %4035 = vmatpush.bf16.msra.mxu0 %v2617
    %4036 = vmatpush.bf16.msra.mxu0 %v2609
    %4037 = vmatpush.bf16.msra.mxu0 %v2601
    %4038 = vmatpush.bf16.msra.mxu0 %v2593
    %4039 = vmatmul.bf16.gmra.mxu0 %v783
    %v4040 = vpop.f32.mrf.mxu0
    %v4041 = vadd.f32 %v4028, %v4040
    %v4042 = vpop.f32.mrf.mxu0
    %4043 = vdwg.mxu0
    %4044 = vmatpush.bf16.msra.mxu0 %v2713
    %4045 = vmatpush.bf16.msra.mxu0 %v2705
    %4046 = vmatpush.bf16.msra.mxu0 %v2697
    %4047 = vmatpush.bf16.msra.mxu0 %v2689
    %4048 = vmatpush.bf16.msra.mxu0 %v2681
    %4049 = vmatpush.bf16.msra.mxu0 %v2673
    %4050 = vmatpush.bf16.msra.mxu0 %v2665
    %4051 = vmatpush.bf16.msra.mxu0 %v2657
    %4052 = vmatmul.bf16.gmra.mxu0 %v784
    %v4053 = vpop.f32.mrf.mxu0
    %v4054 = vadd.f32 %v4041, %v4053
    %v4055 = vpop.f32.mrf.mxu0
    %4056 = vdwg.mxu0
    %4057 = vmatpush.bf16.msra.mxu0 %v2777
    %4058 = vmatpush.bf16.msra.mxu0 %v2769
    %4059 = vmatpush.bf16.msra.mxu0 %v2761
    %4060 = vmatpush.bf16.msra.mxu0 %v2753
    %4061 = vmatpush.bf16.msra.mxu0 %v2745
    %4062 = vmatpush.bf16.msra.mxu0 %v2737
    %4063 = vmatpush.bf16.msra.mxu0 %v2729
    %4064 = vmatpush.bf16.msra.mxu0 %v2721
    %4065 = vmatmul.bf16.gmra.mxu0 %v785
    %v4066 = vpop.f32.mrf.mxu0
    %v4067 = vadd.f32 %v4054, %v4066
    %v4068 = vpop.f32.mrf.mxu0
    %4069 = vdwg.mxu0
    %4070 = vmatpush.bf16.msra.mxu0 %v2841
    %4071 = vmatpush.bf16.msra.mxu0 %v2833
    %4072 = vmatpush.bf16.msra.mxu0 %v2825
    %4073 = vmatpush.bf16.msra.mxu0 %v2817
    %4074 = vmatpush.bf16.msra.mxu0 %v2809
    %4075 = vmatpush.bf16.msra.mxu0 %v2801
    %4076 = vmatpush.bf16.msra.mxu0 %v2793
    %4077 = vmatpush.bf16.msra.mxu0 %v2785
    %4078 = vmatmul.bf16.gmra.mxu0 %v786
    %v4079 = vpop.f32.mrf.mxu0
    %v4080 = vadd.f32 %v4067, %v4079
    %v4081 = vpop.f32.mrf.mxu0
    %4082 = vdwg.mxu0
    %4083 = vmatpush.bf16.msra.mxu0 %v2394
    %4084 = vmatpush.bf16.msra.mxu0 %v2386
    %4085 = vmatpush.bf16.msra.mxu0 %v2378
    %4086 = vmatpush.bf16.msra.mxu0 %v2370
    %4087 = vmatpush.bf16.msra.mxu0 %v2362
    %4088 = vmatpush.bf16.msra.mxu0 %v2354
    %4089 = vmatpush.bf16.msra.mxu0 %v2346
    %4090 = vmatpush.bf16.msra.mxu0 %v2338
    %4091 = vmatmul.bf16.gmra.mxu0 %v779
    %v4092 = vpop.f32.mrf.mxu0
    %v4093 = vadd.f32 %v758, %v4092
    %v4094 = vpop.f32.mrf.mxu0
    %4095 = vdwg.mxu0
    %4096 = vmatpush.bf16.msra.mxu0 %v2458
    %4097 = vmatpush.bf16.msra.mxu0 %v2450
    %4098 = vmatpush.bf16.msra.mxu0 %v2442
    %4099 = vmatpush.bf16.msra.mxu0 %v2434
    %4100 = vmatpush.bf16.msra.mxu0 %v2426
    %4101 = vmatpush.bf16.msra.mxu0 %v2418
    %4102 = vmatpush.bf16.msra.mxu0 %v2410
    %4103 = vmatpush.bf16.msra.mxu0 %v2402
    %4104 = vmatmul.bf16.gmra.mxu0 %v780
    %v4105 = vpop.f32.mrf.mxu0
    %v4106 = vadd.f32 %v4093, %v4105
    %v4107 = vpop.f32.mrf.mxu0
    %4108 = vdwg.mxu0
    %4109 = vmatpush.bf16.msra.mxu0 %v2522
    %4110 = vmatpush.bf16.msra.mxu0 %v2514
    %4111 = vmatpush.bf16.msra.mxu0 %v2506
    %4112 = vmatpush.bf16.msra.mxu0 %v2498
    %4113 = vmatpush.bf16.msra.mxu0 %v2490
    %4114 = vmatpush.bf16.msra.mxu0 %v2482
    %4115 = vmatpush.bf16.msra.mxu0 %v2474
    %4116 = vmatpush.bf16.msra.mxu0 %v2466
    %4117 = vmatmul.bf16.gmra.mxu0 %v781
    %v4118 = vpop.f32.mrf.mxu0
    %v4119 = vadd.f32 %v4106, %v4118
    %v4120 = vpop.f32.mrf.mxu0
    %4121 = vdwg.mxu0
    %4122 = vmatpush.bf16.msra.mxu0 %v2586
    %4123 = vmatpush.bf16.msra.mxu0 %v2578
    %4124 = vmatpush.bf16.msra.mxu0 %v2570
    %4125 = vmatpush.bf16.msra.mxu0 %v2562
    %4126 = vmatpush.bf16.msra.mxu0 %v2554
    %4127 = vmatpush.bf16.msra.mxu0 %v2546
    %4128 = vmatpush.bf16.msra.mxu0 %v2538
    %4129 = vmatpush.bf16.msra.mxu0 %v2530
    %4130 = vmatmul.bf16.gmra.mxu0 %v782
    %v4131 = vpop.f32.mrf.mxu0
    %v4132 = vadd.f32 %v4119, %v4131
    %v4133 = vpop.f32.mrf.mxu0
    %4134 = vdwg.mxu0
    %4135 = vmatpush.bf16.msra.mxu0 %v2650
    %4136 = vmatpush.bf16.msra.mxu0 %v2642
    %4137 = vmatpush.bf16.msra.mxu0 %v2634
    %4138 = vmatpush.bf16.msra.mxu0 %v2626
    %4139 = vmatpush.bf16.msra.mxu0 %v2618
    %4140 = vmatpush.bf16.msra.mxu0 %v2610
    %4141 = vmatpush.bf16.msra.mxu0 %v2602
    %4142 = vmatpush.bf16.msra.mxu0 %v2594
    %4143 = vmatmul.bf16.gmra.mxu0 %v783
    %v4144 = vpop.f32.mrf.mxu0
    %v4145 = vadd.f32 %v4132, %v4144
    %v4146 = vpop.f32.mrf.mxu0
    %4147 = vdwg.mxu0
    %4148 = vmatpush.bf16.msra.mxu0 %v2714
    %4149 = vmatpush.bf16.msra.mxu0 %v2706
    %4150 = vmatpush.bf16.msra.mxu0 %v2698
    %4151 = vmatpush.bf16.msra.mxu0 %v2690
    %4152 = vmatpush.bf16.msra.mxu0 %v2682
    %4153 = vmatpush.bf16.msra.mxu0 %v2674
    %4154 = vmatpush.bf16.msra.mxu0 %v2666
    %4155 = vmatpush.bf16.msra.mxu0 %v2658
    %4156 = vmatmul.bf16.gmra.mxu0 %v784
    %v4157 = vpop.f32.mrf.mxu0
    %v4158 = vadd.f32 %v4145, %v4157
    %v4159 = vpop.f32.mrf.mxu0
    %4160 = vdwg.mxu0
    %4161 = vmatpush.bf16.msra.mxu0 %v2778
    %4162 = vmatpush.bf16.msra.mxu0 %v2770
    %4163 = vmatpush.bf16.msra.mxu0 %v2762
    %4164 = vmatpush.bf16.msra.mxu0 %v2754
    %4165 = vmatpush.bf16.msra.mxu0 %v2746
    %4166 = vmatpush.bf16.msra.mxu0 %v2738
    %4167 = vmatpush.bf16.msra.mxu0 %v2730
    %4168 = vmatpush.bf16.msra.mxu0 %v2722
    %4169 = vmatmul.bf16.gmra.mxu0 %v785
    %v4170 = vpop.f32.mrf.mxu0
    %v4171 = vadd.f32 %v4158, %v4170
    %v4172 = vpop.f32.mrf.mxu0
    %4173 = vdwg.mxu0
    %4174 = vmatpush.bf16.msra.mxu0 %v2842
    %4175 = vmatpush.bf16.msra.mxu0 %v2834
    %4176 = vmatpush.bf16.msra.mxu0 %v2826
    %4177 = vmatpush.bf16.msra.mxu0 %v2818
    %4178 = vmatpush.bf16.msra.mxu0 %v2810
    %4179 = vmatpush.bf16.msra.mxu0 %v2802
    %4180 = vmatpush.bf16.msra.mxu0 %v2794
    %4181 = vmatpush.bf16.msra.mxu0 %v2786
    %4182 = vmatmul.bf16.gmra.mxu0 %v786
    %v4183 = vpop.f32.mrf.mxu0
    %v4184 = vadd.f32 %v4171, %v4183
    %v4185 = vpop.f32.mrf.mxu0
    %4186 = vdwg.mxu0
    %v4187 = vmax.f32 %v3456, 0.0
    %v4188 = vmax.f32 %v3560, 0.0
    %v4189 = vmax.f32 %v3664, 0.0
    %v4190 = vmax.f32 %v3768, 0.0
    %v4191 = vmax.f32 %v3872, 0.0
    %v4192 = vmax.f32 %v3976, 0.0
    %v4193 = vmax.f32 %v4080, 0.0
    %v4194 = vmax.f32 %v4184, 0.0
    %v4195 = vpack.c.bf16 %v4187, %v4187
    %v4196 = vpack.c.bf16 %v4188, %v4188
    %v4197 = vpack.c.bf16 %v4189, %v4189
    %v4198 = vpack.c.bf16 %v4190, %v4190
    %v4199 = vpack.c.bf16 %v4191, %v4191
    %v4200 = vpack.c.bf16 %v4192, %v4192
    %v4201 = vpack.c.bf16 %v4193, %v4193
    %v4202 = vpack.c.bf16 %v4194, %v4194
    %v4203 = vld [vmem:[#allocation8] sm:$0xff]
    %v4204 = vld [vmem:[#allocation8 + $0x8] sm:$0xff]
    %v4205 = vld [vmem:[#allocation8 + $0x10] sm:$0xff]
    %v4206 = vld [vmem:[#allocation8 + $0x18] sm:$0xff]
    %v4207 = vld [vmem:[#allocation8 + $0x20] sm:$0xff]
    %v4208 = vld [vmem:[#allocation8 + $0x28] sm:$0xff]
    %v4209 = vld [vmem:[#allocation8 + $0x30] sm:$0xff]
    %v4210 = vld [vmem:[#allocation8 + $0x38] sm:$0xff]
    %v4211 = vld [vmem:[#allocation8 + $0x40] sm:$0xff]
    %v4212 = vld [vmem:[#allocation8 + $0x48] sm:$0xff]
    %v4213 = vld [vmem:[#allocation8 + $0x50] sm:$0xff]
    %v4214 = vld [vmem:[#allocation8 + $0x58] sm:$0xff]
    %v4215 = vld [vmem:[#allocation8 + $0x60] sm:$0xff]
    %v4216 = vld [vmem:[#allocation8 + $0x68] sm:$0xff]
    %v4217 = vld [vmem:[#allocation8 + $0x70] sm:$0xff]
    %v4218 = vld [vmem:[#allocation8 + $0x78] sm:$0xff]
    %v4219 = vld [vmem:[#allocation8 + $0x80] sm:$0xff]
    %v4220 = vld [vmem:[#allocation8 + $0x88] sm:$0xff]
    %v4221 = vld [vmem:[#allocation8 + $0x90] sm:$0xff]
    %v4222 = vld [vmem:[#allocation8 + $0x98] sm:$0xff]
    %v4223 = vld [vmem:[#allocation8 + $0xa0] sm:$0xff]
    %v4224 = vld [vmem:[#allocation8 + $0xa8] sm:$0xff]
    %v4225 = vld [vmem:[#allocation8 + $0xb0] sm:$0xff]
    %v4226 = vld [vmem:[#allocation8 + $0xb8] sm:$0xff]
    %v4227 = vld [vmem:[#allocation8 + $0xc0] sm:$0xff]
    %v4228 = vld [vmem:[#allocation8 + $0xc8] sm:$0xff]
    %v4229 = vld [vmem:[#allocation8 + $0xd0] sm:$0xff]
    %v4230 = vld [vmem:[#allocation8 + $0xd8] sm:$0xff]
    %v4231 = vld [vmem:[#allocation8 + $0xe0] sm:$0xff]
    %v4232 = vld [vmem:[#allocation8 + $0xe8] sm:$0xff]
    %v4233 = vld [vmem:[#allocation8 + $0xf0] sm:$0xff]
    %v4234 = vld [vmem:[#allocation8 + $0xf8] sm:$0xff]
    %v4235 = vld [vmem:[#allocation8 + $0x100] sm:$0xff]
    %v4236 = vld [vmem:[#allocation8 + $0x108] sm:$0xff]
    %v4237 = vld [vmem:[#allocation8 + $0x110] sm:$0xff]
    %v4238 = vld [vmem:[#allocation8 + $0x118] sm:$0xff]
    %v4239 = vld [vmem:[#allocation8 + $0x120] sm:$0xff]
    %v4240 = vld [vmem:[#allocation8 + $0x128] sm:$0xff]
    %v4241 = vld [vmem:[#allocation8 + $0x130] sm:$0xff]
    %v4242 = vld [vmem:[#allocation8 + $0x138] sm:$0xff]
    %v4243 = vld [vmem:[#allocation8 + $0x140] sm:$0xff]
    %v4244 = vld [vmem:[#allocation8 + $0x148] sm:$0xff]
    %v4245 = vld [vmem:[#allocation8 + $0x150] sm:$0xff]
    %v4246 = vld [vmem:[#allocation8 + $0x158] sm:$0xff]
    %v4247 = vld [vmem:[#allocation8 + $0x160] sm:$0xff]
    %v4248 = vld [vmem:[#allocation8 + $0x168] sm:$0xff]
    %v4249 = vld [vmem:[#allocation8 + $0x170] sm:$0xff]
    %v4250 = vld [vmem:[#allocation8 + $0x178] sm:$0xff]
    %v4251 = vld [vmem:[#allocation8 + $0x180] sm:$0xff]
    %v4252 = vld [vmem:[#allocation8 + $0x188] sm:$0xff]
    %v4253 = vld [vmem:[#allocation8 + $0x190] sm:$0xff]
    %v4254 = vld [vmem:[#allocation8 + $0x198] sm:$0xff]
    %v4255 = vld [vmem:[#allocation8 + $0x1a0] sm:$0xff]
    %v4256 = vld [vmem:[#allocation8 + $0x1a8] sm:$0xff]
    %v4257 = vld [vmem:[#allocation8 + $0x1b0] sm:$0xff]
    %v4258 = vld [vmem:[#allocation8 + $0x1b8] sm:$0xff]
    %v4259 = vld [vmem:[#allocation8 + $0x1c0] sm:$0xff]
    %v4260 = vld [vmem:[#allocation8 + $0x1c8] sm:$0xff]
    %v4261 = vld [vmem:[#allocation8 + $0x1d0] sm:$0xff]
    %v4262 = vld [vmem:[#allocation8 + $0x1d8] sm:$0xff]
    %v4263 = vld [vmem:[#allocation8 + $0x1e0] sm:$0xff]
    %v4264 = vld [vmem:[#allocation8 + $0x1e8] sm:$0xff]
    %v4265 = vld [vmem:[#allocation8 + $0x1f0] sm:$0xff]
    %v4266 = vld [vmem:[#allocation8 + $0x1f8] sm:$0xff]
    %v4267 = vld [vmem:[#allocation8 + $0x200] sm:$0xff]
    %v4268 = vld [vmem:[#allocation8 + $0x208] sm:$0xff]
    %v4269 = vld [vmem:[#allocation8 + $0x210] sm:$0xff]
    %v4270 = vld [vmem:[#allocation8 + $0x218] sm:$0xff]
    %v4271 = vld [vmem:[#allocation8 + $0x220] sm:$0xff]
    %v4272 = vld [vmem:[#allocation8 + $0x228] sm:$0xff]
    %v4273 = vld [vmem:[#allocation8 + $0x230] sm:$0xff]
    %v4274 = vld [vmem:[#allocation8 + $0x238] sm:$0xff]
    %v4275 = vld [vmem:[#allocation8 + $0x240] sm:$0xff]
    %v4276 = vld [vmem:[#allocation8 + $0x248] sm:$0xff]
    %v4277 = vld [vmem:[#allocation8 + $0x250] sm:$0xff]
    %v4278 = vld [vmem:[#allocation8 + $0x258] sm:$0xff]
    %v4279 = vld [vmem:[#allocation8 + $0x260] sm:$0xff]
    %v4280 = vld [vmem:[#allocation8 + $0x268] sm:$0xff]
    %v4281 = vld [vmem:[#allocation8 + $0x270] sm:$0xff]
    %v4282 = vld [vmem:[#allocation8 + $0x278] sm:$0xff]
    %v4283 = vld [vmem:[#allocation8 + $0x280] sm:$0xff]
    %v4284 = vld [vmem:[#allocation8 + $0x288] sm:$0xff]
    %v4285 = vld [vmem:[#allocation8 + $0x290] sm:$0xff]
    %v4286 = vld [vmem:[#allocation8 + $0x298] sm:$0xff]
    %v4287 = vld [vmem:[#allocation8 + $0x2a0] sm:$0xff]
    %v4288 = vld [vmem:[#allocation8 + $0x2a8] sm:$0xff]
    %v4289 = vld [vmem:[#allocation8 + $0x2b0] sm:$0xff]
    %v4290 = vld [vmem:[#allocation8 + $0x2b8] sm:$0xff]
    %v4291 = vld [vmem:[#allocation8 + $0x2c0] sm:$0xff]
    %v4292 = vld [vmem:[#allocation8 + $0x2c8] sm:$0xff]
    %v4293 = vld [vmem:[#allocation8 + $0x2d0] sm:$0xff]
    %v4294 = vld [vmem:[#allocation8 + $0x2d8] sm:$0xff]
    %v4295 = vld [vmem:[#allocation8 + $0x2e0] sm:$0xff]
    %v4296 = vld [vmem:[#allocation8 + $0x2e8] sm:$0xff]
    %v4297 = vld [vmem:[#allocation8 + $0x2f0] sm:$0xff]
    %v4298 = vld [vmem:[#allocation8 + $0x2f8] sm:$0xff]
    %v4299 = vld [vmem:[#allocation8 + $0x300] sm:$0xff]
    %v4300 = vld [vmem:[#allocation8 + $0x308] sm:$0xff]
    %v4301 = vld [vmem:[#allocation8 + $0x310] sm:$0xff]
    %v4302 = vld [vmem:[#allocation8 + $0x318] sm:$0xff]
    %v4303 = vld [vmem:[#allocation8 + $0x320] sm:$0xff]
    %v4304 = vld [vmem:[#allocation8 + $0x328] sm:$0xff]
    %v4305 = vld [vmem:[#allocation8 + $0x330] sm:$0xff]
    %v4306 = vld [vmem:[#allocation8 + $0x338] sm:$0xff]
    %v4307 = vld [vmem:[#allocation8 + $0x340] sm:$0xff]
    %v4308 = vld [vmem:[#allocation8 + $0x348] sm:$0xff]
    %v4309 = vld [vmem:[#allocation8 + $0x350] sm:$0xff]
    %v4310 = vld [vmem:[#allocation8 + $0x358] sm:$0xff]
    %v4311 = vld [vmem:[#allocation8 + $0x360] sm:$0xff]
    %v4312 = vld [vmem:[#allocation8 + $0x368] sm:$0xff]
    %v4313 = vld [vmem:[#allocation8 + $0x370] sm:$0xff]
    %v4314 = vld [vmem:[#allocation8 + $0x378] sm:$0xff]
    %v4315 = vld [vmem:[#allocation8 + $0x380] sm:$0xff]
    %v4316 = vld [vmem:[#allocation8 + $0x388] sm:$0xff]
    %v4317 = vld [vmem:[#allocation8 + $0x390] sm:$0xff]
    %v4318 = vld [vmem:[#allocation8 + $0x398] sm:$0xff]
    %v4319 = vld [vmem:[#allocation8 + $0x3a0] sm:$0xff]
    %v4320 = vld [vmem:[#allocation8 + $0x3a8] sm:$0xff]
    %v4321 = vld [vmem:[#allocation8 + $0x3b0] sm:$0xff]
    %v4322 = vld [vmem:[#allocation8 + $0x3b8] sm:$0xff]
    %v4323 = vld [vmem:[#allocation8 + $0x3c0] sm:$0xff]
    %v4324 = vld [vmem:[#allocation8 + $0x3c8] sm:$0xff]
    %v4325 = vld [vmem:[#allocation8 + $0x3d0] sm:$0xff]
    %v4326 = vld [vmem:[#allocation8 + $0x3d8] sm:$0xff]
    %v4327 = vld [vmem:[#allocation8 + $0x3e0] sm:$0xff]
    %v4328 = vld [vmem:[#allocation8 + $0x3e8] sm:$0xff]
    %v4329 = vld [vmem:[#allocation8 + $0x3f0] sm:$0xff]
    %v4330 = vld [vmem:[#allocation8 + $0x3f8] sm:$0xff]
    %v4331 = vld [vmem:[#allocation8 + $0x400] sm:$0xff]
    %v4332 = vld [vmem:[#allocation8 + $0x408] sm:$0xff]
    %v4333 = vld [vmem:[#allocation8 + $0x410] sm:$0xff]
    %v4334 = vld [vmem:[#allocation8 + $0x418] sm:$0xff]
    %v4335 = vld [vmem:[#allocation8 + $0x420] sm:$0xff]
    %v4336 = vld [vmem:[#allocation8 + $0x428] sm:$0xff]
    %v4337 = vld [vmem:[#allocation8 + $0x430] sm:$0xff]
    %v4338 = vld [vmem:[#allocation8 + $0x438] sm:$0xff]
    %v4339 = vld [vmem:[#allocation8 + $0x440] sm:$0xff]
    %v4340 = vld [vmem:[#allocation8 + $0x448] sm:$0xff]
    %v4341 = vld [vmem:[#allocation8 + $0x450] sm:$0xff]
    %v4342 = vld [vmem:[#allocation8 + $0x458] sm:$0xff]
    %v4343 = vld [vmem:[#allocation8 + $0x460] sm:$0xff]
    %v4344 = vld [vmem:[#allocation8 + $0x468] sm:$0xff]
    %v4345 = vld [vmem:[#allocation8 + $0x470] sm:$0xff]
    %v4346 = vld [vmem:[#allocation8 + $0x478] sm:$0xff]
    %v4347 = vld [vmem:[#allocation8 + $0x480] sm:$0xff]
    %v4348 = vld [vmem:[#allocation8 + $0x488] sm:$0xff]
    %v4349 = vld [vmem:[#allocation8 + $0x490] sm:$0xff]
    %v4350 = vld [vmem:[#allocation8 + $0x498] sm:$0xff]
    %v4351 = vld [vmem:[#allocation8 + $0x4a0] sm:$0xff]
    %v4352 = vld [vmem:[#allocation8 + $0x4a8] sm:$0xff]
    %v4353 = vld [vmem:[#allocation8 + $0x4b0] sm:$0xff]
    %v4354 = vld [vmem:[#allocation8 + $0x4b8] sm:$0xff]
    %v4355 = vld [vmem:[#allocation8 + $0x4c0] sm:$0xff]
    %v4356 = vld [vmem:[#allocation8 + $0x4c8] sm:$0xff]
    %v4357 = vld [vmem:[#allocation8 + $0x4d0] sm:$0xff]
    %v4358 = vld [vmem:[#allocation8 + $0x4d8] sm:$0xff]
    %v4359 = vld [vmem:[#allocation8 + $0x4e0] sm:$0xff]
    %v4360 = vld [vmem:[#allocation8 + $0x4e8] sm:$0xff]
    %v4361 = vld [vmem:[#allocation8 + $0x4f0] sm:$0xff]
    %v4362 = vld [vmem:[#allocation8 + $0x4f8] sm:$0xff]
    %v4363 = vld [vmem:[#allocation8 + $0x500] sm:$0xff]
    %v4364 = vld [vmem:[#allocation8 + $0x508] sm:$0xff]
    %v4365 = vld [vmem:[#allocation8 + $0x510] sm:$0xff]
    %v4366 = vld [vmem:[#allocation8 + $0x518] sm:$0xff]
    %v4367 = vld [vmem:[#allocation8 + $0x520] sm:$0xff]
    %v4368 = vld [vmem:[#allocation8 + $0x528] sm:$0xff]
    %v4369 = vld [vmem:[#allocation8 + $0x530] sm:$0xff]
    %v4370 = vld [vmem:[#allocation8 + $0x538] sm:$0xff]
    %v4371 = vld [vmem:[#allocation8 + $0x540] sm:$0xff]
    %v4372 = vld [vmem:[#allocation8 + $0x548] sm:$0xff]
    %v4373 = vld [vmem:[#allocation8 + $0x550] sm:$0xff]
    %v4374 = vld [vmem:[#allocation8 + $0x558] sm:$0xff]
    %v4375 = vld [vmem:[#allocation8 + $0x560] sm:$0xff]
    %v4376 = vld [vmem:[#allocation8 + $0x568] sm:$0xff]
    %v4377 = vld [vmem:[#allocation8 + $0x570] sm:$0xff]
    %v4378 = vld [vmem:[#allocation8 + $0x578] sm:$0xff]
    %v4379 = vld [vmem:[#allocation8 + $0x580] sm:$0xff]
    %v4380 = vld [vmem:[#allocation8 + $0x588] sm:$0xff]
    %v4381 = vld [vmem:[#allocation8 + $0x590] sm:$0xff]
    %v4382 = vld [vmem:[#allocation8 + $0x598] sm:$0xff]
    %v4383 = vld [vmem:[#allocation8 + $0x5a0] sm:$0xff]
    %v4384 = vld [vmem:[#allocation8 + $0x5a8] sm:$0xff]
    %v4385 = vld [vmem:[#allocation8 + $0x5b0] sm:$0xff]
    %v4386 = vld [vmem:[#allocation8 + $0x5b8] sm:$0xff]
    %v4387 = vld [vmem:[#allocation8 + $0x5c0] sm:$0xff]
    %v4388 = vld [vmem:[#allocation8 + $0x5c8] sm:$0xff]
    %v4389 = vld [vmem:[#allocation8 + $0x5d0] sm:$0xff]
    %v4390 = vld [vmem:[#allocation8 + $0x5d8] sm:$0xff]
    %v4391 = vld [vmem:[#allocation8 + $0x5e0] sm:$0xff]
    %v4392 = vld [vmem:[#allocation8 + $0x5e8] sm:$0xff]
    %v4393 = vld [vmem:[#allocation8 + $0x5f0] sm:$0xff]
    %v4394 = vld [vmem:[#allocation8 + $0x5f8] sm:$0xff]
    %v4395 = vld [vmem:[#allocation8 + $0x600] sm:$0xff]
    %v4396 = vld [vmem:[#allocation8 + $0x608] sm:$0xff]
    %v4397 = vld [vmem:[#allocation8 + $0x610] sm:$0xff]
    %v4398 = vld [vmem:[#allocation8 + $0x618] sm:$0xff]
    %v4399 = vld [vmem:[#allocation8 + $0x620] sm:$0xff]
    %v4400 = vld [vmem:[#allocation8 + $0x628] sm:$0xff]
    %v4401 = vld [vmem:[#allocation8 + $0x630] sm:$0xff]
    %v4402 = vld [vmem:[#allocation8 + $0x638] sm:$0xff]
    %v4403 = vld [vmem:[#allocation8 + $0x640] sm:$0xff]
    %v4404 = vld [vmem:[#allocation8 + $0x648] sm:$0xff]
    %v4405 = vld [vmem:[#allocation8 + $0x650] sm:$0xff]
    %v4406 = vld [vmem:[#allocation8 + $0x658] sm:$0xff]
    %v4407 = vld [vmem:[#allocation8 + $0x660] sm:$0xff]
    %v4408 = vld [vmem:[#allocation8 + $0x668] sm:$0xff]
    %v4409 = vld [vmem:[#allocation8 + $0x670] sm:$0xff]
    %v4410 = vld [vmem:[#allocation8 + $0x678] sm:$0xff]
    %v4411 = vld [vmem:[#allocation8 + $0x680] sm:$0xff]
    %v4412 = vld [vmem:[#allocation8 + $0x688] sm:$0xff]
    %v4413 = vld [vmem:[#allocation8 + $0x690] sm:$0xff]
    %v4414 = vld [vmem:[#allocation8 + $0x698] sm:$0xff]
    %v4415 = vld [vmem:[#allocation8 + $0x6a0] sm:$0xff]
    %v4416 = vld [vmem:[#allocation8 + $0x6a8] sm:$0xff]
    %v4417 = vld [vmem:[#allocation8 + $0x6b0] sm:$0xff]
    %v4418 = vld [vmem:[#allocation8 + $0x6b8] sm:$0xff]
    %v4419 = vld [vmem:[#allocation8 + $0x6c0] sm:$0xff]
    %v4420 = vld [vmem:[#allocation8 + $0x6c8] sm:$0xff]
    %v4421 = vld [vmem:[#allocation8 + $0x6d0] sm:$0xff]
    %v4422 = vld [vmem:[#allocation8 + $0x6d8] sm:$0xff]
    %v4423 = vld [vmem:[#allocation8 + $0x6e0] sm:$0xff]
    %v4424 = vld [vmem:[#allocation8 + $0x6e8] sm:$0xff]
    %v4425 = vld [vmem:[#allocation8 + $0x6f0] sm:$0xff]
    %v4426 = vld [vmem:[#allocation8 + $0x6f8] sm:$0xff]
    %v4427 = vld [vmem:[#allocation8 + $0x700] sm:$0xff]
    %v4428 = vld [vmem:[#allocation8 + $0x708] sm:$0xff]
    %v4429 = vld [vmem:[#allocation8 + $0x710] sm:$0xff]
    %v4430 = vld [vmem:[#allocation8 + $0x718] sm:$0xff]
    %v4431 = vld [vmem:[#allocation8 + $0x720] sm:$0xff]
    %v4432 = vld [vmem:[#allocation8 + $0x728] sm:$0xff]
    %v4433 = vld [vmem:[#allocation8 + $0x730] sm:$0xff]
    %v4434 = vld [vmem:[#allocation8 + $0x738] sm:$0xff]
    %v4435 = vld [vmem:[#allocation8 + $0x740] sm:$0xff]
    %v4436 = vld [vmem:[#allocation8 + $0x748] sm:$0xff]
    %v4437 = vld [vmem:[#allocation8 + $0x750] sm:$0xff]
    %v4438 = vld [vmem:[#allocation8 + $0x758] sm:$0xff]
    %v4439 = vld [vmem:[#allocation8 + $0x760] sm:$0xff]
    %v4440 = vld [vmem:[#allocation8 + $0x768] sm:$0xff]
    %v4441 = vld [vmem:[#allocation8 + $0x770] sm:$0xff]
    %v4442 = vld [vmem:[#allocation8 + $0x778] sm:$0xff]
    %v4443 = vld [vmem:[#allocation8 + $0x780] sm:$0xff]
    %v4444 = vld [vmem:[#allocation8 + $0x788] sm:$0xff]
    %v4445 = vld [vmem:[#allocation8 + $0x790] sm:$0xff]
    %v4446 = vld [vmem:[#allocation8 + $0x798] sm:$0xff]
    %v4447 = vld [vmem:[#allocation8 + $0x7a0] sm:$0xff]
    %v4448 = vld [vmem:[#allocation8 + $0x7a8] sm:$0xff]
    %v4449 = vld [vmem:[#allocation8 + $0x7b0] sm:$0xff]
    %v4450 = vld [vmem:[#allocation8 + $0x7b8] sm:$0xff]
    %v4451 = vld [vmem:[#allocation8 + $0x7c0] sm:$0xff]
    %v4452 = vld [vmem:[#allocation8 + $0x7c8] sm:$0xff]
    %v4453 = vld [vmem:[#allocation8 + $0x7d0] sm:$0xff]
    %v4454 = vld [vmem:[#allocation8 + $0x7d8] sm:$0xff]
    %v4455 = vld [vmem:[#allocation8 + $0x7e0] sm:$0xff]
    %v4456 = vld [vmem:[#allocation8 + $0x7e8] sm:$0xff]
    %v4457 = vld [vmem:[#allocation8 + $0x7f0] sm:$0xff]
    %v4458 = vld [vmem:[#allocation8 + $0x7f8] sm:$0xff]
    %v4459 = vld [vmem:[#allocation10] sm:$0xf]
    %v4461 = vperm.slane %v4459, 0
    %v4462 = vperm.slane %v4459, 1
    %v4463 = vperm.slane %v4459, 2
    %v4464 = vperm.slane %v4459, 3
    %v4725 = vunpack.c.l.b16 %v4203
    %v4726 = vunpack.c.h.b16 %v4203
    %v4727 = vunpack.c.l.b16 %v4204
    %v4728 = vunpack.c.h.b16 %v4204
    %v4729 = vunpack.c.l.b16 %v4205
    %v4730 = vunpack.c.h.b16 %v4205
    %v4731 = vunpack.c.l.b16 %v4206
    %v4732 = vunpack.c.h.b16 %v4206
    %v4733 = vunpack.c.l.b16 %v4207
    %v4734 = vunpack.c.h.b16 %v4207
    %v4735 = vunpack.c.l.b16 %v4208
    %v4736 = vunpack.c.h.b16 %v4208
    %v4737 = vunpack.c.l.b16 %v4209
    %v4738 = vunpack.c.h.b16 %v4209
    %v4739 = vunpack.c.l.b16 %v4210
    %v4740 = vunpack.c.h.b16 %v4210
    %v4741 = vunpack.c.l.b16 %v4211
    %v4742 = vunpack.c.h.b16 %v4211
    %v4743 = vunpack.c.l.b16 %v4212
    %v4744 = vunpack.c.h.b16 %v4212
    %v4745 = vunpack.c.l.b16 %v4213
    %v4746 = vunpack.c.h.b16 %v4213
    %v4747 = vunpack.c.l.b16 %v4214
    %v4748 = vunpack.c.h.b16 %v4214
    %v4749 = vunpack.c.l.b16 %v4215
    %v4750 = vunpack.c.h.b16 %v4215
    %v4751 = vunpack.c.l.b16 %v4216
    %v4752 = vunpack.c.h.b16 %v4216
    %v4753 = vunpack.c.l.b16 %v4217
    %v4754 = vunpack.c.h.b16 %v4217
    %v4755 = vunpack.c.l.b16 %v4218
    %v4756 = vunpack.c.h.b16 %v4218
    %v4757 = vunpack.c.l.b16 %v4219
    %v4758 = vunpack.c.h.b16 %v4219
    %v4759 = vunpack.c.l.b16 %v4220
    %v4760 = vunpack.c.h.b16 %v4220
    %v4761 = vunpack.c.l.b16 %v4221
    %v4762 = vunpack.c.h.b16 %v4221
    %v4763 = vunpack.c.l.b16 %v4222
    %v4764 = vunpack.c.h.b16 %v4222
    %v4765 = vunpack.c.l.b16 %v4223
    %v4766 = vunpack.c.h.b16 %v4223
    %v4767 = vunpack.c.l.b16 %v4224
    %v4768 = vunpack.c.h.b16 %v4224
    %v4769 = vunpack.c.l.b16 %v4225
    %v4770 = vunpack.c.h.b16 %v4225
    %v4771 = vunpack.c.l.b16 %v4226
    %v4772 = vunpack.c.h.b16 %v4226
    %v4773 = vunpack.c.l.b16 %v4227
    %v4774 = vunpack.c.h.b16 %v4227
    %v4775 = vunpack.c.l.b16 %v4228
    %v4776 = vunpack.c.h.b16 %v4228
    %v4777 = vunpack.c.l.b16 %v4229
    %v4778 = vunpack.c.h.b16 %v4229
    %v4779 = vunpack.c.l.b16 %v4230
    %v4780 = vunpack.c.h.b16 %v4230
    %v4781 = vunpack.c.l.b16 %v4231
    %v4782 = vunpack.c.h.b16 %v4231
    %v4783 = vunpack.c.l.b16 %v4232
    %v4784 = vunpack.c.h.b16 %v4232
    %v4785 = vunpack.c.l.b16 %v4233
    %v4786 = vunpack.c.h.b16 %v4233
    %v4787 = vunpack.c.l.b16 %v4234
    %v4788 = vunpack.c.h.b16 %v4234
    %v4789 = vunpack.c.l.b16 %v4235
    %v4790 = vunpack.c.h.b16 %v4235
    %v4791 = vunpack.c.l.b16 %v4236
    %v4792 = vunpack.c.h.b16 %v4236
    %v4793 = vunpack.c.l.b16 %v4237
    %v4794 = vunpack.c.h.b16 %v4237
    %v4795 = vunpack.c.l.b16 %v4238
    %v4796 = vunpack.c.h.b16 %v4238
    %v4797 = vunpack.c.l.b16 %v4239
    %v4798 = vunpack.c.h.b16 %v4239
    %v4799 = vunpack.c.l.b16 %v4240
    %v4800 = vunpack.c.h.b16 %v4240
    %v4801 = vunpack.c.l.b16 %v4241
    %v4802 = vunpack.c.h.b16 %v4241
    %v4803 = vunpack.c.l.b16 %v4242
    %v4804 = vunpack.c.h.b16 %v4242
    %v4805 = vunpack.c.l.b16 %v4243
    %v4806 = vunpack.c.h.b16 %v4243
    %v4807 = vunpack.c.l.b16 %v4244
    %v4808 = vunpack.c.h.b16 %v4244
    %v4809 = vunpack.c.l.b16 %v4245
    %v4810 = vunpack.c.h.b16 %v4245
    %v4811 = vunpack.c.l.b16 %v4246
    %v4812 = vunpack.c.h.b16 %v4246
    %v4813 = vunpack.c.l.b16 %v4247
    %v4814 = vunpack.c.h.b16 %v4247
    %v4815 = vunpack.c.l.b16 %v4248
    %v4816 = vunpack.c.h.b16 %v4248
    %v4817 = vunpack.c.l.b16 %v4249
    %v4818 = vunpack.c.h.b16 %v4249
    %v4819 = vunpack.c.l.b16 %v4250
    %v4820 = vunpack.c.h.b16 %v4250
    %v4821 = vunpack.c.l.b16 %v4251
    %v4822 = vunpack.c.h.b16 %v4251
    %v4823 = vunpack.c.l.b16 %v4252
    %v4824 = vunpack.c.h.b16 %v4252
    %v4825 = vunpack.c.l.b16 %v4253
    %v4826 = vunpack.c.h.b16 %v4253
    %v4827 = vunpack.c.l.b16 %v4254
    %v4828 = vunpack.c.h.b16 %v4254
    %v4829 = vunpack.c.l.b16 %v4255
    %v4830 = vunpack.c.h.b16 %v4255
    %v4831 = vunpack.c.l.b16 %v4256
    %v4832 = vunpack.c.h.b16 %v4256
    %v4833 = vunpack.c.l.b16 %v4257
    %v4834 = vunpack.c.h.b16 %v4257
    %v4835 = vunpack.c.l.b16 %v4258
    %v4836 = vunpack.c.h.b16 %v4258
    %v4837 = vunpack.c.l.b16 %v4259
    %v4838 = vunpack.c.h.b16 %v4259
    %v4839 = vunpack.c.l.b16 %v4260
    %v4840 = vunpack.c.h.b16 %v4260
    %v4841 = vunpack.c.l.b16 %v4261
    %v4842 = vunpack.c.h.b16 %v4261
    %v4843 = vunpack.c.l.b16 %v4262
    %v4844 = vunpack.c.h.b16 %v4262
    %v4845 = vunpack.c.l.b16 %v4263
    %v4846 = vunpack.c.h.b16 %v4263
    %v4847 = vunpack.c.l.b16 %v4264
    %v4848 = vunpack.c.h.b16 %v4264
    %v4849 = vunpack.c.l.b16 %v4265
    %v4850 = vunpack.c.h.b16 %v4265
    %v4851 = vunpack.c.l.b16 %v4266
    %v4852 = vunpack.c.h.b16 %v4266
    %v4853 = vunpack.c.l.b16 %v4267
    %v4854 = vunpack.c.h.b16 %v4267
    %v4855 = vunpack.c.l.b16 %v4268
    %v4856 = vunpack.c.h.b16 %v4268
    %v4857 = vunpack.c.l.b16 %v4269
    %v4858 = vunpack.c.h.b16 %v4269
    %v4859 = vunpack.c.l.b16 %v4270
    %v4860 = vunpack.c.h.b16 %v4270
    %v4861 = vunpack.c.l.b16 %v4271
    %v4862 = vunpack.c.h.b16 %v4271
    %v4863 = vunpack.c.l.b16 %v4272
    %v4864 = vunpack.c.h.b16 %v4272
    %v4865 = vunpack.c.l.b16 %v4273
    %v4866 = vunpack.c.h.b16 %v4273
    %v4867 = vunpack.c.l.b16 %v4274
    %v4868 = vunpack.c.h.b16 %v4274
    %v4869 = vunpack.c.l.b16 %v4275
    %v4870 = vunpack.c.h.b16 %v4275
    %v4871 = vunpack.c.l.b16 %v4276
    %v4872 = vunpack.c.h.b16 %v4276
    %v4873 = vunpack.c.l.b16 %v4277
    %v4874 = vunpack.c.h.b16 %v4277
    %v4875 = vunpack.c.l.b16 %v4278
    %v4876 = vunpack.c.h.b16 %v4278
    %v4877 = vunpack.c.l.b16 %v4279
    %v4878 = vunpack.c.h.b16 %v4279
    %v4879 = vunpack.c.l.b16 %v4280
    %v4880 = vunpack.c.h.b16 %v4280
    %v4881 = vunpack.c.l.b16 %v4281
    %v4882 = vunpack.c.h.b16 %v4281
    %v4883 = vunpack.c.l.b16 %v4282
    %v4884 = vunpack.c.h.b16 %v4282
    %v4885 = vunpack.c.l.b16 %v4283
    %v4886 = vunpack.c.h.b16 %v4283
    %v4887 = vunpack.c.l.b16 %v4284
    %v4888 = vunpack.c.h.b16 %v4284
    %v4889 = vunpack.c.l.b16 %v4285
    %v4890 = vunpack.c.h.b16 %v4285
    %v4891 = vunpack.c.l.b16 %v4286
    %v4892 = vunpack.c.h.b16 %v4286
    %v4893 = vunpack.c.l.b16 %v4287
    %v4894 = vunpack.c.h.b16 %v4287
    %v4895 = vunpack.c.l.b16 %v4288
    %v4896 = vunpack.c.h.b16 %v4288
    %v4897 = vunpack.c.l.b16 %v4289
    %v4898 = vunpack.c.h.b16 %v4289
    %v4899 = vunpack.c.l.b16 %v4290
    %v4900 = vunpack.c.h.b16 %v4290
    %v4901 = vunpack.c.l.b16 %v4291
    %v4902 = vunpack.c.h.b16 %v4291
    %v4903 = vunpack.c.l.b16 %v4292
    %v4904 = vunpack.c.h.b16 %v4292
    %v4905 = vunpack.c.l.b16 %v4293
    %v4906 = vunpack.c.h.b16 %v4293
    %v4907 = vunpack.c.l.b16 %v4294
    %v4908 = vunpack.c.h.b16 %v4294
    %v4909 = vunpack.c.l.b16 %v4295
    %v4910 = vunpack.c.h.b16 %v4295
    %v4911 = vunpack.c.l.b16 %v4296
    %v4912 = vunpack.c.h.b16 %v4296
    %v4913 = vunpack.c.l.b16 %v4297
    %v4914 = vunpack.c.h.b16 %v4297
    %v4915 = vunpack.c.l.b16 %v4298
    %v4916 = vunpack.c.h.b16 %v4298
    %v4917 = vunpack.c.l.b16 %v4299
    %v4918 = vunpack.c.h.b16 %v4299
    %v4919 = vunpack.c.l.b16 %v4300
    %v4920 = vunpack.c.h.b16 %v4300
    %v4921 = vunpack.c.l.b16 %v4301
    %v4922 = vunpack.c.h.b16 %v4301
    %v4923 = vunpack.c.l.b16 %v4302
    %v4924 = vunpack.c.h.b16 %v4302
    %v4925 = vunpack.c.l.b16 %v4303
    %v4926 = vunpack.c.h.b16 %v4303
    %v4927 = vunpack.c.l.b16 %v4304
    %v4928 = vunpack.c.h.b16 %v4304
    %v4929 = vunpack.c.l.b16 %v4305
    %v4930 = vunpack.c.h.b16 %v4305
    %v4931 = vunpack.c.l.b16 %v4306
    %v4932 = vunpack.c.h.b16 %v4306
    %v4933 = vunpack.c.l.b16 %v4307
    %v4934 = vunpack.c.h.b16 %v4307
    %v4935 = vunpack.c.l.b16 %v4308
    %v4936 = vunpack.c.h.b16 %v4308
    %v4937 = vunpack.c.l.b16 %v4309
    %v4938 = vunpack.c.h.b16 %v4309
    %v4939 = vunpack.c.l.b16 %v4310
    %v4940 = vunpack.c.h.b16 %v4310
    %v4941 = vunpack.c.l.b16 %v4311
    %v4942 = vunpack.c.h.b16 %v4311
    %v4943 = vunpack.c.l.b16 %v4312
    %v4944 = vunpack.c.h.b16 %v4312
    %v4945 = vunpack.c.l.b16 %v4313
    %v4946 = vunpack.c.h.b16 %v4313
    %v4947 = vunpack.c.l.b16 %v4314
    %v4948 = vunpack.c.h.b16 %v4314
    %v4949 = vunpack.c.l.b16 %v4315
    %v4950 = vunpack.c.h.b16 %v4315
    %v4951 = vunpack.c.l.b16 %v4316
    %v4952 = vunpack.c.h.b16 %v4316
    %v4953 = vunpack.c.l.b16 %v4317
    %v4954 = vunpack.c.h.b16 %v4317
    %v4955 = vunpack.c.l.b16 %v4318
    %v4956 = vunpack.c.h.b16 %v4318
    %v4957 = vunpack.c.l.b16 %v4319
    %v4958 = vunpack.c.h.b16 %v4319
    %v4959 = vunpack.c.l.b16 %v4320
    %v4960 = vunpack.c.h.b16 %v4320
    %v4961 = vunpack.c.l.b16 %v4321
    %v4962 = vunpack.c.h.b16 %v4321
    %v4963 = vunpack.c.l.b16 %v4322
    %v4964 = vunpack.c.h.b16 %v4322
    %v4965 = vunpack.c.l.b16 %v4323
    %v4966 = vunpack.c.h.b16 %v4323
    %v4967 = vunpack.c.l.b16 %v4324
    %v4968 = vunpack.c.h.b16 %v4324
    %v4969 = vunpack.c.l.b16 %v4325
    %v4970 = vunpack.c.h.b16 %v4325
    %v4971 = vunpack.c.l.b16 %v4326
    %v4972 = vunpack.c.h.b16 %v4326
    %v4973 = vunpack.c.l.b16 %v4327
    %v4974 = vunpack.c.h.b16 %v4327
    %v4975 = vunpack.c.l.b16 %v4328
    %v4976 = vunpack.c.h.b16 %v4328
    %v4977 = vunpack.c.l.b16 %v4329
    %v4978 = vunpack.c.h.b16 %v4329
    %v4979 = vunpack.c.l.b16 %v4330
    %v4980 = vunpack.c.h.b16 %v4330
    %v4981 = vunpack.c.l.b16 %v4331
    %v4982 = vunpack.c.h.b16 %v4331
    %v4983 = vunpack.c.l.b16 %v4332
    %v4984 = vunpack.c.h.b16 %v4332
    %v4985 = vunpack.c.l.b16 %v4333
    %v4986 = vunpack.c.h.b16 %v4333
    %v4987 = vunpack.c.l.b16 %v4334
    %v4988 = vunpack.c.h.b16 %v4334
    %v4989 = vunpack.c.l.b16 %v4335
    %v4990 = vunpack.c.h.b16 %v4335
    %v4991 = vunpack.c.l.b16 %v4336
    %v4992 = vunpack.c.h.b16 %v4336
    %v4993 = vunpack.c.l.b16 %v4337
    %v4994 = vunpack.c.h.b16 %v4337
    %v4995 = vunpack.c.l.b16 %v4338
    %v4996 = vunpack.c.h.b16 %v4338
    %v4997 = vunpack.c.l.b16 %v4339
    %v4998 = vunpack.c.h.b16 %v4339
    %v4999 = vunpack.c.l.b16 %v4340
    %v5000 = vunpack.c.h.b16 %v4340
    %v5001 = vunpack.c.l.b16 %v4341
    %v5002 = vunpack.c.h.b16 %v4341
    %v5003 = vunpack.c.l.b16 %v4342
    %v5004 = vunpack.c.h.b16 %v4342
    %v5005 = vunpack.c.l.b16 %v4343
    %v5006 = vunpack.c.h.b16 %v4343
    %v5007 = vunpack.c.l.b16 %v4344
    %v5008 = vunpack.c.h.b16 %v4344
    %v5009 = vunpack.c.l.b16 %v4345
    %v5010 = vunpack.c.h.b16 %v4345
    %v5011 = vunpack.c.l.b16 %v4346
    %v5012 = vunpack.c.h.b16 %v4346
    %v5013 = vunpack.c.l.b16 %v4347
    %v5014 = vunpack.c.h.b16 %v4347
    %v5015 = vunpack.c.l.b16 %v4348
    %v5016 = vunpack.c.h.b16 %v4348
    %v5017 = vunpack.c.l.b16 %v4349
    %v5018 = vunpack.c.h.b16 %v4349
    %v5019 = vunpack.c.l.b16 %v4350
    %v5020 = vunpack.c.h.b16 %v4350
    %v5021 = vunpack.c.l.b16 %v4351
    %v5022 = vunpack.c.h.b16 %v4351
    %v5023 = vunpack.c.l.b16 %v4352
    %v5024 = vunpack.c.h.b16 %v4352
    %v5025 = vunpack.c.l.b16 %v4353
    %v5026 = vunpack.c.h.b16 %v4353
    %v5027 = vunpack.c.l.b16 %v4354
    %v5028 = vunpack.c.h.b16 %v4354
    %v5029 = vunpack.c.l.b16 %v4355
    %v5030 = vunpack.c.h.b16 %v4355
    %v5031 = vunpack.c.l.b16 %v4356
    %v5032 = vunpack.c.h.b16 %v4356
    %v5033 = vunpack.c.l.b16 %v4357
    %v5034 = vunpack.c.h.b16 %v4357
    %v5035 = vunpack.c.l.b16 %v4358
    %v5036 = vunpack.c.h.b16 %v4358
    %v5037 = vunpack.c.l.b16 %v4359
    %v5038 = vunpack.c.h.b16 %v4359
    %v5039 = vunpack.c.l.b16 %v4360
    %v5040 = vunpack.c.h.b16 %v4360
    %v5041 = vunpack.c.l.b16 %v4361
    %v5042 = vunpack.c.h.b16 %v4361
    %v5043 = vunpack.c.l.b16 %v4362
    %v5044 = vunpack.c.h.b16 %v4362
    %v5045 = vunpack.c.l.b16 %v4363
    %v5046 = vunpack.c.h.b16 %v4363
    %v5047 = vunpack.c.l.b16 %v4364
    %v5048 = vunpack.c.h.b16 %v4364
    %v5049 = vunpack.c.l.b16 %v4365
    %v5050 = vunpack.c.h.b16 %v4365
    %v5051 = vunpack.c.l.b16 %v4366
    %v5052 = vunpack.c.h.b16 %v4366
    %v5053 = vunpack.c.l.b16 %v4367
    %v5054 = vunpack.c.h.b16 %v4367
    %v5055 = vunpack.c.l.b16 %v4368
    %v5056 = vunpack.c.h.b16 %v4368
    %v5057 = vunpack.c.l.b16 %v4369
    %v5058 = vunpack.c.h.b16 %v4369
    %v5059 = vunpack.c.l.b16 %v4370
    %v5060 = vunpack.c.h.b16 %v4370
    %v5061 = vunpack.c.l.b16 %v4371
    %v5062 = vunpack.c.h.b16 %v4371
    %v5063 = vunpack.c.l.b16 %v4372
    %v5064 = vunpack.c.h.b16 %v4372
    %v5065 = vunpack.c.l.b16 %v4373
    %v5066 = vunpack.c.h.b16 %v4373
    %v5067 = vunpack.c.l.b16 %v4374
    %v5068 = vunpack.c.h.b16 %v4374
    %v5069 = vunpack.c.l.b16 %v4375
    %v5070 = vunpack.c.h.b16 %v4375
    %v5071 = vunpack.c.l.b16 %v4376
    %v5072 = vunpack.c.h.b16 %v4376
    %v5073 = vunpack.c.l.b16 %v4377
    %v5074 = vunpack.c.h.b16 %v4377
    %v5075 = vunpack.c.l.b16 %v4378
    %v5076 = vunpack.c.h.b16 %v4378
    %v5077 = vunpack.c.l.b16 %v4379
    %v5078 = vunpack.c.h.b16 %v4379
    %v5079 = vunpack.c.l.b16 %v4380
    %v5080 = vunpack.c.h.b16 %v4380
    %v5081 = vunpack.c.l.b16 %v4381
    %v5082 = vunpack.c.h.b16 %v4381
    %v5083 = vunpack.c.l.b16 %v4382
    %v5084 = vunpack.c.h.b16 %v4382
    %v5085 = vunpack.c.l.b16 %v4383
    %v5086 = vunpack.c.h.b16 %v4383
    %v5087 = vunpack.c.l.b16 %v4384
    %v5088 = vunpack.c.h.b16 %v4384
    %v5089 = vunpack.c.l.b16 %v4385
    %v5090 = vunpack.c.h.b16 %v4385
    %v5091 = vunpack.c.l.b16 %v4386
    %v5092 = vunpack.c.h.b16 %v4386
    %v5093 = vunpack.c.l.b16 %v4387
    %v5094 = vunpack.c.h.b16 %v4387
    %v5095 = vunpack.c.l.b16 %v4388
    %v5096 = vunpack.c.h.b16 %v4388
    %v5097 = vunpack.c.l.b16 %v4389
    %v5098 = vunpack.c.h.b16 %v4389
    %v5099 = vunpack.c.l.b16 %v4390
    %v5100 = vunpack.c.h.b16 %v4390
    %v5101 = vunpack.c.l.b16 %v4391
    %v5102 = vunpack.c.h.b16 %v4391
    %v5103 = vunpack.c.l.b16 %v4392
    %v5104 = vunpack.c.h.b16 %v4392
    %v5105 = vunpack.c.l.b16 %v4393
    %v5106 = vunpack.c.h.b16 %v4393
    %v5107 = vunpack.c.l.b16 %v4394
    %v5108 = vunpack.c.h.b16 %v4394
    %v5109 = vunpack.c.l.b16 %v4395
    %v5110 = vunpack.c.h.b16 %v4395
    %v5111 = vunpack.c.l.b16 %v4396
    %v5112 = vunpack.c.h.b16 %v4396
    %v5113 = vunpack.c.l.b16 %v4397
    %v5114 = vunpack.c.h.b16 %v4397
    %v5115 = vunpack.c.l.b16 %v4398
    %v5116 = vunpack.c.h.b16 %v4398
    %v5117 = vunpack.c.l.b16 %v4399
    %v5118 = vunpack.c.h.b16 %v4399
    %v5119 = vunpack.c.l.b16 %v4400
    %v5120 = vunpack.c.h.b16 %v4400
    %v5121 = vunpack.c.l.b16 %v4401
    %v5122 = vunpack.c.h.b16 %v4401
    %v5123 = vunpack.c.l.b16 %v4402
    %v5124 = vunpack.c.h.b16 %v4402
    %v5125 = vunpack.c.l.b16 %v4403
    %v5126 = vunpack.c.h.b16 %v4403
    %v5127 = vunpack.c.l.b16 %v4404
    %v5128 = vunpack.c.h.b16 %v4404
    %v5129 = vunpack.c.l.b16 %v4405
    %v5130 = vunpack.c.h.b16 %v4405
    %v5131 = vunpack.c.l.b16 %v4406
    %v5132 = vunpack.c.h.b16 %v4406
    %v5133 = vunpack.c.l.b16 %v4407
    %v5134 = vunpack.c.h.b16 %v4407
    %v5135 = vunpack.c.l.b16 %v4408
    %v5136 = vunpack.c.h.b16 %v4408
    %v5137 = vunpack.c.l.b16 %v4409
    %v5138 = vunpack.c.h.b16 %v4409
    %v5139 = vunpack.c.l.b16 %v4410
    %v5140 = vunpack.c.h.b16 %v4410
    %v5141 = vunpack.c.l.b16 %v4411
    %v5142 = vunpack.c.h.b16 %v4411
    %v5143 = vunpack.c.l.b16 %v4412
    %v5144 = vunpack.c.h.b16 %v4412
    %v5145 = vunpack.c.l.b16 %v4413
    %v5146 = vunpack.c.h.b16 %v4413
    %v5147 = vunpack.c.l.b16 %v4414
    %v5148 = vunpack.c.h.b16 %v4414
    %v5149 = vunpack.c.l.b16 %v4415
    %v5150 = vunpack.c.h.b16 %v4415
    %v5151 = vunpack.c.l.b16 %v4416
    %v5152 = vunpack.c.h.b16 %v4416
    %v5153 = vunpack.c.l.b16 %v4417
    %v5154 = vunpack.c.h.b16 %v4417
    %v5155 = vunpack.c.l.b16 %v4418
    %v5156 = vunpack.c.h.b16 %v4418
    %v5157 = vunpack.c.l.b16 %v4419
    %v5158 = vunpack.c.h.b16 %v4419
    %v5159 = vunpack.c.l.b16 %v4420
    %v5160 = vunpack.c.h.b16 %v4420
    %v5161 = vunpack.c.l.b16 %v4421
    %v5162 = vunpack.c.h.b16 %v4421
    %v5163 = vunpack.c.l.b16 %v4422
    %v5164 = vunpack.c.h.b16 %v4422
    %v5165 = vunpack.c.l.b16 %v4423
    %v5166 = vunpack.c.h.b16 %v4423
    %v5167 = vunpack.c.l.b16 %v4424
    %v5168 = vunpack.c.h.b16 %v4424
    %v5169 = vunpack.c.l.b16 %v4425
    %v5170 = vunpack.c.h.b16 %v4425
    %v5171 = vunpack.c.l.b16 %v4426
    %v5172 = vunpack.c.h.b16 %v4426
    %v5173 = vunpack.c.l.b16 %v4427
    %v5174 = vunpack.c.h.b16 %v4427
    %v5175 = vunpack.c.l.b16 %v4428
    %v5176 = vunpack.c.h.b16 %v4428
    %v5177 = vunpack.c.l.b16 %v4429
    %v5178 = vunpack.c.h.b16 %v4429
    %v5179 = vunpack.c.l.b16 %v4430
    %v5180 = vunpack.c.h.b16 %v4430
    %v5181 = vunpack.c.l.b16 %v4431
    %v5182 = vunpack.c.h.b16 %v4431
    %v5183 = vunpack.c.l.b16 %v4432
    %v5184 = vunpack.c.h.b16 %v4432
    %v5185 = vunpack.c.l.b16 %v4433
    %v5186 = vunpack.c.h.b16 %v4433
    %v5187 = vunpack.c.l.b16 %v4434
    %v5188 = vunpack.c.h.b16 %v4434
    %v5189 = vunpack.c.l.b16 %v4435
    %v5190 = vunpack.c.h.b16 %v4435
    %v5191 = vunpack.c.l.b16 %v4436
    %v5192 = vunpack.c.h.b16 %v4436
    %v5193 = vunpack.c.l.b16 %v4437
    %v5194 = vunpack.c.h.b16 %v4437
    %v5195 = vunpack.c.l.b16 %v4438
    %v5196 = vunpack.c.h.b16 %v4438
    %v5197 = vunpack.c.l.b16 %v4439
    %v5198 = vunpack.c.h.b16 %v4439
    %v5199 = vunpack.c.l.b16 %v4440
    %v5200 = vunpack.c.h.b16 %v4440
    %v5201 = vunpack.c.l.b16 %v4441
    %v5202 = vunpack.c.h.b16 %v4441
    %v5203 = vunpack.c.l.b16 %v4442
    %v5204 = vunpack.c.h.b16 %v4442
    %v5205 = vunpack.c.l.b16 %v4443
    %v5206 = vunpack.c.h.b16 %v4443
    %v5207 = vunpack.c.l.b16 %v4444
    %v5208 = vunpack.c.h.b16 %v4444
    %v5209 = vunpack.c.l.b16 %v4445
    %v5210 = vunpack.c.h.b16 %v4445
    %v5211 = vunpack.c.l.b16 %v4446
    %v5212 = vunpack.c.h.b16 %v4446
    %v5213 = vunpack.c.l.b16 %v4447
    %v5214 = vunpack.c.h.b16 %v4447
    %v5215 = vunpack.c.l.b16 %v4448
    %v5216 = vunpack.c.h.b16 %v4448
    %v5217 = vunpack.c.l.b16 %v4449
    %v5218 = vunpack.c.h.b16 %v4449
    %v5219 = vunpack.c.l.b16 %v4450
    %v5220 = vunpack.c.h.b16 %v4450
    %v5221 = vunpack.c.l.b16 %v4451
    %v5222 = vunpack.c.h.b16 %v4451
    %v5223 = vunpack.c.l.b16 %v4452
    %v5224 = vunpack.c.h.b16 %v4452
    %v5225 = vunpack.c.l.b16 %v4453
    %v5226 = vunpack.c.h.b16 %v4453
    %v5227 = vunpack.c.l.b16 %v4454
    %v5228 = vunpack.c.h.b16 %v4454
    %v5229 = vunpack.c.l.b16 %v4455
    %v5230 = vunpack.c.h.b16 %v4455
    %v5231 = vunpack.c.l.b16 %v4456
    %v5232 = vunpack.c.h.b16 %v4456
    %v5233 = vunpack.c.l.b16 %v4457
    %v5234 = vunpack.c.h.b16 %v4457
    %v5235 = vunpack.c.l.b16 %v4458
    %v5236 = vunpack.c.h.b16 %v4458
    %v5237 = vpack.c.b16 %v4729, %v4725
    %v5238 = vpack.c.b16 %v4730, %v4726
    %v5239 = vpack.c.b16 %v4731, %v4727
    %v5240 = vpack.c.b16 %v4732, %v4728
    %v5241 = vpack.c.b16 %v4737, %v4733
    %v5242 = vpack.c.b16 %v4738, %v4734
    %v5243 = vpack.c.b16 %v4739, %v4735
    %v5244 = vpack.c.b16 %v4740, %v4736
    %v5245 = vpack.c.b16 %v4745, %v4741
    %v5246 = vpack.c.b16 %v4746, %v4742
    %v5247 = vpack.c.b16 %v4747, %v4743
    %v5248 = vpack.c.b16 %v4748, %v4744
    %v5249 = vpack.c.b16 %v4753, %v4749
    %v5250 = vpack.c.b16 %v4754, %v4750
    %v5251 = vpack.c.b16 %v4755, %v4751
    %v5252 = vpack.c.b16 %v4756, %v4752
    %v5253 = vpack.c.b16 %v4761, %v4757
    %v5254 = vpack.c.b16 %v4762, %v4758
    %v5255 = vpack.c.b16 %v4763, %v4759
    %v5256 = vpack.c.b16 %v4764, %v4760
    %v5257 = vpack.c.b16 %v4769, %v4765
    %v5258 = vpack.c.b16 %v4770, %v4766
    %v5259 = vpack.c.b16 %v4771, %v4767
    %v5260 = vpack.c.b16 %v4772, %v4768
    %v5261 = vpack.c.b16 %v4777, %v4773
    %v5262 = vpack.c.b16 %v4778, %v4774
    %v5263 = vpack.c.b16 %v4779, %v4775
    %v5264 = vpack.c.b16 %v4780, %v4776
    %v5265 = vpack.c.b16 %v4785, %v4781
    %v5266 = vpack.c.b16 %v4786, %v4782
    %v5267 = vpack.c.b16 %v4787, %v4783
    %v5268 = vpack.c.b16 %v4788, %v4784
    %v5269 = vpack.c.b16 %v4793, %v4789
    %v5270 = vpack.c.b16 %v4794, %v4790
    %v5271 = vpack.c.b16 %v4795, %v4791
    %v5272 = vpack.c.b16 %v4796, %v4792
    %v5273 = vpack.c.b16 %v4801, %v4797
    %v5274 = vpack.c.b16 %v4802, %v4798
    %v5275 = vpack.c.b16 %v4803, %v4799
    %v5276 = vpack.c.b16 %v4804, %v4800
    %v5277 = vpack.c.b16 %v4809, %v4805
    %v5278 = vpack.c.b16 %v4810, %v4806
    %v5279 = vpack.c.b16 %v4811, %v4807
    %v5280 = vpack.c.b16 %v4812, %v4808
    %v5281 = vpack.c.b16 %v4817, %v4813
    %v5282 = vpack.c.b16 %v4818, %v4814
    %v5283 = vpack.c.b16 %v4819, %v4815
    %v5284 = vpack.c.b16 %v4820, %v4816
    %v5285 = vpack.c.b16 %v4825, %v4821
    %v5286 = vpack.c.b16 %v4826, %v4822
    %v5287 = vpack.c.b16 %v4827, %v4823
    %v5288 = vpack.c.b16 %v4828, %v4824
    %v5289 = vpack.c.b16 %v4833, %v4829
    %v5290 = vpack.c.b16 %v4834, %v4830
    %v5291 = vpack.c.b16 %v4835, %v4831
    %v5292 = vpack.c.b16 %v4836, %v4832
    %v5293 = vpack.c.b16 %v4841, %v4837
    %v5294 = vpack.c.b16 %v4842, %v4838
    %v5295 = vpack.c.b16 %v4843, %v4839
    %v5296 = vpack.c.b16 %v4844, %v4840
    %v5297 = vpack.c.b16 %v4849, %v4845
    %v5298 = vpack.c.b16 %v4850, %v4846
    %v5299 = vpack.c.b16 %v4851, %v4847
    %v5300 = vpack.c.b16 %v4852, %v4848
    %v5301 = vpack.c.b16 %v4857, %v4853
    %v5302 = vpack.c.b16 %v4858, %v4854
    %v5303 = vpack.c.b16 %v4859, %v4855
    %v5304 = vpack.c.b16 %v4860, %v4856
    %v5305 = vpack.c.b16 %v4865, %v4861
    %v5306 = vpack.c.b16 %v4866, %v4862
    %v5307 = vpack.c.b16 %v4867, %v4863
    %v5308 = vpack.c.b16 %v4868, %v4864
    %v5309 = vpack.c.b16 %v4873, %v4869
    %v5310 = vpack.c.b16 %v4874, %v4870
    %v5311 = vpack.c.b16 %v4875, %v4871
    %v5312 = vpack.c.b16 %v4876, %v4872
    %v5313 = vpack.c.b16 %v4881, %v4877
    %v5314 = vpack.c.b16 %v4882, %v4878
    %v5315 = vpack.c.b16 %v4883, %v4879
    %v5316 = vpack.c.b16 %v4884, %v4880
    %v5317 = vpack.c.b16 %v4889, %v4885
    %v5318 = vpack.c.b16 %v4890, %v4886
    %v5319 = vpack.c.b16 %v4891, %v4887
    %v5320 = vpack.c.b16 %v4892, %v4888
    %v5321 = vpack.c.b16 %v4897, %v4893
    %v5322 = vpack.c.b16 %v4898, %v4894
    %v5323 = vpack.c.b16 %v4899, %v4895
    %v5324 = vpack.c.b16 %v4900, %v4896
    %v5325 = vpack.c.b16 %v4905, %v4901
    %v5326 = vpack.c.b16 %v4906, %v4902
    %v5327 = vpack.c.b16 %v4907, %v4903
    %v5328 = vpack.c.b16 %v4908, %v4904
    %v5329 = vpack.c.b16 %v4913, %v4909
    %v5330 = vpack.c.b16 %v4914, %v4910
    %v5331 = vpack.c.b16 %v4915, %v4911
    %v5332 = vpack.c.b16 %v4916, %v4912
    %v5333 = vpack.c.b16 %v4921, %v4917
    %v5334 = vpack.c.b16 %v4922, %v4918
    %v5335 = vpack.c.b16 %v4923, %v4919
    %v5336 = vpack.c.b16 %v4924, %v4920
    %v5337 = vpack.c.b16 %v4929, %v4925
    %v5338 = vpack.c.b16 %v4930, %v4926
    %v5339 = vpack.c.b16 %v4931, %v4927
    %v5340 = vpack.c.b16 %v4932, %v4928
    %v5341 = vpack.c.b16 %v4937, %v4933
    %v5342 = vpack.c.b16 %v4938, %v4934
    %v5343 = vpack.c.b16 %v4939, %v4935
    %v5344 = vpack.c.b16 %v4940, %v4936
    %v5345 = vpack.c.b16 %v4945, %v4941
    %v5346 = vpack.c.b16 %v4946, %v4942
    %v5347 = vpack.c.b16 %v4947, %v4943
    %v5348 = vpack.c.b16 %v4948, %v4944
    %v5349 = vpack.c.b16 %v4953, %v4949
    %v5350 = vpack.c.b16 %v4954, %v4950
    %v5351 = vpack.c.b16 %v4955, %v4951
    %v5352 = vpack.c.b16 %v4956, %v4952
    %v5353 = vpack.c.b16 %v4961, %v4957
    %v5354 = vpack.c.b16 %v4962, %v4958
    %v5355 = vpack.c.b16 %v4963, %v4959
    %v5356 = vpack.c.b16 %v4964, %v4960
    %v5357 = vpack.c.b16 %v4969, %v4965
    %v5358 = vpack.c.b16 %v4970, %v4966
    %v5359 = vpack.c.b16 %v4971, %v4967
    %v5360 = vpack.c.b16 %v4972, %v4968
    %v5361 = vpack.c.b16 %v4977, %v4973
    %v5362 = vpack.c.b16 %v4978, %v4974
    %v5363 = vpack.c.b16 %v4979, %v4975
    %v5364 = vpack.c.b16 %v4980, %v4976
    %v5365 = vpack.c.b16 %v4985, %v4981
    %v5366 = vpack.c.b16 %v4986, %v4982
    %v5367 = vpack.c.b16 %v4987, %v4983
    %v5368 = vpack.c.b16 %v4988, %v4984
    %v5369 = vpack.c.b16 %v4993, %v4989
    %v5370 = vpack.c.b16 %v4994, %v4990
    %v5371 = vpack.c.b16 %v4995, %v4991
    %v5372 = vpack.c.b16 %v4996, %v4992
    %v5373 = vpack.c.b16 %v5001, %v4997
    %v5374 = vpack.c.b16 %v5002, %v4998
    %v5375 = vpack.c.b16 %v5003, %v4999
    %v5376 = vpack.c.b16 %v5004, %v5000
    %v5377 = vpack.c.b16 %v5009, %v5005
    %v5378 = vpack.c.b16 %v5010, %v5006
    %v5379 = vpack.c.b16 %v5011, %v5007
    %v5380 = vpack.c.b16 %v5012, %v5008
    %v5381 = vpack.c.b16 %v5017, %v5013
    %v5382 = vpack.c.b16 %v5018, %v5014
    %v5383 = vpack.c.b16 %v5019, %v5015
    %v5384 = vpack.c.b16 %v5020, %v5016
    %v5385 = vpack.c.b16 %v5025, %v5021
    %v5386 = vpack.c.b16 %v5026, %v5022
    %v5387 = vpack.c.b16 %v5027, %v5023
    %v5388 = vpack.c.b16 %v5028, %v5024
    %v5389 = vpack.c.b16 %v5033, %v5029
    %v5390 = vpack.c.b16 %v5034, %v5030
    %v5391 = vpack.c.b16 %v5035, %v5031
    %v5392 = vpack.c.b16 %v5036, %v5032
    %v5393 = vpack.c.b16 %v5041, %v5037
    %v5394 = vpack.c.b16 %v5042, %v5038
    %v5395 = vpack.c.b16 %v5043, %v5039
    %v5396 = vpack.c.b16 %v5044, %v5040
    %v5397 = vpack.c.b16 %v5049, %v5045
    %v5398 = vpack.c.b16 %v5050, %v5046
    %v5399 = vpack.c.b16 %v5051, %v5047
    %v5400 = vpack.c.b16 %v5052, %v5048
    %v5401 = vpack.c.b16 %v5057, %v5053
    %v5402 = vpack.c.b16 %v5058, %v5054
    %v5403 = vpack.c.b16 %v5059, %v5055
    %v5404 = vpack.c.b16 %v5060, %v5056
    %v5405 = vpack.c.b16 %v5065, %v5061
    %v5406 = vpack.c.b16 %v5066, %v5062
    %v5407 = vpack.c.b16 %v5067, %v5063
    %v5408 = vpack.c.b16 %v5068, %v5064
    %v5409 = vpack.c.b16 %v5073, %v5069
    %v5410 = vpack.c.b16 %v5074, %v5070
    %v5411 = vpack.c.b16 %v5075, %v5071
    %v5412 = vpack.c.b16 %v5076, %v5072
    %v5413 = vpack.c.b16 %v5081, %v5077
    %v5414 = vpack.c.b16 %v5082, %v5078
    %v5415 = vpack.c.b16 %v5083, %v5079
    %v5416 = vpack.c.b16 %v5084, %v5080
    %v5417 = vpack.c.b16 %v5089, %v5085
    %v5418 = vpack.c.b16 %v5090, %v5086
    %v5419 = vpack.c.b16 %v5091, %v5087
    %v5420 = vpack.c.b16 %v5092, %v5088
    %v5421 = vpack.c.b16 %v5097, %v5093
    %v5422 = vpack.c.b16 %v5098, %v5094
    %v5423 = vpack.c.b16 %v5099, %v5095
    %v5424 = vpack.c.b16 %v5100, %v5096
    %v5425 = vpack.c.b16 %v5105, %v5101
    %v5426 = vpack.c.b16 %v5106, %v5102
    %v5427 = vpack.c.b16 %v5107, %v5103
    %v5428 = vpack.c.b16 %v5108, %v5104
    %v5429 = vpack.c.b16 %v5113, %v5109
    %v5430 = vpack.c.b16 %v5114, %v5110
    %v5431 = vpack.c.b16 %v5115, %v5111
    %v5432 = vpack.c.b16 %v5116, %v5112
    %v5433 = vpack.c.b16 %v5121, %v5117
    %v5434 = vpack.c.b16 %v5122, %v5118
    %v5435 = vpack.c.b16 %v5123, %v5119
    %v5436 = vpack.c.b16 %v5124, %v5120
    %v5437 = vpack.c.b16 %v5129, %v5125
    %v5438 = vpack.c.b16 %v5130, %v5126
    %v5439 = vpack.c.b16 %v5131, %v5127
    %v5440 = vpack.c.b16 %v5132, %v5128
    %v5441 = vpack.c.b16 %v5137, %v5133
    %v5442 = vpack.c.b16 %v5138, %v5134
    %v5443 = vpack.c.b16 %v5139, %v5135
    %v5444 = vpack.c.b16 %v5140, %v5136
    %v5445 = vpack.c.b16 %v5145, %v5141
    %v5446 = vpack.c.b16 %v5146, %v5142
    %v5447 = vpack.c.b16 %v5147, %v5143
    %v5448 = vpack.c.b16 %v5148, %v5144
    %v5449 = vpack.c.b16 %v5153, %v5149
    %v5450 = vpack.c.b16 %v5154, %v5150
    %v5451 = vpack.c.b16 %v5155, %v5151
    %v5452 = vpack.c.b16 %v5156, %v5152
    %v5453 = vpack.c.b16 %v5161, %v5157
    %v5454 = vpack.c.b16 %v5162, %v5158
    %v5455 = vpack.c.b16 %v5163, %v5159
    %v5456 = vpack.c.b16 %v5164, %v5160
    %v5457 = vpack.c.b16 %v5169, %v5165
    %v5458 = vpack.c.b16 %v5170, %v5166
    %v5459 = vpack.c.b16 %v5171, %v5167
    %v5460 = vpack.c.b16 %v5172, %v5168
    %v5461 = vpack.c.b16 %v5177, %v5173
    %v5462 = vpack.c.b16 %v5178, %v5174
    %v5463 = vpack.c.b16 %v5179, %v5175
    %v5464 = vpack.c.b16 %v5180, %v5176
    %v5465 = vpack.c.b16 %v5185, %v5181
    %v5466 = vpack.c.b16 %v5186, %v5182
    %v5467 = vpack.c.b16 %v5187, %v5183
    %v5468 = vpack.c.b16 %v5188, %v5184
    %v5469 = vpack.c.b16 %v5193, %v5189
    %v5470 = vpack.c.b16 %v5194, %v5190
    %v5471 = vpack.c.b16 %v5195, %v5191
    %v5472 = vpack.c.b16 %v5196, %v5192
    %v5473 = vpack.c.b16 %v5201, %v5197
    %v5474 = vpack.c.b16 %v5202, %v5198
    %v5475 = vpack.c.b16 %v5203, %v5199
    %v5476 = vpack.c.b16 %v5204, %v5200
    %v5477 = vpack.c.b16 %v5209, %v5205
    %v5478 = vpack.c.b16 %v5210, %v5206
    %v5479 = vpack.c.b16 %v5211, %v5207
    %v5480 = vpack.c.b16 %v5212, %v5208
    %v5481 = vpack.c.b16 %v5217, %v5213
    %v5482 = vpack.c.b16 %v5218, %v5214
    %v5483 = vpack.c.b16 %v5219, %v5215
    %v5484 = vpack.c.b16 %v5220, %v5216
    %v5485 = vpack.c.b16 %v5225, %v5221
    %v5486 = vpack.c.b16 %v5226, %v5222
    %v5487 = vpack.c.b16 %v5227, %v5223
    %v5488 = vpack.c.b16 %v5228, %v5224
    %v5489 = vpack.c.b16 %v5233, %v5229
    %v5490 = vpack.c.b16 %v5234, %v5230
    %v5491 = vpack.c.b16 %v5235, %v5231
    %v5492 = vpack.c.b16 %v5236, %v5232
    %5749 = vmatpush.bf16.msra.mxu0 %v5265
    %5750 = vmatpush.bf16.msra.mxu0 %v5261
    %5751 = vmatpush.bf16.msra.mxu0 %v5257
    %5752 = vmatpush.bf16.msra.mxu0 %v5253
    %5753 = vmatpush.bf16.msra.mxu0 %v5249
    %5754 = vmatpush.bf16.msra.mxu0 %v5245
    %5755 = vmatpush.bf16.msra.mxu0 %v5241
    %5756 = vmatpush.bf16.msra.mxu0 %v5237
    %5757 = vmatmul.bf16.gmra.mxu0 %v4195
    %v5758 = vpop.f32.mrf.mxu0
    %v5759 = vadd.f32 %v4461, %v5758
    %v5760 = vpop.f32.mrf.mxu0
    %5761 = vdwg.mxu0
    %5762 = vmatpush.bf16.msra.mxu0 %v5297
    %5763 = vmatpush.bf16.msra.mxu0 %v5293
    %5764 = vmatpush.bf16.msra.mxu0 %v5289
    %5765 = vmatpush.bf16.msra.mxu0 %v5285
    %5766 = vmatpush.bf16.msra.mxu0 %v5281
    %5767 = vmatpush.bf16.msra.mxu0 %v5277
    %5768 = vmatpush.bf16.msra.mxu0 %v5273
    %5769 = vmatpush.bf16.msra.mxu0 %v5269
    %5770 = vmatmul.bf16.gmra.mxu0 %v4196
    %v5771 = vpop.f32.mrf.mxu0
    %v5772 = vadd.f32 %v5759, %v5771
    %v5773 = vpop.f32.mrf.mxu0
    %5774 = vdwg.mxu0
    %5775 = vmatpush.bf16.msra.mxu0 %v5329
    %5776 = vmatpush.bf16.msra.mxu0 %v5325
    %5777 = vmatpush.bf16.msra.mxu0 %v5321
    %5778 = vmatpush.bf16.msra.mxu0 %v5317
    %5779 = vmatpush.bf16.msra.mxu0 %v5313
    %5780 = vmatpush.bf16.msra.mxu0 %v5309
    %5781 = vmatpush.bf16.msra.mxu0 %v5305
    %5782 = vmatpush.bf16.msra.mxu0 %v5301
    %5783 = vmatmul.bf16.gmra.mxu0 %v4197
    %v5784 = vpop.f32.mrf.mxu0
    %v5785 = vadd.f32 %v5772, %v5784
    %v5786 = vpop.f32.mrf.mxu0
    %5787 = vdwg.mxu0
    %5788 = vmatpush.bf16.msra.mxu0 %v5361
    %5789 = vmatpush.bf16.msra.mxu0 %v5357
    %5790 = vmatpush.bf16.msra.mxu0 %v5353
    %5791 = vmatpush.bf16.msra.mxu0 %v5349
    %5792 = vmatpush.bf16.msra.mxu0 %v5345
    %5793 = vmatpush.bf16.msra.mxu0 %v5341
    %5794 = vmatpush.bf16.msra.mxu0 %v5337
    %5795 = vmatpush.bf16.msra.mxu0 %v5333
    %5796 = vmatmul.bf16.gmra.mxu0 %v4198
    %v5797 = vpop.f32.mrf.mxu0
    %v5798 = vadd.f32 %v5785, %v5797
    %v5799 = vpop.f32.mrf.mxu0
    %5800 = vdwg.mxu0
    %5801 = vmatpush.bf16.msra.mxu0 %v5393
    %5802 = vmatpush.bf16.msra.mxu0 %v5389
    %5803 = vmatpush.bf16.msra.mxu0 %v5385
    %5804 = vmatpush.bf16.msra.mxu0 %v5381
    %5805 = vmatpush.bf16.msra.mxu0 %v5377
    %5806 = vmatpush.bf16.msra.mxu0 %v5373
    %5807 = vmatpush.bf16.msra.mxu0 %v5369
    %5808 = vmatpush.bf16.msra.mxu0 %v5365
    %5809 = vmatmul.bf16.gmra.mxu0 %v4199
    %v5810 = vpop.f32.mrf.mxu0
    %v5811 = vadd.f32 %v5798, %v5810
    %v5812 = vpop.f32.mrf.mxu0
    %5813 = vdwg.mxu0
    %5814 = vmatpush.bf16.msra.mxu0 %v5425
    %5815 = vmatpush.bf16.msra.mxu0 %v5421
    %5816 = vmatpush.bf16.msra.mxu0 %v5417
    %5817 = vmatpush.bf16.msra.mxu0 %v5413
    %5818 = vmatpush.bf16.msra.mxu0 %v5409
    %5819 = vmatpush.bf16.msra.mxu0 %v5405
    %5820 = vmatpush.bf16.msra.mxu0 %v5401
    %5821 = vmatpush.bf16.msra.mxu0 %v5397
    %5822 = vmatmul.bf16.gmra.mxu0 %v4200
    %v5823 = vpop.f32.mrf.mxu0
    %v5824 = vadd.f32 %v5811, %v5823
    %v5825 = vpop.f32.mrf.mxu0
    %5826 = vdwg.mxu0
    %5827 = vmatpush.bf16.msra.mxu0 %v5457
    %5828 = vmatpush.bf16.msra.mxu0 %v5453
    %5829 = vmatpush.bf16.msra.mxu0 %v5449
    %5830 = vmatpush.bf16.msra.mxu0 %v5445
    %5831 = vmatpush.bf16.msra.mxu0 %v5441
    %5832 = vmatpush.bf16.msra.mxu0 %v5437
    %5833 = vmatpush.bf16.msra.mxu0 %v5433
    %5834 = vmatpush.bf16.msra.mxu0 %v5429
    %5835 = vmatmul.bf16.gmra.mxu0 %v4201
    %v5836 = vpop.f32.mrf.mxu0
    %v5837 = vadd.f32 %v5824, %v5836
    %v5838 = vpop.f32.mrf.mxu0
    %5839 = vdwg.mxu0
    %5840 = vmatpush.bf16.msra.mxu0 %v5489
    %5841 = vmatpush.bf16.msra.mxu0 %v5485
    %5842 = vmatpush.bf16.msra.mxu0 %v5481
    %5843 = vmatpush.bf16.msra.mxu0 %v5477
    %5844 = vmatpush.bf16.msra.mxu0 %v5473
    %5845 = vmatpush.bf16.msra.mxu0 %v5469
    %5846 = vmatpush.bf16.msra.mxu0 %v5465
    %5847 = vmatpush.bf16.msra.mxu0 %v5461
    %5848 = vmatmul.bf16.gmra.mxu0 %v4202
    %v5849 = vpop.f32.mrf.mxu0
    %v5850 = vadd.f32 %v5837, %v5849
    %v5851 = vpop.f32.mrf.mxu0
    %5852 = vdwg.mxu0
    %5853 = vmatpush.bf16.msra.mxu0 %v5266
    %5854 = vmatpush.bf16.msra.mxu0 %v5262
    %5855 = vmatpush.bf16.msra.mxu0 %v5258
    %5856 = vmatpush.bf16.msra.mxu0 %v5254
    %5857 = vmatpush.bf16.msra.mxu0 %v5250
    %5858 = vmatpush.bf16.msra.mxu0 %v5246
    %5859 = vmatpush.bf16.msra.mxu0 %v5242
    %5860 = vmatpush.bf16.msra.mxu0 %v5238
    %5861 = vmatmul.bf16.gmra.mxu0 %v4195
    %v5862 = vpop.f32.mrf.mxu0
    %v5863 = vadd.f32 %v4462, %v5862
    %v5864 = vpop.f32.mrf.mxu0
    %5865 = vdwg.mxu0
    %5866 = vmatpush.bf16.msra.mxu0 %v5298
    %5867 = vmatpush.bf16.msra.mxu0 %v5294
    %5868 = vmatpush.bf16.msra.mxu0 %v5290
    %5869 = vmatpush.bf16.msra.mxu0 %v5286
    %5870 = vmatpush.bf16.msra.mxu0 %v5282
    %5871 = vmatpush.bf16.msra.mxu0 %v5278
    %5872 = vmatpush.bf16.msra.mxu0 %v5274
    %5873 = vmatpush.bf16.msra.mxu0 %v5270
    %5874 = vmatmul.bf16.gmra.mxu0 %v4196
    %v5875 = vpop.f32.mrf.mxu0
    %v5876 = vadd.f32 %v5863, %v5875
    %v5877 = vpop.f32.mrf.mxu0
    %5878 = vdwg.mxu0
    %5879 = vmatpush.bf16.msra.mxu0 %v5330
    %5880 = vmatpush.bf16.msra.mxu0 %v5326
    %5881 = vmatpush.bf16.msra.mxu0 %v5322
    %5882 = vmatpush.bf16.msra.mxu0 %v5318
    %5883 = vmatpush.bf16.msra.mxu0 %v5314
    %5884 = vmatpush.bf16.msra.mxu0 %v5310
    %5885 = vmatpush.bf16.msra.mxu0 %v5306
    %5886 = vmatpush.bf16.msra.mxu0 %v5302
    %5887 = vmatmul.bf16.gmra.mxu0 %v4197
    %v5888 = vpop.f32.mrf.mxu0
    %v5889 = vadd.f32 %v5876, %v5888
    %v5890 = vpop.f32.mrf.mxu0
    %5891 = vdwg.mxu0
    %5892 = vmatpush.bf16.msra.mxu0 %v5362
    %5893 = vmatpush.bf16.msra.mxu0 %v5358
    %5894 = vmatpush.bf16.msra.mxu0 %v5354
    %5895 = vmatpush.bf16.msra.mxu0 %v5350
    %5896 = vmatpush.bf16.msra.mxu0 %v5346
    %5897 = vmatpush.bf16.msra.mxu0 %v5342
    %5898 = vmatpush.bf16.msra.mxu0 %v5338
    %5899 = vmatpush.bf16.msra.mxu0 %v5334
    %5900 = vmatmul.bf16.gmra.mxu0 %v4198
    %v5901 = vpop.f32.mrf.mxu0
    %v5902 = vadd.f32 %v5889, %v5901
    %v5903 = vpop.f32.mrf.mxu0
    %5904 = vdwg.mxu0
    %5905 = vmatpush.bf16.msra.mxu0 %v5394
    %5906 = vmatpush.bf16.msra.mxu0 %v5390
    %5907 = vmatpush.bf16.msra.mxu0 %v5386
    %5908 = vmatpush.bf16.msra.mxu0 %v5382
    %5909 = vmatpush.bf16.msra.mxu0 %v5378
    %5910 = vmatpush.bf16.msra.mxu0 %v5374
    %5911 = vmatpush.bf16.msra.mxu0 %v5370
    %5912 = vmatpush.bf16.msra.mxu0 %v5366
    %5913 = vmatmul.bf16.gmra.mxu0 %v4199
    %v5914 = vpop.f32.mrf.mxu0
    %v5915 = vadd.f32 %v5902, %v5914
    %v5916 = vpop.f32.mrf.mxu0
    %5917 = vdwg.mxu0
    %5918 = vmatpush.bf16.msra.mxu0 %v5426
    %5919 = vmatpush.bf16.msra.mxu0 %v5422
    %5920 = vmatpush.bf16.msra.mxu0 %v5418
    %5921 = vmatpush.bf16.msra.mxu0 %v5414
    %5922 = vmatpush.bf16.msra.mxu0 %v5410
    %5923 = vmatpush.bf16.msra.mxu0 %v5406
    %5924 = vmatpush.bf16.msra.mxu0 %v5402
    %5925 = vmatpush.bf16.msra.mxu0 %v5398
    %5926 = vmatmul.bf16.gmra.mxu0 %v4200
    %v5927 = vpop.f32.mrf.mxu0
    %v5928 = vadd.f32 %v5915, %v5927
    %v5929 = vpop.f32.mrf.mxu0
    %5930 = vdwg.mxu0
    %5931 = vmatpush.bf16.msra.mxu0 %v5458
    %5932 = vmatpush.bf16.msra.mxu0 %v5454
    %5933 = vmatpush.bf16.msra.mxu0 %v5450
    %5934 = vmatpush.bf16.msra.mxu0 %v5446
    %5935 = vmatpush.bf16.msra.mxu0 %v5442
    %5936 = vmatpush.bf16.msra.mxu0 %v5438
    %5937 = vmatpush.bf16.msra.mxu0 %v5434
    %5938 = vmatpush.bf16.msra.mxu0 %v5430
    %5939 = vmatmul.bf16.gmra.mxu0 %v4201
    %v5940 = vpop.f32.mrf.mxu0
    %v5941 = vadd.f32 %v5928, %v5940
    %v5942 = vpop.f32.mrf.mxu0
    %5943 = vdwg.mxu0
    %5944 = vmatpush.bf16.msra.mxu0 %v5490
    %5945 = vmatpush.bf16.msra.mxu0 %v5486
    %5946 = vmatpush.bf16.msra.mxu0 %v5482
    %5947 = vmatpush.bf16.msra.mxu0 %v5478
    %5948 = vmatpush.bf16.msra.mxu0 %v5474
    %5949 = vmatpush.bf16.msra.mxu0 %v5470
    %5950 = vmatpush.bf16.msra.mxu0 %v5466
    %5951 = vmatpush.bf16.msra.mxu0 %v5462
    %5952 = vmatmul.bf16.gmra.mxu0 %v4202
    %v5953 = vpop.f32.mrf.mxu0
    %v5954 = vadd.f32 %v5941, %v5953
    %v5955 = vpop.f32.mrf.mxu0
    %5956 = vdwg.mxu0
    %5957 = vmatpush.bf16.msra.mxu0 %v5267
    %5958 = vmatpush.bf16.msra.mxu0 %v5263
    %5959 = vmatpush.bf16.msra.mxu0 %v5259
    %5960 = vmatpush.bf16.msra.mxu0 %v5255
    %5961 = vmatpush.bf16.msra.mxu0 %v5251
    %5962 = vmatpush.bf16.msra.mxu0 %v5247
    %5963 = vmatpush.bf16.msra.mxu0 %v5243
    %5964 = vmatpush.bf16.msra.mxu0 %v5239
    %5965 = vmatmul.bf16.gmra.mxu0 %v4195
    %v5966 = vpop.f32.mrf.mxu0
    %v5967 = vadd.f32 %v4463, %v5966
    %v5968 = vpop.f32.mrf.mxu0
    %5969 = vdwg.mxu0
    %5970 = vmatpush.bf16.msra.mxu0 %v5299
    %5971 = vmatpush.bf16.msra.mxu0 %v5295
    %5972 = vmatpush.bf16.msra.mxu0 %v5291
    %5973 = vmatpush.bf16.msra.mxu0 %v5287
    %5974 = vmatpush.bf16.msra.mxu0 %v5283
    %5975 = vmatpush.bf16.msra.mxu0 %v5279
    %5976 = vmatpush.bf16.msra.mxu0 %v5275
    %5977 = vmatpush.bf16.msra.mxu0 %v5271
    %5978 = vmatmul.bf16.gmra.mxu0 %v4196
    %v5979 = vpop.f32.mrf.mxu0
    %v5980 = vadd.f32 %v5967, %v5979
    %v5981 = vpop.f32.mrf.mxu0
    %5982 = vdwg.mxu0
    %5983 = vmatpush.bf16.msra.mxu0 %v5331
    %5984 = vmatpush.bf16.msra.mxu0 %v5327
    %5985 = vmatpush.bf16.msra.mxu0 %v5323
    %5986 = vmatpush.bf16.msra.mxu0 %v5319
    %5987 = vmatpush.bf16.msra.mxu0 %v5315
    %5988 = vmatpush.bf16.msra.mxu0 %v5311
    %5989 = vmatpush.bf16.msra.mxu0 %v5307
    %5990 = vmatpush.bf16.msra.mxu0 %v5303
    %5991 = vmatmul.bf16.gmra.mxu0 %v4197
    %v5992 = vpop.f32.mrf.mxu0
    %v5993 = vadd.f32 %v5980, %v5992
    %v5994 = vpop.f32.mrf.mxu0
    %5995 = vdwg.mxu0
    %5996 = vmatpush.bf16.msra.mxu0 %v5363
    %5997 = vmatpush.bf16.msra.mxu0 %v5359
    %5998 = vmatpush.bf16.msra.mxu0 %v5355
    %5999 = vmatpush.bf16.msra.mxu0 %v5351
    %6000 = vmatpush.bf16.msra.mxu0 %v5347
    %6001 = vmatpush.bf16.msra.mxu0 %v5343
    %6002 = vmatpush.bf16.msra.mxu0 %v5339
    %6003 = vmatpush.bf16.msra.mxu0 %v5335
    %6004 = vmatmul.bf16.gmra.mxu0 %v4198
    %v6005 = vpop.f32.mrf.mxu0
    %v6006 = vadd.f32 %v5993, %v6005
    %v6007 = vpop.f32.mrf.mxu0
    %6008 = vdwg.mxu0
    %6009 = vmatpush.bf16.msra.mxu0 %v5395
    %6010 = vmatpush.bf16.msra.mxu0 %v5391
    %6011 = vmatpush.bf16.msra.mxu0 %v5387
    %6012 = vmatpush.bf16.msra.mxu0 %v5383
    %6013 = vmatpush.bf16.msra.mxu0 %v5379
    %6014 = vmatpush.bf16.msra.mxu0 %v5375
    %6015 = vmatpush.bf16.msra.mxu0 %v5371
    %6016 = vmatpush.bf16.msra.mxu0 %v5367
    %6017 = vmatmul.bf16.gmra.mxu0 %v4199
    %v6018 = vpop.f32.mrf.mxu0
    %v6019 = vadd.f32 %v6006, %v6018
    %v6020 = vpop.f32.mrf.mxu0
    %6021 = vdwg.mxu0
    %6022 = vmatpush.bf16.msra.mxu0 %v5427
    %6023 = vmatpush.bf16.msra.mxu0 %v5423
    %6024 = vmatpush.bf16.msra.mxu0 %v5419
    %6025 = vmatpush.bf16.msra.mxu0 %v5415
    %6026 = vmatpush.bf16.msra.mxu0 %v5411
    %6027 = vmatpush.bf16.msra.mxu0 %v5407
    %6028 = vmatpush.bf16.msra.mxu0 %v5403
    %6029 = vmatpush.bf16.msra.mxu0 %v5399
    %6030 = vmatmul.bf16.gmra.mxu0 %v4200
    %v6031 = vpop.f32.mrf.mxu0
    %v6032 = vadd.f32 %v6019, %v6031
    %v6033 = vpop.f32.mrf.mxu0
    %6034 = vdwg.mxu0
    %6035 = vmatpush.bf16.msra.mxu0 %v5459
    %6036 = vmatpush.bf16.msra.mxu0 %v5455
    %6037 = vmatpush.bf16.msra.mxu0 %v5451
    %6038 = vmatpush.bf16.msra.mxu0 %v5447
    %6039 = vmatpush.bf16.msra.mxu0 %v5443
    %6040 = vmatpush.bf16.msra.mxu0 %v5439
    %6041 = vmatpush.bf16.msra.mxu0 %v5435
    %6042 = vmatpush.bf16.msra.mxu0 %v5431
    %6043 = vmatmul.bf16.gmra.mxu0 %v4201
    %v6044 = vpop.f32.mrf.mxu0
    %v6045 = vadd.f32 %v6032, %v6044
    %v6046 = vpop.f32.mrf.mxu0
    %6047 = vdwg.mxu0
    %6048 = vmatpush.bf16.msra.mxu0 %v5491
    %6049 = vmatpush.bf16.msra.mxu0 %v5487
    %6050 = vmatpush.bf16.msra.mxu0 %v5483
    %6051 = vmatpush.bf16.msra.mxu0 %v5479
    %6052 = vmatpush.bf16.msra.mxu0 %v5475
    %6053 = vmatpush.bf16.msra.mxu0 %v5471
    %6054 = vmatpush.bf16.msra.mxu0 %v5467
    %6055 = vmatpush.bf16.msra.mxu0 %v5463
    %6056 = vmatmul.bf16.gmra.mxu0 %v4202
    %v6057 = vpop.f32.mrf.mxu0
    %v6058 = vadd.f32 %v6045, %v6057
    %v6059 = vpop.f32.mrf.mxu0
    %6060 = vdwg.mxu0
    %6061 = vmatpush.bf16.msra.mxu0 %v5268
    %6062 = vmatpush.bf16.msra.mxu0 %v5264
    %6063 = vmatpush.bf16.msra.mxu0 %v5260
    %6064 = vmatpush.bf16.msra.mxu0 %v5256
    %6065 = vmatpush.bf16.msra.mxu0 %v5252
    %6066 = vmatpush.bf16.msra.mxu0 %v5248
    %6067 = vmatpush.bf16.msra.mxu0 %v5244
    %6068 = vmatpush.bf16.msra.mxu0 %v5240
    %6069 = vmatmul.bf16.gmra.mxu0 %v4195
    %v6070 = vpop.f32.mrf.mxu0
    %v6071 = vadd.f32 %v4464, %v6070
    %v6072 = vpop.f32.mrf.mxu0
    %6073 = vdwg.mxu0
    %6074 = vmatpush.bf16.msra.mxu0 %v5300
    %6075 = vmatpush.bf16.msra.mxu0 %v5296
    %6076 = vmatpush.bf16.msra.mxu0 %v5292
    %6077 = vmatpush.bf16.msra.mxu0 %v5288
    %6078 = vmatpush.bf16.msra.mxu0 %v5284
    %6079 = vmatpush.bf16.msra.mxu0 %v5280
    %6080 = vmatpush.bf16.msra.mxu0 %v5276
    %6081 = vmatpush.bf16.msra.mxu0 %v5272
    %6082 = vmatmul.bf16.gmra.mxu0 %v4196
    %v6083 = vpop.f32.mrf.mxu0
    %v6084 = vadd.f32 %v6071, %v6083
    %v6085 = vpop.f32.mrf.mxu0
    %6086 = vdwg.mxu0
    %6087 = vmatpush.bf16.msra.mxu0 %v5332
    %6088 = vmatpush.bf16.msra.mxu0 %v5328
    %6089 = vmatpush.bf16.msra.mxu0 %v5324
    %6090 = vmatpush.bf16.msra.mxu0 %v5320
    %6091 = vmatpush.bf16.msra.mxu0 %v5316
    %6092 = vmatpush.bf16.msra.mxu0 %v5312
    %6093 = vmatpush.bf16.msra.mxu0 %v5308
    %6094 = vmatpush.bf16.msra.mxu0 %v5304
    %6095 = vmatmul.bf16.gmra.mxu0 %v4197
    %v6096 = vpop.f32.mrf.mxu0
    %v6097 = vadd.f32 %v6084, %v6096
    %v6098 = vpop.f32.mrf.mxu0
    %6099 = vdwg.mxu0
    %6100 = vmatpush.bf16.msra.mxu0 %v5364
    %6101 = vmatpush.bf16.msra.mxu0 %v5360
    %6102 = vmatpush.bf16.msra.mxu0 %v5356
    %6103 = vmatpush.bf16.msra.mxu0 %v5352
    %6104 = vmatpush.bf16.msra.mxu0 %v5348
    %6105 = vmatpush.bf16.msra.mxu0 %v5344
    %6106 = vmatpush.bf16.msra.mxu0 %v5340
    %6107 = vmatpush.bf16.msra.mxu0 %v5336
    %6108 = vmatmul.bf16.gmra.mxu0 %v4198
    %v6109 = vpop.f32.mrf.mxu0
    %v6110 = vadd.f32 %v6097, %v6109
    %v6111 = vpop.f32.mrf.mxu0
    %6112 = vdwg.mxu0
    %6113 = vmatpush.bf16.msra.mxu0 %v5396
    %6114 = vmatpush.bf16.msra.mxu0 %v5392
    %6115 = vmatpush.bf16.msra.mxu0 %v5388
    %6116 = vmatpush.bf16.msra.mxu0 %v5384
    %6117 = vmatpush.bf16.msra.mxu0 %v5380
    %6118 = vmatpush.bf16.msra.mxu0 %v5376
    %6119 = vmatpush.bf16.msra.mxu0 %v5372
    %6120 = vmatpush.bf16.msra.mxu0 %v5368
    %6121 = vmatmul.bf16.gmra.mxu0 %v4199
    %v6122 = vpop.f32.mrf.mxu0
    %v6123 = vadd.f32 %v6110, %v6122
    %v6124 = vpop.f32.mrf.mxu0
    %6125 = vdwg.mxu0
    %6126 = vmatpush.bf16.msra.mxu0 %v5428
    %6127 = vmatpush.bf16.msra.mxu0 %v5424
    %6128 = vmatpush.bf16.msra.mxu0 %v5420
    %6129 = vmatpush.bf16.msra.mxu0 %v5416
    %6130 = vmatpush.bf16.msra.mxu0 %v5412
    %6131 = vmatpush.bf16.msra.mxu0 %v5408
    %6132 = vmatpush.bf16.msra.mxu0 %v5404
    %6133 = vmatpush.bf16.msra.mxu0 %v5400
    %6134 = vmatmul.bf16.gmra.mxu0 %v4200
    %v6135 = vpop.f32.mrf.mxu0
    %v6136 = vadd.f32 %v6123, %v6135
    %v6137 = vpop.f32.mrf.mxu0
    %6138 = vdwg.mxu0
    %6139 = vmatpush.bf16.msra.mxu0 %v5460
    %6140 = vmatpush.bf16.msra.mxu0 %v5456
    %6141 = vmatpush.bf16.msra.mxu0 %v5452
    %6142 = vmatpush.bf16.msra.mxu0 %v5448
    %6143 = vmatpush.bf16.msra.mxu0 %v5444
    %6144 = vmatpush.bf16.msra.mxu0 %v5440
    %6145 = vmatpush.bf16.msra.mxu0 %v5436
    %6146 = vmatpush.bf16.msra.mxu0 %v5432
    %6147 = vmatmul.bf16.gmra.mxu0 %v4201
    %v6148 = vpop.f32.mrf.mxu0
    %v6149 = vadd.f32 %v6136, %v6148
    %v6150 = vpop.f32.mrf.mxu0
    %6151 = vdwg.mxu0
    %6152 = vmatpush.bf16.msra.mxu0 %v5492
    %6153 = vmatpush.bf16.msra.mxu0 %v5488
    %6154 = vmatpush.bf16.msra.mxu0 %v5484
    %6155 = vmatpush.bf16.msra.mxu0 %v5480
    %6156 = vmatpush.bf16.msra.mxu0 %v5476
    %6157 = vmatpush.bf16.msra.mxu0 %v5472
    %6158 = vmatpush.bf16.msra.mxu0 %v5468
    %6159 = vmatpush.bf16.msra.mxu0 %v5464
    %6160 = vmatmul.bf16.gmra.mxu0 %v4202
    %v6161 = vpop.f32.mrf.mxu0
    %v6162 = vadd.f32 %v6149, %v6161
    %v6163 = vpop.f32.mrf.mxu0
    %6164 = vdwg.mxu0
    %v6165 = vmax.f32 %v5850, 0.0
    %v6166 = vmax.f32 %v5954, 0.0
    %v6167 = vmax.f32 %v6058, 0.0
    %v6168 = vmax.f32 %v6162, 0.0
    %v6169 = vpack.c.bf16 %v6165, %v6165
    %v6170 = vpack.c.bf16 %v6166, %v6166
    %v6171 = vpack.c.bf16 %v6167, %v6167
    %v6172 = vpack.c.bf16 %v6168, %v6168
    %v6173 = vld [vmem:[#allocation11] sm:$0xff]
    %v6174 = vld [vmem:[#allocation11 + $0x8] sm:$0xff]
    %v6175 = vld [vmem:[#allocation11 + $0x10] sm:$0xff]
    %v6176 = vld [vmem:[#allocation11 + $0x18] sm:$0xff]
    %v6177 = vld [vmem:[#allocation11 + $0x20] sm:$0xff]
    %v6178 = vld [vmem:[#allocation11 + $0x28] sm:$0xff]
    %v6179 = vld [vmem:[#allocation11 + $0x30] sm:$0xff]
    %v6180 = vld [vmem:[#allocation11 + $0x38] sm:$0xff]
    %v6181 = vld [vmem:[#allocation11 + $0x40] sm:$0xff]
    %v6182 = vld [vmem:[#allocation11 + $0x48] sm:$0xff]
    %v6183 = vld [vmem:[#allocation11 + $0x50] sm:$0xff]
    %v6184 = vld [vmem:[#allocation11 + $0x58] sm:$0xff]
    %v6185 = vld [vmem:[#allocation11 + $0x60] sm:$0xff]
    %v6186 = vld [vmem:[#allocation11 + $0x68] sm:$0xff]
    %v6187 = vld [vmem:[#allocation11 + $0x70] sm:$0xff]
    %v6188 = vld [vmem:[#allocation11 + $0x78] sm:$0xff]
    %v6189 = vld [vmem:[#allocation11 + $0x80] sm:$0xff]
    %v6190 = vld [vmem:[#allocation11 + $0x88] sm:$0xff]
    %v6191 = vld [vmem:[#allocation11 + $0x90] sm:$0xff]
    %v6192 = vld [vmem:[#allocation11 + $0x98] sm:$0xff]
    %v6193 = vld [vmem:[#allocation11 + $0xa0] sm:$0xff]
    %v6194 = vld [vmem:[#allocation11 + $0xa8] sm:$0xff]
    %v6195 = vld [vmem:[#allocation11 + $0xb0] sm:$0xff]
    %v6196 = vld [vmem:[#allocation11 + $0xb8] sm:$0xff]
    %v6197 = vld [vmem:[#allocation11 + $0xc0] sm:$0xff]
    %v6198 = vld [vmem:[#allocation11 + $0xc8] sm:$0xff]
    %v6199 = vld [vmem:[#allocation11 + $0xd0] sm:$0xff]
    %v6200 = vld [vmem:[#allocation11 + $0xd8] sm:$0xff]
    %v6201 = vld [vmem:[#allocation11 + $0xe0] sm:$0xff]
    %v6202 = vld [vmem:[#allocation11 + $0xe8] sm:$0xff]
    %v6203 = vld [vmem:[#allocation11 + $0xf0] sm:$0xff]
    %v6204 = vld [vmem:[#allocation11 + $0xf8] sm:$0xff]
    %v6205 = vld [vmem:[#allocation11 + $0x100] sm:$0xff]
    %v6206 = vld [vmem:[#allocation11 + $0x108] sm:$0xff]
    %v6207 = vld [vmem:[#allocation11 + $0x110] sm:$0xff]
    %v6208 = vld [vmem:[#allocation11 + $0x118] sm:$0xff]
    %v6209 = vld [vmem:[#allocation11 + $0x120] sm:$0xff]
    %v6210 = vld [vmem:[#allocation11 + $0x128] sm:$0xff]
    %v6211 = vld [vmem:[#allocation11 + $0x130] sm:$0xff]
    %v6212 = vld [vmem:[#allocation11 + $0x138] sm:$0xff]
    %v6213 = vld [vmem:[#allocation11 + $0x140] sm:$0xff]
    %v6214 = vld [vmem:[#allocation11 + $0x148] sm:$0xff]
    %v6215 = vld [vmem:[#allocation11 + $0x150] sm:$0xff]
    %v6216 = vld [vmem:[#allocation11 + $0x158] sm:$0xff]
    %v6217 = vld [vmem:[#allocation11 + $0x160] sm:$0xff]
    %v6218 = vld [vmem:[#allocation11 + $0x168] sm:$0xff]
    %v6219 = vld [vmem:[#allocation11 + $0x170] sm:$0xff]
    %v6220 = vld [vmem:[#allocation11 + $0x178] sm:$0xff]
    %v6221 = vld [vmem:[#allocation11 + $0x180] sm:$0xff]
    %v6222 = vld [vmem:[#allocation11 + $0x188] sm:$0xff]
    %v6223 = vld [vmem:[#allocation11 + $0x190] sm:$0xff]
    %v6224 = vld [vmem:[#allocation11 + $0x198] sm:$0xff]
    %v6225 = vld [vmem:[#allocation11 + $0x1a0] sm:$0xff]
    %v6226 = vld [vmem:[#allocation11 + $0x1a8] sm:$0xff]
    %v6227 = vld [vmem:[#allocation11 + $0x1b0] sm:$0xff]
    %v6228 = vld [vmem:[#allocation11 + $0x1b8] sm:$0xff]
    %v6229 = vld [vmem:[#allocation11 + $0x1c0] sm:$0xff]
    %v6230 = vld [vmem:[#allocation11 + $0x1c8] sm:$0xff]
    %v6231 = vld [vmem:[#allocation11 + $0x1d0] sm:$0xff]
    %v6232 = vld [vmem:[#allocation11 + $0x1d8] sm:$0xff]
    %v6233 = vld [vmem:[#allocation11 + $0x1e0] sm:$0xff]
    %v6234 = vld [vmem:[#allocation11 + $0x1e8] sm:$0xff]
    %v6235 = vld [vmem:[#allocation11 + $0x1f0] sm:$0xff]
    %v6236 = vld [vmem:[#allocation11 + $0x1f8] sm:$0xff]
    %v6237 = vld [vmem:[#allocation13] sm:$0x3]
    %v6239 = vperm.slane %v6237, 0
    %v6240 = vperm.slane %v6237, 1
    %v6307 = vunpack.c.l.b16 %v6173
    %v6308 = vunpack.c.h.b16 %v6173
    %v6309 = vunpack.c.l.b16 %v6174
    %v6310 = vunpack.c.h.b16 %v6174
    %v6311 = vunpack.c.l.b16 %v6175
    %v6312 = vunpack.c.h.b16 %v6175
    %v6313 = vunpack.c.l.b16 %v6176
    %v6314 = vunpack.c.h.b16 %v6176
    %v6315 = vunpack.c.l.b16 %v6177
    %v6316 = vunpack.c.h.b16 %v6177
    %v6317 = vunpack.c.l.b16 %v6178
    %v6318 = vunpack.c.h.b16 %v6178
    %v6319 = vunpack.c.l.b16 %v6179
    %v6320 = vunpack.c.h.b16 %v6179
    %v6321 = vunpack.c.l.b16 %v6180
    %v6322 = vunpack.c.h.b16 %v6180
    %v6323 = vunpack.c.l.b16 %v6181
    %v6324 = vunpack.c.h.b16 %v6181
    %v6325 = vunpack.c.l.b16 %v6182
    %v6326 = vunpack.c.h.b16 %v6182
    %v6327 = vunpack.c.l.b16 %v6183
    %v6328 = vunpack.c.h.b16 %v6183
    %v6329 = vunpack.c.l.b16 %v6184
    %v6330 = vunpack.c.h.b16 %v6184
    %v6331 = vunpack.c.l.b16 %v6185
    %v6332 = vunpack.c.h.b16 %v6185
    %v6333 = vunpack.c.l.b16 %v6186
    %v6334 = vunpack.c.h.b16 %v6186
    %v6335 = vunpack.c.l.b16 %v6187
    %v6336 = vunpack.c.h.b16 %v6187
    %v6337 = vunpack.c.l.b16 %v6188
    %v6338 = vunpack.c.h.b16 %v6188
    %v6339 = vunpack.c.l.b16 %v6189
    %v6340 = vunpack.c.h.b16 %v6189
    %v6341 = vunpack.c.l.b16 %v6190
    %v6342 = vunpack.c.h.b16 %v6190
    %v6343 = vunpack.c.l.b16 %v6191
    %v6344 = vunpack.c.h.b16 %v6191
    %v6345 = vunpack.c.l.b16 %v6192
    %v6346 = vunpack.c.h.b16 %v6192
    %v6347 = vunpack.c.l.b16 %v6193
    %v6348 = vunpack.c.h.b16 %v6193
    %v6349 = vunpack.c.l.b16 %v6194
    %v6350 = vunpack.c.h.b16 %v6194
    %v6351 = vunpack.c.l.b16 %v6195
    %v6352 = vunpack.c.h.b16 %v6195
    %v6353 = vunpack.c.l.b16 %v6196
    %v6354 = vunpack.c.h.b16 %v6196
    %v6355 = vunpack.c.l.b16 %v6197
    %v6356 = vunpack.c.h.b16 %v6197
    %v6357 = vunpack.c.l.b16 %v6198
    %v6358 = vunpack.c.h.b16 %v6198
    %v6359 = vunpack.c.l.b16 %v6199
    %v6360 = vunpack.c.h.b16 %v6199
    %v6361 = vunpack.c.l.b16 %v6200
    %v6362 = vunpack.c.h.b16 %v6200
    %v6363 = vunpack.c.l.b16 %v6201
    %v6364 = vunpack.c.h.b16 %v6201
    %v6365 = vunpack.c.l.b16 %v6202
    %v6366 = vunpack.c.h.b16 %v6202
    %v6367 = vunpack.c.l.b16 %v6203
    %v6368 = vunpack.c.h.b16 %v6203
    %v6369 = vunpack.c.l.b16 %v6204
    %v6370 = vunpack.c.h.b16 %v6204
    %v6371 = vunpack.c.l.b16 %v6205
    %v6372 = vunpack.c.h.b16 %v6205
    %v6373 = vunpack.c.l.b16 %v6206
    %v6374 = vunpack.c.h.b16 %v6206
    %v6375 = vunpack.c.l.b16 %v6207
    %v6376 = vunpack.c.h.b16 %v6207
    %v6377 = vunpack.c.l.b16 %v6208
    %v6378 = vunpack.c.h.b16 %v6208
    %v6379 = vunpack.c.l.b16 %v6209
    %v6380 = vunpack.c.h.b16 %v6209
    %v6381 = vunpack.c.l.b16 %v6210
    %v6382 = vunpack.c.h.b16 %v6210
    %v6383 = vunpack.c.l.b16 %v6211
    %v6384 = vunpack.c.h.b16 %v6211
    %v6385 = vunpack.c.l.b16 %v6212
    %v6386 = vunpack.c.h.b16 %v6212
    %v6387 = vunpack.c.l.b16 %v6213
    %v6388 = vunpack.c.h.b16 %v6213
    %v6389 = vunpack.c.l.b16 %v6214
    %v6390 = vunpack.c.h.b16 %v6214
    %v6391 = vunpack.c.l.b16 %v6215
    %v6392 = vunpack.c.h.b16 %v6215
    %v6393 = vunpack.c.l.b16 %v6216
    %v6394 = vunpack.c.h.b16 %v6216
    %v6395 = vunpack.c.l.b16 %v6217
    %v6396 = vunpack.c.h.b16 %v6217
    %v6397 = vunpack.c.l.b16 %v6218
    %v6398 = vunpack.c.h.b16 %v6218
    %v6399 = vunpack.c.l.b16 %v6219
    %v6400 = vunpack.c.h.b16 %v6219
    %v6401 = vunpack.c.l.b16 %v6220
    %v6402 = vunpack.c.h.b16 %v6220
    %v6403 = vunpack.c.l.b16 %v6221
    %v6404 = vunpack.c.h.b16 %v6221
    %v6405 = vunpack.c.l.b16 %v6222
    %v6406 = vunpack.c.h.b16 %v6222
    %v6407 = vunpack.c.l.b16 %v6223
    %v6408 = vunpack.c.h.b16 %v6223
    %v6409 = vunpack.c.l.b16 %v6224
    %v6410 = vunpack.c.h.b16 %v6224
    %v6411 = vunpack.c.l.b16 %v6225
    %v6412 = vunpack.c.h.b16 %v6225
    %v6413 = vunpack.c.l.b16 %v6226
    %v6414 = vunpack.c.h.b16 %v6226
    %v6415 = vunpack.c.l.b16 %v6227
    %v6416 = vunpack.c.h.b16 %v6227
    %v6417 = vunpack.c.l.b16 %v6228
    %v6418 = vunpack.c.h.b16 %v6228
    %v6419 = vunpack.c.l.b16 %v6229
    %v6420 = vunpack.c.h.b16 %v6229
    %v6421 = vunpack.c.l.b16 %v6230
    %v6422 = vunpack.c.h.b16 %v6230
    %v6423 = vunpack.c.l.b16 %v6231
    %v6424 = vunpack.c.h.b16 %v6231
    %v6425 = vunpack.c.l.b16 %v6232
    %v6426 = vunpack.c.h.b16 %v6232
    %v6427 = vunpack.c.l.b16 %v6233
    %v6428 = vunpack.c.h.b16 %v6233
    %v6429 = vunpack.c.l.b16 %v6234
    %v6430 = vunpack.c.h.b16 %v6234
    %v6431 = vunpack.c.l.b16 %v6235
    %v6432 = vunpack.c.h.b16 %v6235
    %v6433 = vunpack.c.l.b16 %v6236
    %v6434 = vunpack.c.h.b16 %v6236
    %v6435 = vpack.c.b16 %v6309, %v6307
    %v6436 = vpack.c.b16 %v6310, %v6308
    %v6437 = vpack.c.b16 %v6313, %v6311
    %v6438 = vpack.c.b16 %v6314, %v6312
    %v6439 = vpack.c.b16 %v6317, %v6315
    %v6440 = vpack.c.b16 %v6318, %v6316
    %v6441 = vpack.c.b16 %v6321, %v6319
    %v6442 = vpack.c.b16 %v6322, %v6320
    %v6443 = vpack.c.b16 %v6325, %v6323
    %v6444 = vpack.c.b16 %v6326, %v6324
    %v6445 = vpack.c.b16 %v6329, %v6327
    %v6446 = vpack.c.b16 %v6330, %v6328
    %v6447 = vpack.c.b16 %v6333, %v6331
    %v6448 = vpack.c.b16 %v6334, %v6332
    %v6449 = vpack.c.b16 %v6337, %v6335
    %v6450 = vpack.c.b16 %v6338, %v6336
    %v6451 = vpack.c.b16 %v6341, %v6339
    %v6452 = vpack.c.b16 %v6342, %v6340
    %v6453 = vpack.c.b16 %v6345, %v6343
    %v6454 = vpack.c.b16 %v6346, %v6344
    %v6455 = vpack.c.b16 %v6349, %v6347
    %v6456 = vpack.c.b16 %v6350, %v6348
    %v6457 = vpack.c.b16 %v6353, %v6351
    %v6458 = vpack.c.b16 %v6354, %v6352
    %v6459 = vpack.c.b16 %v6357, %v6355
    %v6460 = vpack.c.b16 %v6358, %v6356
    %v6461 = vpack.c.b16 %v6361, %v6359
    %v6462 = vpack.c.b16 %v6362, %v6360
    %v6463 = vpack.c.b16 %v6365, %v6363
    %v6464 = vpack.c.b16 %v6366, %v6364
    %v6465 = vpack.c.b16 %v6369, %v6367
    %v6466 = vpack.c.b16 %v6370, %v6368
    %v6467 = vpack.c.b16 %v6373, %v6371
    %v6468 = vpack.c.b16 %v6374, %v6372
    %v6469 = vpack.c.b16 %v6377, %v6375
    %v6470 = vpack.c.b16 %v6378, %v6376
    %v6471 = vpack.c.b16 %v6381, %v6379
    %v6472 = vpack.c.b16 %v6382, %v6380
    %v6473 = vpack.c.b16 %v6385, %v6383
    %v6474 = vpack.c.b16 %v6386, %v6384
    %v6475 = vpack.c.b16 %v6389, %v6387
    %v6476 = vpack.c.b16 %v6390, %v6388
    %v6477 = vpack.c.b16 %v6393, %v6391
    %v6478 = vpack.c.b16 %v6394, %v6392
    %v6479 = vpack.c.b16 %v6397, %v6395
    %v6480 = vpack.c.b16 %v6398, %v6396
    %v6481 = vpack.c.b16 %v6401, %v6399
    %v6482 = vpack.c.b16 %v6402, %v6400
    %v6483 = vpack.c.b16 %v6405, %v6403
    %v6484 = vpack.c.b16 %v6406, %v6404
    %v6485 = vpack.c.b16 %v6409, %v6407
    %v6486 = vpack.c.b16 %v6410, %v6408
    %v6487 = vpack.c.b16 %v6413, %v6411
    %v6488 = vpack.c.b16 %v6414, %v6412
    %v6489 = vpack.c.b16 %v6417, %v6415
    %v6490 = vpack.c.b16 %v6418, %v6416
    %v6491 = vpack.c.b16 %v6421, %v6419
    %v6492 = vpack.c.b16 %v6422, %v6420
    %v6493 = vpack.c.b16 %v6425, %v6423
    %v6494 = vpack.c.b16 %v6426, %v6424
    %v6495 = vpack.c.b16 %v6429, %v6427
    %v6496 = vpack.c.b16 %v6430, %v6428
    %v6497 = vpack.c.b16 %v6433, %v6431
    %v6498 = vpack.c.b16 %v6434, %v6432
    %6563 = vmatpush.bf16.msra.mxu0 %v6449
    %6564 = vmatpush.bf16.msra.mxu0 %v6447
    %6565 = vmatpush.bf16.msra.mxu0 %v6445
    %6566 = vmatpush.bf16.msra.mxu0 %v6443
    %6567 = vmatpush.bf16.msra.mxu0 %v6441
    %6568 = vmatpush.bf16.msra.mxu0 %v6439
    %6569 = vmatpush.bf16.msra.mxu0 %v6437
    %6570 = vmatpush.bf16.msra.mxu0 %v6435
    %6571 = vmatmul.bf16.gmra.mxu0 %v6169
    %v6572 = vpop.f32.mrf.mxu0
    %v6573 = vadd.f32 %v6239, %v6572
    %v6574 = vpop.f32.mrf.mxu0
    %6575 = vdwg.mxu0
    %6576 = vmatpush.bf16.msra.mxu0 %v6465
    %6577 = vmatpush.bf16.msra.mxu0 %v6463
    %6578 = vmatpush.bf16.msra.mxu0 %v6461
    %6579 = vmatpush.bf16.msra.mxu0 %v6459
    %6580 = vmatpush.bf16.msra.mxu0 %v6457
    %6581 = vmatpush.bf16.msra.mxu0 %v6455
    %6582 = vmatpush.bf16.msra.mxu0 %v6453
    %6583 = vmatpush.bf16.msra.mxu0 %v6451
    %6584 = vmatmul.bf16.gmra.mxu0 %v6170
    %v6585 = vpop.f32.mrf.mxu0
    %v6586 = vadd.f32 %v6573, %v6585
    %v6587 = vpop.f32.mrf.mxu0
    %6588 = vdwg.mxu0
    %6589 = vmatpush.bf16.msra.mxu0 %v6481
    %6590 = vmatpush.bf16.msra.mxu0 %v6479
    %6591 = vmatpush.bf16.msra.mxu0 %v6477
    %6592 = vmatpush.bf16.msra.mxu0 %v6475
    %6593 = vmatpush.bf16.msra.mxu0 %v6473
    %6594 = vmatpush.bf16.msra.mxu0 %v6471
    %6595 = vmatpush.bf16.msra.mxu0 %v6469
    %6596 = vmatpush.bf16.msra.mxu0 %v6467
    %6597 = vmatmul.bf16.gmra.mxu0 %v6171
    %v6598 = vpop.f32.mrf.mxu0
    %v6599 = vadd.f32 %v6586, %v6598
    %v6600 = vpop.f32.mrf.mxu0
    %6601 = vdwg.mxu0
    %6602 = vmatpush.bf16.msra.mxu0 %v6497
    %6603 = vmatpush.bf16.msra.mxu0 %v6495
    %6604 = vmatpush.bf16.msra.mxu0 %v6493
    %6605 = vmatpush.bf16.msra.mxu0 %v6491
    %6606 = vmatpush.bf16.msra.mxu0 %v6489
    %6607 = vmatpush.bf16.msra.mxu0 %v6487
    %6608 = vmatpush.bf16.msra.mxu0 %v6485
    %6609 = vmatpush.bf16.msra.mxu0 %v6483
    %6610 = vmatmul.bf16.gmra.mxu0 %v6172
    %v6611 = vpop.f32.mrf.mxu0
    %v6612 = vadd.f32 %v6599, %v6611
    %v6613 = vpop.f32.mrf.mxu0
    %6614 = vdwg.mxu0
    %6615 = vmatpush.bf16.msra.mxu0 %v6450
    %6616 = vmatpush.bf16.msra.mxu0 %v6448
    %6617 = vmatpush.bf16.msra.mxu0 %v6446
    %6618 = vmatpush.bf16.msra.mxu0 %v6444
    %6619 = vmatpush.bf16.msra.mxu0 %v6442
    %6620 = vmatpush.bf16.msra.mxu0 %v6440
    %6621 = vmatpush.bf16.msra.mxu0 %v6438
    %6622 = vmatpush.bf16.msra.mxu0 %v6436
    %6623 = vmatmul.bf16.gmra.mxu0 %v6169
    %v6624 = vpop.f32.mrf.mxu0
    %v6625 = vadd.f32 %v6240, %v6624
    %v6626 = vpop.f32.mrf.mxu0
    %6627 = vdwg.mxu0
    %6628 = vmatpush.bf16.msra.mxu0 %v6466
    %6629 = vmatpush.bf16.msra.mxu0 %v6464
    %6630 = vmatpush.bf16.msra.mxu0 %v6462
    %6631 = vmatpush.bf16.msra.mxu0 %v6460
    %6632 = vmatpush.bf16.msra.mxu0 %v6458
    %6633 = vmatpush.bf16.msra.mxu0 %v6456
    %6634 = vmatpush.bf16.msra.mxu0 %v6454
    %6635 = vmatpush.bf16.msra.mxu0 %v6452
    %6636 = vmatmul.bf16.gmra.mxu0 %v6170
    %v6637 = vpop.f32.mrf.mxu0
    %v6638 = vadd.f32 %v6625, %v6637
    %v6639 = vpop.f32.mrf.mxu0
    %6640 = vdwg.mxu0
    %6641 = vmatpush.bf16.msra.mxu0 %v6482
    %6642 = vmatpush.bf16.msra.mxu0 %v6480
    %6643 = vmatpush.bf16.msra.mxu0 %v6478
    %6644 = vmatpush.bf16.msra.mxu0 %v6476
    %6645 = vmatpush.bf16.msra.mxu0 %v6474
    %6646 = vmatpush.bf16.msra.mxu0 %v6472
    %6647 = vmatpush.bf16.msra.mxu0 %v6470
    %6648 = vmatpush.bf16.msra.mxu0 %v6468
    %6649 = vmatmul.bf16.gmra.mxu0 %v6171
    %v6650 = vpop.f32.mrf.mxu0
    %v6651 = vadd.f32 %v6638, %v6650
    %v6652 = vpop.f32.mrf.mxu0
    %6653 = vdwg.mxu0
    %6654 = vmatpush.bf16.msra.mxu0 %v6498
    %6655 = vmatpush.bf16.msra.mxu0 %v6496
    %6656 = vmatpush.bf16.msra.mxu0 %v6494
    %6657 = vmatpush.bf16.msra.mxu0 %v6492
    %6658 = vmatpush.bf16.msra.mxu0 %v6490
    %6659 = vmatpush.bf16.msra.mxu0 %v6488
    %6660 = vmatpush.bf16.msra.mxu0 %v6486
    %6661 = vmatpush.bf16.msra.mxu0 %v6484
    %6662 = vmatmul.bf16.gmra.mxu0 %v6172
    %v6663 = vpop.f32.mrf.mxu0
    %v6664 = vadd.f32 %v6651, %v6663
    %v6665 = vpop.f32.mrf.mxu0
    %6666 = vdwg.mxu0
    %v6667 = vmax.f32 %v6612, 0.0
    %v6668 = vmax.f32 %v6664, 0.0
    %v6669 = vpack.c.bf16 %v6667, %v6667
    %v6670 = vpack.c.bf16 %v6668, %v6668
    %v6671 = vld [vmem:[#allocation14] sm:$0xf]
    %v6672 = vld [vmem:[#allocation14 + $0x4] sm:$0xf]
    %v6673 = vld [vmem:[#allocation14 + $0x8] sm:$0xf]
    %v6674 = vld [vmem:[#allocation14 + $0xc] sm:$0xf]
    %v6675 = vld [vmem:[#allocation14 + $0x10] sm:$0xf]
    %v6676 = vld [vmem:[#allocation14 + $0x14] sm:$0xf]
    %v6677 = vld [vmem:[#allocation14 + $0x18] sm:$0xf]
    %v6678 = vld [vmem:[#allocation14 + $0x1c] sm:$0xf]
    %v6679 = vld [vmem:[#allocation14 + $0x20] sm:$0xf]
    %v6680 = vld [vmem:[#allocation14 + $0x24] sm:$0xf]
    %v6681 = vld [vmem:[#allocation14 + $0x28] sm:$0xf]
    %v6682 = vld [vmem:[#allocation14 + $0x2c] sm:$0xf]
    %v6683 = vld [vmem:[#allocation14 + $0x30] sm:$0xf]
    %v6684 = vld [vmem:[#allocation14 + $0x34] sm:$0xf]
    %v6685 = vld [vmem:[#allocation14 + $0x38] sm:$0xf]
    %v6686 = vld [vmem:[#allocation14 + $0x3c] sm:$0xf]
    %v6687 = vld [vmem:[#allocation14 + $0x40] sm:$0xf]
    %v6688 = vld [vmem:[#allocation14 + $0x44] sm:$0xf]
    %v6689 = vld [vmem:[#allocation14 + $0x48] sm:$0xf]
    %v6690 = vld [vmem:[#allocation14 + $0x4c] sm:$0xf]
    %v6691 = vld [vmem:[#allocation14 + $0x50] sm:$0xf]
    %v6692 = vld [vmem:[#allocation14 + $0x54] sm:$0xf]
    %v6693 = vld [vmem:[#allocation14 + $0x58] sm:$0xf]
    %v6694 = vld [vmem:[#allocation14 + $0x5c] sm:$0xf]
    %v6695 = vld [vmem:[#allocation14 + $0x60] sm:$0xf]
    %v6696 = vld [vmem:[#allocation14 + $0x64] sm:$0xf]
    %v6697 = vld [vmem:[#allocation14 + $0x68] sm:$0xf]
    %v6698 = vld [vmem:[#allocation14 + $0x6c] sm:$0xf]
    %v6699 = vld [vmem:[#allocation14 + $0x70] sm:$0xf]
    %v6700 = vld [vmem:[#allocation14 + $0x74] sm:$0xf]
    %v6701 = vld [vmem:[#allocation14 + $0x78] sm:$0xf]
    %v6702 = vld [vmem:[#allocation14 + $0x7c] sm:$0xf]
    %v6703 = vld [vmem:[#allocation16] sm:$0x1]
    %v6705 = vperm.slane %v6703, 0
    %v6739 = vunpack.c.l.b16 %v6671
    %v6740 = vunpack.c.l.b16 %v6672
    %v6741 = vunpack.c.l.b16 %v6673
    %v6742 = vunpack.c.l.b16 %v6674
    %v6743 = vunpack.c.l.b16 %v6675
    %v6744 = vunpack.c.l.b16 %v6676
    %v6745 = vunpack.c.l.b16 %v6677
    %v6746 = vunpack.c.l.b16 %v6678
    %v6747 = vunpack.c.l.b16 %v6679
    %v6748 = vunpack.c.l.b16 %v6680
    %v6749 = vunpack.c.l.b16 %v6681
    %v6750 = vunpack.c.l.b16 %v6682
    %v6751 = vunpack.c.l.b16 %v6683
    %v6752 = vunpack.c.l.b16 %v6684
    %v6753 = vunpack.c.l.b16 %v6685
    %v6754 = vunpack.c.l.b16 %v6686
    %v6755 = vunpack.c.l.b16 %v6687
    %v6756 = vunpack.c.l.b16 %v6688
    %v6757 = vunpack.c.l.b16 %v6689
    %v6758 = vunpack.c.l.b16 %v6690
    %v6759 = vunpack.c.l.b16 %v6691
    %v6760 = vunpack.c.l.b16 %v6692
    %v6761 = vunpack.c.l.b16 %v6693
    %v6762 = vunpack.c.l.b16 %v6694
    %v6763 = vunpack.c.l.b16 %v6695
    %v6764 = vunpack.c.l.b16 %v6696
    %v6765 = vunpack.c.l.b16 %v6697
    %v6766 = vunpack.c.l.b16 %v6698
    %v6767 = vunpack.c.l.b16 %v6699
    %v6768 = vunpack.c.l.b16 %v6700
    %v6769 = vunpack.c.l.b16 %v6701
    %v6770 = vunpack.c.l.b16 %v6702
    %v6771 = vpack.c.b16 %v6740, %v6739
    %v6772 = vpack.c.b16 %v6742, %v6741
    %v6773 = vpack.c.b16 %v6744, %v6743
    %v6774 = vpack.c.b16 %v6746, %v6745
    %v6775 = vpack.c.b16 %v6748, %v6747
    %v6776 = vpack.c.b16 %v6750, %v6749
    %v6777 = vpack.c.b16 %v6752, %v6751
    %v6778 = vpack.c.b16 %v6754, %v6753
    %v6779 = vpack.c.b16 %v6756, %v6755
    %v6780 = vpack.c.b16 %v6758, %v6757
    %v6781 = vpack.c.b16 %v6760, %v6759
    %v6782 = vpack.c.b16 %v6762, %v6761
    %v6783 = vpack.c.b16 %v6764, %v6763
    %v6784 = vpack.c.b16 %v6766, %v6765
    %v6785 = vpack.c.b16 %v6768, %v6767
    %v6786 = vpack.c.b16 %v6770, %v6769
    %6803 = vmatpush.bf16.msra.mxu0 %v6778
    %6804 = vmatpush.bf16.msra.mxu0 %v6777
    %6805 = vmatpush.bf16.msra.mxu0 %v6776
    %6806 = vmatpush.bf16.msra.mxu0 %v6775
    %6807 = vmatpush.bf16.msra.mxu0 %v6774
    %6808 = vmatpush.bf16.msra.mxu0 %v6773
    %6809 = vmatpush.bf16.msra.mxu0 %v6772
    %6810 = vmatpush.bf16.msra.mxu0 %v6771
    %6811 = vmatmul.bf16.gmra.mxu0 %v6669
    %v6812 = vpop.f32.mrf.mxu0
    %v6813 = vadd.f32 %v6705, %v6812
    %v6814 = vpop.f32.mrf.mxu0
    %6815 = vdwg.mxu0
    %6816 = vmatpush.bf16.msra.mxu0 %v6786
    %6817 = vmatpush.bf16.msra.mxu0 %v6785
    %6818 = vmatpush.bf16.msra.mxu0 %v6784
    %6819 = vmatpush.bf16.msra.mxu0 %v6783
    %6820 = vmatpush.bf16.msra.mxu0 %v6782
    %6821 = vmatpush.bf16.msra.mxu0 %v6781
    %6822 = vmatpush.bf16.msra.mxu0 %v6780
    %6823 = vmatpush.bf16.msra.mxu0 %v6779
    %6824 = vmatmul.bf16.gmra.mxu0 %v6670
    %v6825 = vpop.f32.mrf.mxu0
    %v6826 = vadd.f32 %v6813, %v6825
    %v6827 = vpop.f32.mrf.mxu0
    %6828 = vdwg.mxu0
    %v6829 = vmax.f32 %v6826, 0.0
    %v6830 = vpack.c.bf16 %v6829, %v6829
    %v6831 = vld [vmem:[#allocation17] sm:$0xf]
    %v6832 = vld [vmem:[#allocation17 + $0x4] sm:$0xf]
    %v6833 = vld [vmem:[#allocation17 + $0x8] sm:$0xf]
    %v6834 = vld [vmem:[#allocation17 + $0xc] sm:$0xf]
    %v6835 = vld [vmem:[#allocation17 + $0x10] sm:$0xf]
    %v6836 = vld [vmem:[#allocation17 + $0x14] sm:$0xf]
    %v6837 = vld [vmem:[#allocation17 + $0x18] sm:$0xf]
    %v6838 = vld [vmem:[#allocation17 + $0x1c] sm:$0xf]
    %v6839 = vld [vmem:[#allocation17 + $0x20] sm:$0xf]
    %v6840 = vld [vmem:[#allocation17 + $0x24] sm:$0xf]
    %v6841 = vld [vmem:[#allocation17 + $0x28] sm:$0xf]
    %v6842 = vld [vmem:[#allocation17 + $0x2c] sm:$0xf]
    %v6843 = vld [vmem:[#allocation17 + $0x30] sm:$0xf]
    %v6844 = vld [vmem:[#allocation17 + $0x34] sm:$0xf]
    %v6845 = vld [vmem:[#allocation17 + $0x38] sm:$0xf]
    %v6846 = vld [vmem:[#allocation17 + $0x3c] sm:$0xf]
    %v6847 = vld [vmem:[#allocation19] sm:$0x1]
    %v6849 = vperm.slane %v6847, 0
    %v6867 = vunpack.c.l.b16 %v6831
    %v6868 = vunpack.c.l.b16 %v6832
    %v6869 = vunpack.c.l.b16 %v6833
    %v6870 = vunpack.c.l.b16 %v6834
    %v6871 = vunpack.c.l.b16 %v6835
    %v6872 = vunpack.c.l.b16 %v6836
    %v6873 = vunpack.c.l.b16 %v6837
    %v6874 = vunpack.c.l.b16 %v6838
    %v6875 = vunpack.c.l.b16 %v6839
    %v6876 = vunpack.c.l.b16 %v6840
    %v6877 = vunpack.c.l.b16 %v6841
    %v6878 = vunpack.c.l.b16 %v6842
    %v6879 = vunpack.c.l.b16 %v6843
    %v6880 = vunpack.c.l.b16 %v6844
    %v6881 = vunpack.c.l.b16 %v6845
    %v6882 = vunpack.c.l.b16 %v6846
    %v6883 = vpack.c.b16 %v6868, %v6867
    %v6884 = vpack.c.b16 %v6870, %v6869
    %v6885 = vpack.c.b16 %v6872, %v6871
    %v6886 = vpack.c.b16 %v6874, %v6873
    %v6887 = vpack.c.b16 %v6876, %v6875
    %v6888 = vpack.c.b16 %v6878, %v6877
    %v6889 = vpack.c.b16 %v6880, %v6879
    %v6890 = vpack.c.b16 %v6882, %v6881
    %6899 = vmatpush.bf16.msra.mxu0 %v6890
    %6900 = vmatpush.bf16.msra.mxu0 %v6889
    %6901 = vmatpush.bf16.msra.mxu0 %v6888
    %6902 = vmatpush.bf16.msra.mxu0 %v6887
    %6903 = vmatpush.bf16.msra.mxu0 %v6886
    %6904 = vmatpush.bf16.msra.mxu0 %v6885
    %6905 = vmatpush.bf16.msra.mxu0 %v6884
    %6906 = vmatpush.bf16.msra.mxu0 %v6883
    %6907 = vmatmul.bf16.gmra.mxu0 %v6830
    %v6908 = vpop.f32.mrf.mxu0
    %v6909 = vadd.f32 %v6849, %v6908
    %v6910 = vpop.f32.mrf.mxu0
    %6911 = vdwg.mxu0
    %v6912 = vmax.f32 %v6909, 0.0
    %v6913 = vpack.c.bf16 %v6912, %v6912
    %v6914 = vld [vmem:[#allocation20] sm:$0xf]
    %v6915 = vld [vmem:[#allocation20 + $0x4] sm:$0xf]
    %v6916 = vld [vmem:[#allocation20 + $0x8] sm:$0xf]
    %v6917 = vld [vmem:[#allocation20 + $0xc] sm:$0xf]
    %v6918 = vld [vmem:[#allocation20 + $0x10] sm:$0xf]
    %v6919 = vld [vmem:[#allocation20 + $0x14] sm:$0xf]
    %v6920 = vld [vmem:[#allocation20 + $0x18] sm:$0xf]
    %v6921 = vld [vmem:[#allocation20 + $0x1c] sm:$0xf]
    %v6922 = vld [vmem:[#allocation20 + $0x20] sm:$0xf]
    %v6923 = vld [vmem:[#allocation20 + $0x24] sm:$0xf]
    %v6924 = vld [vmem:[#allocation20 + $0x28] sm:$0xf]
    %v6925 = vld [vmem:[#allocation20 + $0x2c] sm:$0xf]
    %v6926 = vld [vmem:[#allocation20 + $0x30] sm:$0xf]
    %v6927 = vld [vmem:[#allocation20 + $0x34] sm:$0xf]
    %v6928 = vld [vmem:[#allocation20 + $0x38] sm:$0xf]
    %v6929 = vld [vmem:[#allocation20 + $0x3c] sm:$0xf]
    %v6930 = vld [vmem:[#allocation22] sm:$0x1]
    %v6932 = vperm.slane %v6930, 0
    %v6950 = vunpack.c.l.b16 %v6914
    %v6951 = vunpack.c.l.b16 %v6915
    %v6952 = vunpack.c.l.b16 %v6916
    %v6953 = vunpack.c.l.b16 %v6917
    %v6954 = vunpack.c.l.b16 %v6918
    %v6955 = vunpack.c.l.b16 %v6919
    %v6956 = vunpack.c.l.b16 %v6920
    %v6957 = vunpack.c.l.b16 %v6921
    %v6958 = vunpack.c.l.b16 %v6922
    %v6959 = vunpack.c.l.b16 %v6923
    %v6960 = vunpack.c.l.b16 %v6924
    %v6961 = vunpack.c.l.b16 %v6925
    %v6962 = vunpack.c.l.b16 %v6926
    %v6963 = vunpack.c.l.b16 %v6927
    %v6964 = vunpack.c.l.b16 %v6928
    %v6965 = vunpack.c.l.b16 %v6929
    %v6966 = vpack.c.b16 %v6951, %v6950
    %v6967 = vpack.c.b16 %v6953, %v6952
    %v6968 = vpack.c.b16 %v6955, %v6954
    %v6969 = vpack.c.b16 %v6957, %v6956
    %v6970 = vpack.c.b16 %v6959, %v6958
    %v6971 = vpack.c.b16 %v6961, %v6960
    %v6972 = vpack.c.b16 %v6963, %v6962
    %v6973 = vpack.c.b16 %v6965, %v6964
    %6982 = vmatpush.bf16.msra.mxu0 %v6973
    %6983 = vmatpush.bf16.msra.mxu0 %v6972
    %6984 = vmatpush.bf16.msra.mxu0 %v6971
    %6985 = vmatpush.bf16.msra.mxu0 %v6970
    %6986 = vmatpush.bf16.msra.mxu0 %v6969
    %6987 = vmatpush.bf16.msra.mxu0 %v6968
    %6988 = vmatpush.bf16.msra.mxu0 %v6967
    %6989 = vmatpush.bf16.msra.mxu0 %v6966
    %6990 = vmatmul.bf16.gmra.mxu0 %v6913
    %v6991 = vpop.f32.mrf.mxu0
    %v6992 = vadd.f32 %v6932, %v6991
    %v6993 = vpop.f32.mrf.mxu0
    %6994 = vdwg.mxu0
    %v6995 = vxor.u32 %v6992, 2147483648
    %v6996 = vmul.f32 %v6995, 1.442695
    %v6997 = vpow.pop %v6996
    %v6998 = vadd.f32 %v6997, 1.0
    %v6999 = vrcp.pop %v6998
    %v7000 = vmul.f32 %v6998, %v6999
    %v7001 = vsub.f32 1.0, %v7000
    %v7002 = vmul.f32 %v6999, %v7001
    %v7003 = vadd.f32 %v6999, %v7002
    %vm7004 = vweird.f32 %v6998
    %vm7005 = vweird.f32 %v6999
    %vm7006 = vmor %vm7004, %vm7005
    %v7007 = vsel %vm7006, %v6999, %v7003
    %v7008 = vand.u32 2147483647, %v6998
    %vm7009 = vcmp.eq.f32.partialorder %v7008, 8.507059e+37
    %v7010 = vand.u32 %v6998, 2147483648
    %v7011 = vor.u32 1.1754944e-38, %v7010
    %v7012 = vsel %vm7009, %v7011, %v7007
    %v7013 = vmul.f32 1.0, %v7012
    %7014 = vst [vmem:[#allocation23] sm:$0xff] %v7013
    // Predicated region
    $region106: #{tpu_custom_call.1} parent=1 // pred_check
      _
    $region107: #{tpu_custom_call.1} parent=1 // pred_check_branch
      %7016 = sbr.rel (0) target = $region109
    $region108: #{tpu_custom_call.1} parent=1 // pred_region
      %7018 = vsyncadd [#allocation4], 0
      %s7020 = sshll.u32 [#allocation23], 4
      %s7021 = int_to_ptr.vmem [resolvable:$true] %s7020
      %s7022 = sshll.u32 %s13, 4
      %s7023 = int_to_ptr.hbm [resolvable:$true] %s7022
      %7025 = dma.vmem_to_hbm [thread:$0]  %s7021, 128, %s7023, [#allocation4]
    $region109: #{tpu_custom_call.1} parent=1 // pred_fallthru
      _
    // Predicated region
    $region110: #{tpu_custom_call.1} parent=1 // pred_check
      _
    $region111: #{tpu_custom_call.1} parent=1 // pred_check_branch
      %7027 = sbr.rel (0) target = $region113
    $region112: #{tpu_custom_call.1} parent=1 // pred_region
      %7029 = dma.done [#allocation4], 128
    $region113: #{tpu_custom_call.1} parent=1 // pred_fallthru
      _
    %7030 = vsyncpa [#allocation3], 1
    %7031 = vsyncpa [#allocation6], 1
    %7032 = vsyncpa [#allocation9], 1
    %7033 = vsyncpa [#allocation12], 1
    %7034 = vsyncpa [#allocation15], 1
    %7035 = vsyncpa [#allocation18], 1
    %7036 = vsyncpa [#allocation21], 1
    %7037 = vsyncpa [#allocation4], 1

// kernel: tpu_custom_call.1
$region0: #{tpu_custom_call.1}
  #allocation0 [shape = 'u32[]', space=smem, size = 0x4, offset = 0x4, fixed_abs, tag = 'smem constant byte address 0x4 - core index']
  #allocation1 [shape = 'u32[72,128]{1,0:T(1,128)}', space=vmem, size = 0x9000, scoped, tag = 'internal scratch']
  %s0 = inlined_call_operand.hbm [shape: bf16[8,1024], index: 0, kind: input, shape index: {}]
  %s1 = inlined_call_operand.hbm [shape: bf16[1024,1024], index: 1, kind: input, shape index: {}]
  %s2 = inlined_call_operand.hbm [shape: f32[1,1024], index: 2, kind: input, shape index: {}]
  %s3 = inlined_call_operand.hbm [shape: bf16[1024,512], index: 3, kind: input, shape index: {}]
  %s4 = inlined_call_operand.hbm [shape: f32[1,512], index: 4, kind: input, shape index: {}]
  %s5 = inlined_call_operand.hbm [shape: bf16[512,256], index: 5, kind: input, shape index: {}]
  %s6 = inlined_call_operand.hbm [shape: f32[1,256], index: 6, kind: input, shape index: {}]
  %s7 = inlined_call_operand.hbm [shape: bf16[256,128], index: 7, kind: input, shape index: {}]
  %s8 = inlined_call_operand.hbm [shape: f32[1,128], index: 8, kind: input, shape index: {}]
  %s9 = inlined_call_operand.hbm [shape: bf16[128,128], index: 9, kind: input, shape index: {}]
  %s10 = inlined_call_operand.hbm [shape: f32[1,128], index: 10, kind: input, shape index: {}]
  %s11 = inlined_call_operand.hbm [shape: bf16[128,128], index: 11, kind: input, shape index: {}]
  %s12 = inlined_call_operand.hbm [shape: f32[1,128], index: 12, kind: input, shape index: {}]
  %s13 = inlined_call_operand.hbm [shape: f32[8,128], index: 13, kind: output, shape index: {}]
  %s14 = sld [smem:[#allocation0]]
  $region114: #{tpu_custom_call.1} parent=0
    _
  %s16 = ssub.s32 1, %s14
  %s17 = scalar_select 0, %s16, %s14
  $region1: #{tpu_custom_call.1} parent=0
    #allocation2 [shape = 'u8[16384]{0}', space=vmem, size = 0x4000, scoped, tag = 'input window, operand 0, single buffered']
    #allocation3 [shape = 's32[1]{0}', space=sflag, size = 0x4, scoped, tag = 'scoped memory for tpu_custom_call.1']
    #allocation4 [shape = 's32[1]{0}', space=sflag, size = 0x4, scoped, tag = 'scoped memory for tpu_custom_call.1']
    #allocation5 [shape = 'u8[2097152]{0}', space=vmem, size = 0x200000, scoped, tag = 'input window, operand 1, single buffered']
    #allocation6 [shape = 's32[1]{0}', space=sflag, size = 0x4, scoped, tag = 'scoped memory for tpu_custom_call.1']
    #allocation7 [shape = 'u8[4096]{0}', space=vmem, size = 0x1000, scoped, tag = 'input window, operand 2, single buffered']
    #allocation8 [shape = 'u8[1048576]{0}', space=vmem, size = 0x100000, scoped, tag = 'input window, operand 3, single buffered']
    #allocation9 [shape = 's32[1]{0}', space=sflag, size = 0x4, scoped, tag = 'scoped memory for tpu_custom_call.1']
    #allocation10 [shape = 'u8[2048]{0}', space=vmem, size = 0x800, scoped, tag = 'input window, operand 4, single buffered']
    #allocation11 [shape = 'u8[262144]{0}', space=vmem, size = 0x40000, scoped, tag = 'input window, operand 5, single buffered']
    #allocation12 [shape = 's32[1]{0}', space=sflag, size = 0x4, scoped, tag = 'scoped memory for tpu_custom_call.1']
    #allocation13 [shape = 'u8[1024]{0}', space=vmem, size = 0x400, scoped, tag = 'input window, operand 6, single buffered']
    #allocation14 [shape = 'u8[65536]{0}', space=vmem, size = 0x10000, scoped, tag = 'input window, operand 7, single buffered']
    #allocation15 [shape = 's32[1]{0}', space=sflag, size = 0x4, scoped, tag = 'scoped memory for tpu_custom_call.1']
    #allocation16 [shape = 'u8[512]{0}', space=vmem, size = 0x400, scoped, tag = 'input window, operand 8, single buffered']
    #allocation17 [shape = 'u8[32768]{0}', space=vmem, size = 0x8000, scoped, tag = 'input window, operand 9, single buffered']
    #allocation18 [shape = 's32[1]{0}', space=sflag, size = 0x4, scoped, tag = 'scoped memory for tpu_custom_call.1']
    #allocation19 [shape = 'u8[512]{0}', space=vmem, size = 0x400, scoped, tag = 'input window, operand 10, single buffered']
    #allocation20 [shape = 'u8[32768]{0}', space=vmem, size = 0x8000, scoped, tag = 'input window, operand 11, single buffered']
    #allocation21 [shape = 's32[1]{0}', space=sflag, size = 0x4, scoped, tag = 'scoped memory for tpu_custom_call.1']
    #allocation22 [shape = 'u8[512]{0}', space=vmem, size = 0x400, scoped, tag = 'input window, operand 12, single buffered']
    #allocation23 [shape = 'u8[4096]{0}', space=vmem, size = 0x1000, scoped, tag = 'output window, operand 0, single buffered']
    %18 = vsyncpa [#allocation3], 0
    %19 = vsyncpa [#allocation6], 0
    %20 = vsyncpa [#allocation9], 0
    %21 = vsyncpa [#allocation12], 0
    %22 = vsyncpa [#allocation15], 0
    %23 = vsyncpa [#allocation18], 0
    %24 = vsyncpa [#allocation21], 0
    %25 = vsyncpa [#allocation4], 0
    // Predicated region
    $region2: #{tpu_custom_call.1} parent=1 // pred_check
      _
    $region3: #{tpu_custom_call.1} parent=1 // pred_check_branch
      %27 = sbr.rel (0) target = $region5
    $region4: #{tpu_custom_call.1} parent=1 // pred_region
      %29 = vsyncadd [#allocation3], 0
      %s31 = sshll.u32 %s0, 4
      %s32 = int_to_ptr.hbm [resolvable:$true] %s31
      %s33 = sshll.u32 [#allocation2], 4
      %s34 = int_to_ptr.vmem [resolvable:$true] %s33
      %36 = dma.hbm_to_vmem [thread:$0]  %s32, 512, %s34, [#allocation3]
    $region5: #{tpu_custom_call.1} parent=1 // pred_fallthru
      _
    // Predicated region
    $region6: #{tpu_custom_call.1} parent=1 // pred_check
      _
    $region7: #{tpu_custom_call.1} parent=1 // pred_check_branch
      %38 = sbr.rel (0) target = $region9
    $region8: #{tpu_custom_call.1} parent=1 // pred_region
      %40 = vsyncadd [#allocation6], 0
      %s41 = sshll.u32 %s1, 4
      %s42 = int_to_ptr.hbm [resolvable:$true] %s41
      %s43 = sshll.u32 [#allocation5], 4
      %s44 = int_to_ptr.vmem [resolvable:$true] %s43
      %49 = dma.hbm_to_vmem [thread:$0]  %s42, 65536, %s44, [#allocation6], 512, 512, 32
    $region9: #{tpu_custom_call.1} parent=1 // pred_fallthru
      _
    // Predicated region
    $region10: #{tpu_custom_call.1} parent=1 // pred_check
      _
    $region11: #{tpu_custom_call.1} parent=1 // pred_check_branch
      %51 = sbr.rel (0) target = $region13
    $region12: #{tpu_custom_call.1} parent=1 // pred_region
      %53 = vsyncadd [#allocation6], 0
      %s55 = sshll.u32 %s2, 4
      %s56 = int_to_ptr.hbm [resolvable:$true] %s55
      %s57 = sshll.u32 [#allocation7], 4
      %s58 = int_to_ptr.vmem [resolvable:$true] %s57
      %60 = dma.hbm_to_vmem [thread:$0]  %s56, 128, %s58, [#allocation6]
    $region13: #{tpu_custom_call.1} parent=1 // pred_fallthru
      _
    // Predicated region
    $region14: #{tpu_custom_call.1} parent=1 // pred_check
      _
    $region15: #{tpu_custom_call.1} parent=1 // pred_check_branch
      %62 = sbr.rel (0) target = $region17
    $region16: #{tpu_custom_call.1} parent=1 // pred_region
      %64 = vsyncadd [#allocation9], 0
      %s65 = sshll.u32 %s3, 4
      %s66 = int_to_ptr.hbm [resolvable:$true] %s65
      %s67 = sshll.u32 [#allocation8], 4
      %s68 = int_to_ptr.vmem [resolvable:$true] %s67
      %73 = dma.hbm_to_vmem [thread:$0]  %s66, 32768, %s68, [#allocation9], 256, 256, 16
    $region17: #{tpu_custom_call.1} parent=1 // pred_fallthru
      _
    // Predicated region
    $region18: #{tpu_custom_call.1} parent=1 // pred_check
      _
    $region19: #{tpu_custom_call.1} parent=1 // pred_check_branch
      %75 = sbr.rel (0) target = $region21
    $region20: #{tpu_custom_call.1} parent=1 // pred_region
      %77 = vsyncadd [#allocation9], 0
      %s79 = sshll.u32 %s4, 4
      %s80 = int_to_ptr.hbm [resolvable:$true] %s79
      %s81 = sshll.u32 [#allocation10], 4
      %s82 = int_to_ptr.vmem [resolvable:$true] %s81
      %84 = dma.hbm_to_vmem [thread:$0]  %s80, 64, %s82, [#allocation9]
    $region21: #{tpu_custom_call.1} parent=1 // pred_fallthru
      _
    // Predicated region
    $region22: #{tpu_custom_call.1} parent=1 // pred_check
      _
    $region23: #{tpu_custom_call.1} parent=1 // pred_check_branch
      %86 = sbr.rel (0) target = $region25
    $region24: #{tpu_custom_call.1} parent=1 // pred_region
      %88 = vsyncadd [#allocation12], 0
      %s89 = sshll.u32 %s5, 4
      %s90 = int_to_ptr.hbm [resolvable:$true] %s89
      %s91 = sshll.u32 [#allocation11], 4
      %s92 = int_to_ptr.vmem [resolvable:$true] %s91
      %97 = dma.hbm_to_vmem [thread:$0]  %s90, 8192, %s92, [#allocation12], 128, 128, 8
    $region25: #{tpu_custom_call.1} parent=1 // pred_fallthru
      _
    // Predicated region
    $region26: #{tpu_custom_call.1} parent=1 // pred_check
      _
    $region27: #{tpu_custom_call.1} parent=1 // pred_check_branch
      %99 = sbr.rel (0) target = $region29
    $region28: #{tpu_custom_call.1} parent=1 // pred_region
      %101 = vsyncadd [#allocation12], 0
      %s103 = sshll.u32 %s6, 4
      %s104 = int_to_ptr.hbm [resolvable:$true] %s103
      %s105 = sshll.u32 [#allocation13], 4
      %s106 = int_to_ptr.vmem [resolvable:$true] %s105
      %108 = dma.hbm_to_vmem [thread:$0]  %s104, 32, %s106, [#allocation12]
    $region29: #{tpu_custom_call.1} parent=1 // pred_fallthru
      _
    // Predicated region
    $region30: #{tpu_custom_call.1} parent=1 // pred_check
      _
    $region31: #{tpu_custom_call.1} parent=1 // pred_check_branch
      %110 = sbr.rel (0) target = $region33
    $region32: #{tpu_custom_call.1} parent=1 // pred_region
      %112 = vsyncadd [#allocation15], 0
      %s113 = sshll.u32 %s7, 4
      %s114 = int_to_ptr.hbm [resolvable:$true] %s113
      %s115 = sshll.u32 [#allocation14], 4
      %s116 = int_to_ptr.vmem [resolvable:$true] %s115
      %121 = dma.hbm_to_vmem [thread:$0]  %s114, 2048, %s116, [#allocation15], 64, 64, 4
    $region33: #{tpu_custom_call.1} parent=1 // pred_fallthru
      _
    // Predicated region
    $region34: #{tpu_custom_call.1} parent=1 // pred_check
      _
    $region35: #{tpu_custom_call.1} parent=1 // pred_check_branch
      %123 = sbr.rel (0) target = $region37
    $region36: #{tpu_custom_call.1} parent=1 // pred_region
      %125 = vsyncadd [#allocation15], 0
      %s127 = sshll.u32 %s8, 4
      %s128 = int_to_ptr.hbm [resolvable:$true] %s127
      %s129 = sshll.u32 [#allocation16], 4
      %s130 = int_to_ptr.vmem [resolvable:$true] %s129
      %132 = dma.hbm_to_vmem [thread:$0]  %s128, 16, %s130, [#allocation15]
    $region37: #{tpu_custom_call.1} parent=1 // pred_fallthru
      _
    // Predicated region
    $region38: #{tpu_custom_call.1} parent=1 // pred_check
      _
    $region39: #{tpu_custom_call.1} parent=1 // pred_check_branch
      %134 = sbr.rel (0) target = $region41
    $region40: #{tpu_custom_call.1} parent=1 // pred_region
      %136 = vsyncadd [#allocation18], 0
      %s137 = sshll.u32 %s9, 4
      %s138 = int_to_ptr.hbm [resolvable:$true] %s137
      %s139 = sshll.u32 [#allocation17], 4
      %s140 = int_to_ptr.vmem [resolvable:$true] %s139
      %145 = dma.hbm_to_vmem [thread:$0]  %s138, 1024, %s140, [#allocation18], 64, 64, 4
    $region41: #{tpu_custom_call.1} parent=1 // pred_fallthru
      _
    // Predicated region
    $region42: #{tpu_custom_call.1} parent=1 // pred_check
      _
    $region43: #{tpu_custom_call.1} parent=1 // pred_check_branch
      %147 = sbr.rel (0) target = $region45
    $region44: #{tpu_custom_call.1} parent=1 // pred_region
      %149 = vsyncadd [#allocation18], 0
      %s151 = sshll.u32 %s10, 4
      %s152 = int_to_ptr.hbm [resolvable:$true] %s151
      %s153 = sshll.u32 [#allocation19], 4
      %s154 = int_to_ptr.vmem [resolvable:$true] %s153
      %156 = dma.hbm_to_vmem [thread:$0]  %s152, 16, %s154, [#allocation18]
    $region45: #{tpu_custom_call.1} parent=1 // pred_fallthru
      _
    // Predicated region
    $region46: #{tpu_custom_call.1} parent=1 // pred_check
      _
    $region47: #{tpu_custom_call.1} parent=1 // pred_check_branch
      %158 = sbr.rel (0) target = $region49
    $region48: #{tpu_custom_call.1} parent=1 // pred_region
      %160 = vsyncadd [#allocation21], 0
      %s161 = sshll.u32 %s11, 4
      %s162 = int_to_ptr.hbm [resolvable:$true] %s161
      %s163 = sshll.u32 [#allocation20], 4
      %s164 = int_to_ptr.vmem [resolvable:$true] %s163
      %169 = dma.hbm_to_vmem [thread:$0]  %s162, 1024, %s164, [#allocation21], 64, 64, 4
    $region49: #{tpu_custom_call.1} parent=1 // pred_fallthru
      _
    // Predicated region
    $region50: #{tpu_custom_call.1} parent=1 // pred_check
      _
    $region51: #{tpu_custom_call.1} parent=1 // pred_check_branch
      %171 = sbr.rel (0) target = $region53
    $region52: #{tpu_custom_call.1} parent=1 // pred_region
      %173 = vsyncadd [#allocation21], 0
      %s175 = sshll.u32 %s12, 4
      %s176 = int_to_ptr.hbm [resolvable:$true] %s175
      %s177 = sshll.u32 [#allocation22], 4
      %s178 = int_to_ptr.vmem [resolvable:$true] %s177
      %180 = dma.hbm_to_vmem [thread:$0]  %s176, 16, %s178, [#allocation21]
    $region53: #{tpu_custom_call.1} parent=1 // pred_fallthru
      _
    // Predicated region
    $region54: #{tpu_custom_call.1} parent=1 // pred_check
      _
    $region55: #{tpu_custom_call.1} parent=1 // pred_check_branch
      %182 = sbr.rel (0) target = $region57
    $region56: #{tpu_custom_call.1} parent=1 // pred_region
      %184 = dma.done [#allocation3], 512
    $region57: #{tpu_custom_call.1} parent=1 // pred_fallthru
      _
    // Predicated region
    $region58: #{tpu_custom_call.1} parent=1 // pred_check
      _
    $region59: #{tpu_custom_call.1} parent=1 // pred_check_branch
      %186 = sbr.rel (0) target = $region61
    $region60: #{tpu_custom_call.1} parent=1 // pred_region
      %188 = dma.done [#allocation6], 65536
    $region61: #{tpu_custom_call.1} parent=1 // pred_fallthru
      _
    // Predicated region
    $region62: #{tpu_custom_call.1} parent=1 // pred_check
      _
    $region63: #{tpu_custom_call.1} parent=1 // pred_check_branch
      %190 = sbr.rel (0) target = $region65
    $region64: #{tpu_custom_call.1} parent=1 // pred_region
      %192 = dma.done [#allocation6], 128
    $region65: #{tpu_custom_call.1} parent=1 // pred_fallthru
      _
    // Predicated region
    $region66: #{tpu_custom_call.1} parent=1 // pred_check
      _
    $region67: #{tpu_custom_call.1} parent=1 // pred_check_branch
      %194 = sbr.rel (0) target = $region69
    $region68: #{tpu_custom_call.1} parent=1 // pred_region
      %196 = dma.done [#allocation9], 32768
    $region69: #{tpu_custom_call.1} parent=1 // pred_fallthru
      _
    // Predicated region
    $region70: #{tpu_custom_call.1} parent=1 // pred_check
      _
    $region71: #{tpu_custom_call.1} parent=1 // pred_check_branch
      %198 = sbr.rel (0) target = $region73
    $region72: #{tpu_custom_call.1} parent=1 // pred_region
      %200 = dma.done [#allocation9], 64
    $region73: #{tpu_custom_call.1} parent=1 // pred_fallthru
      _
    // Predicated region
    $region74: #{tpu_custom_call.1} parent=1 // pred_check
      _
    $region75: #{tpu_custom_call.1} parent=1 // pred_check_branch
      %202 = sbr.rel (0) target = $region77
    $region76: #{tpu_custom_call.1} parent=1 // pred_region
      %204 = dma.done [#allocation12], 8192
    $region77: #{tpu_custom_call.1} parent=1 // pred_fallthru
      _
    // Predicated region
    $region78: #{tpu_custom_call.1} parent=1 // pred_check
      _
    $region79: #{tpu_custom_call.1} parent=1 // pred_check_branch
      %206 = sbr.rel (0) target = $region81
    $region80: #{tpu_custom_call.1} parent=1 // pred_region
      %208 = dma.done [#allocation12], 32
    $region81: #{tpu_custom_call.1} parent=1 // pred_fallthru
      _
    // Predicated region
    $region82: #{tpu_custom_call.1} parent=1 // pred_check
      _
    $region83: #{tpu_custom_call.1} parent=1 // pred_check_branch
      %210 = sbr.rel (0) target = $region85
    $region84: #{tpu_custom_call.1} parent=1 // pred_region
      %212 = dma.done [#allocation15], 2048
    $region85: #{tpu_custom_call.1} parent=1 // pred_fallthru
      _
    // Predicated region
    $region86: #{tpu_custom_call.1} parent=1 // pred_check
      _
    $region87: #{tpu_custom_call.1} parent=1 // pred_check_branch
      %214 = sbr.rel (0) target = $region89
    $region88: #{tpu_custom_call.1} parent=1 // pred_region
      %216 = dma.done [#allocation15], 16
    $region89: #{tpu_custom_call.1} parent=1 // pred_fallthru
      _
    // Predicated region
    $region90: #{tpu_custom_call.1} parent=1 // pred_check
      _
    $region91: #{tpu_custom_call.1} parent=1 // pred_check_branch
      %218 = sbr.rel (0) target = $region93
    $region92: #{tpu_custom_call.1} parent=1 // pred_region
      %220 = dma.done [#allocation18], 1024
    $region93: #{tpu_custom_call.1} parent=1 // pred_fallthru
      _
    // Predicated region
    $region94: #{tpu_custom_call.1} parent=1 // pred_check
      _
    $region95: #{tpu_custom_call.1} parent=1 // pred_check_branch
      %222 = sbr.rel (0) target = $region97
    $region96: #{tpu_custom_call.1} parent=1 // pred_region
      %224 = dma.done [#allocation18], 16
    $region97: #{tpu_custom_call.1} parent=1 // pred_fallthru
      _
    // Predicated region
    $region98: #{tpu_custom_call.1} parent=1 // pred_check
      _
    $region99: #{tpu_custom_call.1} parent=1 // pred_check_branch
      %226 = sbr.rel (0) target = $region101
    $region100: #{tpu_custom_call.1} parent=1 // pred_region
      %228 = dma.done [#allocation21], 1024
    $region101: #{tpu_custom_call.1} parent=1 // pred_fallthru
      _
    // Predicated region
    $region102: #{tpu_custom_call.1} parent=1 // pred_check
      _
    $region103: #{tpu_custom_call.1} parent=1 // pred_check_branch
      %230 = sbr.rel (0) target = $region105
    $region104: #{tpu_custom_call.1} parent=1 // pred_region
      %232 = dma.done [#allocation21], 16
    $region105: #{tpu_custom_call.1} parent=1 // pred_fallthru
      _
    %v233 = vld [vmem:[#allocation2] sm:$0xff]
    %v234 = vld [vmem:[#allocation2 + $0x8] sm:$0xff]
    %v235 = vld [vmem:[#allocation2 + $0x10] sm:$0xff]
    %v236 = vld [vmem:[#allocation2 + $0x18] sm:$0xff]
    %v237 = vld [vmem:[#allocation5] sm:$0xff]
    %v238 = vld [vmem:[#allocation5 + $0x8] sm:$0xff]
    %v239 = vld [vmem:[#allocation5 + $0x10] sm:$0xff]
    %v240 = vld [vmem:[#allocation5 + $0x18] sm:$0xff]
    %v241 = vld [vmem:[#allocation5 + $0x20] sm:$0xff]
    %v242 = vld [vmem:[#allocation5 + $0x28] sm:$0xff]
    %v243 = vld [vmem:[#allocation5 + $0x30] sm:$0xff]
    %v244 = vld [vmem:[#allocation5 + $0x38] sm:$0xff]
    %v245 = vld [vmem:[#allocation5 + $0x40] sm:$0xff]
    %v246 = vld [vmem:[#allocation5 + $0x48] sm:$0xff]
    %v247 = vld [vmem:[#allocation5 + $0x50] sm:$0xff]
    %v248 = vld [vmem:[#allocation5 + $0x58] sm:$0xff]
    %v249 = vld [vmem:[#allocation5 + $0x60] sm:$0xff]
    %v250 = vld [vmem:[#allocation5 + $0x68] sm:$0xff]
    %v251 = vld [vmem:[#allocation5 + $0x70] sm:$0xff]
    %v252 = vld [vmem:[#allocation5 + $0x78] sm:$0xff]
    %v253 = vld [vmem:[#allocation5 + $0x80] sm:$0xff]
    %v254 = vld [vmem:[#allocation5 + $0x88] sm:$0xff]
    %v255 = vld [vmem:[#allocation5 + $0x90] sm:$0xff]
    %v256 = vld [vmem:[#allocation5 + $0x98] sm:$0xff]
    %v257 = vld [vmem:[#allocation5 + $0xa0] sm:$0xff]
    %v258 = vld [vmem:[#allocation5 + $0xa8] sm:$0xff]
    %v259 = vld [vmem:[#allocation5 + $0xb0] sm:$0xff]
    %v260 = vld [vmem:[#allocation5 + $0xb8] sm:$0xff]
    %v261 = vld [vmem:[#allocation5 + $0xc0] sm:$0xff]
    %v262 = vld [vmem:[#allocation5 + $0xc8] sm:$0xff]
    %v263 = vld [vmem:[#allocation5 + $0xd0] sm:$0xff]
    %v264 = vld [vmem:[#allocation5 + $0xd8] sm:$0xff]
    %v265 = vld [vmem:[#allocation5 + $0xe0] sm:$0xff]
    %v266 = vld [vmem:[#allocation5 + $0xe8] sm:$0xff]
    %v267 = vld [vmem:[#allocation5 + $0xf0] sm:$0xff]
    %v268 = vld [vmem:[#allocation5 + $0xf8] sm:$0xff]
    %v269 = vld [vmem:[#allocation5 + $0x100] sm:$0xff]
    %v270 = vld [vmem:[#allocation5 + $0x108] sm:$0xff]
    %v271 = vld [vmem:[#allocation5 + $0x110] sm:$0xff]
    %v272 = vld [vmem:[#allocation5 + $0x118] sm:$0xff]
    %v273 = vld [vmem:[#allocation5 + $0x120] sm:$0xff]
    %v274 = vld [vmem:[#allocation5 + $0x128] sm:$0xff]
    %v275 = vld [vmem:[#allocation5 + $0x130] sm:$0xff]
    %v276 = vld [vmem:[#allocation5 + $0x138] sm:$0xff]
    %v277 = vld [vmem:[#allocation5 + $0x140] sm:$0xff]
    %v278 = vld [vmem:[#allocation5 + $0x148] sm:$0xff]
    %v279 = vld [vmem:[#allocation5 + $0x150] sm:$0xff]
    %v280 = vld [vmem:[#allocation5 + $0x158] sm:$0xff]
    %v281 = vld [vmem:[#allocation5 + $0x160] sm:$0xff]
    %v282 = vld [vmem:[#allocation5 + $0x168] sm:$0xff]
    %v283 = vld [vmem:[#allocation5 + $0x170] sm:$0xff]
    %v284 = vld [vmem:[#allocation5 + $0x178] sm:$0xff]
    %v285 = vld [vmem:[#allocation5 + $0x180] sm:$0xff]
    %v286 = vld [vmem:[#allocation5 + $0x188] sm:$0xff]
    %v287 = vld [vmem:[#allocation5 + $0x190] sm:$0xff]
    %v288 = vld [vmem:[#allocation5 + $0x198] sm:$0xff]
    %v289 = vld [vmem:[#allocation5 + $0x1a0] sm:$0xff]
    %v290 = vld [vmem:[#allocation5 + $0x1a8] sm:$0xff]
    %v291 = vld [vmem:[#allocation5 + $0x1b0] sm:$0xff]
    %v292 = vld [vmem:[#allocation5 + $0x1b8] sm:$0xff]
    %v293 = vld [vmem:[#allocation5 + $0x1c0] sm:$0xff]
    %v294 = vld [vmem:[#allocation5 + $0x1c8] sm:$0xff]
    %v295 = vld [vmem:[#allocation5 + $0x1d0] sm:$0xff]
    %v296 = vld [vmem:[#allocation5 + $0x1d8] sm:$0xff]
    %v297 = vld [vmem:[#allocation5 + $0x1e0] sm:$0xff]
    %v298 = vld [vmem:[#allocation5 + $0x1e8] sm:$0xff]
    %v299 = vld [vmem:[#allocation5 + $0x1f0] sm:$0xff]
    %v300 = vld [vmem:[#allocation5 + $0x1f8] sm:$0xff]
    %v301 = vld [vmem:[#allocation5 + $0x200] sm:$0xff]
    %v302 = vld [vmem:[#allocation5 + $0x208] sm:$0xff]
    %v303 = vld [vmem:[#allocation5 + $0x210] sm:$0xff]
    %v304 = vld [vmem:[#allocation5 + $0x218] sm:$0xff]
    %v305 = vld [vmem:[#allocation5 + $0x220] sm:$0xff]
    %v306 = vld [vmem:[#allocation5 + $0x228] sm:$0xff]
    %v307 = vld [vmem:[#allocation5 + $0x230] sm:$0xff]
    %v308 = vld [vmem:[#allocation5 + $0x238] sm:$0xff]
    %v309 = vld [vmem:[#allocation5 + $0x240] sm:$0xff]
    %v310 = vld [vmem:[#allocation5 + $0x248] sm:$0xff]
    %v311 = vld [vmem:[#allocation5 + $0x250] sm:$0xff]
    %v312 = vld [vmem:[#allocation5 + $0x258] sm:$0xff]
    %v313 = vld [vmem:[#allocation5 + $0x260] sm:$0xff]
    %v314 = vld [vmem:[#allocation5 + $0x268] sm:$0xff]
    %v315 = vld [vmem:[#allocation5 + $0x270] sm:$0xff]
    %v316 = vld [vmem:[#allocation5 + $0x278] sm:$0xff]
    %v317 = vld [vmem:[#allocation5 + $0x280] sm:$0xff]
    %v318 = vld [vmem:[#allocation5 + $0x288] sm:$0xff]
    %v319 = vld [vmem:[#allocation5 + $0x290] sm:$0xff]
    %v320 = vld [vmem:[#allocation5 + $0x298] sm:$0xff]
    %v321 = vld [vmem:[#allocation5 + $0x2a0] sm:$0xff]
    %v322 = vld [vmem:[#allocation5 + $0x2a8] sm:$0xff]
    %v323 = vld [vmem:[#allocation5 + $0x2b0] sm:$0xff]
    %v324 = vld [vmem:[#allocation5 + $0x2b8] sm:$0xff]
    %v325 = vld [vmem:[#allocation5 + $0x2c0] sm:$0xff]
    %v326 = vld [vmem:[#allocation5 + $0x2c8] sm:$0xff]
    %v327 = vld [vmem:[#allocation5 + $0x2d0] sm:$0xff]
    %v328 = vld [vmem:[#allocation5 + $0x2d8] sm:$0xff]
    %v329 = vld [vmem:[#allocation5 + $0x2e0] sm:$0xff]
    %v330 = vld [vmem:[#allocation5 + $0x2e8] sm:$0xff]
    %v331 = vld [vmem:[#allocation5 + $0x2f0] sm:$0xff]
    %v332 = vld [vmem:[#allocation5 + $0x2f8] sm:$0xff]
    %v333 = vld [vmem:[#allocation5 + $0x300] sm:$0xff]
    %v334 = vld [vmem:[#allocation5 + $0x308] sm:$0xff]
    %v335 = vld [vmem:[#allocation5 + $0x310] sm:$0xff]
    %v336 = vld [vmem:[#allocation5 + $0x318] sm:$0xff]
    %v337 = vld [vmem:[#allocation5 + $0x320] sm:$0xff]
    %v338 = vld [vmem:[#allocation5 + $0x328] sm:$0xff]
    %v339 = vld [vmem:[#allocation5 + $0x330] sm:$0xff]
    %v340 = vld [vmem:[#allocation5 + $0x338] sm:$0xff]
    %v341 = vld [vmem:[#allocation5 + $0x340] sm:$0xff]
    %v342 = vld [vmem:[#allocation5 + $0x348] sm:$0xff]
    %v343 = vld [vmem:[#allocation5 + $0x350] sm:$0xff]
    %v344 = vld [vmem:[#allocation5 + $0x358] sm:$0xff]
    %v345 = vld [vmem:[#allocation5 + $0x360] sm:$0xff]
    %v346 = vld [vmem:[#allocation5 + $0x368] sm:$0xff]
    %v347 = vld [vmem:[#allocation5 + $0x370] sm:$0xff]
    %v348 = vld [vmem:[#allocation5 + $0x378] sm:$0xff]
    %v349 = vld [vmem:[#allocation5 + $0x380] sm:$0xff]
    %v350 = vld [vmem:[#allocation5 + $0x388] sm:$0xff]
    %v351 = vld [vmem:[#allocation5 + $0x390] sm:$0xff]
    %v352 = vld [vmem:[#allocation5 + $0x398] sm:$0xff]
    %v353 = vld [vmem:[#allocation5 + $0x3a0] sm:$0xff]
    %v354 = vld [vmem:[#allocation5 + $0x3a8] sm:$0xff]
    %v355 = vld [vmem:[#allocation5 + $0x3b0] sm:$0xff]
    %v356 = vld [vmem:[#allocation5 + $0x3b8] sm:$0xff]
    %v357 = vld [vmem:[#allocation5 + $0x3c0] sm:$0xff]
    %v358 = vld [vmem:[#allocation5 + $0x3c8] sm:$0xff]
    %v359 = vld [vmem:[#allocation5 + $0x3d0] sm:$0xff]
    %v360 = vld [vmem:[#allocation5 + $0x3d8] sm:$0xff]
    %v361 = vld [vmem:[#allocation5 + $0x3e0] sm:$0xff]
    %v362 = vld [vmem:[#allocation5 + $0x3e8] sm:$0xff]
    %v363 = vld [vmem:[#allocation5 + $0x3f0] sm:$0xff]
    %v364 = vld [vmem:[#allocation5 + $0x3f8] sm:$0xff]
    %v365 = vld [vmem:[#allocation5 + $0x400] sm:$0xff]
    %v366 = vld [vmem:[#allocation5 + $0x408] sm:$0xff]
    %v367 = vld [vmem:[#allocation5 + $0x410] sm:$0xff]
    %v368 = vld [vmem:[#allocation5 + $0x418] sm:$0xff]
    %v369 = vld [vmem:[#allocation5 + $0x420] sm:$0xff]
    %v370 = vld [vmem:[#allocation5 + $0x428] sm:$0xff]
    %v371 = vld [vmem:[#allocation5 + $0x430] sm:$0xff]
    %v372 = vld [vmem:[#allocation5 + $0x438] sm:$0xff]
    %v373 = vld [vmem:[#allocation5 + $0x440] sm:$0xff]
    %v374 = vld [vmem:[#allocation5 + $0x448] sm:$0xff]
    %v375 = vld [vmem:[#allocation5 + $0x450] sm:$0xff]
    %v376 = vld [vmem:[#allocation5 + $0x458] sm:$0xff]
    %v377 = vld [vmem:[#allocation5 + $0x460] sm:$0xff]
    %v378 = vld [vmem:[#allocation5 + $0x468] sm:$0xff]
    %v379 = vld [vmem:[#allocation5 + $0x470] sm:$0xff]
    %v380 = vld [vmem:[#allocation5 + $0x478] sm:$0xff]
    %v381 = vld [vmem:[#allocation5 + $0x480] sm:$0xff]
    %v382 = vld [vmem:[#allocation5 + $0x488] sm:$0xff]
    %v383 = vld [vmem:[#allocation5 + $0x490] sm:$0xff]
    %v384 = vld [vmem:[#allocation5 + $0x498] sm:$0xff]
    %v385 = vld [vmem:[#allocation5 + $0x4a0] sm:$0xff]
    %v386 = vld [vmem:[#allocation5 + $0x4a8] sm:$0xff]
    %v387 = vld [vmem:[#allocation5 + $0x4b0] sm:$0xff]
    %v388 = vld [vmem:[#allocation5 + $0x4b8] sm:$0xff]
    %v389 = vld [vmem:[#allocation5 + $0x4c0] sm:$0xff]
    %v390 = vld [vmem:[#allocation5 + $0x4c8] sm:$0xff]
    %v391 = vld [vmem:[#allocation5 + $0x4d0] sm:$0xff]
    %v392 = vld [vmem:[#allocation5 + $0x4d8] sm:$0xff]
    %v393 = vld [vmem:[#allocation5 + $0x4e0] sm:$0xff]
    %v394 = vld [vmem:[#allocation5 + $0x4e8] sm:$0xff]
    %v395 = vld [vmem:[#allocation5 + $0x4f0] sm:$0xff]
    %v396 = vld [vmem:[#allocation5 + $0x4f8] sm:$0xff]
    %v397 = vld [vmem:[#allocation5 + $0x500] sm:$0xff]
    %v398 = vld [vmem:[#allocation5 + $0x508] sm:$0xff]
    %v399 = vld [vmem:[#allocation5 + $0x510] sm:$0xff]
    %v400 = vld [vmem:[#allocation5 + $0x518] sm:$0xff]
    %v401 = vld [vmem:[#allocation5 + $0x520] sm:$0xff]
    %v402 = vld [vmem:[#allocation5 + $0x528] sm:$0xff]
    %v403 = vld [vmem:[#allocation5 + $0x530] sm:$0xff]
    %v404 = vld [vmem:[#allocation5 + $0x538] sm:$0xff]
    %v405 = vld [vmem:[#allocation5 + $0x540] sm:$0xff]
    %v406 = vld [vmem:[#allocation5 + $0x548] sm:$0xff]
    %v407 = vld [vmem:[#allocation5 + $0x550] sm:$0xff]
    %v408 = vld [vmem:[#allocation5 + $0x558] sm:$0xff]
    %v409 = vld [vmem:[#allocation5 + $0x560] sm:$0xff]
    %v410 = vld [vmem:[#allocation5 + $0x568] sm:$0xff]
    %v411 = vld [vmem:[#allocation5 + $0x570] sm:$0xff]
    %v412 = vld [vmem:[#allocation5 + $0x578] sm:$0xff]
    %v413 = vld [vmem:[#allocation5 + $0x580] sm:$0xff]
    %v414 = vld [vmem:[#allocation5 + $0x588] sm:$0xff]
    %v415 = vld [vmem:[#allocation5 + $0x590] sm:$0xff]
    %v416 = vld [vmem:[#allocation5 + $0x598] sm:$0xff]
    %v417 = vld [vmem:[#allocation5 + $0x5a0] sm:$0xff]
    %v418 = vld [vmem:[#allocation5 + $0x5a8] sm:$0xff]
    %v419 = vld [vmem:[#allocation5 + $0x5b0] sm:$0xff]
    %v420 = vld [vmem:[#allocation5 + $0x5b8] sm:$0xff]
    %v421 = vld [vmem:[#allocation5 + $0x5c0] sm:$0xff]
    %v422 = vld [vmem:[#allocation5 + $0x5c8] sm:$0xff]
    %v423 = vld [vmem:[#allocation5 + $0x5d0] sm:$0xff]
    %v424 = vld [vmem:[#allocation5 + $0x5d8] sm:$0xff]
    %v425 = vld [vmem:[#allocation5 + $0x5e0] sm:$0xff]
    %v426 = vld [vmem:[#allocation5 + $0x5e8] sm:$0xff]
    %v427 = vld [vmem:[#allocation5 + $0x5f0] sm:$0xff]
    %v428 = vld [vmem:[#allocation5 + $0x5f8] sm:$0xff]
    %v429 = vld [vmem:[#allocation5 + $0x600] sm:$0xff]
    %v430 = vld [vmem:[#allocation5 + $0x608] sm:$0xff]
    %v431 = vld [vmem:[#allocation5 + $0x610] sm:$0xff]
    %v432 = vld [vmem:[#allocation5 + $0x618] sm:$0xff]
    %v433 = vld [vmem:[#allocation5 + $0x620] sm:$0xff]
    %v434 = vld [vmem:[#allocation5 + $0x628] sm:$0xff]
    %v435 = vld [vmem:[#allocation5 + $0x630] sm:$0xff]
    %v436 = vld [vmem:[#allocation5 + $0x638] sm:$0xff]
    %v437 = vld [vmem:[#allocation5 + $0x640] sm:$0xff]
    %v438 = vld [vmem:[#allocation5 + $0x648] sm:$0xff]
    %v439 = vld [vmem:[#allocation5 + $0x650] sm:$0xff]
    %v440 = vld [vmem:[#allocation5 + $0x658] sm:$0xff]
    %v441 = vld [vmem:[#allocation5 + $0x660] sm:$0xff]
    %v442 = vld [vmem:[#allocation5 + $0x668] sm:$0xff]
    %v443 = vld [vmem:[#allocation5 + $0x670] sm:$0xff]
    %v444 = vld [vmem:[#allocation5 + $0x678] sm:$0xff]
    %v445 = vld [vmem:[#allocation5 + $0x680] sm:$0xff]
    %v446 = vld [vmem:[#allocation5 + $0x688] sm:$0xff]
    %v447 = vld [vmem:[#allocation5 + $0x690] sm:$0xff]
    %v448 = vld [vmem:[#allocation5 + $0x698] sm:$0xff]
    %v449 = vld [vmem:[#allocation5 + $0x6a0] sm:$0xff]
    %v450 = vld [vmem:[#allocation5 + $0x6a8] sm:$0xff]
    %v451 = vld [vmem:[#allocation5 + $0x6b0] sm:$0xff]
    %v452 = vld [vmem:[#allocation5 + $0x6b8] sm:$0xff]
    %v453 = vld [vmem:[#allocation5 + $0x6c0] sm:$0xff]
    %v454 = vld [vmem:[#allocation5 + $0x6c8] sm:$0xff]
    %v455 = vld [vmem:[#allocation5 + $0x6d0] sm:$0xff]
    %v456 = vld [vmem:[#allocation5 + $0x6d8] sm:$0xff]
    %v457 = vld [vmem:[#allocation5 + $0x6e0] sm:$0xff]
    %v458 = vld [vmem:[#allocation5 + $0x6e8] sm:$0xff]
    %v459 = vld [vmem:[#allocation5 + $0x6f0] sm:$0xff]
    %v460 = vld [vmem:[#allocation5 + $0x6f8] sm:$0xff]
    %v461 = vld [vmem:[#allocation5 + $0x700] sm:$0xff]
    %v462 = vld [vmem:[#allocation5 + $0x708] sm:$0xff]
    %v463 = vld [vmem:[#allocation5 + $0x710] sm:$0xff]
    %v464 = vld [vmem:[#allocation5 + $0x718] sm:$0xff]
    %v465 = vld [vmem:[#allocation5 + $0x720] sm:$0xff]
    %v466 = vld [vmem:[#allocation5 + $0x728] sm:$0xff]
    %v467 = vld [vmem:[#allocation5 + $0x730] sm:$0xff]
    %v468 = vld [vmem:[#allocation5 + $0x738] sm:$0xff]
    %v469 = vld [vmem:[#allocation5 + $0x740] sm:$0xff]
    %v470 = vld [vmem:[#allocation5 + $0x748] sm:$0xff]
    %v471 = vld [vmem:[#allocation5 + $0x750] sm:$0xff]
    %v472 = vld [vmem:[#allocation5 + $0x758] sm:$0xff]
    %v473 = vld [vmem:[#allocation5 + $0x760] sm:$0xff]
    %v474 = vld [vmem:[#allocation5 + $0x768] sm:$0xff]
    %v475 = vld [vmem:[#allocation5 + $0x770] sm:$0xff]
    %v476 = vld [vmem:[#allocation5 + $0x778] sm:$0xff]
    %v477 = vld [vmem:[#allocation5 + $0x780] sm:$0xff]
    %v478 = vld [vmem:[#allocation5 + $0x788] sm:$0xff]
    %v479 = vld [vmem:[#allocation5 + $0x790] sm:$0xff]
    %v480 = vld [vmem:[#allocation5 + $0x798] sm:$0xff]
    %v481 = vld [vmem:[#allocation5 + $0x7a0] sm:$0xff]
    %v482 = vld [vmem:[#allocation5 + $0x7a8] sm:$0xff]
    %v483 = vld [vmem:[#allocation5 + $0x7b0] sm:$0xff]
    %v484 = vld [vmem:[#allocation5 + $0x7b8] sm:$0xff]
    %v485 = vld [vmem:[#allocation5 + $0x7c0] sm:$0xff]
    %v486 = vld [vmem:[#allocation5 + $0x7c8] sm:$0xff]
    %v487 = vld [vmem:[#allocation5 + $0x7d0] sm:$0xff]
    %v488 = vld [vmem:[#allocation5 + $0x7d8] sm:$0xff]
    %v489 = vld [vmem:[#allocation5 + $0x7e0] sm:$0xff]
    %v490 = vld [vmem:[#allocation5 + $0x7e8] sm:$0xff]
    %v491 = vld [vmem:[#allocation5 + $0x7f0] sm:$0xff]
    %v492 = vld [vmem:[#allocation5 + $0x7f8] sm:$0xff]
    %v493 = vld [vmem:[#allocation5 + $0x800] sm:$0xff]
    %v494 = vld [vmem:[#allocation5 + $0x808] sm:$0xff]
    %v495 = vld [vmem:[#allocation5 + $0x810] sm:$0xff]
    %v496 = vld [vmem:[#allocation5 + $0x818] sm:$0xff]
    %v497 = vld [vmem:[#allocation5 + $0x820] sm:$0xff]
    %v498 = vld [vmem:[#allocation5 + $0x828] sm:$0xff]
    %v499 = vld [vmem:[#allocation5 + $0x830] sm:$0xff]
    %v500 = vld [vmem:[#allocation5 + $0x838] sm:$0xff]
    %v501 = vld [vmem:[#allocation5 + $0x840] sm:$0xff]
    %v502 = vld [vmem:[#allocation5 + $0x848] sm:$0xff]
    %v503 = vld [vmem:[#allocation5 + $0x850] sm:$0xff]
    %v504 = vld [vmem:[#allocation5 + $0x858] sm:$0xff]
    %v505 = vld [vmem:[#allocation5 + $0x860] sm:$0xff]
    %v506 = vld [vmem:[#allocation5 + $0x868] sm:$0xff]
    %v507 = vld [vmem:[#allocation5 + $0x870] sm:$0xff]
    %v508 = vld [vmem:[#allocation5 + $0x878] sm:$0xff]
    %v509 = vld [vmem:[#allocation5 + $0x880] sm:$0xff]
    %v510 = vld [vmem:[#allocation5 + $0x888] sm:$0xff]
    %v511 = vld [vmem:[#allocation5 + $0x890] sm:$0xff]
    %v512 = vld [vmem:[#allocation5 + $0x898] sm:$0xff]
    %v513 = vld [vmem:[#allocation5 + $0x8a0] sm:$0xff]
    %v514 = vld [vmem:[#allocation5 + $0x8a8] sm:$0xff]
    %v515 = vld [vmem:[#allocation5 + $0x8b0] sm:$0xff]
    %v516 = vld [vmem:[#allocation5 + $0x8b8] sm:$0xff]
    %v517 = vld [vmem:[#allocation5 + $0x8c0] sm:$0xff]
    %v518 = vld [vmem:[#allocation5 + $0x8c8] sm:$0xff]
    %v519 = vld [vmem:[#allocation5 + $0x8d0] sm:$0xff]
    %v520 = vld [vmem:[#allocation5 + $0x8d8] sm:$0xff]
    %v521 = vld [vmem:[#allocation5 + $0x8e0] sm:$0xff]
    %v522 = vld [vmem:[#allocation5 + $0x8e8] sm:$0xff]
    %v523 = vld [vmem:[#allocation5 + $0x8f0] sm:$0xff]
    %v524 = vld [vmem:[#allocation5 + $0x8f8] sm:$0xff]
    %v525 = vld [vmem:[#allocation5 + $0x900] sm:$0xff]
    %v526 = vld [vmem:[#allocation5 + $0x908] sm:$0xff]
    %v527 = vld [vmem:[#allocation5 + $0x910] sm:$0xff]
    %v528 = vld [vmem:[#allocation5 + $0x918] sm:$0xff]
    %v529 = vld [vmem:[#allocation5 + $0x920] sm:$0xff]
    %v530 = vld [vmem:[#allocation5 + $0x928] sm:$0xff]
    %v531 = vld [vmem:[#allocation5 + $0x930] sm:$0xff]
    %v532 = vld [vmem:[#allocation5 + $0x938] sm:$0xff]
    %v533 = vld [vmem:[#allocation5 + $0x940] sm:$0xff]
    %v534 = vld [vmem:[#allocation5 + $0x948] sm:$0xff]
    %v535 = vld [vmem:[#allocation5 + $0x950] sm:$0xff]
    %v536 = vld [vmem:[#allocation5 + $0x958] sm:$0xff]
    %v537 = vld [vmem:[#allocation5 + $0x960] sm:$0xff]
    %v538 = vld [vmem:[#allocation5 + $0x968] sm:$0xff]
    %v539 = vld [vmem:[#allocation5 + $0x970] sm:$0xff]
    %v540 = vld [vmem:[#allocation5 + $0x978] sm:$0xff]
    %v541 = vld [vmem:[#allocation5 + $0x980] sm:$0xff]
    %v542 = vld [vmem:[#allocation5 + $0x988] sm:$0xff]
    %v543 = vld [vmem:[#allocation5 + $0x990] sm:$0xff]
    %v544 = vld [vmem:[#allocation5 + $0x998] sm:$0xff]
    %v545 = vld [vmem:[#allocation5 + $0x9a0] sm:$0xff]
    %v546 = vld [vmem:[#allocation5 + $0x9a8] sm:$0xff]
    %v547 = vld [vmem:[#allocation5 + $0x9b0] sm:$0xff]
    %v548 = vld [vmem:[#allocation5 + $0x9b8] sm:$0xff]
    %v549 = vld [vmem:[#allocation5 + $0x9c0] sm:$0xff]
    %v550 = vld [vmem:[#allocation5 + $0x9c8] sm:$0xff]
    %v551 = vld [vmem:[#allocation5 + $0x9d0] sm:$0xff]
    %v552 = vld [vmem:[#allocation5 + $0x9d8] sm:$0xff]
    %v553 = vld [vmem:[#allocation5 + $0x9e0] sm:$0xff]
    %v554 = vld [vmem:[#allocation5 + $0x9e8] sm:$0xff]
    %v555 = vld [vmem:[#allocation5 + $0x9f0] sm:$0xff]
    %v556 = vld [vmem:[#allocation5 + $0x9f8] sm:$0xff]
    %v557 = vld [vmem:[#allocation5 + $0xa00] sm:$0xff]
    %v558 = vld [vmem:[#allocation5 + $0xa08] sm:$0xff]
    %v559 = vld [vmem:[#allocation5 + $0xa10] sm:$0xff]
    %v560 = vld [vmem:[#allocation5 + $0xa18] sm:$0xff]
    %v561 = vld [vmem:[#allocation5 + $0xa20] sm:$0xff]
    %v562 = vld [vmem:[#allocation5 + $0xa28] sm:$0xff]
    %v563 = vld [vmem:[#allocation5 + $0xa30] sm:$0xff]
    %v564 = vld [vmem:[#allocation5 + $0xa38] sm:$0xff]
    %v565 = vld [vmem:[#allocation5 + $0xa40] sm:$0xff]
    %v566 = vld [vmem:[#allocation5 + $0xa48] sm:$0xff]
    %v567 = vld [vmem:[#allocation5 + $0xa50] sm:$0xff]
    %v568 = vld [vmem:[#allocation5 + $0xa58] sm:$0xff]
    %v569 = vld [vmem:[#allocation5 + $0xa60] sm:$0xff]
    %v570 = vld [vmem:[#allocation5 + $0xa68] sm:$0xff]
    %v571 = vld [vmem:[#allocation5 + $0xa70] sm:$0xff]
    %v572 = vld [vmem:[#allocation5 + $0xa78] sm:$0xff]
    %v573 = vld [vmem:[#allocation5 + $0xa80] sm:$0xff]
    %v574 = vld [vmem:[#allocation5 + $0xa88] sm:$0xff]
    %v575 = vld [vmem:[#allocation5 + $0xa90] sm:$0xff]
    %v576 = vld [vmem:[#allocation5 + $0xa98] sm:$0xff]
    %v577 = vld [vmem:[#allocation5 + $0xaa0] sm:$0xff]
    %v578 = vld [vmem:[#allocation5 + $0xaa8] sm:$0xff]
    %v579 = vld [vmem:[#allocation5 + $0xab0] sm:$0xff]
    %v580 = vld [vmem:[#allocation5 + $0xab8] sm:$0xff]
    %v581 = vld [vmem:[#allocation5 + $0xac0] sm:$0xff]
    %v582 = vld [vmem:[#allocation5 + $0xac8] sm:$0xff]
    %v583 = vld [vmem:[#allocation5 + $0xad0] sm:$0xff]
    %v584 = vld [vmem:[#allocation5 + $0xad8] sm:$0xff]
    %v585 = vld [vmem:[#allocation5 + $0xae0] sm:$0xff]
    %v586 = vld [vmem:[#allocation5 + $0xae8] sm:$0xff]
    %v587 = vld [vmem:[#allocation5 + $0xaf0] sm:$0xff]
    %v588 = vld [vmem:[#allocation5 + $0xaf8] sm:$0xff]
    %v589 = vld [vmem:[#allocation5 + $0xb00] sm:$0xff]
    %v590 = vld [vmem:[#allocation5 + $0xb08] sm:$0xff]
    %v591 = vld [vmem:[#allocation5 + $0xb10] sm:$0xff]
    %v592 = vld [vmem:[#allocation5 + $0xb18] sm:$0xff]
    %v593 = vld [vmem:[#allocation5 + $0xb20] sm:$0xff]
    %v594 = vld [vmem:[#allocation5 + $0xb28] sm:$0xff]
    %v595 = vld [vmem:[#allocation5 + $0xb30] sm:$0xff]
    %v596 = vld [vmem:[#allocation5 + $0xb38] sm:$0xff]
    %v597 = vld [vmem:[#allocation5 + $0xb40] sm:$0xff]
    %v598 = vld [vmem:[#allocation5 + $0xb48] sm:$0xff]
    %v599 = vld [vmem:[#allocation5 + $0xb50] sm:$0xff]
    %v600 = vld [vmem:[#allocation5 + $0xb58] sm:$0xff]
    %v601 = vld [vmem:[#allocation5 + $0xb60] sm:$0xff]
    %v602 = vld [vmem:[#allocation5 + $0xb68] sm:$0xff]
    %v603 = vld [vmem:[#allocation5 + $0xb70] sm:$0xff]
    %v604 = vld [vmem:[#allocation5 + $0xb78] sm:$0xff]
    %v605 = vld [vmem:[#allocation5 + $0xb80] sm:$0xff]
    %v606 = vld [vmem:[#allocation5 + $0xb88] sm:$0xff]
    %v607 = vld [vmem:[#allocation5 + $0xb90] sm:$0xff]
    %v608 = vld [vmem:[#allocation5 + $0xb98] sm:$0xff]
    %v609 = vld [vmem:[#allocation5 + $0xba0] sm:$0xff]
    %v610 = vld [vmem:[#allocation5 + $0xba8] sm:$0xff]
    %v611 = vld [vmem:[#allocation5 + $0xbb0] sm:$0xff]
    %v612 = vld [vmem:[#allocation5 + $0xbb8] sm:$0xff]
    %v613 = vld [vmem:[#allocation5 + $0xbc0] sm:$0xff]
    %v614 = vld [vmem:[#allocation5 + $0xbc8] sm:$0xff]
    %v615 = vld [vmem:[#allocation5 + $0xbd0] sm:$0xff]
    %v616 = vld [vmem:[#allocation5 + $0xbd8] sm:$0xff]
    %v617 = vld [vmem:[#allocation5 + $0xbe0] sm:$0xff]
    %v618 = vld [vmem:[#allocation5 + $0xbe8] sm:$0xff]
    %v619 = vld [vmem:[#allocation5 + $0xbf0] sm:$0xff]
    %v620 = vld [vmem:[#allocation5 + $0xbf8] sm:$0xff]
    %v621 = vld [vmem:[#allocation5 + $0xc00] sm:$0xff]
    %v622 = vld [vmem:[#allocation5 + $0xc08] sm:$0xff]
    %v623 = vld [vmem:[#allocation5 + $0xc10] sm:$0xff]
    %v624 = vld [vmem:[#allocation5 + $0xc18] sm:$0xff]
    %v625 = vld [vmem:[#allocation5 + $0xc20] sm:$0xff]
    %v626 = vld [vmem:[#allocation5 + $0xc28] sm:$0xff]
    %v627 = vld [vmem:[#allocation5 + $0xc30] sm:$0xff]
    %v628 = vld [vmem:[#allocation5 + $0xc38] sm:$0xff]
    %v629 = vld [vmem:[#allocation5 + $0xc40] sm:$0xff]
    %v630 = vld [vmem:[#allocation5 + $0xc48] sm:$0xff]
    %v631 = vld [vmem:[#allocation5 + $0xc50] sm:$0xff]
    %v632 = vld [vmem:[#allocation5 + $0xc58] sm:$0xff]
    %v633 = vld [vmem:[#allocation5 + $0xc60] sm:$0xff]
    %v634 = vld [vmem:[#allocation5 + $0xc68] sm:$0xff]
    %v635 = vld [vmem:[#allocation5 + $0xc70] sm:$0xff]
    %v636 = vld [vmem:[#allocation5 + $0xc78] sm:$0xff]
    %v637 = vld [vmem:[#allocation5 + $0xc80] sm:$0xff]
    %v638 = vld [vmem:[#allocation5 + $0xc88] sm:$0xff]
    %v639 = vld [vmem:[#allocation5 + $0xc90] sm:$0xff]
    %v640 = vld [vmem:[#allocation5 + $0xc98] sm:$0xff]
    %v641 = vld [vmem:[#allocation5 + $0xca0] sm:$0xff]
    %v642 = vld [vmem:[#allocation5 + $0xca8] sm:$0xff]
    %v643 = vld [vmem:[#allocation5 + $0xcb0] sm:$0xff]
    %v644 = vld [vmem:[#allocation5 + $0xcb8] sm:$0xff]
    %v645 = vld [vmem:[#allocation5 + $0xcc0] sm:$0xff]
    %v646 = vld [vmem:[#allocation5 + $0xcc8] sm:$0xff]
    %v647 = vld [vmem:[#allocation5 + $0xcd0] sm:$0xff]
    %v648 = vld [vmem:[#allocation5 + $0xcd8] sm:$0xff]
    %v649 = vld [vmem:[#allocation5 + $0xce0] sm:$0xff]
    %v650 = vld [vmem:[#allocation5 + $0xce8] sm:$0xff]
    %v651 = vld [vmem:[#allocation5 + $0xcf0] sm:$0xff]
    %v652 = vld [vmem:[#allocation5 + $0xcf8] sm:$0xff]
    %v653 = vld [vmem:[#allocation5 + $0xd00] sm:$0xff]
    %v654 = vld [vmem:[#allocation5 + $0xd08] sm:$0xff]
    %v655 = vld [vmem:[#allocation5 + $0xd10] sm:$0xff]
    %v656 = vld [vmem:[#allocation5 + $0xd18] sm:$0xff]
    %v657 = vld [vmem:[#allocation5 + $0xd20] sm:$0xff]
    %v658 = vld [vmem:[#allocation5 + $0xd28] sm:$0xff]
    %v659 = vld [vmem:[#allocation5 + $0xd30] sm:$0xff]
    %v660 = vld [vmem:[#allocation5 + $0xd38] sm:$0xff]
    %v661 = vld [vmem:[#allocation5 + $0xd40] sm:$0xff]
    %v662 = vld [vmem:[#allocation5 + $0xd48] sm:$0xff]
    %v663 = vld [vmem:[#allocation5 + $0xd50] sm:$0xff]
    %v664 = vld [vmem:[#allocation5 + $0xd58] sm:$0xff]
    %v665 = vld [vmem:[#allocation5 + $0xd60] sm:$0xff]
    %v666 = vld [vmem:[#allocation5 + $0xd68] sm:$0xff]
    %v667 = vld [vmem:[#allocation5 + $0xd70] sm:$0xff]
    %v668 = vld [vmem:[#allocation5 + $0xd78] sm:$0xff]
    %v669 = vld [vmem:[#allocation5 + $0xd80] sm:$0xff]
    %v670 = vld [vmem:[#allocation5 + $0xd88] sm:$0xff]
    %v671 = vld [vmem:[#allocation5 + $0xd90] sm:$0xff]
    %v672 = vld [vmem:[#allocation5 + $0xd98] sm:$0xff]
    %v673 = vld [vmem:[#allocation5 + $0xda0] sm:$0xff]
    %v674 = vld [vmem:[#allocation5 + $0xda8] sm:$0xff]
    %v675 = vld [vmem:[#allocation5 + $0xdb0] sm:$0xff]
    %v676 = vld [vmem:[#allocation5 + $0xdb8] sm:$0xff]
    %v677 = vld [vmem:[#allocation5 + $0xdc0] sm:$0xff]
    %v678 = vld [vmem:[#allocation5 + $0xdc8] sm:$0xff]
    %v679 = vld [vmem:[#allocation5 + $0xdd0] sm:$0xff]
    %v680 = vld [vmem:[#allocation5 + $0xdd8] sm:$0xff]
    %v681 = vld [vmem:[#allocation5 + $0xde0] sm:$0xff]
    %v682 = vld [vmem:[#allocation5 + $0xde8] sm:$0xff]
    %v683 = vld [vmem:[#allocation5 + $0xdf0] sm:$0xff]
    %v684 = vld [vmem:[#allocation5 + $0xdf8] sm:$0xff]
    %v685 = vld [vmem:[#allocation5 + $0xe00] sm:$0xff]
    %v686 = vld [vmem:[#allocation5 + $0xe08] sm:$0xff]
    %v687 = vld [vmem:[#allocation5 + $0xe10] sm:$0xff]
    %v688 = vld [vmem:[#allocation5 + $0xe18] sm:$0xff]
    %v689 = vld [vmem:[#allocation5 + $0xe20] sm:$0xff]
    %v690 = vld [vmem:[#allocation5 + $0xe28] sm:$0xff]
    %v691 = vld [vmem:[#allocation5 + $0xe30] sm:$0xff]
    %v692 = vld [vmem:[#allocation5 + $0xe38] sm:$0xff]
    %v693 = vld [vmem:[#allocation5 + $0xe40] sm:$0xff]
    %v694 = vld [vmem:[#allocation5 + $0xe48] sm:$0xff]
    %v695 = vld [vmem:[#allocation5 + $0xe50] sm:$0xff]
    %v696 = vld [vmem:[#allocation5 + $0xe58] sm:$0xff]
    %v697 = vld [vmem:[#allocation5 + $0xe60] sm:$0xff]
    %v698 = vld [vmem:[#allocation5 + $0xe68] sm:$0xff]
    %v699 = vld [vmem:[#allocation5 + $0xe70] sm:$0xff]
    %v700 = vld [vmem:[#allocation5 + $0xe78] sm:$0xff]
    %v701 = vld [vmem:[#allocation5 + $0xe80] sm:$0xff]
    %v702 = vld [vmem:[#allocation5 + $0xe88] sm:$0xff]
    %v703 = vld [vmem:[#allocation5 + $0xe90] sm:$0xff]
    %v704 = vld [vmem:[#allocation5 + $0xe98] sm:$0xff]
    %v705 = vld [vmem:[#allocation5 + $0xea0] sm:$0xff]
    %v706 = vld [vmem:[#allocation5 + $0xea8] sm:$0xff]
    %v707 = vld [vmem:[#allocation5 + $0xeb0] sm:$0xff]
    %v708 = vld [vmem:[#allocation5 + $0xeb8] sm:$0xff]
    %v709 = vld [vmem:[#allocation5 + $0xec0] sm:$0xff]
    %v710 = vld [vmem:[#allocation5 + $0xec8] sm:$0xff]
    %v711 = vld [vmem:[#allocation5 + $0xed0] sm:$0xff]
    %v712 = vld [vmem:[#allocation5 + $0xed8] sm:$0xff]
    %v713 = vld [vmem:[#allocation5 + $0xee0] sm:$0xff]
    %v714 = vld [vmem:[#allocation5 + $0xee8] sm:$0xff]
    %v715 = vld [vmem:[#allocation5 + $0xef0] sm:$0xff]
    %v716 = vld [vmem:[#allocation5 + $0xef8] sm:$0xff]
    %v717 = vld [vmem:[#allocation5 + $0xf00] sm:$0xff]
    %v718 = vld [vmem:[#allocation5 + $0xf08] sm:$0xff]
    %v719 = vld [vmem:[#allocation5 + $0xf10] sm:$0xff]
    %v720 = vld [vmem:[#allocation5 + $0xf18] sm:$0xff]
    %v721 = vld [vmem:[#allocation5 + $0xf20] sm:$0xff]
    %v722 = vld [vmem:[#allocation5 + $0xf28] sm:$0xff]
    %v723 = vld [vmem:[#allocation5 + $0xf30] sm:$0xff]
    %v724 = vld [vmem:[#allocation5 + $0xf38] sm:$0xff]
    %v725 = vld [vmem:[#allocation5 + $0xf40] sm:$0xff]
    %v726 = vld [vmem:[#allocation5 + $0xf48] sm:$0xff]
    %v727 = vld [vmem:[#allocation5 + $0xf50] sm:$0xff]
    %v728 = vld [vmem:[#allocation5 + $0xf58] sm:$0xff]
    %v729 = vld [vmem:[#allocation5 + $0xf60] sm:$0xff]
    %v730 = vld [vmem:[#allocation5 + $0xf68] sm:$0xff]
    %v731 = vld [vmem:[#allocation5 + $0xf70] sm:$0xff]
    %v732 = vld [vmem:[#allocation5 + $0xf78] sm:$0xff]
    %v733 = vld [vmem:[#allocation5 + $0xf80] sm:$0xff]
    %v734 = vld [vmem:[#allocation5 + $0xf88] sm:$0xff]
    %v735 = vld [vmem:[#allocation5 + $0xf90] sm:$0xff]
    %v736 = vld [vmem:[#allocation5 + $0xf98] sm:$0xff]
    %v737 = vld [vmem:[#allocation5 + $0xfa0] sm:$0xff]
    %v738 = vld [vmem:[#allocation5 + $0xfa8] sm:$0xff]
    %v739 = vld [vmem:[#allocation5 + $0xfb0] sm:$0xff]
    %v740 = vld [vmem:[#allocation5 + $0xfb8] sm:$0xff]
    %v741 = vld [vmem:[#allocation5 + $0xfc0] sm:$0xff]
    %v742 = vld [vmem:[#allocation5 + $0xfc8] sm:$0xff]
    %v743 = vld [vmem:[#allocation5 + $0xfd0] sm:$0xff]
    %v744 = vld [vmem:[#allocation5 + $0xfd8] sm:$0xff]
    %v745 = vld [vmem:[#allocation5 + $0xfe0] sm:$0xff]
    %v746 = vld [vmem:[#allocation5 + $0xfe8] sm:$0xff]
    %v747 = vld [vmem:[#allocation5 + $0xff0] sm:$0xff]
    %v748 = vld [vmem:[#allocation5 + $0xff8] sm:$0xff]
    %v749 = vld [vmem:[#allocation7] sm:$0xff]
    %v751 = vperm.slane %v749, 0
    %v752 = vperm.slane %v749, 1
    %v753 = vperm.slane %v749, 2
    %v754 = vperm.slane %v749, 3
    %v755 = vperm.slane %v749, 4
    %v756 = vperm.slane %v749, 5
    %v757 = vperm.slane %v749, 6
    %v758 = vperm.slane %v749, 7
    %v771 = vunpack.c.l.b16 %v233
    %v772 = vunpack.c.h.b16 %v233
    %v773 = vunpack.c.l.b16 %v234
    %v774 = vunpack.c.h.b16 %v234
    %v775 = vunpack.c.l.b16 %v235
    %v776 = vunpack.c.h.b16 %v235
    %v777 = vunpack.c.l.b16 %v236
    %v778 = vunpack.c.h.b16 %v236
    %v779 = vpack.c.b16 %v771, %v771
    %v780 = vpack.c.b16 %v772, %v772
    %v781 = vpack.c.b16 %v773, %v773
    %v782 = vpack.c.b16 %v774, %v774
    %v783 = vpack.c.b16 %v775, %v775
    %v784 = vpack.c.b16 %v776, %v776
    %v785 = vpack.c.b16 %v777, %v777
    %v786 = vpack.c.b16 %v778, %v778
    %v1307 = vunpack.c.l.b16 %v237
    %v1308 = vunpack.c.h.b16 %v237
    %v1309 = vunpack.c.l.b16 %v238
    %v1310 = vunpack.c.h.b16 %v238
    %v1311 = vunpack.c.l.b16 %v239
    %v1312 = vunpack.c.h.b16 %v239
    %v1313 = vunpack.c.l.b16 %v240
    %v1314 = vunpack.c.h.b16 %v240
    %v1315 = vunpack.c.l.b16 %v241
    %v1316 = vunpack.c.h.b16 %v241
    %v1317 = vunpack.c.l.b16 %v242
    %v1318 = vunpack.c.h.b16 %v242
    %v1319 = vunpack.c.l.b16 %v243
    %v1320 = vunpack.c.h.b16 %v243
    %v1321 = vunpack.c.l.b16 %v244
    %v1322 = vunpack.c.h.b16 %v244
    %v1323 = vunpack.c.l.b16 %v245
    %v1324 = vunpack.c.h.b16 %v245
    %v1325 = vunpack.c.l.b16 %v246
    %v1326 = vunpack.c.h.b16 %v246
    %v1327 = vunpack.c.l.b16 %v247
    %v1328 = vunpack.c.h.b16 %v247
    %v1329 = vunpack.c.l.b16 %v248
    %v1330 = vunpack.c.h.b16 %v248
    %v1331 = vunpack.c.l.b16 %v249
    %v1332 = vunpack.c.h.b16 %v249
    %v1333 = vunpack.c.l.b16 %v250
    %v1334 = vunpack.c.h.b16 %v250
    %v1335 = vunpack.c.l.b16 %v251
    %v1336 = vunpack.c.h.b16 %v251
    %v1337 = vunpack.c.l.b16 %v252
    %v1338 = vunpack.c.h.b16 %v252
    %v1339 = vunpack.c.l.b16 %v253
    %v1340 = vunpack.c.h.b16 %v253
    %v1341 = vunpack.c.l.b16 %v254
    %v1342 = vunpack.c.h.b16 %v254
    %v1343 = vunpack.c.l.b16 %v255
    %v1344 = vunpack.c.h.b16 %v255
    %v1345 = vunpack.c.l.b16 %v256
    %v1346 = vunpack.c.h.b16 %v256
    %v1347 = vunpack.c.l.b16 %v257
    %v1348 = vunpack.c.h.b16 %v257
    %v1349 = vunpack.c.l.b16 %v258
    %v1350 = vunpack.c.h.b16 %v258
    %v1351 = vunpack.c.l.b16 %v259
    %v1352 = vunpack.c.h.b16 %v259
    %v1353 = vunpack.c.l.b16 %v260
    %v1354 = vunpack.c.h.b16 %v260
    %v1355 = vunpack.c.l.b16 %v261
    %v1356 = vunpack.c.h.b16 %v261
    %v1357 = vunpack.c.l.b16 %v262
    %v1358 = vunpack.c.h.b16 %v262
    %v1359 = vunpack.c.l.b16 %v263
    %v1360 = vunpack.c.h.b16 %v263
    %v1361 = vunpack.c.l.b16 %v264
    %v1362 = vunpack.c.h.b16 %v264
    %v1363 = vunpack.c.l.b16 %v265
    %v1364 = vunpack.c.h.b16 %v265
    %v1365 = vunpack.c.l.b16 %v266
    %v1366 = vunpack.c.h.b16 %v266
    %v1367 = vunpack.c.l.b16 %v267
    %v1368 = vunpack.c.h.b16 %v267
    %v1369 = vunpack.c.l.b16 %v268
    %v1370 = vunpack.c.h.b16 %v268
    %v1371 = vunpack.c.l.b16 %v269
    %v1372 = vunpack.c.h.b16 %v269
    %v1373 = vunpack.c.l.b16 %v270
    %v1374 = vunpack.c.h.b16 %v270
    %v1375 = vunpack.c.l.b16 %v271
    %v1376 = vunpack.c.h.b16 %v271
    %v1377 = vunpack.c.l.b16 %v272
    %v1378 = vunpack.c.h.b16 %v272
    %v1379 = vunpack.c.l.b16 %v273
    %v1380 = vunpack.c.h.b16 %v273
    %v1381 = vunpack.c.l.b16 %v274
    %v1382 = vunpack.c.h.b16 %v274
    %v1383 = vunpack.c.l.b16 %v275
    %v1384 = vunpack.c.h.b16 %v275
    %v1385 = vunpack.c.l.b16 %v276
    %v1386 = vunpack.c.h.b16 %v276
    %v1387 = vunpack.c.l.b16 %v277
    %v1388 = vunpack.c.h.b16 %v277
    %v1389 = vunpack.c.l.b16 %v278
    %v1390 = vunpack.c.h.b16 %v278
    %v1391 = vunpack.c.l.b16 %v279
    %v1392 = vunpack.c.h.b16 %v279
    %v1393 = vunpack.c.l.b16 %v280
    %v1394 = vunpack.c.h.b16 %v280
    %v1395 = vunpack.c.l.b16 %v281
    %v1396 = vunpack.c.h.b16 %v281
    %v1397 = vunpack.c.l.b16 %v282
    %v1398 = vunpack.c.h.b16 %v282
    %v1399 = vunpack.c.l.b16 %v283
    %v1400 = vunpack.c.h.b16 %v283
    %v1401 = vunpack.c.l.b16 %v284
    %v1402 = vunpack.c.h.b16 %v284
    %v1403 = vunpack.c.l.b16 %v285
    %v1404 = vunpack.c.h.b16 %v285
    %v1405 = vunpack.c.l.b16 %v286
    %v1406 = vunpack.c.h.b16 %v286
    %v1407 = vunpack.c.l.b16 %v287
    %v1408 = vunpack.c.h.b16 %v287
    %v1409 = vunpack.c.l.b16 %v288
    %v1410 = vunpack.c.h.b16 %v288
    %v1411 = vunpack.c.l.b16 %v289
    %v1412 = vunpack.c.h.b16 %v289
    %v1413 = vunpack.c.l.b16 %v290
    %v1414 = vunpack.c.h.b16 %v290
    %v1415 = vunpack.c.l.b16 %v291
    %v1416 = vunpack.c.h.b16 %v291
    %v1417 = vunpack.c.l.b16 %v292
    %v1418 = vunpack.c.h.b16 %v292
    %v1419 = vunpack.c.l.b16 %v293
    %v1420 = vunpack.c.h.b16 %v293
    %v1421 = vunpack.c.l.b16 %v294
    %v1422 = vunpack.c.h.b16 %v294
    %v1423 = vunpack.c.l.b16 %v295
    %v1424 = vunpack.c.h.b16 %v295
    %v1425 = vunpack.c.l.b16 %v296
    %v1426 = vunpack.c.h.b16 %v296
    %v1427 = vunpack.c.l.b16 %v297
    %v1428 = vunpack.c.h.b16 %v297
    %v1429 = vunpack.c.l.b16 %v298
    %v1430 = vunpack.c.h.b16 %v298
    %v1431 = vunpack.c.l.b16 %v299
    %v1432 = vunpack.c.h.b16 %v299
    %v1433 = vunpack.c.l.b16 %v300
    %v1434 = vunpack.c.h.b16 %v300
    %v1435 = vunpack.c.l.b16 %v301
    %v1436 = vunpack.c.h.b16 %v301
    %v1437 = vunpack.c.l.b16 %v302
    %v1438 = vunpack.c.h.b16 %v302
    %v1439 = vunpack.c.l.b16 %v303
    %v1440 = vunpack.c.h.b16 %v303
    %v1441 = vunpack.c.l.b16 %v304
    %v1442 = vunpack.c.h.b16 %v304
    %v1443 = vunpack.c.l.b16 %v305
    %v1444 = vunpack.c.h.b16 %v305
    %v1445 = vunpack.c.l.b16 %v306
    %v1446 = vunpack.c.h.b16 %v306
    %v1447 = vunpack.c.l.b16 %v307
    %v1448 = vunpack.c.h.b16 %v307
    %v1449 = vunpack.c.l.b16 %v308
    %v1450 = vunpack.c.h.b16 %v308
    %v1451 = vunpack.c.l.b16 %v309
    %v1452 = vunpack.c.h.b16 %v309
    %v1453 = vunpack.c.l.b16 %v310
    %v1454 = vunpack.c.h.b16 %v310
    %v1455 = vunpack.c.l.b16 %v311
    %v1456 = vunpack.c.h.b16 %v311
    %v1457 = vunpack.c.l.b16 %v312
    %v1458 = vunpack.c.h.b16 %v312
    %v1459 = vunpack.c.l.b16 %v313
    %v1460 = vunpack.c.h.b16 %v313
    %v1461 = vunpack.c.l.b16 %v314
    %v1462 = vunpack.c.h.b16 %v314
    %v1463 = vunpack.c.l.b16 %v315
    %v1464 = vunpack.c.h.b16 %v315
    %v1465 = vunpack.c.l.b16 %v316
    %v1466 = vunpack.c.h.b16 %v316
    %v1467 = vunpack.c.l.b16 %v317
    %v1468 = vunpack.c.h.b16 %v317
    %v1469 = vunpack.c.l.b16 %v318
    %v1470 = vunpack.c.h.b16 %v318
    %v1471 = vunpack.c.l.b16 %v319
    %v1472 = vunpack.c.h.b16 %v319
    %v1473 = vunpack.c.l.b16 %v320
    %v1474 = vunpack.c.h.b16 %v320
    %v1475 = vunpack.c.l.b16 %v321
    %v1476 = vunpack.c.h.b16 %v321
    %v1477 = vunpack.c.l.b16 %v322
    %v1478 = vunpack.c.h.b16 %v322
    %v1479 = vunpack.c.l.b16 %v323
    %v1480 = vunpack.c.h.b16 %v323
    %v1481 = vunpack.c.l.b16 %v324
    %v1482 = vunpack.c.h.b16 %v324
    %v1483 = vunpack.c.l.b16 %v325
    %v1484 = vunpack.c.h.b16 %v325
    %v1485 = vunpack.c.l.b16 %v326
    %v1486 = vunpack.c.h.b16 %v326
    %v1487 = vunpack.c.l.b16 %v327
    %v1488 = vunpack.c.h.b16 %v327
    %v1489 = vunpack.c.l.b16 %v328
    %v1490 = vunpack.c.h.b16 %v328
    %v1491 = vunpack.c.l.b16 %v329
    %v1492 = vunpack.c.h.b16 %v329
    %v1493 = vunpack.c.l.b16 %v330
    %v1494 = vunpack.c.h.b16 %v330
    %v1495 = vunpack.c.l.b16 %v331
    %v1496 = vunpack.c.h.b16 %v331
    %v1497 = vunpack.c.l.b16 %v332
    %v1498 = vunpack.c.h.b16 %v332
    %v1499 = vunpack.c.l.b16 %v333
    %v1500 = vunpack.c.h.b16 %v333
    %v1501 = vunpack.c.l.b16 %v334
    %v1502 = vunpack.c.h.b16 %v334
    %v1503 = vunpack.c.l.b16 %v335
    %v1504 = vunpack.c.h.b16 %v335
    %v1505 = vunpack.c.l.b16 %v336
    %v1506 = vunpack.c.h.b16 %v336
    %v1507 = vunpack.c.l.b16 %v337
    %v1508 = vunpack.c.h.b16 %v337
    %v1509 = vunpack.c.l.b16 %v338
    %v1510 = vunpack.c.h.b16 %v338
    %v1511 = vunpack.c.l.b16 %v339
    %v1512 = vunpack.c.h.b16 %v339
    %v1513 = vunpack.c.l.b16 %v340
    %v1514 = vunpack.c.h.b16 %v340
    %v1515 = vunpack.c.l.b16 %v341
    %v1516 = vunpack.c.h.b16 %v341
    %v1517 = vunpack.c.l.b16 %v342
    %v1518 = vunpack.c.h.b16 %v342
    %v1519 = vunpack.c.l.b16 %v343
    %v1520 = vunpack.c.h.b16 %v343
    %v1521 = vunpack.c.l.b16 %v344
    %v1522 = vunpack.c.h.b16 %v344
    %v1523 = vunpack.c.l.b16 %v345
    %v1524 = vunpack.c.h.b16 %v345
    %v1525 = vunpack.c.l.b16 %v346
    %v1526 = vunpack.c.h.b16 %v346
    %v1527 = vunpack.c.l.b16 %v347
    %v1528 = vunpack.c.h.b16 %v347
    %v1529 = vunpack.c.l.b16 %v348
    %v1530 = vunpack.c.h.b16 %v348
    %v1531 = vunpack.c.l.b16 %v349
    %v1532 = vunpack.c.h.b16 %v349
    %v1533 = vunpack.c.l.b16 %v350
    %v1534 = vunpack.c.h.b16 %v350
    %v1535 = vunpack.c.l.b16 %v351
    %v1536 = vunpack.c.h.b16 %v351
    %v1537 = vunpack.c.l.b16 %v352
    %v1538 = vunpack.c.h.b16 %v352
    %v1539 = vunpack.c.l.b16 %v353
    %v1540 = vunpack.c.h.b16 %v353
    %v1541 = vunpack.c.l.b16 %v354
    %v1542 = vunpack.c.h.b16 %v354
    %v1543 = vunpack.c.l.b16 %v355
    %v1544 = vunpack.c.h.b16 %v355
    %v1545 = vunpack.c.l.b16 %v356
    %v1546 = vunpack.c.h.b16 %v356
    %v1547 = vunpack.c.l.b16 %v357
    %v1548 = vunpack.c.h.b16 %v357
    %v1549 = vunpack.c.l.b16 %v358
    %v1550 = vunpack.c.h.b16 %v358
    %v1551 = vunpack.c.l.b16 %v359
    %v1552 = vunpack.c.h.b16 %v359
    %v1553 = vunpack.c.l.b16 %v360
    %v1554 = vunpack.c.h.b16 %v360
    %v1555 = vunpack.c.l.b16 %v361
    %v1556 = vunpack.c.h.b16 %v361
    %v1557 = vunpack.c.l.b16 %v362
    %v1558 = vunpack.c.h.b16 %v362
    %v1559 = vunpack.c.l.b16 %v363
    %v1560 = vunpack.c.h.b16 %v363
    %v1561 = vunpack.c.l.b16 %v364
    %v1562 = vunpack.c.h.b16 %v364
    %v1563 = vunpack.c.l.b16 %v365
    %v1564 = vunpack.c.h.b16 %v365
    %v1565 = vunpack.c.l.b16 %v366
    %v1566 = vunpack.c.h.b16 %v366
    %v1567 = vunpack.c.l.b16 %v367
    %v1568 = vunpack.c.h.b16 %v367
    %v1569 = vunpack.c.l.b16 %v368
    %v1570 = vunpack.c.h.b16 %v368
    %v1571 = vunpack.c.l.b16 %v369
    %v1572 = vunpack.c.h.b16 %v369
    %v1573 = vunpack.c.l.b16 %v370
    %v1574 = vunpack.c.h.b16 %v370
    %v1575 = vunpack.c.l.b16 %v371
    %v1576 = vunpack.c.h.b16 %v371
    %v1577 = vunpack.c.l.b16 %v372
    %v1578 = vunpack.c.h.b16 %v372
    %v1579 = vunpack.c.l.b16 %v373
    %v1580 = vunpack.c.h.b16 %v373
    %v1581 = vunpack.c.l.b16 %v374
    %v1582 = vunpack.c.h.b16 %v374
    %v1583 = vunpack.c.l.b16 %v375
    %v1584 = vunpack.c.h.b16 %v375
    %v1585 = vunpack.c.l.b16 %v376
    %v1586 = vunpack.c.h.b16 %v376
    %v1587 = vunpack.c.l.b16 %v377
    %v1588 = vunpack.c.h.b16 %v377
    %v1589 = vunpack.c.l.b16 %v378
    %v1590 = vunpack.c.h.b16 %v378
    %v1591 = vunpack.c.l.b16 %v379
    %v1592 = vunpack.c.h.b16 %v379
    %v1593 = vunpack.c.l.b16 %v380
    %v1594 = vunpack.c.h.b16 %v380
    %v1595 = vunpack.c.l.b16 %v381
    %v1596 = vunpack.c.h.b16 %v381
    %v1597 = vunpack.c.l.b16 %v382
    %v1598 = vunpack.c.h.b16 %v382
    %v1599 = vunpack.c.l.b16 %v383
    %v1600 = vunpack.c.h.b16 %v383
    %v1601 = vunpack.c.l.b16 %v384
    %v1602 = vunpack.c.h.b16 %v384
    %v1603 = vunpack.c.l.b16 %v385
    %v1604 = vunpack.c.h.b16 %v385
    %v1605 = vunpack.c.l.b16 %v386
    %v1606 = vunpack.c.h.b16 %v386
    %v1607 = vunpack.c.l.b16 %v387
    %v1608 = vunpack.c.h.b16 %v387
    %v1609 = vunpack.c.l.b16 %v388
    %v1610 = vunpack.c.h.b16 %v388
    %v1611 = vunpack.c.l.b16 %v389
    %v1612 = vunpack.c.h.b16 %v389
    %v1613 = vunpack.c.l.b16 %v390
    %v1614 = vunpack.c.h.b16 %v390
    %v1615 = vunpack.c.l.b16 %v391
    %v1616 = vunpack.c.h.b16 %v391
    %v1617 = vunpack.c.l.b16 %v392
    %v1618 = vunpack.c.h.b16 %v392
    %v1619 = vunpack.c.l.b16 %v393
    %v1620 = vunpack.c.h.b16 %v393
    %v1621 = vunpack.c.l.b16 %v394
    %v1622 = vunpack.c.h.b16 %v394
    %v1623 = vunpack.c.l.b16 %v395
    %v1624 = vunpack.c.h.b16 %v395
    %v1625 = vunpack.c.l.b16 %v396
    %v1626 = vunpack.c.h.b16 %v396
    %v1627 = vunpack.c.l.b16 %v397
    %v1628 = vunpack.c.h.b16 %v397
    %v1629 = vunpack.c.l.b16 %v398
    %v1630 = vunpack.c.h.b16 %v398
    %v1631 = vunpack.c.l.b16 %v399
    %v1632 = vunpack.c.h.b16 %v399
    %v1633 = vunpack.c.l.b16 %v400
    %v1634 = vunpack.c.h.b16 %v400
    %v1635 = vunpack.c.l.b16 %v401
    %v1636 = vunpack.c.h.b16 %v401
    %v1637 = vunpack.c.l.b16 %v402
    %v1638 = vunpack.c.h.b16 %v402
    %v1639 = vunpack.c.l.b16 %v403
    %v1640 = vunpack.c.h.b16 %v403
    %v1641 = vunpack.c.l.b16 %v404
    %v1642 = vunpack.c.h.b16 %v404
    %v1643 = vunpack.c.l.b16 %v405
    %v1644 = vunpack.c.h.b16 %v405
    %v1645 = vunpack.c.l.b16 %v406
    %v1646 = vunpack.c.h.b16 %v406
    %v1647 = vunpack.c.l.b16 %v407
    %v1648 = vunpack.c.h.b16 %v407
    %v1649 = vunpack.c.l.b16 %v408
    %v1650 = vunpack.c.h.b16 %v408
    %v1651 = vunpack.c.l.b16 %v409
    %v1652 = vunpack.c.h.b16 %v409
    %v1653 = vunpack.c.l.b16 %v410
    %v1654 = vunpack.c.h.b16 %v410
    %v1655 = vunpack.c.l.b16 %v411
    %v1656 = vunpack.c.h.b16 %v411
    %v1657 = vunpack.c.l.b16 %v412
    %v1658 = vunpack.c.h.b16 %v412
    %v1659 = vunpack.c.l.b16 %v413
    %v1660 = vunpack.c.h.b16 %v413
    %v1661 = vunpack.c.l.b16 %v414
    %v1662 = vunpack.c.h.b16 %v414
    %v1663 = vunpack.c.l.b16 %v415
    %v1664 = vunpack.c.h.b16 %v415
    %v1665 = vunpack.c.l.b16 %v416
    %v1666 = vunpack.c.h.b16 %v416
    %v1667 = vunpack.c.l.b16 %v417
    %v1668 = vunpack.c.h.b16 %v417
    %v1669 = vunpack.c.l.b16 %v418
    %v1670 = vunpack.c.h.b16 %v418
    %v1671 = vunpack.c.l.b16 %v419
    %v1672 = vunpack.c.h.b16 %v419
    %v1673 = vunpack.c.l.b16 %v420
    %v1674 = vunpack.c.h.b16 %v420
    %v1675 = vunpack.c.l.b16 %v421
    %v1676 = vunpack.c.h.b16 %v421
    %v1677 = vunpack.c.l.b16 %v422
    %v1678 = vunpack.c.h.b16 %v422
    %v1679 = vunpack.c.l.b16 %v423
    %v1680 = vunpack.c.h.b16 %v423
    %v1681 = vunpack.c.l.b16 %v424
    %v1682 = vunpack.c.h.b16 %v424
    %v1683 = vunpack.c.l.b16 %v425
    %v1684 = vunpack.c.h.b16 %v425
    %v1685 = vunpack.c.l.b16 %v426
    %v1686 = vunpack.c.h.b16 %v426
    %v1687 = vunpack.c.l.b16 %v427
    %v1688 = vunpack.c.h.b16 %v427
    %v1689 = vunpack.c.l.b16 %v428
    %v1690 = vunpack.c.h.b16 %v428
    %v1691 = vunpack.c.l.b16 %v429
    %v1692 = vunpack.c.h.b16 %v429
    %v1693 = vunpack.c.l.b16 %v430
    %v1694 = vunpack.c.h.b16 %v430
    %v1695 = vunpack.c.l.b16 %v431
    %v1696 = vunpack.c.h.b16 %v431
    %v1697 = vunpack.c.l.b16 %v432
    %v1698 = vunpack.c.h.b16 %v432
    %v1699 = vunpack.c.l.b16 %v433
    %v1700 = vunpack.c.h.b16 %v433
    %v1701 = vunpack.c.l.b16 %v434
    %v1702 = vunpack.c.h.b16 %v434
    %v1703 = vunpack.c.l.b16 %v435
    %v1704 = vunpack.c.h.b16 %v435
    %v1705 = vunpack.c.l.b16 %v436
    %v1706 = vunpack.c.h.b16 %v436
    %v1707 = vunpack.c.l.b16 %v437
    %v1708 = vunpack.c.h.b16 %v437
    %v1709 = vunpack.c.l.b16 %v438
    %v1710 = vunpack.c.h.b16 %v438
    %v1711 = vunpack.c.l.b16 %v439
    %v1712 = vunpack.c.h.b16 %v439
    %v1713 = vunpack.c.l.b16 %v440
    %v1714 = vunpack.c.h.b16 %v440
    %v1715 = vunpack.c.l.b16 %v441
    %v1716 = vunpack.c.h.b16 %v441
    %v1717 = vunpack.c.l.b16 %v442
    %v1718 = vunpack.c.h.b16 %v442
    %v1719 = vunpack.c.l.b16 %v443
    %v1720 = vunpack.c.h.b16 %v443
    %v1721 = vunpack.c.l.b16 %v444
    %v1722 = vunpack.c.h.b16 %v444
    %v1723 = vunpack.c.l.b16 %v445
    %v1724 = vunpack.c.h.b16 %v445
    %v1725 = vunpack.c.l.b16 %v446
    %v1726 = vunpack.c.h.b16 %v446
    %v1727 = vunpack.c.l.b16 %v447
    %v1728 = vunpack.c.h.b16 %v447
    %v1729 = vunpack.c.l.b16 %v448
    %v1730 = vunpack.c.h.b16 %v448
    %v1731 = vunpack.c.l.b16 %v449
    %v1732 = vunpack.c.h.b16 %v449
    %v1733 = vunpack.c.l.b16 %v450
    %v1734 = vunpack.c.h.b16 %v450
    %v1735 = vunpack.c.l.b16 %v451
    %v1736 = vunpack.c.h.b16 %v451
    %v1737 = vunpack.c.l.b16 %v452
    %v1738 = vunpack.c.h.b16 %v452
    %v1739 = vunpack.c.l.b16 %v453
    %v1740 = vunpack.c.h.b16 %v453
    %v1741 = vunpack.c.l.b16 %v454
    %v1742 = vunpack.c.h.b16 %v454
    %v1743 = vunpack.c.l.b16 %v455
    %v1744 = vunpack.c.h.b16 %v455
    %v1745 = vunpack.c.l.b16 %v456
    %v1746 = vunpack.c.h.b16 %v456
    %v1747 = vunpack.c.l.b16 %v457
    %v1748 = vunpack.c.h.b16 %v457
    %v1749 = vunpack.c.l.b16 %v458
    %v1750 = vunpack.c.h.b16 %v458
    %v1751 = vunpack.c.l.b16 %v459
    %v1752 = vunpack.c.h.b16 %v459
    %v1753 = vunpack.c.l.b16 %v460
    %v1754 = vunpack.c.h.b16 %v460
    %v1755 = vunpack.c.l.b16 %v461
    %v1756 = vunpack.c.h.b16 %v461
    %v1757 = vunpack.c.l.b16 %v462
    %v1758 = vunpack.c.h.b16 %v462
    %v1759 = vunpack.c.l.b16 %v463
    %v1760 = vunpack.c.h.b16 %v463
    %v1761 = vunpack.c.l.b16 %v464
    %v1762 = vunpack.c.h.b16 %v464
    %v1763 = vunpack.c.l.b16 %v465
    %v1764 = vunpack.c.h.b16 %v465
    %v1765 = vunpack.c.l.b16 %v466
    %v1766 = vunpack.c.h.b16 %v466
    %v1767 = vunpack.c.l.b16 %v467
    %v1768 = vunpack.c.h.b16 %v467
    %v1769 = vunpack.c.l.b16 %v468
    %v1770 = vunpack.c.h.b16 %v468
    %v1771 = vunpack.c.l.b16 %v469
    %v1772 = vunpack.c.h.b16 %v469
    %v1773 = vunpack.c.l.b16 %v470
    %v1774 = vunpack.c.h.b16 %v470
    %v1775 = vunpack.c.l.b16 %v471
    %v1776 = vunpack.c.h.b16 %v471
    %v1777 = vunpack.c.l.b16 %v472
    %v1778 = vunpack.c.h.b16 %v472
    %v1779 = vunpack.c.l.b16 %v473
    %v1780 = vunpack.c.h.b16 %v473
    %v1781 = vunpack.c.l.b16 %v474
    %v1782 = vunpack.c.h.b16 %v474
    %v1783 = vunpack.c.l.b16 %v475
    %v1784 = vunpack.c.h.b16 %v475
    %v1785 = vunpack.c.l.b16 %v476
    %v1786 = vunpack.c.h.b16 %v476
    %v1787 = vunpack.c.l.b16 %v477
    %v1788 = vunpack.c.h.b16 %v477
    %v1789 = vunpack.c.l.b16 %v478
    %v1790 = vunpack.c.h.b16 %v478
    %v1791 = vunpack.c.l.b16 %v479
    %v1792 = vunpack.c.h.b16 %v479
    %v1793 = vunpack.c.l.b16 %v480
    %v1794 = vunpack.c.h.b16 %v480
    %v1795 = vunpack.c.l.b16 %v481
    %v1796 = vunpack.c.h.b16 %v481
    %v1797 = vunpack.c.l.b16 %v482
    %v1798 = vunpack.c.h.b16 %v482
    %v1799 = vunpack.c.l.b16 %v483
    %v1800 = vunpack.c.h.b16 %v483
    %v1801 = vunpack.c.l.b16 %v484
    %v1802 = vunpack.c.h.b16 %v484
    %v1803 = vunpack.c.l.b16 %v485
    %v1804 = vunpack.c.h.b16 %v485
    %v1805 = vunpack.c.l.b16 %v486
    %v1806 = vunpack.c.h.b16 %v486
    %v1807 = vunpack.c.l.b16 %v487
    %v1808 = vunpack.c.h.b16 %v487
    %v1809 = vunpack.c.l.b16 %v488
    %v1810 = vunpack.c.h.b16 %v488
    %v1811 = vunpack.c.l.b16 %v489
    %v1812 = vunpack.c.h.b16 %v489
    %v1813 = vunpack.c.l.b16 %v490
    %v1814 = vunpack.c.h.b16 %v490
    %v1815 = vunpack.c.l.b16 %v491
    %v1816 = vunpack.c.h.b16 %v491
    %v1817 = vunpack.c.l.b16 %v492
    %v1818 = vunpack.c.h.b16 %v492
    %v1819 = vunpack.c.l.b16 %v493
    %v1820 = vunpack.c.h.b16 %v493
    %v1821 = vunpack.c.l.b16 %v494
    %v1822 = vunpack.c.h.b16 %v494
    %v1823 = vunpack.c.l.b16 %v495
    %v1824 = vunpack.c.h.b16 %v495
    %v1825 = vunpack.c.l.b16 %v496
    %v1826 = vunpack.c.h.b16 %v496
    %v1827 = vunpack.c.l.b16 %v497
    %v1828 = vunpack.c.h.b16 %v497
    %v1829 = vunpack.c.l.b16 %v498
    %v1830 = vunpack.c.h.b16 %v498
    %v1831 = vunpack.c.l.b16 %v499
    %v1832 = vunpack.c.h.b16 %v499
    %v1833 = vunpack.c.l.b16 %v500
    %v1834 = vunpack.c.h.b16 %v500
    %v1835 = vunpack.c.l.b16 %v501
    %v1836 = vunpack.c.h.b16 %v501
    %v1837 = vunpack.c.l.b16 %v502
    %v1838 = vunpack.c.h.b16 %v502
    %v1839 = vunpack.c.l.b16 %v503
    %v1840 = vunpack.c.h.b16 %v503
    %v1841 = vunpack.c.l.b16 %v504
    %v1842 = vunpack.c.h.b16 %v504
    %v1843 = vunpack.c.l.b16 %v505
    %v1844 = vunpack.c.h.b16 %v505
    %v1845 = vunpack.c.l.b16 %v506
    %v1846 = vunpack.c.h.b16 %v506
    %v1847 = vunpack.c.l.b16 %v507
    %v1848 = vunpack.c.h.b16 %v507
    %v1849 = vunpack.c.l.b16 %v508
    %v1850 = vunpack.c.h.b16 %v508
    %v1851 = vunpack.c.l.b16 %v509
    %v1852 = vunpack.c.h.b16 %v509
    %v1853 = vunpack.c.l.b16 %v510
    %v1854 = vunpack.c.h.b16 %v510
    %v1855 = vunpack.c.l.b16 %v511
    %v1856 = vunpack.c.h.b16 %v511
    %v1857 = vunpack.c.l.b16 %v512
    %v1858 = vunpack.c.h.b16 %v512
    %v1859 = vunpack.c.l.b16 %v513
    %v1860 = vunpack.c.h.b16 %v513
    %v1861 = vunpack.c.l.b16 %v514
    %v1862 = vunpack.c.h.b16 %v514
    %v1863 = vunpack.c.l.b16 %v515
    %v1864 = vunpack.c.h.b16 %v515
    %v1865 = vunpack.c.l.b16 %v516
    %v1866 = vunpack.c.h.b16 %v516
    %v1867 = vunpack.c.l.b16 %v517
    %v1868 = vunpack.c.h.b16 %v517
    %v1869 = vunpack.c.l.b16 %v518
    %v1870 = vunpack.c.h.b16 %v518
    %v1871 = vunpack.c.l.b16 %v519
    %v1872 = vunpack.c.h.b16 %v519
    %v1873 = vunpack.c.l.b16 %v520
    %v1874 = vunpack.c.h.b16 %v520
    %v1875 = vunpack.c.l.b16 %v521
    %v1876 = vunpack.c.h.b16 %v521
    %v1877 = vunpack.c.l.b16 %v522
    %v1878 = vunpack.c.h.b16 %v522
    %v1879 = vunpack.c.l.b16 %v523
    %v1880 = vunpack.c.h.b16 %v523
    %v1881 = vunpack.c.l.b16 %v524
    %v1882 = vunpack.c.h.b16 %v524
    %v1883 = vunpack.c.l.b16 %v525
    %v1884 = vunpack.c.h.b16 %v525
    %v1885 = vunpack.c.l.b16 %v526
    %v1886 = vunpack.c.h.b16 %v526
    %v1887 = vunpack.c.l.b16 %v527
    %v1888 = vunpack.c.h.b16 %v527
    %v1889 = vunpack.c.l.b16 %v528
    %v1890 = vunpack.c.h.b16 %v528
    %v1891 = vunpack.c.l.b16 %v529
    %v1892 = vunpack.c.h.b16 %v529
    %v1893 = vunpack.c.l.b16 %v530
    %v1894 = vunpack.c.h.b16 %v530
    %v1895 = vunpack.c.l.b16 %v531
    %v1896 = vunpack.c.h.b16 %v531
    %v1897 = vunpack.c.l.b16 %v532
    %v1898 = vunpack.c.h.b16 %v532
    %v1899 = vunpack.c.l.b16 %v533
    %v1900 = vunpack.c.h.b16 %v533
    %v1901 = vunpack.c.l.b16 %v534
    %v1902 = vunpack.c.h.b16 %v534
    %v1903 = vunpack.c.l.b16 %v535
    %v1904 = vunpack.c.h.b16 %v535
    %v1905 = vunpack.c.l.b16 %v536
    %v1906 = vunpack.c.h.b16 %v536
    %v1907 = vunpack.c.l.b16 %v537
    %v1908 = vunpack.c.h.b16 %v537
    %v1909 = vunpack.c.l.b16 %v538
    %v1910 = vunpack.c.h.b16 %v538
    %v1911 = vunpack.c.l.b16 %v539
    %v1912 = vunpack.c.h.b16 %v539
    %v1913 = vunpack.c.l.b16 %v540
    %v1914 = vunpack.c.h.b16 %v540
    %v1915 = vunpack.c.l.b16 %v541
    %v1916 = vunpack.c.h.b16 %v541
    %v1917 = vunpack.c.l.b16 %v542
    %v1918 = vunpack.c.h.b16 %v542
    %v1919 = vunpack.c.l.b16 %v543
    %v1920 = vunpack.c.h.b16 %v543
    %v1921 = vunpack.c.l.b16 %v544
    %v1922 = vunpack.c.h.b16 %v544
    %v1923 = vunpack.c.l.b16 %v545
    %v1924 = vunpack.c.h.b16 %v545
    %v1925 = vunpack.c.l.b16 %v546
    %v1926 = vunpack.c.h.b16 %v546
    %v1927 = vunpack.c.l.b16 %v547
    %v1928 = vunpack.c.h.b16 %v547
    %v1929 = vunpack.c.l.b16 %v548
    %v1930 = vunpack.c.h.b16 %v548
    %v1931 = vunpack.c.l.b16 %v549
    %v1932 = vunpack.c.h.b16 %v549
    %v1933 = vunpack.c.l.b16 %v550
    %v1934 = vunpack.c.h.b16 %v550
    %v1935 = vunpack.c.l.b16 %v551
    %v1936 = vunpack.c.h.b16 %v551
    %v1937 = vunpack.c.l.b16 %v552
    %v1938 = vunpack.c.h.b16 %v552
    %v1939 = vunpack.c.l.b16 %v553
    %v1940 = vunpack.c.h.b16 %v553
    %v1941 = vunpack.c.l.b16 %v554
    %v1942 = vunpack.c.h.b16 %v554
    %v1943 = vunpack.c.l.b16 %v555
    %v1944 = vunpack.c.h.b16 %v555
    %v1945 = vunpack.c.l.b16 %v556
    %v1946 = vunpack.c.h.b16 %v556
    %v1947 = vunpack.c.l.b16 %v557
    %v1948 = vunpack.c.h.b16 %v557
    %v1949 = vunpack.c.l.b16 %v558
    %v1950 = vunpack.c.h.b16 %v558
    %v1951 = vunpack.c.l.b16 %v559
    %v1952 = vunpack.c.h.b16 %v559
    %v1953 = vunpack.c.l.b16 %v560
    %v1954 = vunpack.c.h.b16 %v560
    %v1955 = vunpack.c.l.b16 %v561
    %v1956 = vunpack.c.h.b16 %v561
    %v1957 = vunpack.c.l.b16 %v562
    %v1958 = vunpack.c.h.b16 %v562
    %v1959 = vunpack.c.l.b16 %v563
    %v1960 = vunpack.c.h.b16 %v563
    %v1961 = vunpack.c.l.b16 %v564
    %v1962 = vunpack.c.h.b16 %v564
    %v1963 = vunpack.c.l.b16 %v565
    %v1964 = vunpack.c.h.b16 %v565
    %v1965 = vunpack.c.l.b16 %v566
    %v1966 = vunpack.c.h.b16 %v566
    %v1967 = vunpack.c.l.b16 %v567
    %v1968 = vunpack.c.h.b16 %v567
    %v1969 = vunpack.c.l.b16 %v568
    %v1970 = vunpack.c.h.b16 %v568
    %v1971 = vunpack.c.l.b16 %v569
    %v1972 = vunpack.c.h.b16 %v569
    %v1973 = vunpack.c.l.b16 %v570
    %v1974 = vunpack.c.h.b16 %v570
    %v1975 = vunpack.c.l.b16 %v571
    %v1976 = vunpack.c.h.b16 %v571
    %v1977 = vunpack.c.l.b16 %v572
    %v1978 = vunpack.c.h.b16 %v572
    %v1979 = vunpack.c.l.b16 %v573
    %v1980 = vunpack.c.h.b16 %v573
    %v1981 = vunpack.c.l.b16 %v574
    %v1982 = vunpack.c.h.b16 %v574
    %v1983 = vunpack.c.l.b16 %v575
    %v1984 = vunpack.c.h.b16 %v575
    %v1985 = vunpack.c.l.b16 %v576
    %v1986 = vunpack.c.h.b16 %v576
    %v1987 = vunpack.c.l.b16 %v577
    %v1988 = vunpack.c.h.b16 %v577
    %v1989 = vunpack.c.l.b16 %v578
    %v1990 = vunpack.c.h.b16 %v578
    %v1991 = vunpack.c.l.b16 %v579
    %v1992 = vunpack.c.h.b16 %v579
    %v1993 = vunpack.c.l.b16 %v580
    %v1994 = vunpack.c.h.b16 %v580
    %v1995 = vunpack.c.l.b16 %v581
    %v1996 = vunpack.c.h.b16 %v581
    %v1997 = vunpack.c.l.b16 %v582
    %v1998 = vunpack.c.h.b16 %v582
    %v1999 = vunpack.c.l.b16 %v583
    %v2000 = vunpack.c.h.b16 %v583
    %v2001 = vunpack.c.l.b16 %v584
    %v2002 = vunpack.c.h.b16 %v584
    %v2003 = vunpack.c.l.b16 %v585
    %v2004 = vunpack.c.h.b16 %v585
    %v2005 = vunpack.c.l.b16 %v586
    %v2006 = vunpack.c.h.b16 %v586
    %v2007 = vunpack.c.l.b16 %v587
    %v2008 = vunpack.c.h.b16 %v587
    %v2009 = vunpack.c.l.b16 %v588
    %v2010 = vunpack.c.h.b16 %v588
    %v2011 = vunpack.c.l.b16 %v589
    %v2012 = vunpack.c.h.b16 %v589
    %v2013 = vunpack.c.l.b16 %v590
    %v2014 = vunpack.c.h.b16 %v590
    %v2015 = vunpack.c.l.b16 %v591
    %v2016 = vunpack.c.h.b16 %v591
    %v2017 = vunpack.c.l.b16 %v592
    %v2018 = vunpack.c.h.b16 %v592
    %v2019 = vunpack.c.l.b16 %v593
    %v2020 = vunpack.c.h.b16 %v593
    %v2021 = vunpack.c.l.b16 %v594
    %v2022 = vunpack.c.h.b16 %v594
    %v2023 = vunpack.c.l.b16 %v595
    %v2024 = vunpack.c.h.b16 %v595
    %v2025 = vunpack.c.l.b16 %v596
    %v2026 = vunpack.c.h.b16 %v596
    %v2027 = vunpack.c.l.b16 %v597
    %v2028 = vunpack.c.h.b16 %v597
    %v2029 = vunpack.c.l.b16 %v598
    %v2030 = vunpack.c.h.b16 %v598
    %v2031 = vunpack.c.l.b16 %v599
    %v2032 = vunpack.c.h.b16 %v599
    %v2033 = vunpack.c.l.b16 %v600
    %v2034 = vunpack.c.h.b16 %v600
    %v2035 = vunpack.c.l.b16 %v601
    %v2036 = vunpack.c.h.b16 %v601
    %v2037 = vunpack.c.l.b16 %v602
    %v2038 = vunpack.c.h.b16 %v602
    %v2039 = vunpack.c.l.b16 %v603
    %v2040 = vunpack.c.h.b16 %v603
    %v2041 = vunpack.c.l.b16 %v604
    %v2042 = vunpack.c.h.b16 %v604
    %v2043 = vunpack.c.l.b16 %v605
    %v2044 = vunpack.c.h.b16 %v605
    %v2045 = vunpack.c.l.b16 %v606
    %v2046 = vunpack.c.h.b16 %v606
    %v2047 = vunpack.c.l.b16 %v607
    %v2048 = vunpack.c.h.b16 %v607
    %v2049 = vunpack.c.l.b16 %v608
    %v2050 = vunpack.c.h.b16 %v608
    %v2051 = vunpack.c.l.b16 %v609
    %v2052 = vunpack.c.h.b16 %v609
    %v2053 = vunpack.c.l.b16 %v610
    %v2054 = vunpack.c.h.b16 %v610
    %v2055 = vunpack.c.l.b16 %v611
    %v2056 = vunpack.c.h.b16 %v611
    %v2057 = vunpack.c.l.b16 %v612
    %v2058 = vunpack.c.h.b16 %v612
    %v2059 = vunpack.c.l.b16 %v613
    %v2060 = vunpack.c.h.b16 %v613
    %v2061 = vunpack.c.l.b16 %v614
    %v2062 = vunpack.c.h.b16 %v614
    %v2063 = vunpack.c.l.b16 %v615
    %v2064 = vunpack.c.h.b16 %v615
    %v2065 = vunpack.c.l.b16 %v616
    %v2066 = vunpack.c.h.b16 %v616
    %v2067 = vunpack.c.l.b16 %v617
    %v2068 = vunpack.c.h.b16 %v617
    %v2069 = vunpack.c.l.b16 %v618
    %v2070 = vunpack.c.h.b16 %v618
    %v2071 = vunpack.c.l.b16 %v619
    %v2072 = vunpack.c.h.b16 %v619
    %v2073 = vunpack.c.l.b16 %v620
    %v2074 = vunpack.c.h.b16 %v620
    %v2075 = vunpack.c.l.b16 %v621
    %v2076 = vunpack.c.h.b16 %v621
    %v2077 = vunpack.c.l.b16 %v622
    %v2078 = vunpack.c.h.b16 %v622
    %v2079 = vunpack.c.l.b16 %v623
    %v2080 = vunpack.c.h.b16 %v623
    %v2081 = vunpack.c.l.b16 %v624
    %v2082 = vunpack.c.h.b16 %v624
    %v2083 = vunpack.c.l.b16 %v625
    %v2084 = vunpack.c.h.b16 %v625
    %v2085 = vunpack.c.l.b16 %v626
    %v2086 = vunpack.c.h.b16 %v626
    %v2087 = vunpack.c.l.b16 %v627
    %v2088 = vunpack.c.h.b16 %v627
    %v2089 = vunpack.c.l.b16 %v628
    %v2090 = vunpack.c.h.b16 %v628
    %v2091 = vunpack.c.l.b16 %v629
    %v2092 = vunpack.c.h.b16 %v629
    %v2093 = vunpack.c.l.b16 %v630
    %v2094 = vunpack.c.h.b16 %v630
    %v2095 = vunpack.c.l.b16 %v631
    %v2096 = vunpack.c.h.b16 %v631
    %v2097 = vunpack.c.l.b16 %v632
    %v2098 = vunpack.c.h.b16 %v632
    %v2099 = vunpack.c.l.b16 %v633
    %v2100 = vunpack.c.h.b16 %v633
    %v2101 = vunpack.c.l.b16 %v634
    %v2102 = vunpack.c.h.b16 %v634
    %v2103 = vunpack.c.l.b16 %v635
    %v2104 = vunpack.c.h.b16 %v635
    %v2105 = vunpack.c.l.b16 %v636
    %v2106 = vunpack.c.h.b16 %v636
    %v2107 = vunpack.c.l.b16 %v637
    %v2108 = vunpack.c.h.b16 %v637
    %v2109 = vunpack.c.l.b16 %v638
    %v2110 = vunpack.c.h.b16 %v638
    %v2111 = vunpack.c.l.b16 %v639
    %v2112 = vunpack.c.h.b16 %v639
    %v2113 = vunpack.c.l.b16 %v640
    %v2114 = vunpack.c.h.b16 %v640
    %v2115 = vunpack.c.l.b16 %v641
    %v2116 = vunpack.c.h.b16 %v641
    %v2117 = vunpack.c.l.b16 %v642
    %v2118 = vunpack.c.h.b16 %v642
    %v2119 = vunpack.c.l.b16 %v643
    %v2120 = vunpack.c.h.b16 %v643
    %v2121 = vunpack.c.l.b16 %v644
    %v2122 = vunpack.c.h.b16 %v644
    %v2123 = vunpack.c.l.b16 %v645
    %v2124 = vunpack.c.h.b16 %v645
    %v2125 = vunpack.c.l.b16 %v646
    %v2126 = vunpack.c.h.b16 %v646
    %v2127 = vunpack.c.l.b16 %v647
    %v2128 = vunpack.c.h.b16 %v647
    %v2129 = vunpack.c.l.b16 %v648
    %v2130 = vunpack.c.h.b16 %v648
    %v2131 = vunpack.c.l.b16 %v649
    %v2132 = vunpack.c.h.b16 %v649
    %v2133 = vunpack.c.l.b16 %v650
    %v2134 = vunpack.c.h.b16 %v650
    %v2135 = vunpack.c.l.b16 %v651
    %v2136 = vunpack.c.h.b16 %v651
    %v2137 = vunpack.c.l.b16 %v652
    %v2138 = vunpack.c.h.b16 %v652
    %v2139 = vunpack.c.l.b16 %v653
    %v2140 = vunpack.c.h.b16 %v653
    %v2141 = vunpack.c.l.b16 %v654
    %v2142 = vunpack.c.h.b16 %v654
    %v2143 = vunpack.c.l.b16 %v655
    %v2144 = vunpack.c.h.b16 %v655
    %v2145 = vunpack.c.l.b16 %v656
    %v2146 = vunpack.c.h.b16 %v656
    %v2147 = vunpack.c.l.b16 %v657
    %v2148 = vunpack.c.h.b16 %v657
    %v2149 = vunpack.c.l.b16 %v658
    %v2150 = vunpack.c.h.b16 %v658
    %v2151 = vunpack.c.l.b16 %v659
    %v2152 = vunpack.c.h.b16 %v659
    %v2153 = vunpack.c.l.b16 %v660
    %v2154 = vunpack.c.h.b16 %v660
    %v2155 = vunpack.c.l.b16 %v661
    %v2156 = vunpack.c.h.b16 %v661
    %v2157 = vunpack.c.l.b16 %v662
    %v2158 = vunpack.c.h.b16 %v662
    %v2159 = vunpack.c.l.b16 %v663
    %v2160 = vunpack.c.h.b16 %v663
    %v2161 = vunpack.c.l.b16 %v664
    %v2162 = vunpack.c.h.b16 %v664
    %v2163 = vunpack.c.l.b16 %v665
    %v2164 = vunpack.c.h.b16 %v665
    %v2165 = vunpack.c.l.b16 %v666
    %v2166 = vunpack.c.h.b16 %v666
    %v2167 = vunpack.c.l.b16 %v667
    %v2168 = vunpack.c.h.b16 %v667
    %v2169 = vunpack.c.l.b16 %v668
    %v2170 = vunpack.c.h.b16 %v668
    %v2171 = vunpack.c.l.b16 %v669
    %v2172 = vunpack.c.h.b16 %v669
    %v2173 = vunpack.c.l.b16 %v670
    %v2174 = vunpack.c.h.b16 %v670
    %v2175 = vunpack.c.l.b16 %v671
    %v2176 = vunpack.c.h.b16 %v671
    %v2177 = vunpack.c.l.b16 %v672
    %v2178 = vunpack.c.h.b16 %v672
    %v2179 = vunpack.c.l.b16 %v673
    %v2180 = vunpack.c.h.b16 %v673
    %v2181 = vunpack.c.l.b16 %v674
    %v2182 = vunpack.c.h.b16 %v674
    %v2183 = vunpack.c.l.b16 %v675
    %v2184 = vunpack.c.h.b16 %v675
    %v2185 = vunpack.c.l.b16 %v676
    %v2186 = vunpack.c.h.b16 %v676
    %v2187 = vunpack.c.l.b16 %v677
    %v2188 = vunpack.c.h.b16 %v677
    %v2189 = vunpack.c.l.b16 %v678
    %v2190 = vunpack.c.h.b16 %v678
    %v2191 = vunpack.c.l.b16 %v679
    %v2192 = vunpack.c.h.b16 %v679
    %v2193 = vunpack.c.l.b16 %v680
    %v2194 = vunpack.c.h.b16 %v680
    %v2195 = vunpack.c.l.b16 %v681
    %v2196 = vunpack.c.h.b16 %v681
    %v2197 = vunpack.c.l.b16 %v682
    %v2198 = vunpack.c.h.b16 %v682
    %v2199 = vunpack.c.l.b16 %v683
    %v2200 = vunpack.c.h.b16 %v683
    %v2201 = vunpack.c.l.b16 %v684
    %v2202 = vunpack.c.h.b16 %v684
    %v2203 = vunpack.c.l.b16 %v685
    %v2204 = vunpack.c.h.b16 %v685
    %v2205 = vunpack.c.l.b16 %v686
    %v2206 = vunpack.c.h.b16 %v686
    %v2207 = vunpack.c.l.b16 %v687
    %v2208 = vunpack.c.h.b16 %v687
    %v2209 = vunpack.c.l.b16 %v688
    %v2210 = vunpack.c.h.b16 %v688
    %v2211 = vunpack.c.l.b16 %v689
    %v2212 = vunpack.c.h.b16 %v689
    %v2213 = vunpack.c.l.b16 %v690
    %v2214 = vunpack.c.h.b16 %v690
    %v2215 = vunpack.c.l.b16 %v691
    %v2216 = vunpack.c.h.b16 %v691
    %v2217 = vunpack.c.l.b16 %v692
    %v2218 = vunpack.c.h.b16 %v692
    %v2219 = vunpack.c.l.b16 %v693
    %v2220 = vunpack.c.h.b16 %v693
    %v2221 = vunpack.c.l.b16 %v694
    %v2222 = vunpack.c.h.b16 %v694
    %v2223 = vunpack.c.l.b16 %v695
    %v2224 = vunpack.c.h.b16 %v695
    %v2225 = vunpack.c.l.b16 %v696
    %v2226 = vunpack.c.h.b16 %v696
    %v2227 = vunpack.c.l.b16 %v697
    %v2228 = vunpack.c.h.b16 %v697
    %v2229 = vunpack.c.l.b16 %v698
    %v2230 = vunpack.c.h.b16 %v698
    %v2231 = vunpack.c.l.b16 %v699
    %v2232 = vunpack.c.h.b16 %v699
    %v2233 = vunpack.c.l.b16 %v700
    %v2234 = vunpack.c.h.b16 %v700
    %v2235 = vunpack.c.l.b16 %v701
    %v2236 = vunpack.c.h.b16 %v701
    %v2237 = vunpack.c.l.b16 %v702
    %v2238 = vunpack.c.h.b16 %v702
    %v2239 = vunpack.c.l.b16 %v703
    %v2240 = vunpack.c.h.b16 %v703
    %v2241 = vunpack.c.l.b16 %v704
    %v2242 = vunpack.c.h.b16 %v704
    %v2243 = vunpack.c.l.b16 %v705
    %v2244 = vunpack.c.h.b16 %v705
    %v2245 = vunpack.c.l.b16 %v706
    %v2246 = vunpack.c.h.b16 %v706
    %v2247 = vunpack.c.l.b16 %v707
    %v2248 = vunpack.c.h.b16 %v707
    %v2249 = vunpack.c.l.b16 %v708
    %v2250 = vunpack.c.h.b16 %v708
    %v2251 = vunpack.c.l.b16 %v709
    %v2252 = vunpack.c.h.b16 %v709
    %v2253 = vunpack.c.l.b16 %v710
    %v2254 = vunpack.c.h.b16 %v710
    %v2255 = vunpack.c.l.b16 %v711
    %v2256 = vunpack.c.h.b16 %v711
    %v2257 = vunpack.c.l.b16 %v712
    %v2258 = vunpack.c.h.b16 %v712
    %v2259 = vunpack.c.l.b16 %v713
    %v2260 = vunpack.c.h.b16 %v713
    %v2261 = vunpack.c.l.b16 %v714
    %v2262 = vunpack.c.h.b16 %v714
    %v2263 = vunpack.c.l.b16 %v715
    %v2264 = vunpack.c.h.b16 %v715
    %v2265 = vunpack.c.l.b16 %v716
    %v2266 = vunpack.c.h.b16 %v716
    %v2267 = vunpack.c.l.b16 %v717
    %v2268 = vunpack.c.h.b16 %v717
    %v2269 = vunpack.c.l.b16 %v718
    %v2270 = vunpack.c.h.b16 %v718
    %v2271 = vunpack.c.l.b16 %v719
    %v2272 = vunpack.c.h.b16 %v719
    %v2273 = vunpack.c.l.b16 %v720
    %v2274 = vunpack.c.h.b16 %v720
    %v2275 = vunpack.c.l.b16 %v721
    %v2276 = vunpack.c.h.b16 %v721
    %v2277 = vunpack.c.l.b16 %v722
    %v2278 = vunpack.c.h.b16 %v722
    %v2279 = vunpack.c.l.b16 %v723
    %v2280 = vunpack.c.h.b16 %v723
    %v2281 = vunpack.c.l.b16 %v724
    %v2282 = vunpack.c.h.b16 %v724
    %v2283 = vunpack.c.l.b16 %v725
    %v2284 = vunpack.c.h.b16 %v725
    %v2285 = vunpack.c.l.b16 %v726
    %v2286 = vunpack.c.h.b16 %v726
    %v2287 = vunpack.c.l.b16 %v727
    %v2288 = vunpack.c.h.b16 %v727
    %v2289 = vunpack.c.l.b16 %v728
    %v2290 = vunpack.c.h.b16 %v728
    %v2291 = vunpack.c.l.b16 %v729
    %v2292 = vunpack.c.h.b16 %v729
    %v2293 = vunpack.c.l.b16 %v730
    %v2294 = vunpack.c.h.b16 %v730
    %v2295 = vunpack.c.l.b16 %v731
    %v2296 = vunpack.c.h.b16 %v731
    %v2297 = vunpack.c.l.b16 %v732
    %v2298 = vunpack.c.h.b16 %v732
    %v2299 = vunpack.c.l.b16 %v733
    %v2300 = vunpack.c.h.b16 %v733
    %v2301 = vunpack.c.l.b16 %v734
    %v2302 = vunpack.c.h.b16 %v734
    %v2303 = vunpack.c.l.b16 %v735
    %v2304 = vunpack.c.h.b16 %v735
    %v2305 = vunpack.c.l.b16 %v736
    %v2306 = vunpack.c.h.b16 %v736
    %v2307 = vunpack.c.l.b16 %v737
    %v2308 = vunpack.c.h.b16 %v737
    %v2309 = vunpack.c.l.b16 %v738
    %v2310 = vunpack.c.h.b16 %v738
    %v2311 = vunpack.c.l.b16 %v739
    %v2312 = vunpack.c.h.b16 %v739
    %v2313 = vunpack.c.l.b16 %v740
    %v2314 = vunpack.c.h.b16 %v740
    %v2315 = vunpack.c.l.b16 %v741
    %v2316 = vunpack.c.h.b16 %v741
    %v2317 = vunpack.c.l.b16 %v742
    %v2318 = vunpack.c.h.b16 %v742
    %v2319 = vunpack.c.l.b16 %v743
    %v2320 = vunpack.c.h.b16 %v743
    %v2321 = vunpack.c.l.b16 %v744
    %v2322 = vunpack.c.h.b16 %v744
    %v2323 = vunpack.c.l.b16 %v745
    %v2324 = vunpack.c.h.b16 %v745
    %v2325 = vunpack.c.l.b16 %v746
    %v2326 = vunpack.c.h.b16 %v746
    %v2327 = vunpack.c.l.b16 %v747
    %v2328 = vunpack.c.h.b16 %v747
    %v2329 = vunpack.c.l.b16 %v748
    %v2330 = vunpack.c.h.b16 %v748
    %v2331 = vpack.c.b16 %v1315, %v1307
    %v2332 = vpack.c.b16 %v1316, %v1308
    %v2333 = vpack.c.b16 %v1317, %v1309
    %v2334 = vpack.c.b16 %v1318, %v1310
    %v2335 = vpack.c.b16 %v1319, %v1311
    %v2336 = vpack.c.b16 %v1320, %v1312
    %v2337 = vpack.c.b16 %v1321, %v1313
    %v2338 = vpack.c.b16 %v1322, %v1314
    %v2339 = vpack.c.b16 %v1331, %v1323
    %v2340 = vpack.c.b16 %v1332, %v1324
    %v2341 = vpack.c.b16 %v1333, %v1325
    %v2342 = vpack.c.b16 %v1334, %v1326
    %v2343 = vpack.c.b16 %v1335, %v1327
    %v2344 = vpack.c.b16 %v1336, %v1328
    %v2345 = vpack.c.b16 %v1337, %v1329
    %v2346 = vpack.c.b16 %v1338, %v1330
    %v2347 = vpack.c.b16 %v1347, %v1339
    %v2348 = vpack.c.b16 %v1348, %v1340
    %v2349 = vpack.c.b16 %v1349, %v1341
    %v2350 = vpack.c.b16 %v1350, %v1342
    %v2351 = vpack.c.b16 %v1351, %v1343
    %v2352 = vpack.c.b16 %v1352, %v1344
    %v2353 = vpack.c.b16 %v1353, %v1345
    %v2354 = vpack.c.b16 %v1354, %v1346
    %v2355 = vpack.c.b16 %v1363, %v1355
    %v2356 = vpack.c.b16 %v1364, %v1356
    %v2357 = vpack.c.b16 %v1365, %v1357
    %v2358 = vpack.c.b16 %v1366, %v1358
    %v2359 = vpack.c.b16 %v1367, %v1359
    %v2360 = vpack.c.b16 %v1368, %v1360
    %v2361 = vpack.c.b16 %v1369, %v1361
    %v2362 = vpack.c.b16 %v1370, %v1362
    %v2363 = vpack.c.b16 %v1379, %v1371
    %v2364 = vpack.c.b16 %v1380, %v1372
    %v2365 = vpack.c.b16 %v1381, %v1373
    %v2366 = vpack.c.b16 %v1382, %v1374
    %v2367 = vpack.c.b16 %v1383, %v1375
    %v2368 = vpack.c.b16 %v1384, %v1376
    %v2369 = vpack.c.b16 %v1385, %v1377
    %v2370 = vpack.c.b16 %v1386, %v1378
    %v2371 = vpack.c.b16 %v1395, %v1387
    %v2372 = vpack.c.b16 %v1396, %v1388
    %v2373 = vpack.c.b16 %v1397, %v1389
    %v2374 = vpack.c.b16 %v1398, %v1390
    %v2375 = vpack.c.b16 %v1399, %v1391
    %v2376 = vpack.c.b16 %v1400, %v1392
    %v2377 = vpack.c.b16 %v1401, %v1393
    %v2378 = vpack.c.b16 %v1402, %v1394
    %v2379 = vpack.c.b16 %v1411, %v1403
    %v2380 = vpack.c.b16 %v1412, %v1404
    %v2381 = vpack.c.b16 %v1413, %v1405
    %v2382 = vpack.c.b16 %v1414, %v1406
    %v2383 = vpack.c.b16 %v1415, %v1407
    %v2384 = vpack.c.b16 %v1416, %v1408
    %v2385 = vpack.c.b16 %v1417, %v1409
    %v2386 = vpack.c.b16 %v1418, %v1410
    %v2387 = vpack.c.b16 %v1427, %v1419
    %v2388 = vpack.c.b16 %v1428, %v1420
    %v2389 = vpack.c.b16 %v1429, %v1421
    %v2390 = vpack.c.b16 %v1430, %v1422
    %v2391 = vpack.c.b16 %v1431, %v1423
    %v2392 = vpack.c.b16 %v1432, %v1424
    %v2393 = vpack.c.b16 %v1433, %v1425
    %v2394 = vpack.c.b16 %v1434, %v1426
    %v2395 = vpack.c.b16 %v1443, %v1435
    %v2396 = vpack.c.b16 %v1444, %v1436
    %v2397 = vpack.c.b16 %v1445, %v1437
    %v2398 = vpack.c.b16 %v1446, %v1438
    %v2399 = vpack.c.b16 %v1447, %v1439
    %v2400 = vpack.c.b16 %v1448, %v1440
    %v2401 = vpack.c.b16 %v1449, %v1441
    %v2402 = vpack.c.b16 %v1450, %v1442
    %v2403 = vpack.c.b16 %v1459, %v1451
    %v2404 = vpack.c.b16 %v1460, %v1452
    %v2405 = vpack.c.b16 %v1461, %v1453
    %v2406 = vpack.c.b16 %v1462, %v1454
    %v2407 = vpack.c.b16 %v1463, %v1455
    %v2408 = vpack.c.b16 %v1464, %v1456
    %v2409 = vpack.c.b16 %v1465, %v1457
    %v2410 = vpack.c.b16 %v1466, %v1458
    %v2411 = vpack.c.b16 %v1475, %v1467
    %v2412 = vpack.c.b16 %v1476, %v1468
    %v2413 = vpack.c.b16 %v1477, %v1469
    %v2414 = vpack.c.b16 %v1478, %v1470
    %v2415 = vpack.c.b16 %v1479, %v1471
    %v2416 = vpack.c.b16 %v1480, %v1472
    %v2417 = vpack.c.b16 %v1481, %v1473
    %v2418 = vpack.c.b16 %v1482, %v1474
    %v2419 = vpack.c.b16 %v1491, %v1483
    %v2420 = vpack.c.b16 %v1492, %v1484
    %v2421 = vpack.c.b16 %v1493, %v1485
    %v2422 = vpack.c.b16 %v1494, %v1486
    %v2423 = vpack.c.b16 %v1495, %v1487
    %v2424 = vpack.c.b16 %v1496, %v1488
    %v2425 = vpack.c.b16 %v1497, %v1489
    %v2426 = vpack.c.b16 %v1498, %v1490
    %v2427 = vpack.c.b16 %v1507, %v1499
    %v2428 = vpack.c.b16 %v1508, %v1500
    %v2429 = vpack.c.b16 %v1509, %v1501
    %v2430 = vpack.c.b16 %v1510, %v1502
    %v2431 = vpack.c.b16 %v1511, %v1503
    %v2432 = vpack.c.b16 %v1512, %v1504
    %v2433 = vpack.c.b16 %v1513, %v1505
    %v2434 = vpack.c.b16 %v1514, %v1506
    %v2435 = vpack.c.b16 %v1523, %v1515
    %v2436 = vpack.c.b16 %v1524, %v1516
    %v2437 = vpack.c.b16 %v1525, %v1517
    %v2438 = vpack.c.b16 %v1526, %v1518
    %v2439 = vpack.c.b16 %v1527, %v1519
    %v2440 = vpack.c.b16 %v1528, %v1520
    %v2441 = vpack.c.b16 %v1529, %v1521
    %v2442 = vpack.c.b16 %v1530, %v1522
    %v2443 = vpack.c.b16 %v1539, %v1531
    %v2444 = vpack.c.b16 %v1540, %v1532
    %v2445 = vpack.c.b16 %v1541, %v1533
    %v2446 = vpack.c.b16 %v1542, %v1534
    %v2447 = vpack.c.b16 %v1543, %v1535
    %v2448 = vpack.c.b16 %v1544, %v1536
    %v2449 = vpack.c.b16 %v1545, %v1537
    %v2450 = vpack.c.b16 %v1546, %v1538
    %v2451 = vpack.c.b16 %v1555, %v1547
    %v2452 = vpack.c.b16 %v1556, %v1548
    %v2453 = vpack.c.b16 %v1557, %v1549
    %v2454 = vpack.c.b16 %v1558, %v1550
    %v2455 = vpack.c.b16 %v1559, %v1551
    %v2456 = vpack.c.b16 %v1560, %v1552
    %v2457 = vpack.c.b16 %v1561, %v1553
    %v2458 = vpack.c.b16 %v1562, %v1554
    %v2459 = vpack.c.b16 %v1571, %v1563
    %v2460 = vpack.c.b16 %v1572, %v1564
    %v2461 = vpack.c.b16 %v1573, %v1565
    %v2462 = vpack.c.b16 %v1574, %v1566
    %v2463 = vpack.c.b16 %v1575, %v1567
    %v2464 = vpack.c.b16 %v1576, %v1568
    %v2465 = vpack.c.b16 %v1577, %v1569
    %v2466 = vpack.c.b16 %v1578, %v1570
    %v2467 = vpack.c.b16 %v1587, %v1579
    %v2468 = vpack.c.b16 %v1588, %v1580
    %v2469 = vpack.c.b16 %v1589, %v1581
    %v2470 = vpack.c.b16 %v1590, %v1582
    %v2471 = vpack.c.b16 %v1591, %v1583
    %v2472 = vpack.c.b16 %v1592, %v1584
    %v2473 = vpack.c.b16 %v1593, %v1585
    %v2474 = vpack.c.b16 %v1594, %v1586
    %v2475 = vpack.c.b16 %v1603, %v1595
    %v2476 = vpack.c.b16 %v1604, %v1596
    %v2477 = vpack.c.b16 %v1605, %v1597
    %v2478 = vpack.c.b16 %v1606, %v1598
    %v2479 = vpack.c.b16 %v1607, %v1599
    %v2480 = vpack.c.b16 %v1608, %v1600
    %v2481 = vpack.c.b16 %v1609, %v1601
    %v2482 = vpack.c.b16 %v1610, %v1602
    %v2483 = vpack.c.b16 %v1619, %v1611
    %v2484 = vpack.c.b16 %v1620, %v1612
    %v2485 = vpack.c.b16 %v1621, %v1613
    %v2486 = vpack.c.b16 %v1622, %v1614
    %v2487 = vpack.c.b16 %v1623, %v1615
    %v2488 = vpack.c.b16 %v1624, %v1616
    %v2489 = vpack.c.b16 %v1625, %v1617
    %v2490 = vpack.c.b16 %v1626, %v1618
    %v2491 = vpack.c.b16 %v1635, %v1627
    %v2492 = vpack.c.b16 %v1636, %v1628
    %v2493 = vpack.c.b16 %v1637, %v1629
    %v2494 = vpack.c.b16 %v1638, %v1630
    %v2495 = vpack.c.b16 %v1639, %v1631
    %v2496 = vpack.c.b16 %v1640, %v1632
    %v2497 = vpack.c.b16 %v1641, %v1633
    %v2498 = vpack.c.b16 %v1642, %v1634
    %v2499 = vpack.c.b16 %v1651, %v1643
    %v2500 = vpack.c.b16 %v1652, %v1644
    %v2501 = vpack.c.b16 %v1653, %v1645
    %v2502 = vpack.c.b16 %v1654, %v1646
    %v2503 = vpack.c.b16 %v1655, %v1647
    %v2504 = vpack.c.b16 %v1656, %v1648
    %v2505 = vpack.c.b16 %v1657, %v1649
    %v2506 = vpack.c.b16 %v1658, %v1650
    %v2507 = vpack.c.b16 %v1667, %v1659
    %v2508 = vpack.c.b16 %v1668, %v1660
    %v2509 = vpack.c.b16 %v1669, %v1661
    %v2510 = vpack.c.b16 %v1670, %v1662
    %v2511 = vpack.c.b16 %v1671, %v1663
    %v2512 = vpack.c.b16 %v1672, %v1664
    %v2513 = vpack.c.b16 %v1673, %v1665
    %v2514 = vpack.c.b16 %v1674, %v1666
    %v2515 = vpack.c.b16 %v1683, %v1675
    %v2516 = vpack.c.b16 %v1684, %v1676
    %v2517 = vpack.c.b16 %v1685, %v1677
    %v2518 = vpack.c.b16 %v1686, %v1678
    %v2519 = vpack.c.b16 %v1687, %v1679
    %v2520 = vpack.c.b16 %v1688, %v1680
    %v2521 = vpack.c.b16 %v1689, %v1681
    %v2522 = vpack.c.b16 %v1690, %v1682
    %v2523 = vpack.c.b16 %v1699, %v1691
    %v2524 = vpack.c.b16 %v1700, %v1692
    %v2525 = vpack.c.b16 %v1701, %v1693
    %v2526 = vpack.c.b16 %v1702, %v1694
    %v2527 = vpack.c.b16 %v1703, %v1695
    %v2528 = vpack.c.b16 %v1704, %v1696
    %v2529 = vpack.c.b16 %v1705, %v1697
    %v2530 = vpack.c.b16 %v1706, %v1698
    %v2531 = vpack.c.b16 %v1715, %v1707
    %v2532 = vpack.c.b16 %v1716, %v1708
    %v2533 = vpack.c.b16 %v1717, %v1709
    %v2534 = vpack.c.b16 %v1718, %v1710
    %v2535 = vpack.c.b16 %v1719, %v1711
    %v2536 = vpack.c.b16 %v1720, %v1712
    %v2537 = vpack.c.b16 %v1721, %v1713
    %v2538 = vpack.c.b16 %v1722, %v1714
    %v2539 = vpack.c.b16 %v1731, %v1723
    %v2540 = vpack.c.b16 %v1732, %v1724
    %v2541 = vpack.c.b16 %v1733, %v1725
    %v2542 = vpack.c.b16 %v1734, %v1726
    %v2543 = vpack.c.b16 %v1735, %v1727
    %v2544 = vpack.c.b16 %v1736, %v1728
    %v2545 = vpack.c.b16 %v1737, %v1729
    %v2546 = vpack.c.b16 %v1738, %v1730
    %v2547 = vpack.c.b16 %v1747, %v1739
    %v2548 = vpack.c.b16 %v1748, %v1740
    %v2549 = vpack.c.b16 %v1749, %v1741
    %v2550 = vpack.c.b16 %v1750, %v1742
    %v2551 = vpack.c.b16 %v1751, %v1743
    %v2552 = vpack.c.b16 %v1752, %v1744
    %v2553 = vpack.c.b16 %v1753, %v1745
    %v2554 = vpack.c.b16 %v1754, %v1746
    %v2555 = vpack.c.b16 %v1763, %v1755
    %v2556 = vpack.c.b16 %v1764, %v1756
    %v2557 = vpack.c.b16 %v1765, %v1757
    %v2558 = vpack.c.b16 %v1766, %v1758
    %v2559 = vpack.c.b16 %v1767, %v1759
    %v2560 = vpack.c.b16 %v1768, %v1760
    %v2561 = vpack.c.b16 %v1769, %v1761
    %v2562 = vpack.c.b16 %v1770, %v1762
    %v2563 = vpack.c.b16 %v1779, %v1771
    %v2564 = vpack.c.b16 %v1780, %v1772
    %v2565 = vpack.c.b16 %v1781, %v1773
    %v2566 = vpack.c.b16 %v1782, %v1774
    %v2567 = vpack.c.b16 %v1783, %v1775
    %v2568 = vpack.c.b16 %v1784, %v1776
    %v2569 = vpack.c.b16 %v1785, %v1777
    %v2570 = vpack.c.b16 %v1786, %v1778
    %v2571 = vpack.c.b16 %v1795, %v1787
    %v2572 = vpack.c.b16 %v1796, %v1788
    %v2573 = vpack.c.b16 %v1797, %v1789
    %v2574 = vpack.c.b16 %v1798, %v1790
    %v2575 = vpack.c.b16 %v1799, %v1791
    %v2576 = vpack.c.b16 %v1800, %v1792
    %v2577 = vpack.c.b16 %v1801, %v1793
    %v2578 = vpack.c.b16 %v1802, %v1794
    %v2579 = vpack.c.b16 %v1811, %v1803
    %v2580 = vpack.c.b16 %v1812, %v1804
    %v2581 = vpack.c.b16 %v1813, %v1805
    %v2582 = vpack.c.b16 %v1814, %v1806
    %v2583 = vpack.c.b16 %v1815, %v1807
    %v2584 = vpack.c.b16 %v1816, %v1808
    %v2585 = vpack.c.b16 %v1817, %v1809
    %v2586 = vpack.c.b16 %v1818, %v1810
    %v2587 = vpack.c.b16 %v1827, %v1819
    %v2588 = vpack.c.b16 %v1828, %v1820
    %v2589 = vpack.c.b16 %v1829, %v1821
    %v2590 = vpack.c.b16 %v1830, %v1822
    %v2591 = vpack.c.b16 %v1831, %v1823
    %v2592 = vpack.c.b16 %v1832, %v1824
    %v2593 = vpack.c.b16 %v1833, %v1825
    %v2594 = vpack.c.b16 %v1834, %v1826
    %v2595 = vpack.c.b16 %v1843, %v1835
    %v2596 = vpack.c.b16 %v1844, %v1836
    %v2597 = vpack.c.b16 %v1845, %v1837
    %v2598 = vpack.c.b16 %v1846, %v1838
    %v2599 = vpack.c.b16 %v1847, %v1839
    %v2600 = vpack.c.b16 %v1848, %v1840
    %v2601 = vpack.c.b16 %v1849, %v1841
    %v2602 = vpack.c.b16 %v1850, %v1842
    %v2603 = vpack.c.b16 %v1859, %v1851
    %v2604 = vpack.c.b16 %v1860, %v1852
    %v2605 = vpack.c.b16 %v1861, %v1853
    %v2606 = vpack.c.b16 %v1862, %v1854
    %v2607 = vpack.c.b16 %v1863, %v1855
    %v2608 = vpack.c.b16 %v1864, %v1856
    %v2609 = vpack.c.b16 %v1865, %v1857
    %v2610 = vpack.c.b16 %v1866, %v1858
    %v2611 = vpack.c.b16 %v1875, %v1867
    %v2612 = vpack.c.b16 %v1876, %v1868
    %v2613 = vpack.c.b16 %v1877, %v1869
    %v2614 = vpack.c.b16 %v1878, %v1870
    %v2615 = vpack.c.b16 %v1879, %v1871
    %v2616 = vpack.c.b16 %v1880, %v1872
    %v2617 = vpack.c.b16 %v1881, %v1873
    %v2618 = vpack.c.b16 %v1882, %v1874
    %v2619 = vpack.c.b16 %v1891, %v1883
    %v2620 = vpack.c.b16 %v1892, %v1884
    %v2621 = vpack.c.b16 %v1893, %v1885
    %v2622 = vpack.c.b16 %v1894, %v1886
    %v2623 = vpack.c.b16 %v1895, %v1887
    %v2624 = vpack.c.b16 %v1896, %v1888
    %v2625 = vpack.c.b16 %v1897, %v1889
    %v2626 = vpack.c.b16 %v1898, %v1890
    %v2627 = vpack.c.b16 %v1907, %v1899
    %v2628 = vpack.c.b16 %v1908, %v1900
    %v2629 = vpack.c.b16 %v1909, %v1901
    %v2630 = vpack.c.b16 %v1910, %v1902
    %v2631 = vpack.c.b16 %v1911, %v1903
    %v2632 = vpack.c.b16 %v1912, %v1904
    %v2633 = vpack.c.b16 %v1913, %v1905
    %v2634 = vpack.c.b16 %v1914, %v1906
    %v2635 = vpack.c.b16 %v1923, %v1915
    %v2636 = vpack.c.b16 %v1924, %v1916
    %v2637 = vpack.c.b16 %v1925, %v1917
    %v2638 = vpack.c.b16 %v1926, %v1918
    %v2639 = vpack.c.b16 %v1927, %v1919
    %v2640 = vpack.c.b16 %v1928, %v1920
    %v2641 = vpack.c.b16 %v1929, %v1921
    %v2642 = vpack.c.b16 %v1930, %v1922
    %v2643 = vpack.c.b16 %v1939, %v1931
    %v2644 = vpack.c.b16 %v1940, %v1932
    %v2645 = vpack.c.b16 %v1941, %v1933
    %v2646 = vpack.c.b16 %v1942, %v1934
    %v2647 = vpack.c.b16 %v1943, %v1935
    %v2648 = vpack.c.b16 %v1944, %v1936
    %v2649 = vpack.c.b16 %v1945, %v1937
    %v2650 = vpack.c.b16 %v1946, %v1938
    %v2651 = vpack.c.b16 %v1955, %v1947
    %v2652 = vpack.c.b16 %v1956, %v1948
    %v2653 = vpack.c.b16 %v1957, %v1949
    %v2654 = vpack.c.b16 %v1958, %v1950
    %v2655 = vpack.c.b16 %v1959, %v1951
    %v2656 = vpack.c.b16 %v1960, %v1952
    %v2657 = vpack.c.b16 %v1961, %v1953
    %v2658 = vpack.c.b16 %v1962, %v1954
    %v2659 = vpack.c.b16 %v1971, %v1963
    %v2660 = vpack.c.b16 %v1972, %v1964
    %v2661 = vpack.c.b16 %v1973, %v1965
    %v2662 = vpack.c.b16 %v1974, %v1966
    %v2663 = vpack.c.b16 %v1975, %v1967
    %v2664 = vpack.c.b16 %v1976, %v1968
    %v2665 = vpack.c.b16 %v1977, %v1969
    %v2666 = vpack.c.b16 %v1978, %v1970
    %v2667 = vpack.c.b16 %v1987, %v1979
    %v2668 = vpack.c.b16 %v1988, %v1980
    %v2669 = vpack.c.b16 %v1989, %v1981
    %v2670 = vpack.c.b16 %v1990, %v1982
    %v2671 = vpack.c.b16 %v1991, %v1983
    %v2672 = vpack.c.b16 %v1992, %v1984
    %v2673 = vpack.c.b16 %v1993, %v1985
    %v2674 = vpack.c.b16 %v1994, %v1986
    %v2675 = vpack.c.b16 %v2003, %v1995
    %v2676 = vpack.c.b16 %v2004, %v1996
    %v2677 = vpack.c.b16 %v2005, %v1997
    %v2678 = vpack.c.b16 %v2006, %v1998
    %v2679 = vpack.c.b16 %v2007, %v1999
    %v2680 = vpack.c.b16 %v2008, %v2000
    %v2681 = vpack.c.b16 %v2009, %v2001
    %v2682 = vpack.c.b16 %v2010, %v2002
    %v2683 = vpack.c.b16 %v2019, %v2011
    %v2684 = vpack.c.b16 %v2020, %v2012
    %v2685 = vpack.c.b16 %v2021, %v2013
    %v2686 = vpack.c.b16 %v2022, %v2014
    %v2687 = vpack.c.b16 %v2023, %v2015
    %v2688 = vpack.c.b16 %v2024, %v2016
    %v2689 = vpack.c.b16 %v2025, %v2017
    %v2690 = vpack.c.b16 %v2026, %v2018
    %v2691 = vpack.c.b16 %v2035, %v2027
    %v2692 = vpack.c.b16 %v2036, %v2028
    %v2693 = vpack.c.b16 %v2037, %v2029
    %v2694 = vpack.c.b16 %v2038, %v2030
    %v2695 = vpack.c.b16 %v2039, %v2031
    %v2696 = vpack.c.b16 %v2040, %v2032
    %v2697 = vpack.c.b16 %v2041, %v2033
    %v2698 = vpack.c.b16 %v2042, %v2034
    %v2699 = vpack.c.b16 %v2051, %v2043
    %v2700 = vpack.c.b16 %v2052, %v2044
    %v2701 = vpack.c.b16 %v2053, %v2045
    %v2702 = vpack.c.b16 %v2054, %v2046
    %v2703 = vpack.c.b16 %v2055, %v2047
    %v2704 = vpack.c.b16 %v2056, %v2048
    %v2705 = vpack.c.b16 %v2057, %v2049
    %v2706 = vpack.c.b16 %v2058, %v2050
    %v2707 = vpack.c.b16 %v2067, %v2059
    %v2708 = vpack.c.b16 %v2068, %v2060
    %v2709 = vpack.c.b16 %v2069, %v2061
    %v2710 = vpack.c.b16 %v2070, %v2062
    %v2711 = vpack.c.b16 %v2071, %v2063
    %v2712 = vpack.c.b16 %v2072, %v2064
    %v2713 = vpack.c.b16 %v2073, %v2065
    %v2714 = vpack.c.b16 %v2074, %v2066
    %v2715 = vpack.c.b16 %v2083, %v2075
    %v2716 = vpack.c.b16 %v2084, %v2076
    %v2717 = vpack.c.b16 %v2085, %v2077
    %v2718 = vpack.c.b16 %v2086, %v2078
    %v2719 = vpack.c.b16 %v2087, %v2079
    %v2720 = vpack.c.b16 %v2088, %v2080
    %v2721 = vpack.c.b16 %v2089, %v2081
    %v2722 = vpack.c.b16 %v2090, %v2082
    %v2723 = vpack.c.b16 %v2099, %v2091
    %v2724 = vpack.c.b16 %v2100, %v2092
    %v2725 = vpack.c.b16 %v2101, %v2093
    %v2726 = vpack.c.b16 %v2102, %v2094
    %v2727 = vpack.c.b16 %v2103, %v2095
    %v2728 = vpack.c.b16 %v2104, %v2096
    %v2729 = vpack.c.b16 %v2105, %v2097
    %v2730 = vpack.c.b16 %v2106, %v2098
    %v2731 = vpack.c.b16 %v2115, %v2107
    %v2732 = vpack.c.b16 %v2116, %v2108
    %v2733 = vpack.c.b16 %v2117, %v2109
    %v2734 = vpack.c.b16 %v2118, %v2110
    %v2735 = vpack.c.b16 %v2119, %v2111
    %v2736 = vpack.c.b16 %v2120, %v2112
    %v2737 = vpack.c.b16 %v2121, %v2113
    %v2738 = vpack.c.b16 %v2122, %v2114
    %v2739 = vpack.c.b16 %v2131, %v2123
    %v2740 = vpack.c.b16 %v2132, %v2124
    %v2741 = vpack.c.b16 %v2133, %v2125
    %v2742 = vpack.c.b16 %v2134, %v2126
    %v2743 = vpack.c.b16 %v2135, %v2127
    %v2744 = vpack.c.b16 %v2136, %v2128
    %v2745 = vpack.c.b16 %v2137, %v2129
    %v2746 = vpack.c.b16 %v2138, %v2130
    %v2747 = vpack.c.b16 %v2147, %v2139
    %v2748 = vpack.c.b16 %v2148, %v2140
    %v2749 = vpack.c.b16 %v2149, %v2141
    %v2750 = vpack.c.b16 %v2150, %v2142
    %v2751 = vpack.c.b16 %v2151, %v2143
    %v2752 = vpack.c.b16 %v2152, %v2144
    %v2753 = vpack.c.b16 %v2153, %v2145
    %v2754 = vpack.c.b16 %v2154, %v2146
    %v2755 = vpack.c.b16 %v2163, %v2155
    %v2756 = vpack.c.b16 %v2164, %v2156
    %v2757 = vpack.c.b16 %v2165, %v2157
    %v2758 = vpack.c.b16 %v2166, %v2158
    %v2759 = vpack.c.b16 %v2167, %v2159
    %v2760 = vpack.c.b16 %v2168, %v2160
    %v2761 = vpack.c.b16 %v2169, %v2161
    %v2762 = vpack.c.b16 %v2170, %v2162
    %v2763 = vpack.c.b16 %v2179, %v2171
    %v2764 = vpack.c.b16 %v2180, %v2172
    %v2765 = vpack.c.b16 %v2181, %v2173
    %v2766 = vpack.c.b16 %v2182, %v2174
    %v2767 = vpack.c.b16 %v2183, %v2175
    %v2768 = vpack.c.b16 %v2184, %v2176
    %v2769 = vpack.c.b16 %v2185, %v2177
    %v2770 = vpack.c.b16 %v2186, %v2178
    %v2771 = vpack.c.b16 %v2195, %v2187
    %v2772 = vpack.c.b16 %v2196, %v2188
    %v2773 = vpack.c.b16 %v2197, %v2189
    %v2774 = vpack.c.b16 %v2198, %v2190
    %v2775 = vpack.c.b16 %v2199, %v2191
    %v2776 = vpack.c.b16 %v2200, %v2192
    %v2777 = vpack.c.b16 %v2201, %v2193
    %v2778 = vpack.c.b16 %v2202, %v2194
    %v2779 = vpack.c.b16 %v2211, %v2203
    %v2780 = vpack.c.b16 %v2212, %v2204
    %v2781 = vpack.c.b16 %v2213, %v2205
    %v2782 = vpack.c.b16 %v2214, %v2206
    %v2783 = vpack.c.b16 %v2215, %v2207
    %v2784 = vpack.c.b16 %v2216, %v2208
    %v2785 = vpack.c.b16 %v2217, %v2209
    %v2786 = vpack.c.b16 %v2218, %v2210
    %v2787 = vpack.c.b16 %v2227, %v2219
    %v2788 = vpack.c.b16 %v2228, %v2220
    %v2789 = vpack.c.b16 %v2229, %v2221
    %v2790 = vpack.c.b16 %v2230, %v2222
    %v2791 = vpack.c.b16 %v2231, %v2223
    %v2792 = vpack.c.b16 %v2232, %v2224
    %v2793 = vpack.c.b16 %v2233, %v2225
    %v2794 = vpack.c.b16 %v2234, %v2226
    %v2795 = vpack.c.b16 %v2243, %v2235
    %v2796 = vpack.c.b16 %v2244, %v2236
    %v2797 = vpack.c.b16 %v2245, %v2237
    %v2798 = vpack.c.b16 %v2246, %v2238
    %v2799 = vpack.c.b16 %v2247, %v2239
    %v2800 = vpack.c.b16 %v2248, %v2240
    %v2801 = vpack.c.b16 %v2249, %v2241
    %v2802 = vpack.c.b16 %v2250, %v2242
    %v2803 = vpack.c.b16 %v2259, %v2251
    %v2804 = vpack.c.b16 %v2260, %v2252
    %v2805 = vpack.c.b16 %v2261, %v2253
    %v2806 = vpack.c.b16 %v2262, %v2254
    %v2807 = vpack.c.b16 %v2263, %v2255
    %v2808 = vpack.c.b16 %v2264, %v2256
    %v2809 = vpack.c.b16 %v2265, %v2257
    %v2810 = vpack.c.b16 %v2266, %v2258
    %v2811 = vpack.c.b16 %v2275, %v2267
    %v2812 = vpack.c.b16 %v2276, %v2268
    %v2813 = vpack.c.b16 %v2277, %v2269
    %v2814 = vpack.c.b16 %v2278, %v2270
    %v2815 = vpack.c.b16 %v2279, %v2271
    %v2816 = vpack.c.b16 %v2280, %v2272
    %v2817 = vpack.c.b16 %v2281, %v2273
    %v2818 = vpack.c.b16 %v2282, %v2274
    %v2819 = vpack.c.b16 %v2291, %v2283
    %v2820 = vpack.c.b16 %v2292, %v2284
    %v2821 = vpack.c.b16 %v2293, %v2285
    %v2822 = vpack.c.b16 %v2294, %v2286
    %v2823 = vpack.c.b16 %v2295, %v2287
    %v2824 = vpack.c.b16 %v2296, %v2288
    %v2825 = vpack.c.b16 %v2297, %v2289
    %v2826 = vpack.c.b16 %v2298, %v2290
    %v2827 = vpack.c.b16 %v2307, %v2299
    %v2828 = vpack.c.b16 %v2308, %v2300
    %v2829 = vpack.c.b16 %v2309, %v2301
    %v2830 = vpack.c.b16 %v2310, %v2302
    %v2831 = vpack.c.b16 %v2311, %v2303
    %v2832 = vpack.c.b16 %v2312, %v2304
    %v2833 = vpack.c.b16 %v2313, %v2305
    %v2834 = vpack.c.b16 %v2314, %v2306
    %v2835 = vpack.c.b16 %v2323, %v2315
    %v2836 = vpack.c.b16 %v2324, %v2316
    %v2837 = vpack.c.b16 %v2325, %v2317
    %v2838 = vpack.c.b16 %v2326, %v2318
    %v2839 = vpack.c.b16 %v2327, %v2319
    %v2840 = vpack.c.b16 %v2328, %v2320
    %v2841 = vpack.c.b16 %v2329, %v2321
    %v2842 = vpack.c.b16 %v2330, %v2322
    %3355 = vmatpush.bf16.msra.mxu0 %v2387
    %3356 = vmatpush.bf16.msra.mxu0 %v2379
    %3357 = vmatpush.bf16.msra.mxu0 %v2371
    %3358 = vmatpush.bf16.msra.mxu0 %v2363
    %3359 = vmatpush.bf16.msra.mxu0 %v2355
    %3360 = vmatpush.bf16.msra.mxu0 %v2347
    %3361 = vmatpush.bf16.msra.mxu0 %v2339
    %3362 = vmatpush.bf16.msra.mxu0 %v2331
    %3363 = vmatmul.bf16.gmra.mxu0 %v779
    %v3364 = vpop.f32.mrf.mxu0
    %v3365 = vadd.f32 %v751, %v3364
    %v3366 = vpop.f32.mrf.mxu0
    %3367 = vdwg.mxu0
    %3368 = vmatpush.bf16.msra.mxu0 %v2451
    %3369 = vmatpush.bf16.msra.mxu0 %v2443
    %3370 = vmatpush.bf16.msra.mxu0 %v2435
    %3371 = vmatpush.bf16.msra.mxu0 %v2427
    %3372 = vmatpush.bf16.msra.mxu0 %v2419
    %3373 = vmatpush.bf16.msra.mxu0 %v2411
    %3374 = vmatpush.bf16.msra.mxu0 %v2403
    %3375 = vmatpush.bf16.msra.mxu0 %v2395
    %3376 = vmatmul.bf16.gmra.mxu0 %v780
    %v3377 = vpop.f32.mrf.mxu0
    %v3378 = vadd.f32 %v3365, %v3377
    %v3379 = vpop.f32.mrf.mxu0
    %3380 = vdwg.mxu0
    %3381 = vmatpush.bf16.msra.mxu0 %v2515
    %3382 = vmatpush.bf16.msra.mxu0 %v2507
    %3383 = vmatpush.bf16.msra.mxu0 %v2499
    %3384 = vmatpush.bf16.msra.mxu0 %v2491
    %3385 = vmatpush.bf16.msra.mxu0 %v2483
    %3386 = vmatpush.bf16.msra.mxu0 %v2475
    %3387 = vmatpush.bf16.msra.mxu0 %v2467
    %3388 = vmatpush.bf16.msra.mxu0 %v2459
    %3389 = vmatmul.bf16.gmra.mxu0 %v781
    %v3390 = vpop.f32.mrf.mxu0
    %v3391 = vadd.f32 %v3378, %v3390
    %v3392 = vpop.f32.mrf.mxu0
    %3393 = vdwg.mxu0
    %3394 = vmatpush.bf16.msra.mxu0 %v2579
    %3395 = vmatpush.bf16.msra.mxu0 %v2571
    %3396 = vmatpush.bf16.msra.mxu0 %v2563
    %3397 = vmatpush.bf16.msra.mxu0 %v2555
    %3398 = vmatpush.bf16.msra.mxu0 %v2547
    %3399 = vmatpush.bf16.msra.mxu0 %v2539
    %3400 = vmatpush.bf16.msra.mxu0 %v2531
    %3401 = vmatpush.bf16.msra.mxu0 %v2523
    %3402 = vmatmul.bf16.gmra.mxu0 %v782
    %v3403 = vpop.f32.mrf.mxu0
    %v3404 = vadd.f32 %v3391, %v3403
    %v3405 = vpop.f32.mrf.mxu0
    %3406 = vdwg.mxu0
    %3407 = vmatpush.bf16.msra.mxu0 %v2643
    %3408 = vmatpush.bf16.msra.mxu0 %v2635
    %3409 = vmatpush.bf16.msra.mxu0 %v2627
    %3410 = vmatpush.bf16.msra.mxu0 %v2619
    %3411 = vmatpush.bf16.msra.mxu0 %v2611
    %3412 = vmatpush.bf16.msra.mxu0 %v2603
    %3413 = vmatpush.bf16.msra.mxu0 %v2595
    %3414 = vmatpush.bf16.msra.mxu0 %v2587
    %3415 = vmatmul.bf16.gmra.mxu0 %v783
    %v3416 = vpop.f32.mrf.mxu0
    %v3417 = vadd.f32 %v3404, %v3416
    %v3418 = vpop.f32.mrf.mxu0
    %3419 = vdwg.mxu0
    %3420 = vmatpush.bf16.msra.mxu0 %v2707
    %3421 = vmatpush.bf16.msra.mxu0 %v2699
    %3422 = vmatpush.bf16.msra.mxu0 %v2691
    %3423 = vmatpush.bf16.msra.mxu0 %v2683
    %3424 = vmatpush.bf16.msra.mxu0 %v2675
    %3425 = vmatpush.bf16.msra.mxu0 %v2667
    %3426 = vmatpush.bf16.msra.mxu0 %v2659
    %3427 = vmatpush.bf16.msra.mxu0 %v2651
    %3428 = vmatmul.bf16.gmra.mxu0 %v784
    %v3429 = vpop.f32.mrf.mxu0
    %v3430 = vadd.f32 %v3417, %v3429
    %v3431 = vpop.f32.mrf.mxu0
    %3432 = vdwg.mxu0
    %3433 = vmatpush.bf16.msra.mxu0 %v2771
    %3434 = vmatpush.bf16.msra.mxu0 %v2763
    %3435 = vmatpush.bf16.msra.mxu0 %v2755
    %3436 = vmatpush.bf16.msra.mxu0 %v2747
    %3437 = vmatpush.bf16.msra.mxu0 %v2739
    %3438 = vmatpush.bf16.msra.mxu0 %v2731
    %3439 = vmatpush.bf16.msra.mxu0 %v2723
    %3440 = vmatpush.bf16.msra.mxu0 %v2715
    %3441 = vmatmul.bf16.gmra.mxu0 %v785
    %v3442 = vpop.f32.mrf.mxu0
    %v3443 = vadd.f32 %v3430, %v3442
    %v3444 = vpop.f32.mrf.mxu0
    %3445 = vdwg.mxu0
    %3446 = vmatpush.bf16.msra.mxu0 %v2835
    %3447 = vmatpush.bf16.msra.mxu0 %v2827
    %3448 = vmatpush.bf16.msra.mxu0 %v2819
    %3449 = vmatpush.bf16.msra.mxu0 %v2811
    %3450 = vmatpush.bf16.msra.mxu0 %v2803
    %3451 = vmatpush.bf16.msra.mxu0 %v2795
    %3452 = vmatpush.bf16.msra.mxu0 %v2787
    %3453 = vmatpush.bf16.msra.mxu0 %v2779
    %3454 = vmatmul.bf16.gmra.mxu0 %v786
    %v3455 = vpop.f32.mrf.mxu0
    %v3456 = vadd.f32 %v3443, %v3455
    %v3457 = vpop.f32.mrf.mxu0
    %3458 = vdwg.mxu0
    %3459 = vmatpush.bf16.msra.mxu0 %v2388
    %3460 = vmatpush.bf16.msra.mxu0 %v2380
    %3461 = vmatpush.bf16.msra.mxu0 %v2372
    %3462 = vmatpush.bf16.msra.mxu0 %v2364
    %3463 = vmatpush.bf16.msra.mxu0 %v2356
    %3464 = vmatpush.bf16.msra.mxu0 %v2348
    %3465 = vmatpush.bf16.msra.mxu0 %v2340
    %3466 = vmatpush.bf16.msra.mxu0 %v2332
    %3467 = vmatmul.bf16.gmra.mxu0 %v779
    %v3468 = vpop.f32.mrf.mxu0
    %v3469 = vadd.f32 %v752, %v3468
    %v3470 = vpop.f32.mrf.mxu0
    %3471 = vdwg.mxu0
    %3472 = vmatpush.bf16.msra.mxu0 %v2452
    %3473 = vmatpush.bf16.msra.mxu0 %v2444
    %3474 = vmatpush.bf16.msra.mxu0 %v2436
    %3475 = vmatpush.bf16.msra.mxu0 %v2428
    %3476 = vmatpush.bf16.msra.mxu0 %v2420
    %3477 = vmatpush.bf16.msra.mxu0 %v2412
    %3478 = vmatpush.bf16.msra.mxu0 %v2404
    %3479 = vmatpush.bf16.msra.mxu0 %v2396
    %3480 = vmatmul.bf16.gmra.mxu0 %v780
    %v3481 = vpop.f32.mrf.mxu0
    %v3482 = vadd.f32 %v3469, %v3481
    %v3483 = vpop.f32.mrf.mxu0
    %3484 = vdwg.mxu0
    %3485 = vmatpush.bf16.msra.mxu0 %v2516
    %3486 = vmatpush.bf16.msra.mxu0 %v2508
    %3487 = vmatpush.bf16.msra.mxu0 %v2500
    %3488 = vmatpush.bf16.msra.mxu0 %v2492
    %3489 = vmatpush.bf16.msra.mxu0 %v2484
    %3490 = vmatpush.bf16.msra.mxu0 %v2476
    %3491 = vmatpush.bf16.msra.mxu0 %v2468
    %3492 = vmatpush.bf16.msra.mxu0 %v2460
    %3493 = vmatmul.bf16.gmra.mxu0 %v781
    %v3494 = vpop.f32.mrf.mxu0
    %v3495 = vadd.f32 %v3482, %v3494
    %v3496 = vpop.f32.mrf.mxu0
    %3497 = vdwg.mxu0
    %3498 = vmatpush.bf16.msra.mxu0 %v2580
    %3499 = vmatpush.bf16.msra.mxu0 %v2572
    %3500 = vmatpush.bf16.msra.mxu0 %v2564
    %3501 = vmatpush.bf16.msra.mxu0 %v2556
    %3502 = vmatpush.bf16.msra.mxu0 %v2548
    %3503 = vmatpush.bf16.msra.mxu0 %v2540
    %3504 = vmatpush.bf16.msra.mxu0 %v2532
    %3505 = vmatpush.bf16.msra.mxu0 %v2524
    %3506 = vmatmul.bf16.gmra.mxu0 %v782
    %v3507 = vpop.f32.mrf.mxu0
    %v3508 = vadd.f32 %v3495, %v3507
    %v3509 = vpop.f32.mrf.mxu0
    %3510 = vdwg.mxu0
    %3511 = vmatpush.bf16.msra.mxu0 %v2644
    %3512 = vmatpush.bf16.msra.mxu0 %v2636
    %3513 = vmatpush.bf16.msra.mxu0 %v2628
    %3514 = vmatpush.bf16.msra.mxu0 %v2620
    %3515 = vmatpush.bf16.msra.mxu0 %v2612
    %3516 = vmatpush.bf16.msra.mxu0 %v2604
    %3517 = vmatpush.bf16.msra.mxu0 %v2596
    %3518 = vmatpush.bf16.msra.mxu0 %v2588
    %3519 = vmatmul.bf16.gmra.mxu0 %v783
    %v3520 = vpop.f32.mrf.mxu0
    %v3521 = vadd.f32 %v3508, %v3520
    %v3522 = vpop.f32.mrf.mxu0
    %3523 = vdwg.mxu0
    %3524 = vmatpush.bf16.msra.mxu0 %v2708
    %3525 = vmatpush.bf16.msra.mxu0 %v2700
    %3526 = vmatpush.bf16.msra.mxu0 %v2692
    %3527 = vmatpush.bf16.msra.mxu0 %v2684
    %3528 = vmatpush.bf16.msra.mxu0 %v2676
    %3529 = vmatpush.bf16.msra.mxu0 %v2668
    %3530 = vmatpush.bf16.msra.mxu0 %v2660
    %3531 = vmatpush.bf16.msra.mxu0 %v2652
    %3532 = vmatmul.bf16.gmra.mxu0 %v784
    %v3533 = vpop.f32.mrf.mxu0
    %v3534 = vadd.f32 %v3521, %v3533
    %v3535 = vpop.f32.mrf.mxu0
    %3536 = vdwg.mxu0
    %3537 = vmatpush.bf16.msra.mxu0 %v2772
    %3538 = vmatpush.bf16.msra.mxu0 %v2764
    %3539 = vmatpush.bf16.msra.mxu0 %v2756
    %3540 = vmatpush.bf16.msra.mxu0 %v2748
    %3541 = vmatpush.bf16.msra.mxu0 %v2740
    %3542 = vmatpush.bf16.msra.mxu0 %v2732
    %3543 = vmatpush.bf16.msra.mxu0 %v2724
    %3544 = vmatpush.bf16.msra.mxu0 %v2716
    %3545 = vmatmul.bf16.gmra.mxu0 %v785
    %v3546 = vpop.f32.mrf.mxu0
    %v3547 = vadd.f32 %v3534, %v3546
    %v3548 = vpop.f32.mrf.mxu0
    %3549 = vdwg.mxu0
    %3550 = vmatpush.bf16.msra.mxu0 %v2836
    %3551 = vmatpush.bf16.msra.mxu0 %v2828
    %3552 = vmatpush.bf16.msra.mxu0 %v2820
    %3553 = vmatpush.bf16.msra.mxu0 %v2812
    %3554 = vmatpush.bf16.msra.mxu0 %v2804
    %3555 = vmatpush.bf16.msra.mxu0 %v2796
    %3556 = vmatpush.bf16.msra.mxu0 %v2788
    %3557 = vmatpush.bf16.msra.mxu0 %v2780
    %3558 = vmatmul.bf16.gmra.mxu0 %v786
    %v3559 = vpop.f32.mrf.mxu0
    %v3560 = vadd.f32 %v3547, %v3559
    %v3561 = vpop.f32.mrf.mxu0
    %3562 = vdwg.mxu0
    %3563 = vmatpush.bf16.msra.mxu0 %v2389
    %3564 = vmatpush.bf16.msra.mxu0 %v2381
    %3565 = vmatpush.bf16.msra.mxu0 %v2373
    %3566 = vmatpush.bf16.msra.mxu0 %v2365
    %3567 = vmatpush.bf16.msra.mxu0 %v2357
    %3568 = vmatpush.bf16.msra.mxu0 %v2349
    %3569 = vmatpush.bf16.msra.mxu0 %v2341
    %3570 = vmatpush.bf16.msra.mxu0 %v2333
    %3571 = vmatmul.bf16.gmra.mxu0 %v779
    %v3572 = vpop.f32.mrf.mxu0
    %v3573 = vadd.f32 %v753, %v3572
    %v3574 = vpop.f32.mrf.mxu0
    %3575 = vdwg.mxu0
    %3576 = vmatpush.bf16.msra.mxu0 %v2453
    %3577 = vmatpush.bf16.msra.mxu0 %v2445
    %3578 = vmatpush.bf16.msra.mxu0 %v2437
    %3579 = vmatpush.bf16.msra.mxu0 %v2429
    %3580 = vmatpush.bf16.msra.mxu0 %v2421
    %3581 = vmatpush.bf16.msra.mxu0 %v2413
    %3582 = vmatpush.bf16.msra.mxu0 %v2405
    %3583 = vmatpush.bf16.msra.mxu0 %v2397
    %3584 = vmatmul.bf16.gmra.mxu0 %v780
    %v3585 = vpop.f32.mrf.mxu0
    %v3586 = vadd.f32 %v3573, %v3585
    %v3587 = vpop.f32.mrf.mxu0
    %3588 = vdwg.mxu0
    %3589 = vmatpush.bf16.msra.mxu0 %v2517
    %3590 = vmatpush.bf16.msra.mxu0 %v2509
    %3591 = vmatpush.bf16.msra.mxu0 %v2501
    %3592 = vmatpush.bf16.msra.mxu0 %v2493
    %3593 = vmatpush.bf16.msra.mxu0 %v2485
    %3594 = vmatpush.bf16.msra.mxu0 %v2477
    %3595 = vmatpush.bf16.msra.mxu0 %v2469
    %3596 = vmatpush.bf16.msra.mxu0 %v2461
    %3597 = vmatmul.bf16.gmra.mxu0 %v781
    %v3598 = vpop.f32.mrf.mxu0
    %v3599 = vadd.f32 %v3586, %v3598
    %v3600 = vpop.f32.mrf.mxu0
    %3601 = vdwg.mxu0
    %3602 = vmatpush.bf16.msra.mxu0 %v2581
    %3603 = vmatpush.bf16.msra.mxu0 %v2573
    %3604 = vmatpush.bf16.msra.mxu0 %v2565
    %3605 = vmatpush.bf16.msra.mxu0 %v2557
    %3606 = vmatpush.bf16.msra.mxu0 %v2549
    %3607 = vmatpush.bf16.msra.mxu0 %v2541
    %3608 = vmatpush.bf16.msra.mxu0 %v2533
    %3609 = vmatpush.bf16.msra.mxu0 %v2525
    %3610 = vmatmul.bf16.gmra.mxu0 %v782
    %v3611 = vpop.f32.mrf.mxu0
    %v3612 = vadd.f32 %v3599, %v3611
    %v3613 = vpop.f32.mrf.mxu0
    %3614 = vdwg.mxu0
    %3615 = vmatpush.bf16.msra.mxu0 %v2645
    %3616 = vmatpush.bf16.msra.mxu0 %v2637
    %3617 = vmatpush.bf16.msra.mxu0 %v2629
    %3618 = vmatpush.bf16.msra.mxu0 %v2621
    %3619 = vmatpush.bf16.msra.mxu0 %v2613
    %3620 = vmatpush.bf16.msra.mxu0 %v2605
    %3621 = vmatpush.bf16.msra.mxu0 %v2597
    %3622 = vmatpush.bf16.msra.mxu0 %v2589
    %3623 = vmatmul.bf16.gmra.mxu0 %v783
    %v3624 = vpop.f32.mrf.mxu0
    %v3625 = vadd.f32 %v3612, %v3624
    %v3626 = vpop.f32.mrf.mxu0
    %3627 = vdwg.mxu0
    %3628 = vmatpush.bf16.msra.mxu0 %v2709
    %3629 = vmatpush.bf16.msra.mxu0 %v2701
    %3630 = vmatpush.bf16.msra.mxu0 %v2693
    %3631 = vmatpush.bf16.msra.mxu0 %v2685
    %3632 = vmatpush.bf16.msra.mxu0 %v2677
    %3633 = vmatpush.bf16.msra.mxu0 %v2669
    %3634 = vmatpush.bf16.msra.mxu0 %v2661
    %3635 = vmatpush.bf16.msra.mxu0 %v2653
    %3636 = vmatmul.bf16.gmra.mxu0 %v784
    %v3637 = vpop.f32.mrf.mxu0
    %v3638 = vadd.f32 %v3625, %v3637
    %v3639 = vpop.f32.mrf.mxu0
    %3640 = vdwg.mxu0
    %3641 = vmatpush.bf16.msra.mxu0 %v2773
    %3642 = vmatpush.bf16.msra.mxu0 %v2765
    %3643 = vmatpush.bf16.msra.mxu0 %v2757
    %3644 = vmatpush.bf16.msra.mxu0 %v2749
    %3645 = vmatpush.bf16.msra.mxu0 %v2741
    %3646 = vmatpush.bf16.msra.mxu0 %v2733
    %3647 = vmatpush.bf16.msra.mxu0 %v2725
    %3648 = vmatpush.bf16.msra.mxu0 %v2717
    %3649 = vmatmul.bf16.gmra.mxu0 %v785
    %v3650 = vpop.f32.mrf.mxu0
    %v3651 = vadd.f32 %v3638, %v3650
    %v3652 = vpop.f32.mrf.mxu0
    %3653 = vdwg.mxu0
    %3654 = vmatpush.bf16.msra.mxu0 %v2837
    %3655 = vmatpush.bf16.msra.mxu0 %v2829
    %3656 = vmatpush.bf16.msra.mxu0 %v2821
    %3657 = vmatpush.bf16.msra.mxu0 %v2813
    %3658 = vmatpush.bf16.msra.mxu0 %v2805
    %3659 = vmatpush.bf16.msra.mxu0 %v2797
    %3660 = vmatpush.bf16.msra.mxu0 %v2789
    %3661 = vmatpush.bf16.msra.mxu0 %v2781
    %3662 = vmatmul.bf16.gmra.mxu0 %v786
    %v3663 = vpop.f32.mrf.mxu0
    %v3664 = vadd.f32 %v3651, %v3663
    %v3665 = vpop.f32.mrf.mxu0
    %3666 = vdwg.mxu0
    %3667 = vmatpush.bf16.msra.mxu0 %v2390
    %3668 = vmatpush.bf16.msra.mxu0 %v2382
    %3669 = vmatpush.bf16.msra.mxu0 %v2374
    %3670 = vmatpush.bf16.msra.mxu0 %v2366
    %3671 = vmatpush.bf16.msra.mxu0 %v2358
    %3672 = vmatpush.bf16.msra.mxu0 %v2350
    %3673 = vmatpush.bf16.msra.mxu0 %v2342
    %3674 = vmatpush.bf16.msra.mxu0 %v2334
    %3675 = vmatmul.bf16.gmra.mxu0 %v779
    %v3676 = vpop.f32.mrf.mxu0
    %v3677 = vadd.f32 %v754, %v3676
    %v3678 = vpop.f32.mrf.mxu0
    %3679 = vdwg.mxu0
    %3680 = vmatpush.bf16.msra.mxu0 %v2454
    %3681 = vmatpush.bf16.msra.mxu0 %v2446
    %3682 = vmatpush.bf16.msra.mxu0 %v2438
    %3683 = vmatpush.bf16.msra.mxu0 %v2430
    %3684 = vmatpush.bf16.msra.mxu0 %v2422
    %3685 = vmatpush.bf16.msra.mxu0 %v2414
    %3686 = vmatpush.bf16.msra.mxu0 %v2406
    %3687 = vmatpush.bf16.msra.mxu0 %v2398
    %3688 = vmatmul.bf16.gmra.mxu0 %v780
    %v3689 = vpop.f32.mrf.mxu0
    %v3690 = vadd.f32 %v3677, %v3689
    %v3691 = vpop.f32.mrf.mxu0
    %3692 = vdwg.mxu0
    %3693 = vmatpush.bf16.msra.mxu0 %v2518
    %3694 = vmatpush.bf16.msra.mxu0 %v2510
    %3695 = vmatpush.bf16.msra.mxu0 %v2502
    %3696 = vmatpush.bf16.msra.mxu0 %v2494
    %3697 = vmatpush.bf16.msra.mxu0 %v2486
    %3698 = vmatpush.bf16.msra.mxu0 %v2478
    %3699 = vmatpush.bf16.msra.mxu0 %v2470
    %3700 = vmatpush.bf16.msra.mxu0 %v2462
    %3701 = vmatmul.bf16.gmra.mxu0 %v781
    %v3702 = vpop.f32.mrf.mxu0
    %v3703 = vadd.f32 %v3690, %v3702
    %v3704 = vpop.f32.mrf.mxu0
    %3705 = vdwg.mxu0
    %3706 = vmatpush.bf16.msra.mxu0 %v2582
    %3707 = vmatpush.bf16.msra.mxu0 %v2574
    %3708 = vmatpush.bf16.msra.mxu0 %v2566
    %3709 = vmatpush.bf16.msra.mxu0 %v2558
    %3710 = vmatpush.bf16.msra.mxu0 %v2550
    %3711 = vmatpush.bf16.msra.mxu0 %v2542
    %3712 = vmatpush.bf16.msra.mxu0 %v2534
    %3713 = vmatpush.bf16.msra.mxu0 %v2526
    %3714 = vmatmul.bf16.gmra.mxu0 %v782
    %v3715 = vpop.f32.mrf.mxu0
    %v3716 = vadd.f32 %v3703, %v3715
    %v3717 = vpop.f32.mrf.mxu0
    %3718 = vdwg.mxu0
    %3719 = vmatpush.bf16.msra.mxu0 %v2646
    %3720 = vmatpush.bf16.msra.mxu0 %v2638
    %3721 = vmatpush.bf16.msra.mxu0 %v2630
    %3722 = vmatpush.bf16.msra.mxu0 %v2622
    %3723 = vmatpush.bf16.msra.mxu0 %v2614
    %3724 = vmatpush.bf16.msra.mxu0 %v2606
    %3725 = vmatpush.bf16.msra.mxu0 %v2598
    %3726 = vmatpush.bf16.msra.mxu0 %v2590
    %3727 = vmatmul.bf16.gmra.mxu0 %v783
    %v3728 = vpop.f32.mrf.mxu0
    %v3729 = vadd.f32 %v3716, %v3728
    %v3730 = vpop.f32.mrf.mxu0
    %3731 = vdwg.mxu0
    %3732 = vmatpush.bf16.msra.mxu0 %v2710
    %3733 = vmatpush.bf16.msra.mxu0 %v2702
    %3734 = vmatpush.bf16.msra.mxu0 %v2694
    %3735 = vmatpush.bf16.msra.mxu0 %v2686
    %3736 = vmatpush.bf16.msra.mxu0 %v2678
    %3737 = vmatpush.bf16.msra.mxu0 %v2670
    %3738 = vmatpush.bf16.msra.mxu0 %v2662
    %3739 = vmatpush.bf16.msra.mxu0 %v2654
    %3740 = vmatmul.bf16.gmra.mxu0 %v784
    %v3741 = vpop.f32.mrf.mxu0
    %v3742 = vadd.f32 %v3729, %v3741
    %v3743 = vpop.f32.mrf.mxu0
    %3744 = vdwg.mxu0
    %3745 = vmatpush.bf16.msra.mxu0 %v2774
    %3746 = vmatpush.bf16.msra.mxu0 %v2766
    %3747 = vmatpush.bf16.msra.mxu0 %v2758
    %3748 = vmatpush.bf16.msra.mxu0 %v2750
    %3749 = vmatpush.bf16.msra.mxu0 %v2742
    %3750 = vmatpush.bf16.msra.mxu0 %v2734
    %3751 = vmatpush.bf16.msra.mxu0 %v2726
    %3752 = vmatpush.bf16.msra.mxu0 %v2718
    %3753 = vmatmul.bf16.gmra.mxu0 %v785
    %v3754 = vpop.f32.mrf.mxu0
    %v3755 = vadd.f32 %v3742, %v3754
    %v3756 = vpop.f32.mrf.mxu0
    %3757 = vdwg.mxu0
    %3758 = vmatpush.bf16.msra.mxu0 %v2838
    %3759 = vmatpush.bf16.msra.mxu0 %v2830
    %3760 = vmatpush.bf16.msra.mxu0 %v2822
    %3761 = vmatpush.bf16.msra.mxu0 %v2814
    %3762 = vmatpush.bf16.msra.mxu0 %v2806
    %3763 = vmatpush.bf16.msra.mxu0 %v2798
    %3764 = vmatpush.bf16.msra.mxu0 %v2790
    %3765 = vmatpush.bf16.msra.mxu0 %v2782
    %3766 = vmatmul.bf16.gmra.mxu0 %v786
    %v3767 = vpop.f32.mrf.mxu0
    %v3768 = vadd.f32 %v3755, %v3767
    %v3769 = vpop.f32.mrf.mxu0
    %3770 = vdwg.mxu0
    %3771 = vmatpush.bf16.msra.mxu0 %v2391
    %3772 = vmatpush.bf16.msra.mxu0 %v2383
    %3773 = vmatpush.bf16.msra.mxu0 %v2375
    %3774 = vmatpush.bf16.msra.mxu0 %v2367
    %3775 = vmatpush.bf16.msra.mxu0 %v2359
    %3776 = vmatpush.bf16.msra.mxu0 %v2351
    %3777 = vmatpush.bf16.msra.mxu0 %v2343
    %3778 = vmatpush.bf16.msra.mxu0 %v2335
    %3779 = vmatmul.bf16.gmra.mxu0 %v779
    %v3780 = vpop.f32.mrf.mxu0
    %v3781 = vadd.f32 %v755, %v3780
    %v3782 = vpop.f32.mrf.mxu0
    %3783 = vdwg.mxu0
    %3784 = vmatpush.bf16.msra.mxu0 %v2455
    %3785 = vmatpush.bf16.msra.mxu0 %v2447
    %3786 = vmatpush.bf16.msra.mxu0 %v2439
    %3787 = vmatpush.bf16.msra.mxu0 %v2431
    %3788 = vmatpush.bf16.msra.mxu0 %v2423
    %3789 = vmatpush.bf16.msra.mxu0 %v2415
    %3790 = vmatpush.bf16.msra.mxu0 %v2407
    %3791 = vmatpush.bf16.msra.mxu0 %v2399
    %3792 = vmatmul.bf16.gmra.mxu0 %v780
    %v3793 = vpop.f32.mrf.mxu0
    %v3794 = vadd.f32 %v3781, %v3793
    %v3795 = vpop.f32.mrf.mxu0
    %3796 = vdwg.mxu0
    %3797 = vmatpush.bf16.msra.mxu0 %v2519
    %3798 = vmatpush.bf16.msra.mxu0 %v2511
    %3799 = vmatpush.bf16.msra.mxu0 %v2503
    %3800 = vmatpush.bf16.msra.mxu0 %v2495
    %3801 = vmatpush.bf16.msra.mxu0 %v2487
    %3802 = vmatpush.bf16.msra.mxu0 %v2479
    %3803 = vmatpush.bf16.msra.mxu0 %v2471
    %3804 = vmatpush.bf16.msra.mxu0 %v2463
    %3805 = vmatmul.bf16.gmra.mxu0 %v781
    %v3806 = vpop.f32.mrf.mxu0
    %v3807 = vadd.f32 %v3794, %v3806
    %v3808 = vpop.f32.mrf.mxu0
    %3809 = vdwg.mxu0
    %3810 = vmatpush.bf16.msra.mxu0 %v2583
    %3811 = vmatpush.bf16.msra.mxu0 %v2575
    %3812 = vmatpush.bf16.msra.mxu0 %v2567
    %3813 = vmatpush.bf16.msra.mxu0 %v2559
    %3814 = vmatpush.bf16.msra.mxu0 %v2551
    %3815 = vmatpush.bf16.msra.mxu0 %v2543
    %3816 = vmatpush.bf16.msra.mxu0 %v2535
    %3817 = vmatpush.bf16.msra.mxu0 %v2527
    %3818 = vmatmul.bf16.gmra.mxu0 %v782
    %v3819 = vpop.f32.mrf.mxu0
    %v3820 = vadd.f32 %v3807, %v3819
    %v3821 = vpop.f32.mrf.mxu0
    %3822 = vdwg.mxu0
    %3823 = vmatpush.bf16.msra.mxu0 %v2647
    %3824 = vmatpush.bf16.msra.mxu0 %v2639
    %3825 = vmatpush.bf16.msra.mxu0 %v2631
    %3826 = vmatpush.bf16.msra.mxu0 %v2623
    %3827 = vmatpush.bf16.msra.mxu0 %v2615
    %3828 = vmatpush.bf16.msra.mxu0 %v2607
    %3829 = vmatpush.bf16.msra.mxu0 %v2599
    %3830 = vmatpush.bf16.msra.mxu0 %v2591
    %3831 = vmatmul.bf16.gmra.mxu0 %v783
    %v3832 = vpop.f32.mrf.mxu0
    %v3833 = vadd.f32 %v3820, %v3832
    %v3834 = vpop.f32.mrf.mxu0
    %3835 = vdwg.mxu0
    %3836 = vmatpush.bf16.msra.mxu0 %v2711
    %3837 = vmatpush.bf16.msra.mxu0 %v2703
    %3838 = vmatpush.bf16.msra.mxu0 %v2695
    %3839 = vmatpush.bf16.msra.mxu0 %v2687
    %3840 = vmatpush.bf16.msra.mxu0 %v2679
    %3841 = vmatpush.bf16.msra.mxu0 %v2671
    %3842 = vmatpush.bf16.msra.mxu0 %v2663
    %3843 = vmatpush.bf16.msra.mxu0 %v2655
    %3844 = vmatmul.bf16.gmra.mxu0 %v784
    %v3845 = vpop.f32.mrf.mxu0
    %v3846 = vadd.f32 %v3833, %v3845
    %v3847 = vpop.f32.mrf.mxu0
    %3848 = vdwg.mxu0
    %3849 = vmatpush.bf16.msra.mxu0 %v2775
    %3850 = vmatpush.bf16.msra.mxu0 %v2767
    %3851 = vmatpush.bf16.msra.mxu0 %v2759
    %3852 = vmatpush.bf16.msra.mxu0 %v2751
    %3853 = vmatpush.bf16.msra.mxu0 %v2743
    %3854 = vmatpush.bf16.msra.mxu0 %v2735
    %3855 = vmatpush.bf16.msra.mxu0 %v2727
    %3856 = vmatpush.bf16.msra.mxu0 %v2719
    %3857 = vmatmul.bf16.gmra.mxu0 %v785
    %v3858 = vpop.f32.mrf.mxu0
    %v3859 = vadd.f32 %v3846, %v3858
    %v3860 = vpop.f32.mrf.mxu0
    %3861 = vdwg.mxu0
    %3862 = vmatpush.bf16.msra.mxu0 %v2839
    %3863 = vmatpush.bf16.msra.mxu0 %v2831
    %3864 = vmatpush.bf16.msra.mxu0 %v2823
    %3865 = vmatpush.bf16.msra.mxu0 %v2815
    %3866 = vmatpush.bf16.msra.mxu0 %v2807
    %3867 = vmatpush.bf16.msra.mxu0 %v2799
    %3868 = vmatpush.bf16.msra.mxu0 %v2791
    %3869 = vmatpush.bf16.msra.mxu0 %v2783
    %3870 = vmatmul.bf16.gmra.mxu0 %v786
    %v3871 = vpop.f32.mrf.mxu0
    %v3872 = vadd.f32 %v3859, %v3871
    %v3873 = vpop.f32.mrf.mxu0
    %3874 = vdwg.mxu0
    %3875 = vmatpush.bf16.msra.mxu0 %v2392
    %3876 = vmatpush.bf16.msra.mxu0 %v2384
    %3877 = vmatpush.bf16.msra.mxu0 %v2376
    %3878 = vmatpush.bf16.msra.mxu0 %v2368
    %3879 = vmatpush.bf16.msra.mxu0 %v2360
    %3880 = vmatpush.bf16.msra.mxu0 %v2352
    %3881 = vmatpush.bf16.msra.mxu0 %v2344
    %3882 = vmatpush.bf16.msra.mxu0 %v2336
    %3883 = vmatmul.bf16.gmra.mxu0 %v779
    %v3884 = vpop.f32.mrf.mxu0
    %v3885 = vadd.f32 %v756, %v3884
    %v3886 = vpop.f32.mrf.mxu0
    %3887 = vdwg.mxu0
    %3888 = vmatpush.bf16.msra.mxu0 %v2456
    %3889 = vmatpush.bf16.msra.mxu0 %v2448
    %3890 = vmatpush.bf16.msra.mxu0 %v2440
    %3891 = vmatpush.bf16.msra.mxu0 %v2432
    %3892 = vmatpush.bf16.msra.mxu0 %v2424
    %3893 = vmatpush.bf16.msra.mxu0 %v2416
    %3894 = vmatpush.bf16.msra.mxu0 %v2408
    %3895 = vmatpush.bf16.msra.mxu0 %v2400
    %3896 = vmatmul.bf16.gmra.mxu0 %v780
    %v3897 = vpop.f32.mrf.mxu0
    %v3898 = vadd.f32 %v3885, %v3897
    %v3899 = vpop.f32.mrf.mxu0
    %3900 = vdwg.mxu0
    %3901 = vmatpush.bf16.msra.mxu0 %v2520
    %3902 = vmatpush.bf16.msra.mxu0 %v2512
    %3903 = vmatpush.bf16.msra.mxu0 %v2504
    %3904 = vmatpush.bf16.msra.mxu0 %v2496
    %3905 = vmatpush.bf16.msra.mxu0 %v2488
    %3906 = vmatpush.bf16.msra.mxu0 %v2480
    %3907 = vmatpush.bf16.msra.mxu0 %v2472
    %3908 = vmatpush.bf16.msra.mxu0 %v2464
    %3909 = vmatmul.bf16.gmra.mxu0 %v781
    %v3910 = vpop.f32.mrf.mxu0
    %v3911 = vadd.f32 %v3898, %v3910
    %v3912 = vpop.f32.mrf.mxu0
    %3913 = vdwg.mxu0
    %3914 = vmatpush.bf16.msra.mxu0 %v2584
    %3915 = vmatpush.bf16.msra.mxu0 %v2576
    %3916 = vmatpush.bf16.msra.mxu0 %v2568
    %3917 = vmatpush.bf16.msra.mxu0 %v2560
    %3918 = vmatpush.bf16.msra.mxu0 %v2552
    %3919 = vmatpush.bf16.msra.mxu0 %v2544
    %3920 = vmatpush.bf16.msra.mxu0 %v2536
    %3921 = vmatpush.bf16.msra.mxu0 %v2528
    %3922 = vmatmul.bf16.gmra.mxu0 %v782
    %v3923 = vpop.f32.mrf.mxu0
    %v3924 = vadd.f32 %v3911, %v3923
    %v3925 = vpop.f32.mrf.mxu0
    %3926 = vdwg.mxu0
    %3927 = vmatpush.bf16.msra.mxu0 %v2648
    %3928 = vmatpush.bf16.msra.mxu0 %v2640
    %3929 = vmatpush.bf16.msra.mxu0 %v2632
    %3930 = vmatpush.bf16.msra.mxu0 %v2624
    %3931 = vmatpush.bf16.msra.mxu0 %v2616
    %3932 = vmatpush.bf16.msra.mxu0 %v2608
    %3933 = vmatpush.bf16.msra.mxu0 %v2600
    %3934 = vmatpush.bf16.msra.mxu0 %v2592
    %3935 = vmatmul.bf16.gmra.mxu0 %v783
    %v3936 = vpop.f32.mrf.mxu0
    %v3937 = vadd.f32 %v3924, %v3936
    %v3938 = vpop.f32.mrf.mxu0
    %3939 = vdwg.mxu0
    %3940 = vmatpush.bf16.msra.mxu0 %v2712
    %3941 = vmatpush.bf16.msra.mxu0 %v2704
    %3942 = vmatpush.bf16.msra.mxu0 %v2696
    %3943 = vmatpush.bf16.msra.mxu0 %v2688
    %3944 = vmatpush.bf16.msra.mxu0 %v2680
    %3945 = vmatpush.bf16.msra.mxu0 %v2672
    %3946 = vmatpush.bf16.msra.mxu0 %v2664
    %3947 = vmatpush.bf16.msra.mxu0 %v2656
    %3948 = vmatmul.bf16.gmra.mxu0 %v784
    %v3949 = vpop.f32.mrf.mxu0
    %v3950 = vadd.f32 %v3937, %v3949
    %v3951 = vpop.f32.mrf.mxu0
    %3952 = vdwg.mxu0
    %3953 = vmatpush.bf16.msra.mxu0 %v2776
    %3954 = vmatpush.bf16.msra.mxu0 %v2768
    %3955 = vmatpush.bf16.msra.mxu0 %v2760
    %3956 = vmatpush.bf16.msra.mxu0 %v2752
    %3957 = vmatpush.bf16.msra.mxu0 %v2744
    %3958 = vmatpush.bf16.msra.mxu0 %v2736
    %3959 = vmatpush.bf16.msra.mxu0 %v2728
    %3960 = vmatpush.bf16.msra.mxu0 %v2720
    %3961 = vmatmul.bf16.gmra.mxu0 %v785
    %v3962 = vpop.f32.mrf.mxu0
    %v3963 = vadd.f32 %v3950, %v3962
    %v3964 = vpop.f32.mrf.mxu0
    %3965 = vdwg.mxu0
    %3966 = vmatpush.bf16.msra.mxu0 %v2840
    %3967 = vmatpush.bf16.msra.mxu0 %v2832
    %3968 = vmatpush.bf16.msra.mxu0 %v2824
    %3969 = vmatpush.bf16.msra.mxu0 %v2816
    %3970 = vmatpush.bf16.msra.mxu0 %v2808
    %3971 = vmatpush.bf16.msra.mxu0 %v2800
    %3972 = vmatpush.bf16.msra.mxu0 %v2792
    %3973 = vmatpush.bf16.msra.mxu0 %v2784
    %3974 = vmatmul.bf16.gmra.mxu0 %v786
    %v3975 = vpop.f32.mrf.mxu0
    %v3976 = vadd.f32 %v3963, %v3975
    %v3977 = vpop.f32.mrf.mxu0
    %3978 = vdwg.mxu0
    %3979 = vmatpush.bf16.msra.mxu0 %v2393
    %3980 = vmatpush.bf16.msra.mxu0 %v2385
    %3981 = vmatpush.bf16.msra.mxu0 %v2377
    %3982 = vmatpush.bf16.msra.mxu0 %v2369
    %3983 = vmatpush.bf16.msra.mxu0 %v2361
    %3984 = vmatpush.bf16.msra.mxu0 %v2353
    %3985 = vmatpush.bf16.msra.mxu0 %v2345
    %3986 = vmatpush.bf16.msra.mxu0 %v2337
    %3987 = vmatmul.bf16.gmra.mxu0 %v779
    %v3988 = vpop.f32.mrf.mxu0
    %v3989 = vadd.f32 %v757, %v3988
    %v3990 = vpop.f32.mrf.mxu0
    %3991 = vdwg.mxu0
    %3992 = vmatpush.bf16.msra.mxu0 %v2457
    %3993 = vmatpush.bf16.msra.mxu0 %v2449
    %3994 = vmatpush.bf16.msra.mxu0 %v2441
    %3995 = vmatpush.bf16.msra.mxu0 %v2433
    %3996 = vmatpush.bf16.msra.mxu0 %v2425
    %3997 = vmatpush.bf16.msra.mxu0 %v2417
    %3998 = vmatpush.bf16.msra.mxu0 %v2409
    %3999 = vmatpush.bf16.msra.mxu0 %v2401
    %4000 = vmatmul.bf16.gmra.mxu0 %v780
    %v4001 = vpop.f32.mrf.mxu0
    %v4002 = vadd.f32 %v3989, %v4001
    %v4003 = vpop.f32.mrf.mxu0
    %4004 = vdwg.mxu0
    %4005 = vmatpush.bf16.msra.mxu0 %v2521
    %4006 = vmatpush.bf16.msra.mxu0 %v2513
    %4007 = vmatpush.bf16.msra.mxu0 %v2505
    %4008 = vmatpush.bf16.msra.mxu0 %v2497
    %4009 = vmatpush.bf16.msra.mxu0 %v2489
    %4010 = vmatpush.bf16.msra.mxu0 %v2481
    %4011 = vmatpush.bf16.msra.mxu0 %v2473
    %4012 = vmatpush.bf16.msra.mxu0 %v2465
    %4013 = vmatmul.bf16.gmra.mxu0 %v781
    %v4014 = vpop.f32.mrf.mxu0
    %v4015 = vadd.f32 %v4002, %v4014
    %v4016 = vpop.f32.mrf.mxu0
    %4017 = vdwg.mxu0
    %4018 = vmatpush.bf16.msra.mxu0 %v2585
    %4019 = vmatpush.bf16.msra.mxu0 %v2577
    %4020 = vmatpush.bf16.msra.mxu0 %v2569
    %4021 = vmatpush.bf16.msra.mxu0 %v2561
    %4022 = vmatpush.bf16.msra.mxu0 %v2553
    %4023 = vmatpush.bf16.msra.mxu0 %v2545
    %4024 = vmatpush.bf16.msra.mxu0 %v2537
    %4025 = vmatpush.bf16.msra.mxu0 %v2529
    %4026 = vmatmul.bf16.gmra.mxu0 %v782
    %v4027 = vpop.f32.mrf.mxu0
    %v4028 = vadd.f32 %v4015, %v4027
    %v4029 = vpop.f32.mrf.mxu0
    %4030 = vdwg.mxu0
    %4031 = vmatpush.bf16.msra.mxu0 %v2649
    %4032 = vmatpush.bf16.msra.mxu0 %v2641
    %4033 = vmatpush.bf16.msra.mxu0 %v2633
    %4034 = vmatpush.bf16.msra.mxu0 %v2625
    %4035 = vmatpush.bf16.msra.mxu0 %v2617
    %4036 = vmatpush.bf16.msra.mxu0 %v2609
    %4037 = vmatpush.bf16.msra.mxu0 %v2601
    %4038 = vmatpush.bf16.msra.mxu0 %v2593
    %4039 = vmatmul.bf16.gmra.mxu0 %v783
    %v4040 = vpop.f32.mrf.mxu0
    %v4041 = vadd.f32 %v4028, %v4040
    %v4042 = vpop.f32.mrf.mxu0
    %4043 = vdwg.mxu0
    %4044 = vmatpush.bf16.msra.mxu0 %v2713
    %4045 = vmatpush.bf16.msra.mxu0 %v2705
    %4046 = vmatpush.bf16.msra.mxu0 %v2697
    %4047 = vmatpush.bf16.msra.mxu0 %v2689
    %4048 = vmatpush.bf16.msra.mxu0 %v2681
    %4049 = vmatpush.bf16.msra.mxu0 %v2673
    %4050 = vmatpush.bf16.msra.mxu0 %v2665
    %4051 = vmatpush.bf16.msra.mxu0 %v2657
    %4052 = vmatmul.bf16.gmra.mxu0 %v784
    %v4053 = vpop.f32.mrf.mxu0
    %v4054 = vadd.f32 %v4041, %v4053
    %v4055 = vpop.f32.mrf.mxu0
    %4056 = vdwg.mxu0
    %4057 = vmatpush.bf16.msra.mxu0 %v2777
    %4058 = vmatpush.bf16.msra.mxu0 %v2769
    %4059 = vmatpush.bf16.msra.mxu0 %v2761
    %4060 = vmatpush.bf16.msra.mxu0 %v2753
    %4061 = vmatpush.bf16.msra.mxu0 %v2745
    %4062 = vmatpush.bf16.msra.mxu0 %v2737
    %4063 = vmatpush.bf16.msra.mxu0 %v2729
    %4064 = vmatpush.bf16.msra.mxu0 %v2721
    %4065 = vmatmul.bf16.gmra.mxu0 %v785
    %v4066 = vpop.f32.mrf.mxu0
    %v4067 = vadd.f32 %v4054, %v4066
    %v4068 = vpop.f32.mrf.mxu0
    %4069 = vdwg.mxu0
    %4070 = vmatpush.bf16.msra.mxu0 %v2841
    %4071 = vmatpush.bf16.msra.mxu0 %v2833
    %4072 = vmatpush.bf16.msra.mxu0 %v2825
    %4073 = vmatpush.bf16.msra.mxu0 %v2817
    %4074 = vmatpush.bf16.msra.mxu0 %v2809
    %4075 = vmatpush.bf16.msra.mxu0 %v2801
    %4076 = vmatpush.bf16.msra.mxu0 %v2793
    %4077 = vmatpush.bf16.msra.mxu0 %v2785
    %4078 = vmatmul.bf16.gmra.mxu0 %v786
    %v4079 = vpop.f32.mrf.mxu0
    %v4080 = vadd.f32 %v4067, %v4079
    %v4081 = vpop.f32.mrf.mxu0
    %4082 = vdwg.mxu0
    %4083 = vmatpush.bf16.msra.mxu0 %v2394
    %4084 = vmatpush.bf16.msra.mxu0 %v2386
    %4085 = vmatpush.bf16.msra.mxu0 %v2378
    %4086 = vmatpush.bf16.msra.mxu0 %v2370
    %4087 = vmatpush.bf16.msra.mxu0 %v2362
    %4088 = vmatpush.bf16.msra.mxu0 %v2354
    %4089 = vmatpush.bf16.msra.mxu0 %v2346
    %4090 = vmatpush.bf16.msra.mxu0 %v2338
    %4091 = vmatmul.bf16.gmra.mxu0 %v779
    %v4092 = vpop.f32.mrf.mxu0
    %v4093 = vadd.f32 %v758, %v4092
    %v4094 = vpop.f32.mrf.mxu0
    %4095 = vdwg.mxu0
    %4096 = vmatpush.bf16.msra.mxu0 %v2458
    %4097 = vmatpush.bf16.msra.mxu0 %v2450
    %4098 = vmatpush.bf16.msra.mxu0 %v2442
    %4099 = vmatpush.bf16.msra.mxu0 %v2434
    %4100 = vmatpush.bf16.msra.mxu0 %v2426
    %4101 = vmatpush.bf16.msra.mxu0 %v2418
    %4102 = vmatpush.bf16.msra.mxu0 %v2410
    %4103 = vmatpush.bf16.msra.mxu0 %v2402
    %4104 = vmatmul.bf16.gmra.mxu0 %v780
    %v4105 = vpop.f32.mrf.mxu0
    %v4106 = vadd.f32 %v4093, %v4105
    %v4107 = vpop.f32.mrf.mxu0
    %4108 = vdwg.mxu0
    %4109 = vmatpush.bf16.msra.mxu0 %v2522
    %4110 = vmatpush.bf16.msra.mxu0 %v2514
    %4111 = vmatpush.bf16.msra.mxu0 %v2506
    %4112 = vmatpush.bf16.msra.mxu0 %v2498
    %4113 = vmatpush.bf16.msra.mxu0 %v2490
    %4114 = vmatpush.bf16.msra.mxu0 %v2482
    %4115 = vmatpush.bf16.msra.mxu0 %v2474
    %4116 = vmatpush.bf16.msra.mxu0 %v2466
    %4117 = vmatmul.bf16.gmra.mxu0 %v781
    %v4118 = vpop.f32.mrf.mxu0
    %v4119 = vadd.f32 %v4106, %v4118
    %v4120 = vpop.f32.mrf.mxu0
    %4121 = vdwg.mxu0
    %4122 = vmatpush.bf16.msra.mxu0 %v2586
    %4123 = vmatpush.bf16.msra.mxu0 %v2578
    %4124 = vmatpush.bf16.msra.mxu0 %v2570
    %4125 = vmatpush.bf16.msra.mxu0 %v2562
    %4126 = vmatpush.bf16.msra.mxu0 %v2554
    %4127 = vmatpush.bf16.msra.mxu0 %v2546
    %4128 = vmatpush.bf16.msra.mxu0 %v2538
    %4129 = vmatpush.bf16.msra.mxu0 %v2530
    %4130 = vmatmul.bf16.gmra.mxu0 %v782
    %v4131 = vpop.f32.mrf.mxu0
    %v4132 = vadd.f32 %v4119, %v4131
    %v4133 = vpop.f32.mrf.mxu0
    %4134 = vdwg.mxu0
    %4135 = vmatpush.bf16.msra.mxu0 %v2650
    %4136 = vmatpush.bf16.msra.mxu0 %v2642
    %4137 = vmatpush.bf16.msra.mxu0 %v2634
    %4138 = vmatpush.bf16.msra.mxu0 %v2626
    %4139 = vmatpush.bf16.msra.mxu0 %v2618
    %4140 = vmatpush.bf16.msra.mxu0 %v2610
    %4141 = vmatpush.bf16.msra.mxu0 %v2602
    %4142 = vmatpush.bf16.msra.mxu0 %v2594
    %4143 = vmatmul.bf16.gmra.mxu0 %v783
    %v4144 = vpop.f32.mrf.mxu0
    %v4145 = vadd.f32 %v4132, %v4144
    %v4146 = vpop.f32.mrf.mxu0
    %4147 = vdwg.mxu0
    %4148 = vmatpush.bf16.msra.mxu0 %v2714
    %4149 = vmatpush.bf16.msra.mxu0 %v2706
    %4150 = vmatpush.bf16.msra.mxu0 %v2698
    %4151 = vmatpush.bf16.msra.mxu0 %v2690
    %4152 = vmatpush.bf16.msra.mxu0 %v2682
    %4153 = vmatpush.bf16.msra.mxu0 %v2674
    %4154 = vmatpush.bf16.msra.mxu0 %v2666
    %4155 = vmatpush.bf16.msra.mxu0 %v2658
    %4156 = vmatmul.bf16.gmra.mxu0 %v784
    %v4157 = vpop.f32.mrf.mxu0
    %v4158 = vadd.f32 %v4145, %v4157
    %v4159 = vpop.f32.mrf.mxu0
    %4160 = vdwg.mxu0
    %4161 = vmatpush.bf16.msra.mxu0 %v2778
    %4162 = vmatpush.bf16.msra.mxu0 %v2770
    %4163 = vmatpush.bf16.msra.mxu0 %v2762
    %4164 = vmatpush.bf16.msra.mxu0 %v2754
    %4165 = vmatpush.bf16.msra.mxu0 %v2746
    %4166 = vmatpush.bf16.msra.mxu0 %v2738
    %4167 = vmatpush.bf16.msra.mxu0 %v2730
    %4168 = vmatpush.bf16.msra.mxu0 %v2722
    %4169 = vmatmul.bf16.gmra.mxu0 %v785
    %v4170 = vpop.f32.mrf.mxu0
    %v4171 = vadd.f32 %v4158, %v4170
    %v4172 = vpop.f32.mrf.mxu0
    %4173 = vdwg.mxu0
    %4174 = vmatpush.bf16.msra.mxu0 %v2842
    %4175 = vmatpush.bf16.msra.mxu0 %v2834
    %4176 = vmatpush.bf16.msra.mxu0 %v2826
    %4177 = vmatpush.bf16.msra.mxu0 %v2818
    %4178 = vmatpush.bf16.msra.mxu0 %v2810
    %4179 = vmatpush.bf16.msra.mxu0 %v2802
    %4180 = vmatpush.bf16.msra.mxu0 %v2794
    %4181 = vmatpush.bf16.msra.mxu0 %v2786
    %4182 = vmatmul.bf16.gmra.mxu0 %v786
    %v4183 = vpop.f32.mrf.mxu0
    %v4184 = vadd.f32 %v4171, %v4183
    %v4185 = vpop.f32.mrf.mxu0
    %4186 = vdwg.mxu0
    %v4187 = vmax.f32 %v3456, 0.0
    %v4188 = vmax.f32 %v3560, 0.0
    %v4189 = vmax.f32 %v3664, 0.0
    %v4190 = vmax.f32 %v3768, 0.0
    %v4191 = vmax.f32 %v3872, 0.0
    %v4192 = vmax.f32 %v3976, 0.0
    %v4193 = vmax.f32 %v4080, 0.0
    %v4194 = vmax.f32 %v4184, 0.0
    %v4195 = vpack.c.bf16 %v4187, %v4187
    %v4196 = vpack.c.bf16 %v4188, %v4188
    %v4197 = vpack.c.bf16 %v4189, %v4189
    %v4198 = vpack.c.bf16 %v4190, %v4190
    %v4199 = vpack.c.bf16 %v4191, %v4191
    %v4200 = vpack.c.bf16 %v4192, %v4192
    %v4201 = vpack.c.bf16 %v4193, %v4193
    %v4202 = vpack.c.bf16 %v4194, %v4194
    %v4203 = vld [vmem:[#allocation8] sm:$0xff]
    %v4204 = vld [vmem:[#allocation8 + $0x8] sm:$0xff]
    %v4205 = vld [vmem:[#allocation8 + $0x10] sm:$0xff]
    %v4206 = vld [vmem:[#allocation8 + $0x18] sm:$0xff]
    %v4207 = vld [vmem:[#allocation8 + $0x20] sm:$0xff]
    %v4208 = vld [vmem:[#allocation8 + $0x28] sm:$0xff]
    %v4209 = vld [vmem:[#allocation8 + $0x30] sm:$0xff]
    %v4210 = vld [vmem:[#allocation8 + $0x38] sm:$0xff]
    %v4211 = vld [vmem:[#allocation8 + $0x40] sm:$0xff]
    %v4212 = vld [vmem:[#allocation8 + $0x48] sm:$0xff]
    %v4213 = vld [vmem:[#allocation8 + $0x50] sm:$0xff]
    %v4214 = vld [vmem:[#allocation8 + $0x58] sm:$0xff]
    %v4215 = vld [vmem:[#allocation8 + $0x60] sm:$0xff]
    %v4216 = vld [vmem:[#allocation8 + $0x68] sm:$0xff]
    %v4217 = vld [vmem:[#allocation8 + $0x70] sm:$0xff]
    %v4218 = vld [vmem:[#allocation8 + $0x78] sm:$0xff]
    %v4219 = vld [vmem:[#allocation8 + $0x80] sm:$0xff]
    %v4220 = vld [vmem:[#allocation8 + $0x88] sm:$0xff]
    %v4221 = vld [vmem:[#allocation8 + $0x90] sm:$0xff]
    %v4222 = vld [vmem:[#allocation8 + $0x98] sm:$0xff]
    %v4223 = vld [vmem:[#allocation8 + $0xa0] sm:$0xff]
    %v4224 = vld [vmem:[#allocation8 + $0xa8] sm:$0xff]
    %v4225 = vld [vmem:[#allocation8 + $0xb0] sm:$0xff]
    %v4226 = vld [vmem:[#allocation8 + $0xb8] sm:$0xff]
    %v4227 = vld [vmem:[#allocation8 + $0xc0] sm:$0xff]
    %v4228 = vld [vmem:[#allocation8 + $0xc8] sm:$0xff]
    %v4229 = vld [vmem:[#allocation8 + $0xd0] sm:$0xff]
    %v4230 = vld [vmem:[#allocation8 + $0xd8] sm:$0xff]
    %v4231 = vld [vmem:[#allocation8 + $0xe0] sm:$0xff]
    %v4232 = vld [vmem:[#allocation8 + $0xe8] sm:$0xff]
    %v4233 = vld [vmem:[#allocation8 + $0xf0] sm:$0xff]
    %v4234 = vld [vmem:[#allocation8 + $0xf8] sm:$0xff]
    %v4235 = vld [vmem:[#allocation8 + $0x100] sm:$0xff]
    %v4236 = vld [vmem:[#allocation8 + $0x108] sm:$0xff]
    %v4237 = vld [vmem:[#allocation8 + $0x110] sm:$0xff]
    %v4238 = vld [vmem:[#allocation8 + $0x118] sm:$0xff]
    %v4239 = vld [vmem:[#allocation8 + $0x120] sm:$0xff]
    %v4240 = vld [vmem:[#allocation8 + $0x128] sm:$0xff]
    %v4241 = vld [vmem:[#allocation8 + $0x130] sm:$0xff]
    %v4242 = vld [vmem:[#allocation8 + $0x138] sm:$0xff]
    %v4243 = vld [vmem:[#allocation8 + $0x140] sm:$0xff]
    %v4244 = vld [vmem:[#allocation8 + $0x148] sm:$0xff]
    %v4245 = vld [vmem:[#allocation8 + $0x150] sm:$0xff]
    %v4246 = vld [vmem:[#allocation8 + $0x158] sm:$0xff]
    %v4247 = vld [vmem:[#allocation8 + $0x160] sm:$0xff]
    %v4248 = vld [vmem:[#allocation8 + $0x168] sm:$0xff]
    %v4249 = vld [vmem:[#allocation8 + $0x170] sm:$0xff]
    %v4250 = vld [vmem:[#allocation8 + $0x178] sm:$0xff]
    %v4251 = vld [vmem:[#allocation8 + $0x180] sm:$0xff]
    %v4252 = vld [vmem:[#allocation8 + $0x188] sm:$0xff]
    %v4253 = vld [vmem:[#allocation8 + $0x190] sm:$0xff]
    %v4254 = vld [vmem:[#allocation8 + $0x198] sm:$0xff]
    %v4255 = vld [vmem:[#allocation8 + $0x1a0] sm:$0xff]
    %v4256 = vld [vmem:[#allocation8 + $0x1a8] sm:$0xff]
    %v4257 = vld [vmem:[#allocation8 + $0x1b0] sm:$0xff]
    %v4258 = vld [vmem:[#allocation8 + $0x1b8] sm:$0xff]
    %v4259 = vld [vmem:[#allocation8 + $0x1c0] sm:$0xff]
    %v4260 = vld [vmem:[#allocation8 + $0x1c8] sm:$0xff]
    %v4261 = vld [vmem:[#allocation8 + $0x1d0] sm:$0xff]
    %v4262 = vld [vmem:[#allocation8 + $0x1d8] sm:$0xff]
    %v4263 = vld [vmem:[#allocation8 + $0x1e0] sm:$0xff]
    %v4264 = vld [vmem:[#allocation8 + $0x1e8] sm:$0xff]
    %v4265 = vld [vmem:[#allocation8 + $0x1f0] sm:$0xff]
    %v4266 = vld [vmem:[#allocation8 + $0x1f8] sm:$0xff]
    %v4267 = vld [vmem:[#allocation8 + $0x200] sm:$0xff]
    %v4268 = vld [vmem:[#allocation8 + $0x208] sm:$0xff]
    %v4269 = vld [vmem:[#allocation8 + $0x210] sm:$0xff]
    %v4270 = vld [vmem:[#allocation8 + $0x218] sm:$0xff]
    %v4271 = vld [vmem:[#allocation8 + $0x220] sm:$0xff]
    %v4272 = vld [vmem:[#allocation8 + $0x228] sm:$0xff]
    %v4273 = vld [vmem:[#allocation8 + $0x230] sm:$0xff]
    %v4274 = vld [vmem:[#allocation8 + $0x238] sm:$0xff]
    %v4275 = vld [vmem:[#allocation8 + $0x240] sm:$0xff]
    %v4276 = vld [vmem:[#allocation8 + $0x248] sm:$0xff]
    %v4277 = vld [vmem:[#allocation8 + $0x250] sm:$0xff]
    %v4278 = vld [vmem:[#allocation8 + $0x258] sm:$0xff]
    %v4279 = vld [vmem:[#allocation8 + $0x260] sm:$0xff]
    %v4280 = vld [vmem:[#allocation8 + $0x268] sm:$0xff]
    %v4281 = vld [vmem:[#allocation8 + $0x270] sm:$0xff]
    %v4282 = vld [vmem:[#allocation8 + $0x278] sm:$0xff]
    %v4283 = vld [vmem:[#allocation8 + $0x280] sm:$0xff]
    %v4284 = vld [vmem:[#allocation8 + $0x288] sm:$0xff]
    %v4285 = vld [vmem:[#allocation8 + $0x290] sm:$0xff]
    %v4286 = vld [vmem:[#allocation8 + $0x298] sm:$0xff]
    %v4287 = vld [vmem:[#allocation8 + $0x2a0] sm:$0xff]
    %v4288 = vld [vmem:[#allocation8 + $0x2a8] sm:$0xff]
    %v4289 = vld [vmem:[#allocation8 + $0x2b0] sm:$0xff]
    %v4290 = vld [vmem:[#allocation8 + $0x2b8] sm:$0xff]
    %v4291 = vld [vmem:[#allocation8 + $0x2c0] sm:$0xff]
    %v4292 = vld [vmem:[#allocation8 + $0x2c8] sm:$0xff]
    %v4293 = vld [vmem:[#allocation8 + $0x2d0] sm:$0xff]
    %v4294 = vld [vmem:[#allocation8 + $0x2d8] sm:$0xff]
    %v4295 = vld [vmem:[#allocation8 + $0x2e0] sm:$0xff]
    %v4296 = vld [vmem:[#allocation8 + $0x2e8] sm:$0xff]
    %v4297 = vld [vmem:[#allocation8 + $0x2f0] sm:$0xff]
    %v4298 = vld [vmem:[#allocation8 + $0x2f8] sm:$0xff]
    %v4299 = vld [vmem:[#allocation8 + $0x300] sm:$0xff]
    %v4300 = vld [vmem:[#allocation8 + $0x308] sm:$0xff]
    %v4301 = vld [vmem:[#allocation8 + $0x310] sm:$0xff]
    %v4302 = vld [vmem:[#allocation8 + $0x318] sm:$0xff]
    %v4303 = vld [vmem:[#allocation8 + $0x320] sm:$0xff]
    %v4304 = vld [vmem:[#allocation8 + $0x328] sm:$0xff]
    %v4305 = vld [vmem:[#allocation8 + $0x330] sm:$0xff]
    %v4306 = vld [vmem:[#allocation8 + $0x338] sm:$0xff]
    %v4307 = vld [vmem:[#allocation8 + $0x340] sm:$0xff]
    %v4308 = vld [vmem:[#allocation8 + $0x348] sm:$0xff]
    %v4309 = vld [vmem:[#allocation8 + $0x350] sm:$0xff]
    %v4310 = vld [vmem:[#allocation8 + $0x358] sm:$0xff]
    %v4311 = vld [vmem:[#allocation8 + $0x360] sm:$0xff]
    %v4312 = vld [vmem:[#allocation8 + $0x368] sm:$0xff]
    %v4313 = vld [vmem:[#allocation8 + $0x370] sm:$0xff]
    %v4314 = vld [vmem:[#allocation8 + $0x378] sm:$0xff]
    %v4315 = vld [vmem:[#allocation8 + $0x380] sm:$0xff]
    %v4316 = vld [vmem:[#allocation8 + $0x388] sm:$0xff]
    %v4317 = vld [vmem:[#allocation8 + $0x390] sm:$0xff]
    %v4318 = vld [vmem:[#allocation8 + $0x398] sm:$0xff]
    %v4319 = vld [vmem:[#allocation8 + $0x3a0] sm:$0xff]
    %v4320 = vld [vmem:[#allocation8 + $0x3a8] sm:$0xff]
    %v4321 = vld [vmem:[#allocation8 + $0x3b0] sm:$0xff]
    %v4322 = vld [vmem:[#allocation8 + $0x3b8] sm:$0xff]
    %v4323 = vld [vmem:[#allocation8 + $0x3c0] sm:$0xff]
    %v4324 = vld [vmem:[#allocation8 + $0x3c8] sm:$0xff]
    %v4325 = vld [vmem:[#allocation8 + $0x3d0] sm:$0xff]
    %v4326 = vld [vmem:[#allocation8 + $0x3d8] sm:$0xff]
    %v4327 = vld [vmem:[#allocation8 + $0x3e0] sm:$0xff]
    %v4328 = vld [vmem:[#allocation8 + $0x3e8] sm:$0xff]
    %v4329 = vld [vmem:[#allocation8 + $0x3f0] sm:$0xff]
    %v4330 = vld [vmem:[#allocation8 + $0x3f8] sm:$0xff]
    %v4331 = vld [vmem:[#allocation8 + $0x400] sm:$0xff]
    %v4332 = vld [vmem:[#allocation8 + $0x408] sm:$0xff]
    %v4333 = vld [vmem:[#allocation8 + $0x410] sm:$0xff]
    %v4334 = vld [vmem:[#allocation8 + $0x418] sm:$0xff]
    %v4335 = vld [vmem:[#allocation8 + $0x420] sm:$0xff]
    %v4336 = vld [vmem:[#allocation8 + $0x428] sm:$0xff]
    %v4337 = vld [vmem:[#allocation8 + $0x430] sm:$0xff]
    %v4338 = vld [vmem:[#allocation8 + $0x438] sm:$0xff]
    %v4339 = vld [vmem:[#allocation8 + $0x440] sm:$0xff]
    %v4340 = vld [vmem:[#allocation8 + $0x448] sm:$0xff]
    %v4341 = vld [vmem:[#allocation8 + $0x450] sm:$0xff]
    %v4342 = vld [vmem:[#allocation8 + $0x458] sm:$0xff]
    %v4343 = vld [vmem:[#allocation8 + $0x460] sm:$0xff]
    %v4344 = vld [vmem:[#allocation8 + $0x468] sm:$0xff]
    %v4345 = vld [vmem:[#allocation8 + $0x470] sm:$0xff]
    %v4346 = vld [vmem:[#allocation8 + $0x478] sm:$0xff]
    %v4347 = vld [vmem:[#allocation8 + $0x480] sm:$0xff]
    %v4348 = vld [vmem:[#allocation8 + $0x488] sm:$0xff]
    %v4349 = vld [vmem:[#allocation8 + $0x490] sm:$0xff]
    %v4350 = vld [vmem:[#allocation8 + $0x498] sm:$0xff]
    %v4351 = vld [vmem:[#allocation8 + $0x4a0] sm:$0xff]
    %v4352 = vld [vmem:[#allocation8 + $0x4a8] sm:$0xff]
    %v4353 = vld [vmem:[#allocation8 + $0x4b0] sm:$0xff]
    %v4354 = vld [vmem:[#allocation8 + $0x4b8] sm:$0xff]
    %v4355 = vld [vmem:[#allocation8 + $0x4c0] sm:$0xff]
    %v4356 = vld [vmem:[#allocation8 + $0x4c8] sm:$0xff]
    %v4357 = vld [vmem:[#allocation8 + $0x4d0] sm:$0xff]
    %v4358 = vld [vmem:[#allocation8 + $0x4d8] sm:$0xff]
    %v4359 = vld [vmem:[#allocation8 + $0x4e0] sm:$0xff]
    %v4360 = vld [vmem:[#allocation8 + $0x4e8] sm:$0xff]
    %v4361 = vld [vmem:[#allocation8 + $0x4f0] sm:$0xff]
    %v4362 = vld [vmem:[#allocation8 + $0x4f8] sm:$0xff]
    %v4363 = vld [vmem:[#allocation8 + $0x500] sm:$0xff]
    %v4364 = vld [vmem:[#allocation8 + $0x508] sm:$0xff]
    %v4365 = vld [vmem:[#allocation8 + $0x510] sm:$0xff]
    %v4366 = vld [vmem:[#allocation8 + $0x518] sm:$0xff]
    %v4367 = vld [vmem:[#allocation8 + $0x520] sm:$0xff]
    %v4368 = vld [vmem:[#allocation8 + $0x528] sm:$0xff]
    %v4369 = vld [vmem:[#allocation8 + $0x530] sm:$0xff]
    %v4370 = vld [vmem:[#allocation8 + $0x538] sm:$0xff]
    %v4371 = vld [vmem:[#allocation8 + $0x540] sm:$0xff]
    %v4372 = vld [vmem:[#allocation8 + $0x548] sm:$0xff]
    %v4373 = vld [vmem:[#allocation8 + $0x550] sm:$0xff]
    %v4374 = vld [vmem:[#allocation8 + $0x558] sm:$0xff]
    %v4375 = vld [vmem:[#allocation8 + $0x560] sm:$0xff]
    %v4376 = vld [vmem:[#allocation8 + $0x568] sm:$0xff]
    %v4377 = vld [vmem:[#allocation8 + $0x570] sm:$0xff]
    %v4378 = vld [vmem:[#allocation8 + $0x578] sm:$0xff]
    %v4379 = vld [vmem:[#allocation8 + $0x580] sm:$0xff]
    %v4380 = vld [vmem:[#allocation8 + $0x588] sm:$0xff]
    %v4381 = vld [vmem:[#allocation8 + $0x590] sm:$0xff]
    %v4382 = vld [vmem:[#allocation8 + $0x598] sm:$0xff]
    %v4383 = vld [vmem:[#allocation8 + $0x5a0] sm:$0xff]
    %v4384 = vld [vmem:[#allocation8 + $0x5a8] sm:$0xff]
    %v4385 = vld [vmem:[#allocation8 + $0x5b0] sm:$0xff]
    %v4386 = vld [vmem:[#allocation8 + $0x5b8] sm:$0xff]
    %v4387 = vld [vmem:[#allocation8 + $0x5c0] sm:$0xff]
    %v4388 = vld [vmem:[#allocation8 + $0x5c8] sm:$0xff]
    %v4389 = vld [vmem:[#allocation8 + $0x5d0] sm:$0xff]
    %v4390 = vld [vmem:[#allocation8 + $0x5d8] sm:$0xff]
    %v4391 = vld [vmem:[#allocation8 + $0x5e0] sm:$0xff]
    %v4392 = vld [vmem:[#allocation8 + $0x5e8] sm:$0xff]
    %v4393 = vld [vmem:[#allocation8 + $0x5f0] sm:$0xff]
    %v4394 = vld [vmem:[#allocation8 + $0x5f8] sm:$0xff]
    %v4395 = vld [vmem:[#allocation8 + $0x600] sm:$0xff]
    %v4396 = vld [vmem:[#allocation8 + $0x608] sm:$0xff]
    %v4397 = vld [vmem:[#allocation8 + $0x610] sm:$0xff]
    %v4398 = vld [vmem:[#allocation8 + $0x618] sm:$0xff]
    %v4399 = vld [vmem:[#allocation8 + $0x620] sm:$0xff]
    %v4400 = vld [vmem:[#allocation8 + $0x628] sm:$0xff]
    %v4401 = vld [vmem:[#allocation8 + $0x630] sm:$0xff]
    %v4402 = vld [vmem:[#allocation8 + $0x638] sm:$0xff]
    %v4403 = vld [vmem:[#allocation8 + $0x640] sm:$0xff]
    %v4404 = vld [vmem:[#allocation8 + $0x648] sm:$0xff]
    %v4405 = vld [vmem:[#allocation8 + $0x650] sm:$0xff]
    %v4406 = vld [vmem:[#allocation8 + $0x658] sm:$0xff]
    %v4407 = vld [vmem:[#allocation8 + $0x660] sm:$0xff]
    %v4408 = vld [vmem:[#allocation8 + $0x668] sm:$0xff]
    %v4409 = vld [vmem:[#allocation8 + $0x670] sm:$0xff]
    %v4410 = vld [vmem:[#allocation8 + $0x678] sm:$0xff]
    %v4411 = vld [vmem:[#allocation8 + $0x680] sm:$0xff]
    %v4412 = vld [vmem:[#allocation8 + $0x688] sm:$0xff]
    %v4413 = vld [vmem:[#allocation8 + $0x690] sm:$0xff]
    %v4414 = vld [vmem:[#allocation8 + $0x698] sm:$0xff]
    %v4415 = vld [vmem:[#allocation8 + $0x6a0] sm:$0xff]
    %v4416 = vld [vmem:[#allocation8 + $0x6a8] sm:$0xff]
    %v4417 = vld [vmem:[#allocation8 + $0x6b0] sm:$0xff]
    %v4418 = vld [vmem:[#allocation8 + $0x6b8] sm:$0xff]
    %v4419 = vld [vmem:[#allocation8 + $0x6c0] sm:$0xff]
    %v4420 = vld [vmem:[#allocation8 + $0x6c8] sm:$0xff]
    %v4421 = vld [vmem:[#allocation8 + $0x6d0] sm:$0xff]
    %v4422 = vld [vmem:[#allocation8 + $0x6d8] sm:$0xff]
    %v4423 = vld [vmem:[#allocation8 + $0x6e0] sm:$0xff]
    %v4424 = vld [vmem:[#allocation8 + $0x6e8] sm:$0xff]
    %v4425 = vld [vmem:[#allocation8 + $0x6f0] sm:$0xff]
    %v4426 = vld [vmem:[#allocation8 + $0x6f8] sm:$0xff]
    %v4427 = vld [vmem:[#allocation8 + $0x700] sm:$0xff]
    %v4428 = vld [vmem:[#allocation8 + $0x708] sm:$0xff]
    %v4429 = vld [vmem:[#allocation8 + $0x710] sm:$0xff]
    %v4430 = vld [vmem:[#allocation8 + $0x718] sm:$0xff]
    %v4431 = vld [vmem:[#allocation8 + $0x720] sm:$0xff]
    %v4432 = vld [vmem:[#allocation8 + $0x728] sm:$0xff]
    %v4433 = vld [vmem:[#allocation8 + $0x730] sm:$0xff]
    %v4434 = vld [vmem:[#allocation8 + $0x738] sm:$0xff]
    %v4435 = vld [vmem:[#allocation8 + $0x740] sm:$0xff]
    %v4436 = vld [vmem:[#allocation8 + $0x748] sm:$0xff]
    %v4437 = vld [vmem:[#allocation8 + $0x750] sm:$0xff]
    %v4438 = vld [vmem:[#allocation8 + $0x758] sm:$0xff]
    %v4439 = vld [vmem:[#allocation8 + $0x760] sm:$0xff]
    %v4440 = vld [vmem:[#allocation8 + $0x768] sm:$0xff]
    %v4441 = vld [vmem:[#allocation8 + $0x770] sm:$0xff]
    %v4442 = vld [vmem:[#allocation8 + $0x778] sm:$0xff]
    %v4443 = vld [vmem:[#allocation8 + $0x780] sm:$0xff]
    %v4444 = vld [vmem:[#allocation8 + $0x788] sm:$0xff]
    %v4445 = vld [vmem:[#allocation8 + $0x790] sm:$0xff]
    %v4446 = vld [vmem:[#allocation8 + $0x798] sm:$0xff]
    %v4447 = vld [vmem:[#allocation8 + $0x7a0] sm:$0xff]
    %v4448 = vld [vmem:[#allocation8 + $0x7a8] sm:$0xff]
    %v4449 = vld [vmem:[#allocation8 + $0x7b0] sm:$0xff]
    %v4450 = vld [vmem:[#allocation8 + $0x7b8] sm:$0xff]
    %v4451 = vld [vmem:[#allocation8 + $0x7c0] sm:$0xff]
    %v4452 = vld [vmem:[#allocation8 + $0x7c8] sm:$0xff]
    %v4453 = vld [vmem:[#allocation8 + $0x7d0] sm:$0xff]
    %v4454 = vld [vmem:[#allocation8 + $0x7d8] sm:$0xff]
    %v4455 = vld [vmem:[#allocation8 + $0x7e0] sm:$0xff]
    %v4456 = vld [vmem:[#allocation8 + $0x7e8] sm:$0xff]
    %v4457 = vld [vmem:[#allocation8 + $0x7f0] sm:$0xff]
    %v4458 = vld [vmem:[#allocation8 + $0x7f8] sm:$0xff]
    %v4459 = vld [vmem:[#allocation10] sm:$0xf]
    %v4461 = vperm.slane %v4459, 0
    %v4462 = vperm.slane %v4459, 1
    %v4463 = vperm.slane %v4459, 2
    %v4464 = vperm.slane %v4459, 3
    %v4725 = vunpack.c.l.b16 %v4203
    %v4726 = vunpack.c.h.b16 %v4203
    %v4727 = vunpack.c.l.b16 %v4204
    %v4728 = vunpack.c.h.b16 %v4204
    %v4729 = vunpack.c.l.b16 %v4205
    %v4730 = vunpack.c.h.b16 %v4205
    %v4731 = vunpack.c.l.b16 %v4206
    %v4732 = vunpack.c.h.b16 %v4206
    %v4733 = vunpack.c.l.b16 %v4207
    %v4734 = vunpack.c.h.b16 %v4207
    %v4735 = vunpack.c.l.b16 %v4208
    %v4736 = vunpack.c.h.b16 %v4208
    %v4737 = vunpack.c.l.b16 %v4209
    %v4738 = vunpack.c.h.b16 %v4209
    %v4739 = vunpack.c.l.b16 %v4210
    %v4740 = vunpack.c.h.b16 %v4210
    %v4741 = vunpack.c.l.b16 %v4211
    %v4742 = vunpack.c.h.b16 %v4211
    %v4743 = vunpack.c.l.b16 %v4212
    %v4744 = vunpack.c.h.b16 %v4212
    %v4745 = vunpack.c.l.b16 %v4213
    %v4746 = vunpack.c.h.b16 %v4213
    %v4747 = vunpack.c.l.b16 %v4214
    %v4748 = vunpack.c.h.b16 %v4214
    %v4749 = vunpack.c.l.b16 %v4215
    %v4750 = vunpack.c.h.b16 %v4215
    %v4751 = vunpack.c.l.b16 %v4216
    %v4752 = vunpack.c.h.b16 %v4216
    %v4753 = vunpack.c.l.b16 %v4217
    %v4754 = vunpack.c.h.b16 %v4217
    %v4755 = vunpack.c.l.b16 %v4218
    %v4756 = vunpack.c.h.b16 %v4218
    %v4757 = vunpack.c.l.b16 %v4219
    %v4758 = vunpack.c.h.b16 %v4219
    %v4759 = vunpack.c.l.b16 %v4220
    %v4760 = vunpack.c.h.b16 %v4220
    %v4761 = vunpack.c.l.b16 %v4221
    %v4762 = vunpack.c.h.b16 %v4221
    %v4763 = vunpack.c.l.b16 %v4222
    %v4764 = vunpack.c.h.b16 %v4222
    %v4765 = vunpack.c.l.b16 %v4223
    %v4766 = vunpack.c.h.b16 %v4223
    %v4767 = vunpack.c.l.b16 %v4224
    %v4768 = vunpack.c.h.b16 %v4224
    %v4769 = vunpack.c.l.b16 %v4225
    %v4770 = vunpack.c.h.b16 %v4225
    %v4771 = vunpack.c.l.b16 %v4226
    %v4772 = vunpack.c.h.b16 %v4226
    %v4773 = vunpack.c.l.b16 %v4227
    %v4774 = vunpack.c.h.b16 %v4227
    %v4775 = vunpack.c.l.b16 %v4228
    %v4776 = vunpack.c.h.b16 %v4228
    %v4777 = vunpack.c.l.b16 %v4229
    %v4778 = vunpack.c.h.b16 %v4229
    %v4779 = vunpack.c.l.b16 %v4230
    %v4780 = vunpack.c.h.b16 %v4230
    %v4781 = vunpack.c.l.b16 %v4231
    %v4782 = vunpack.c.h.b16 %v4231
    %v4783 = vunpack.c.l.b16 %v4232
    %v4784 = vunpack.c.h.b16 %v4232
    %v4785 = vunpack.c.l.b16 %v4233
    %v4786 = vunpack.c.h.b16 %v4233
    %v4787 = vunpack.c.l.b16 %v4234
    %v4788 = vunpack.c.h.b16 %v4234
    %v4789 = vunpack.c.l.b16 %v4235
    %v4790 = vunpack.c.h.b16 %v4235
    %v4791 = vunpack.c.l.b16 %v4236
    %v4792 = vunpack.c.h.b16 %v4236
    %v4793 = vunpack.c.l.b16 %v4237
    %v4794 = vunpack.c.h.b16 %v4237
    %v4795 = vunpack.c.l.b16 %v4238
    %v4796 = vunpack.c.h.b16 %v4238
    %v4797 = vunpack.c.l.b16 %v4239
    %v4798 = vunpack.c.h.b16 %v4239
    %v4799 = vunpack.c.l.b16 %v4240
    %v4800 = vunpack.c.h.b16 %v4240
    %v4801 = vunpack.c.l.b16 %v4241
    %v4802 = vunpack.c.h.b16 %v4241
    %v4803 = vunpack.c.l.b16 %v4242
    %v4804 = vunpack.c.h.b16 %v4242
    %v4805 = vunpack.c.l.b16 %v4243
    %v4806 = vunpack.c.h.b16 %v4243
    %v4807 = vunpack.c.l.b16 %v4244
    %v4808 = vunpack.c.h.b16 %v4244
    %v4809 = vunpack.c.l.b16 %v4245
    %v4810 = vunpack.c.h.b16 %v4245
    %v4811 = vunpack.c.l.b16 %v4246
    %v4812 = vunpack.c.h.b16 %v4246
    %v4813 = vunpack.c.l.b16 %v4247
    %v4814 = vunpack.c.h.b16 %v4247
    %v4815 = vunpack.c.l.b16 %v4248
    %v4816 = vunpack.c.h.b16 %v4248
    %v4817 = vunpack.c.l.b16 %v4249
    %v4818 = vunpack.c.h.b16 %v4249
    %v4819 = vunpack.c.l.b16 %v4250
    %v4820 = vunpack.c.h.b16 %v4250
    %v4821 = vunpack.c.l.b16 %v4251
    %v4822 = vunpack.c.h.b16 %v4251
    %v4823 = vunpack.c.l.b16 %v4252
    %v4824 = vunpack.c.h.b16 %v4252
    %v4825 = vunpack.c.l.b16 %v4253
    %v4826 = vunpack.c.h.b16 %v4253
    %v4827 = vunpack.c.l.b16 %v4254
    %v4828 = vunpack.c.h.b16 %v4254
    %v4829 = vunpack.c.l.b16 %v4255
    %v4830 = vunpack.c.h.b16 %v4255
    %v4831 = vunpack.c.l.b16 %v4256
    %v4832 = vunpack.c.h.b16 %v4256
    %v4833 = vunpack.c.l.b16 %v4257
    %v4834 = vunpack.c.h.b16 %v4257
    %v4835 = vunpack.c.l.b16 %v4258
    %v4836 = vunpack.c.h.b16 %v4258
    %v4837 = vunpack.c.l.b16 %v4259
    %v4838 = vunpack.c.h.b16 %v4259
    %v4839 = vunpack.c.l.b16 %v4260
    %v4840 = vunpack.c.h.b16 %v4260
    %v4841 = vunpack.c.l.b16 %v4261
    %v4842 = vunpack.c.h.b16 %v4261
    %v4843 = vunpack.c.l.b16 %v4262
    %v4844 = vunpack.c.h.b16 %v4262
    %v4845 = vunpack.c.l.b16 %v4263
    %v4846 = vunpack.c.h.b16 %v4263
    %v4847 = vunpack.c.l.b16 %v4264
    %v4848 = vunpack.c.h.b16 %v4264
    %v4849 = vunpack.c.l.b16 %v4265
    %v4850 = vunpack.c.h.b16 %v4265
    %v4851 = vunpack.c.l.b16 %v4266
    %v4852 = vunpack.c.h.b16 %v4266
    %v4853 = vunpack.c.l.b16 %v4267
    %v4854 = vunpack.c.h.b16 %v4267
    %v4855 = vunpack.c.l.b16 %v4268
    %v4856 = vunpack.c.h.b16 %v4268
    %v4857 = vunpack.c.l.b16 %v4269
    %v4858 = vunpack.c.h.b16 %v4269
    %v4859 = vunpack.c.l.b16 %v4270
    %v4860 = vunpack.c.h.b16 %v4270
    %v4861 = vunpack.c.l.b16 %v4271
    %v4862 = vunpack.c.h.b16 %v4271
    %v4863 = vunpack.c.l.b16 %v4272
    %v4864 = vunpack.c.h.b16 %v4272
    %v4865 = vunpack.c.l.b16 %v4273
    %v4866 = vunpack.c.h.b16 %v4273
    %v4867 = vunpack.c.l.b16 %v4274
    %v4868 = vunpack.c.h.b16 %v4274
    %v4869 = vunpack.c.l.b16 %v4275
    %v4870 = vunpack.c.h.b16 %v4275
    %v4871 = vunpack.c.l.b16 %v4276
    %v4872 = vunpack.c.h.b16 %v4276
    %v4873 = vunpack.c.l.b16 %v4277
    %v4874 = vunpack.c.h.b16 %v4277
    %v4875 = vunpack.c.l.b16 %v4278
    %v4876 = vunpack.c.h.b16 %v4278
    %v4877 = vunpack.c.l.b16 %v4279
    %v4878 = vunpack.c.h.b16 %v4279
    %v4879 = vunpack.c.l.b16 %v4280
    %v4880 = vunpack.c.h.b16 %v4280
    %v4881 = vunpack.c.l.b16 %v4281
    %v4882 = vunpack.c.h.b16 %v4281
    %v4883 = vunpack.c.l.b16 %v4282
    %v4884 = vunpack.c.h.b16 %v4282
    %v4885 = vunpack.c.l.b16 %v4283
    %v4886 = vunpack.c.h.b16 %v4283
    %v4887 = vunpack.c.l.b16 %v4284
    %v4888 = vunpack.c.h.b16 %v4284
    %v4889 = vunpack.c.l.b16 %v4285
    %v4890 = vunpack.c.h.b16 %v4285
    %v4891 = vunpack.c.l.b16 %v4286
    %v4892 = vunpack.c.h.b16 %v4286
    %v4893 = vunpack.c.l.b16 %v4287
    %v4894 = vunpack.c.h.b16 %v4287
    %v4895 = vunpack.c.l.b16 %v4288
    %v4896 = vunpack.c.h.b16 %v4288
    %v4897 = vunpack.c.l.b16 %v4289
    %v4898 = vunpack.c.h.b16 %v4289
    %v4899 = vunpack.c.l.b16 %v4290
    %v4900 = vunpack.c.h.b16 %v4290
    %v4901 = vunpack.c.l.b16 %v4291
    %v4902 = vunpack.c.h.b16 %v4291
    %v4903 = vunpack.c.l.b16 %v4292
    %v4904 = vunpack.c.h.b16 %v4292
    %v4905 = vunpack.c.l.b16 %v4293
    %v4906 = vunpack.c.h.b16 %v4293
    %v4907 = vunpack.c.l.b16 %v4294
    %v4908 = vunpack.c.h.b16 %v4294
    %v4909 = vunpack.c.l.b16 %v4295
    %v4910 = vunpack.c.h.b16 %v4295
    %v4911 = vunpack.c.l.b16 %v4296
    %v4912 = vunpack.c.h.b16 %v4296
    %v4913 = vunpack.c.l.b16 %v4297
    %v4914 = vunpack.c.h.b16 %v4297
    %v4915 = vunpack.c.l.b16 %v4298
    %v4916 = vunpack.c.h.b16 %v4298
    %v4917 = vunpack.c.l.b16 %v4299
    %v4918 = vunpack.c.h.b16 %v4299
    %v4919 = vunpack.c.l.b16 %v4300
    %v4920 = vunpack.c.h.b16 %v4300
    %v4921 = vunpack.c.l.b16 %v4301
    %v4922 = vunpack.c.h.b16 %v4301
    %v4923 = vunpack.c.l.b16 %v4302
    %v4924 = vunpack.c.h.b16 %v4302
    %v4925 = vunpack.c.l.b16 %v4303
    %v4926 = vunpack.c.h.b16 %v4303
    %v4927 = vunpack.c.l.b16 %v4304
    %v4928 = vunpack.c.h.b16 %v4304
    %v4929 = vunpack.c.l.b16 %v4305
    %v4930 = vunpack.c.h.b16 %v4305
    %v4931 = vunpack.c.l.b16 %v4306
    %v4932 = vunpack.c.h.b16 %v4306
    %v4933 = vunpack.c.l.b16 %v4307
    %v4934 = vunpack.c.h.b16 %v4307
    %v4935 = vunpack.c.l.b16 %v4308
    %v4936 = vunpack.c.h.b16 %v4308
    %v4937 = vunpack.c.l.b16 %v4309
    %v4938 = vunpack.c.h.b16 %v4309
    %v4939 = vunpack.c.l.b16 %v4310
    %v4940 = vunpack.c.h.b16 %v4310
    %v4941 = vunpack.c.l.b16 %v4311
    %v4942 = vunpack.c.h.b16 %v4311
    %v4943 = vunpack.c.l.b16 %v4312
    %v4944 = vunpack.c.h.b16 %v4312
    %v4945 = vunpack.c.l.b16 %v4313
    %v4946 = vunpack.c.h.b16 %v4313
    %v4947 = vunpack.c.l.b16 %v4314
    %v4948 = vunpack.c.h.b16 %v4314
    %v4949 = vunpack.c.l.b16 %v4315
    %v4950 = vunpack.c.h.b16 %v4315
    %v4951 = vunpack.c.l.b16 %v4316
    %v4952 = vunpack.c.h.b16 %v4316
    %v4953 = vunpack.c.l.b16 %v4317
    %v4954 = vunpack.c.h.b16 %v4317
    %v4955 = vunpack.c.l.b16 %v4318
    %v4956 = vunpack.c.h.b16 %v4318
    %v4957 = vunpack.c.l.b16 %v4319
    %v4958 = vunpack.c.h.b16 %v4319
    %v4959 = vunpack.c.l.b16 %v4320
    %v4960 = vunpack.c.h.b16 %v4320
    %v4961 = vunpack.c.l.b16 %v4321
    %v4962 = vunpack.c.h.b16 %v4321
    %v4963 = vunpack.c.l.b16 %v4322
    %v4964 = vunpack.c.h.b16 %v4322
    %v4965 = vunpack.c.l.b16 %v4323
    %v4966 = vunpack.c.h.b16 %v4323
    %v4967 = vunpack.c.l.b16 %v4324
    %v4968 = vunpack.c.h.b16 %v4324
    %v4969 = vunpack.c.l.b16 %v4325
    %v4970 = vunpack.c.h.b16 %v4325
    %v4971 = vunpack.c.l.b16 %v4326
    %v4972 = vunpack.c.h.b16 %v4326
    %v4973 = vunpack.c.l.b16 %v4327
    %v4974 = vunpack.c.h.b16 %v4327
    %v4975 = vunpack.c.l.b16 %v4328
    %v4976 = vunpack.c.h.b16 %v4328
    %v4977 = vunpack.c.l.b16 %v4329
    %v4978 = vunpack.c.h.b16 %v4329
    %v4979 = vunpack.c.l.b16 %v4330
    %v4980 = vunpack.c.h.b16 %v4330
    %v4981 = vunpack.c.l.b16 %v4331
    %v4982 = vunpack.c.h.b16 %v4331
    %v4983 = vunpack.c.l.b16 %v4332
    %v4984 = vunpack.c.h.b16 %v4332
    %v4985 = vunpack.c.l.b16 %v4333
    %v4986 = vunpack.c.h.b16 %v4333
    %v4987 = vunpack.c.l.b16 %v4334
    %v4988 = vunpack.c.h.b16 %v4334
    %v4989 = vunpack.c.l.b16 %v4335
    %v4990 = vunpack.c.h.b16 %v4335
    %v4991 = vunpack.c.l.b16 %v4336
    %v4992 = vunpack.c.h.b16 %v4336
    %v4993 = vunpack.c.l.b16 %v4337
    %v4994 = vunpack.c.h.b16 %v4337
    %v4995 = vunpack.c.l.b16 %v4338
    %v4996 = vunpack.c.h.b16 %v4338
    %v4997 = vunpack.c.l.b16 %v4339
    %v4998 = vunpack.c.h.b16 %v4339
    %v4999 = vunpack.c.l.b16 %v4340
    %v5000 = vunpack.c.h.b16 %v4340
    %v5001 = vunpack.c.l.b16 %v4341
    %v5002 = vunpack.c.h.b16 %v4341
    %v5003 = vunpack.c.l.b16 %v4342
    %v5004 = vunpack.c.h.b16 %v4342
    %v5005 = vunpack.c.l.b16 %v4343
    %v5006 = vunpack.c.h.b16 %v4343
    %v5007 = vunpack.c.l.b16 %v4344
    %v5008 = vunpack.c.h.b16 %v4344
    %v5009 = vunpack.c.l.b16 %v4345
    %v5010 = vunpack.c.h.b16 %v4345
    %v5011 = vunpack.c.l.b16 %v4346
    %v5012 = vunpack.c.h.b16 %v4346
    %v5013 = vunpack.c.l.b16 %v4347
    %v5014 = vunpack.c.h.b16 %v4347
    %v5015 = vunpack.c.l.b16 %v4348
    %v5016 = vunpack.c.h.b16 %v4348
    %v5017 = vunpack.c.l.b16 %v4349
    %v5018 = vunpack.c.h.b16 %v4349
    %v5019 = vunpack.c.l.b16 %v4350
    %v5020 = vunpack.c.h.b16 %v4350
    %v5021 = vunpack.c.l.b16 %v4351
    %v5022 = vunpack.c.h.b16 %v4351
    %v5023 = vunpack.c.l.b16 %v4352
    %v5024 = vunpack.c.h.b16 %v4352
    %v5025 = vunpack.c.l.b16 %v4353
    %v5026 = vunpack.c.h.b16 %v4353
    %v5027 = vunpack.c.l.b16 %v4354
    %v5028 = vunpack.c.h.b16 %v4354
    %v5029 = vunpack.c.l.b16 %v4355
    %v5030 = vunpack.c.h.b16 %v4355
    %v5031 = vunpack.c.l.b16 %v4356
    %v5032 = vunpack.c.h.b16 %v4356
    %v5033 = vunpack.c.l.b16 %v4357
    %v5034 = vunpack.c.h.b16 %v4357
    %v5035 = vunpack.c.l.b16 %v4358
    %v5036 = vunpack.c.h.b16 %v4358
    %v5037 = vunpack.c.l.b16 %v4359
    %v5038 = vunpack.c.h.b16 %v4359
    %v5039 = vunpack.c.l.b16 %v4360
    %v5040 = vunpack.c.h.b16 %v4360
    %v5041 = vunpack.c.l.b16 %v4361
    %v5042 = vunpack.c.h.b16 %v4361
    %v5043 = vunpack.c.l.b16 %v4362
    %v5044 = vunpack.c.h.b16 %v4362
    %v5045 = vunpack.c.l.b16 %v4363
    %v5046 = vunpack.c.h.b16 %v4363
    %v5047 = vunpack.c.l.b16 %v4364
    %v5048 = vunpack.c.h.b16 %v4364
    %v5049 = vunpack.c.l.b16 %v4365
    %v5050 = vunpack.c.h.b16 %v4365
    %v5051 = vunpack.c.l.b16 %v4366
    %v5052 = vunpack.c.h.b16 %v4366
    %v5053 = vunpack.c.l.b16 %v4367
    %v5054 = vunpack.c.h.b16 %v4367
    %v5055 = vunpack.c.l.b16 %v4368
    %v5056 = vunpack.c.h.b16 %v4368
    %v5057 = vunpack.c.l.b16 %v4369
    %v5058 = vunpack.c.h.b16 %v4369
    %v5059 = vunpack.c.l.b16 %v4370
    %v5060 = vunpack.c.h.b16 %v4370
    %v5061 = vunpack.c.l.b16 %v4371
    %v5062 = vunpack.c.h.b16 %v4371
    %v5063 = vunpack.c.l.b16 %v4372
    %v5064 = vunpack.c.h.b16 %v4372
    %v5065 = vunpack.c.l.b16 %v4373
    %v5066 = vunpack.c.h.b16 %v4373
    %v5067 = vunpack.c.l.b16 %v4374
    %v5068 = vunpack.c.h.b16 %v4374
    %v5069 = vunpack.c.l.b16 %v4375
    %v5070 = vunpack.c.h.b16 %v4375
    %v5071 = vunpack.c.l.b16 %v4376
    %v5072 = vunpack.c.h.b16 %v4376
    %v5073 = vunpack.c.l.b16 %v4377
    %v5074 = vunpack.c.h.b16 %v4377
    %v5075 = vunpack.c.l.b16 %v4378
    %v5076 = vunpack.c.h.b16 %v4378
    %v5077 = vunpack.c.l.b16 %v4379
    %v5078 = vunpack.c.h.b16 %v4379
    %v5079 = vunpack.c.l.b16 %v4380
    %v5080 = vunpack.c.h.b16 %v4380
    %v5081 = vunpack.c.l.b16 %v4381
    %v5082 = vunpack.c.h.b16 %v4381
    %v5083 = vunpack.c.l.b16 %v4382
    %v5084 = vunpack.c.h.b16 %v4382
    %v5085 = vunpack.c.l.b16 %v4383
    %v5086 = vunpack.c.h.b16 %v4383
    %v5087 = vunpack.c.l.b16 %v4384
    %v5088 = vunpack.c.h.b16 %v4384
    %v5089 = vunpack.c.l.b16 %v4385
    %v5090 = vunpack.c.h.b16 %v4385
    %v5091 = vunpack.c.l.b16 %v4386
    %v5092 = vunpack.c.h.b16 %v4386
    %v5093 = vunpack.c.l.b16 %v4387
    %v5094 = vunpack.c.h.b16 %v4387
    %v5095 = vunpack.c.l.b16 %v4388
    %v5096 = vunpack.c.h.b16 %v4388
    %v5097 = vunpack.c.l.b16 %v4389
    %v5098 = vunpack.c.h.b16 %v4389
    %v5099 = vunpack.c.l.b16 %v4390
    %v5100 = vunpack.c.h.b16 %v4390
    %v5101 = vunpack.c.l.b16 %v4391
    %v5102 = vunpack.c.h.b16 %v4391
    %v5103 = vunpack.c.l.b16 %v4392
    %v5104 = vunpack.c.h.b16 %v4392
    %v5105 = vunpack.c.l.b16 %v4393
    %v5106 = vunpack.c.h.b16 %v4393
    %v5107 = vunpack.c.l.b16 %v4394
    %v5108 = vunpack.c.h.b16 %v4394
    %v5109 = vunpack.c.l.b16 %v4395
    %v5110 = vunpack.c.h.b16 %v4395
    %v5111 = vunpack.c.l.b16 %v4396
    %v5112 = vunpack.c.h.b16 %v4396
    %v5113 = vunpack.c.l.b16 %v4397
    %v5114 = vunpack.c.h.b16 %v4397
    %v5115 = vunpack.c.l.b16 %v4398
    %v5116 = vunpack.c.h.b16 %v4398
    %v5117 = vunpack.c.l.b16 %v4399
    %v5118 = vunpack.c.h.b16 %v4399
    %v5119 = vunpack.c.l.b16 %v4400
    %v5120 = vunpack.c.h.b16 %v4400
    %v5121 = vunpack.c.l.b16 %v4401
    %v5122 = vunpack.c.h.b16 %v4401
    %v5123 = vunpack.c.l.b16 %v4402
    %v5124 = vunpack.c.h.b16 %v4402
    %v5125 = vunpack.c.l.b16 %v4403
    %v5126 = vunpack.c.h.b16 %v4403
    %v5127 = vunpack.c.l.b16 %v4404
    %v5128 = vunpack.c.h.b16 %v4404
    %v5129 = vunpack.c.l.b16 %v4405
    %v5130 = vunpack.c.h.b16 %v4405
    %v5131 = vunpack.c.l.b16 %v4406
    %v5132 = vunpack.c.h.b16 %v4406
    %v5133 = vunpack.c.l.b16 %v4407
    %v5134 = vunpack.c.h.b16 %v4407
    %v5135 = vunpack.c.l.b16 %v4408
    %v5136 = vunpack.c.h.b16 %v4408
    %v5137 = vunpack.c.l.b16 %v4409
    %v5138 = vunpack.c.h.b16 %v4409
    %v5139 = vunpack.c.l.b16 %v4410
    %v5140 = vunpack.c.h.b16 %v4410
    %v5141 = vunpack.c.l.b16 %v4411
    %v5142 = vunpack.c.h.b16 %v4411
    %v5143 = vunpack.c.l.b16 %v4412
    %v5144 = vunpack.c.h.b16 %v4412
    %v5145 = vunpack.c.l.b16 %v4413
    %v5146 = vunpack.c.h.b16 %v4413
    %v5147 = vunpack.c.l.b16 %v4414
    %v5148 = vunpack.c.h.b16 %v4414
    %v5149 = vunpack.c.l.b16 %v4415
    %v5150 = vunpack.c.h.b16 %v4415
    %v5151 = vunpack.c.l.b16 %v4416
    %v5152 = vunpack.c.h.b16 %v4416
    %v5153 = vunpack.c.l.b16 %v4417
    %v5154 = vunpack.c.h.b16 %v4417
    %v5155 = vunpack.c.l.b16 %v4418
    %v5156 = vunpack.c.h.b16 %v4418
    %v5157 = vunpack.c.l.b16 %v4419
    %v5158 = vunpack.c.h.b16 %v4419
    %v5159 = vunpack.c.l.b16 %v4420
    %v5160 = vunpack.c.h.b16 %v4420
    %v5161 = vunpack.c.l.b16 %v4421
    %v5162 = vunpack.c.h.b16 %v4421
    %v5163 = vunpack.c.l.b16 %v4422
    %v5164 = vunpack.c.h.b16 %v4422
    %v5165 = vunpack.c.l.b16 %v4423
    %v5166 = vunpack.c.h.b16 %v4423
    %v5167 = vunpack.c.l.b16 %v4424
    %v5168 = vunpack.c.h.b16 %v4424
    %v5169 = vunpack.c.l.b16 %v4425
    %v5170 = vunpack.c.h.b16 %v4425
    %v5171 = vunpack.c.l.b16 %v4426
    %v5172 = vunpack.c.h.b16 %v4426
    %v5173 = vunpack.c.l.b16 %v4427
    %v5174 = vunpack.c.h.b16 %v4427
    %v5175 = vunpack.c.l.b16 %v4428
    %v5176 = vunpack.c.h.b16 %v4428
    %v5177 = vunpack.c.l.b16 %v4429
    %v5178 = vunpack.c.h.b16 %v4429
    %v5179 = vunpack.c.l.b16 %v4430
    %v5180 = vunpack.c.h.b16 %v4430
    %v5181 = vunpack.c.l.b16 %v4431
    %v5182 = vunpack.c.h.b16 %v4431
    %v5183 = vunpack.c.l.b16 %v4432
    %v5184 = vunpack.c.h.b16 %v4432
    %v5185 = vunpack.c.l.b16 %v4433
    %v5186 = vunpack.c.h.b16 %v4433
    %v5187 = vunpack.c.l.b16 %v4434
    %v5188 = vunpack.c.h.b16 %v4434
    %v5189 = vunpack.c.l.b16 %v4435
    %v5190 = vunpack.c.h.b16 %v4435
    %v5191 = vunpack.c.l.b16 %v4436
    %v5192 = vunpack.c.h.b16 %v4436
    %v5193 = vunpack.c.l.b16 %v4437
    %v5194 = vunpack.c.h.b16 %v4437
    %v5195 = vunpack.c.l.b16 %v4438
    %v5196 = vunpack.c.h.b16 %v4438
    %v5197 = vunpack.c.l.b16 %v4439
    %v5198 = vunpack.c.h.b16 %v4439
    %v5199 = vunpack.c.l.b16 %v4440
    %v5200 = vunpack.c.h.b16 %v4440
    %v5201 = vunpack.c.l.b16 %v4441
    %v5202 = vunpack.c.h.b16 %v4441
    %v5203 = vunpack.c.l.b16 %v4442
    %v5204 = vunpack.c.h.b16 %v4442
    %v5205 = vunpack.c.l.b16 %v4443
    %v5206 = vunpack.c.h.b16 %v4443
    %v5207 = vunpack.c.l.b16 %v4444
    %v5208 = vunpack.c.h.b16 %v4444
    %v5209 = vunpack.c.l.b16 %v4445
    %v5210 = vunpack.c.h.b16 %v4445
    %v5211 = vunpack.c.l.b16 %v4446
    %v5212 = vunpack.c.h.b16 %v4446
    %v5213 = vunpack.c.l.b16 %v4447
    %v5214 = vunpack.c.h.b16 %v4447
    %v5215 = vunpack.c.l.b16 %v4448
    %v5216 = vunpack.c.h.b16 %v4448
    %v5217 = vunpack.c.l.b16 %v4449
    %v5218 = vunpack.c.h.b16 %v4449
    %v5219 = vunpack.c.l.b16 %v4450
    %v5220 = vunpack.c.h.b16 %v4450
    %v5221 = vunpack.c.l.b16 %v4451
    %v5222 = vunpack.c.h.b16 %v4451
    %v5223 = vunpack.c.l.b16 %v4452
    %v5224 = vunpack.c.h.b16 %v4452
    %v5225 = vunpack.c.l.b16 %v4453
    %v5226 = vunpack.c.h.b16 %v4453
    %v5227 = vunpack.c.l.b16 %v4454
    %v5228 = vunpack.c.h.b16 %v4454
    %v5229 = vunpack.c.l.b16 %v4455
    %v5230 = vunpack.c.h.b16 %v4455
    %v5231 = vunpack.c.l.b16 %v4456
    %v5232 = vunpack.c.h.b16 %v4456
    %v5233 = vunpack.c.l.b16 %v4457
    %v5234 = vunpack.c.h.b16 %v4457
    %v5235 = vunpack.c.l.b16 %v4458
    %v5236 = vunpack.c.h.b16 %v4458
    %v5237 = vpack.c.b16 %v4729, %v4725
    %v5238 = vpack.c.b16 %v4730, %v4726
    %v5239 = vpack.c.b16 %v4731, %v4727
    %v5240 = vpack.c.b16 %v4732, %v4728
    %v5241 = vpack.c.b16 %v4737, %v4733
    %v5242 = vpack.c.b16 %v4738, %v4734
    %v5243 = vpack.c.b16 %v4739, %v4735
    %v5244 = vpack.c.b16 %v4740, %v4736
    %v5245 = vpack.c.b16 %v4745, %v4741
    %v5246 = vpack.c.b16 %v4746, %v4742
    %v5247 = vpack.c.b16 %v4747, %v4743
    %v5248 = vpack.c.b16 %v4748, %v4744
    %v5249 = vpack.c.b16 %v4753, %v4749
    %v5250 = vpack.c.b16 %v4754, %v4750
    %v5251 = vpack.c.b16 %v4755, %v4751
    %v5252 = vpack.c.b16 %v4756, %v4752
    %v5253 = vpack.c.b16 %v4761, %v4757
    %v5254 = vpack.c.b16 %v4762, %v4758
    %v5255 = vpack.c.b16 %v4763, %v4759
    %v5256 = vpack.c.b16 %v4764, %v4760
    %v5257 = vpack.c.b16 %v4769, %v4765
    %v5258 = vpack.c.b16 %v4770, %v4766
    %v5259 = vpack.c.b16 %v4771, %v4767
    %v5260 = vpack.c.b16 %v4772, %v4768
    %v5261 = vpack.c.b16 %v4777, %v4773
    %v5262 = vpack.c.b16 %v4778, %v4774
    %v5263 = vpack.c.b16 %v4779, %v4775
    %v5264 = vpack.c.b16 %v4780, %v4776
    %v5265 = vpack.c.b16 %v4785, %v4781
    %v5266 = vpack.c.b16 %v4786, %v4782
    %v5267 = vpack.c.b16 %v4787, %v4783
    %v5268 = vpack.c.b16 %v4788, %v4784
    %v5269 = vpack.c.b16 %v4793, %v4789
    %v5270 = vpack.c.b16 %v4794, %v4790
    %v5271 = vpack.c.b16 %v4795, %v4791
    %v5272 = vpack.c.b16 %v4796, %v4792
    %v5273 = vpack.c.b16 %v4801, %v4797
    %v5274 = vpack.c.b16 %v4802, %v4798
    %v5275 = vpack.c.b16 %v4803, %v4799
    %v5276 = vpack.c.b16 %v4804, %v4800
    %v5277 = vpack.c.b16 %v4809, %v4805
    %v5278 = vpack.c.b16 %v4810, %v4806
    %v5279 = vpack.c.b16 %v4811, %v4807
    %v5280 = vpack.c.b16 %v4812, %v4808
    %v5281 = vpack.c.b16 %v4817, %v4813
    %v5282 = vpack.c.b16 %v4818, %v4814
    %v5283 = vpack.c.b16 %v4819, %v4815
    %v5284 = vpack.c.b16 %v4820, %v4816
    %v5285 = vpack.c.b16 %v4825, %v4821
    %v5286 = vpack.c.b16 %v4826, %v4822
    %v5287 = vpack.c.b16 %v4827, %v4823
    %v5288 = vpack.c.b16 %v4828, %v4824
    %v5289 = vpack.c.b16 %v4833, %v4829
    %v5290 = vpack.c.b16 %v4834, %v4830
    %v5291 = vpack.c.b16 %v4835, %v4831
    %v5292 = vpack.c.b16 %v4836, %v4832
    %v5293 = vpack.c.b16 %v4841, %v4837
    %v5294 = vpack.c.b16 %v4842, %v4838
    %v5295 = vpack.c.b16 %v4843, %v4839
    %v5296 = vpack.c.b16 %v4844, %v4840
    %v5297 = vpack.c.b16 %v4849, %v4845
    %v5298 = vpack.c.b16 %v4850, %v4846
    %v5299 = vpack.c.b16 %v4851, %v4847
    %v5300 = vpack.c.b16 %v4852, %v4848
    %v5301 = vpack.c.b16 %v4857, %v4853
    %v5302 = vpack.c.b16 %v4858, %v4854
    %v5303 = vpack.c.b16 %v4859, %v4855
    %v5304 = vpack.c.b16 %v4860, %v4856
    %v5305 = vpack.c.b16 %v4865, %v4861
    %v5306 = vpack.c.b16 %v4866, %v4862
    %v5307 = vpack.c.b16 %v4867, %v4863
    %v5308 = vpack.c.b16 %v4868, %v4864
    %v5309 = vpack.c.b16 %v4873, %v4869
    %v5310 = vpack.c.b16 %v4874, %v4870
    %v5311 = vpack.c.b16 %v4875, %v4871
    %v5312 = vpack.c.b16 %v4876, %v4872
    %v5313 = vpack.c.b16 %v4881, %v4877
    %v5314 = vpack.c.b16 %v4882, %v4878
    %v5315 = vpack.c.b16 %v4883, %v4879
    %v5316 = vpack.c.b16 %v4884, %v4880
    %v5317 = vpack.c.b16 %v4889, %v4885
    %v5318 = vpack.c.b16 %v4890, %v4886
    %v5319 = vpack.c.b16 %v4891, %v4887
    %v5320 = vpack.c.b16 %v4892, %v4888
    %v5321 = vpack.c.b16 %v4897, %v4893
    %v5322 = vpack.c.b16 %v4898, %v4894
    %v5323 = vpack.c.b16 %v4899, %v4895
    %v5324 = vpack.c.b16 %v4900, %v4896
    %v5325 = vpack.c.b16 %v4905, %v4901
    %v5326 = vpack.c.b16 %v4906, %v4902
    %v5327 = vpack.c.b16 %v4907, %v4903
    %v5328 = vpack.c.b16 %v4908, %v4904
    %v5329 = vpack.c.b16 %v4913, %v4909
    %v5330 = vpack.c.b16 %v4914, %v4910
    %v5331 = vpack.c.b16 %v4915, %v4911
    %v5332 = vpack.c.b16 %v4916, %v4912
    %v5333 = vpack.c.b16 %v4921, %v4917
    %v5334 = vpack.c.b16 %v4922, %v4918
    %v5335 = vpack.c.b16 %v4923, %v4919
    %v5336 = vpack.c.b16 %v4924, %v4920
    %v5337 = vpack.c.b16 %v4929, %v4925
    %v5338 = vpack.c.b16 %v4930, %v4926
    %v5339 = vpack.c.b16 %v4931, %v4927
    %v5340 = vpack.c.b16 %v4932, %v4928
    %v5341 = vpack.c.b16 %v4937, %v4933
    %v5342 = vpack.c.b16 %v4938, %v4934
    %v5343 = vpack.c.b16 %v4939, %v4935
    %v5344 = vpack.c.b16 %v4940, %v4936
    %v5345 = vpack.c.b16 %v4945, %v4941
    %v5346 = vpack.c.b16 %v4946, %v4942
    %v5347 = vpack.c.b16 %v4947, %v4943
    %v5348 = vpack.c.b16 %v4948, %v4944
    %v5349 = vpack.c.b16 %v4953, %v4949
    %v5350 = vpack.c.b16 %v4954, %v4950
    %v5351 = vpack.c.b16 %v4955, %v4951
    %v5352 = vpack.c.b16 %v4956, %v4952
    %v5353 = vpack.c.b16 %v4961, %v4957
    %v5354 = vpack.c.b16 %v4962, %v4958
    %v5355 = vpack.c.b16 %v4963, %v4959
    %v5356 = vpack.c.b16 %v4964, %v4960
    %v5357 = vpack.c.b16 %v4969, %v4965
    %v5358 = vpack.c.b16 %v4970, %v4966
    %v5359 = vpack.c.b16 %v4971, %v4967
    %v5360 = vpack.c.b16 %v4972, %v4968
    %v5361 = vpack.c.b16 %v4977, %v4973
    %v5362 = vpack.c.b16 %v4978, %v4974
    %v5363 = vpack.c.b16 %v4979, %v4975
    %v5364 = vpack.c.b16 %v4980, %v4976
    %v5365 = vpack.c.b16 %v4985, %v4981
    %v5366 = vpack.c.b16 %v4986, %v4982
    %v5367 = vpack.c.b16 %v4987, %v4983
    %v5368 = vpack.c.b16 %v4988, %v4984
    %v5369 = vpack.c.b16 %v4993, %v4989
    %v5370 = vpack.c.b16 %v4994, %v4990
    %v5371 = vpack.c.b16 %v4995, %v4991
    %v5372 = vpack.c.b16 %v4996, %v4992
    %v5373 = vpack.c.b16 %v5001, %v4997
    %v5374 = vpack.c.b16 %v5002, %v4998
    %v5375 = vpack.c.b16 %v5003, %v4999
    %v5376 = vpack.c.b16 %v5004, %v5000
    %v5377 = vpack.c.b16 %v5009, %v5005
    %v5378 = vpack.c.b16 %v5010, %v5006
    %v5379 = vpack.c.b16 %v5011, %v5007
    %v5380 = vpack.c.b16 %v5012, %v5008
    %v5381 = vpack.c.b16 %v5017, %v5013
    %v5382 = vpack.c.b16 %v5018, %v5014
    %v5383 = vpack.c.b16 %v5019, %v5015
    %v5384 = vpack.c.b16 %v5020, %v5016
    %v5385 = vpack.c.b16 %v5025, %v5021
    %v5386 = vpack.c.b16 %v5026, %v5022
    %v5387 = vpack.c.b16 %v5027, %v5023
    %v5388 = vpack.c.b16 %v5028, %v5024
    %v5389 = vpack.c.b16 %v5033, %v5029
    %v5390 = vpack.c.b16 %v5034, %v5030
    %v5391 = vpack.c.b16 %v5035, %v5031
    %v5392 = vpack.c.b16 %v5036, %v5032
    %v5393 = vpack.c.b16 %v5041, %v5037
    %v5394 = vpack.c.b16 %v5042, %v5038
    %v5395 = vpack.c.b16 %v5043, %v5039
    %v5396 = vpack.c.b16 %v5044, %v5040
    %v5397 = vpack.c.b16 %v5049, %v5045
    %v5398 = vpack.c.b16 %v5050, %v5046
    %v5399 = vpack.c.b16 %v5051, %v5047
    %v5400 = vpack.c.b16 %v5052, %v5048
    %v5401 = vpack.c.b16 %v5057, %v5053
    %v5402 = vpack.c.b16 %v5058, %v5054
    %v5403 = vpack.c.b16 %v5059, %v5055
    %v5404 = vpack.c.b16 %v5060, %v5056
    %v5405 = vpack.c.b16 %v5065, %v5061
    %v5406 = vpack.c.b16 %v5066, %v5062
    %v5407 = vpack.c.b16 %v5067, %v5063
    %v5408 = vpack.c.b16 %v5068, %v5064
    %v5409 = vpack.c.b16 %v5073, %v5069
    %v5410 = vpack.c.b16 %v5074, %v5070
    %v5411 = vpack.c.b16 %v5075, %v5071
    %v5412 = vpack.c.b16 %v5076, %v5072
    %v5413 = vpack.c.b16 %v5081, %v5077
    %v5414 = vpack.c.b16 %v5082, %v5078
    %v5415 = vpack.c.b16 %v5083, %v5079
    %v5416 = vpack.c.b16 %v5084, %v5080
    %v5417 = vpack.c.b16 %v5089, %v5085
    %v5418 = vpack.c.b16 %v5090, %v5086
    %v5419 = vpack.c.b16 %v5091, %v5087
    %v5420 = vpack.c.b16 %v5092, %v5088
    %v5421 = vpack.c.b16 %v5097, %v5093
    %v5422 = vpack.c.b16 %v5098, %v5094
    %v5423 = vpack.c.b16 %v5099, %v5095
    %v5424 = vpack.c.b16 %v5100, %v5096
    %v5425 = vpack.c.b16 %v5105, %v5101
    %v5426 = vpack.c.b16 %v5106, %v5102
    %v5427 = vpack.c.b16 %v5107, %v5103
    %v5428 = vpack.c.b16 %v5108, %v5104
    %v5429 = vpack.c.b16 %v5113, %v5109
    %v5430 = vpack.c.b16 %v5114, %v5110
    %v5431 = vpack.c.b16 %v5115, %v5111
    %v5432 = vpack.c.b16 %v5116, %v5112
    %v5433 = vpack.c.b16 %v5121, %v5117
    %v5434 = vpack.c.b16 %v5122, %v5118
    %v5435 = vpack.c.b16 %v5123, %v5119
    %v5436 = vpack.c.b16 %v5124, %v5120
    %v5437 = vpack.c.b16 %v5129, %v5125
    %v5438 = vpack.c.b16 %v5130, %v5126
    %v5439 = vpack.c.b16 %v5131, %v5127
    %v5440 = vpack.c.b16 %v5132, %v5128
    %v5441 = vpack.c.b16 %v5137, %v5133
    %v5442 = vpack.c.b16 %v5138, %v5134
    %v5443 = vpack.c.b16 %v5139, %v5135
    %v5444 = vpack.c.b16 %v5140, %v5136
    %v5445 = vpack.c.b16 %v5145, %v5141
    %v5446 = vpack.c.b16 %v5146, %v5142
    %v5447 = vpack.c.b16 %v5147, %v5143
    %v5448 = vpack.c.b16 %v5148, %v5144
    %v5449 = vpack.c.b16 %v5153, %v5149
    %v5450 = vpack.c.b16 %v5154, %v5150
    %v5451 = vpack.c.b16 %v5155, %v5151
    %v5452 = vpack.c.b16 %v5156, %v5152
    %v5453 = vpack.c.b16 %v5161, %v5157
    %v5454 = vpack.c.b16 %v5162, %v5158
    %v5455 = vpack.c.b16 %v5163, %v5159
    %v5456 = vpack.c.b16 %v5164, %v5160
    %v5457 = vpack.c.b16 %v5169, %v5165
    %v5458 = vpack.c.b16 %v5170, %v5166
    %v5459 = vpack.c.b16 %v5171, %v5167
    %v5460 = vpack.c.b16 %v5172, %v5168
    %v5461 = vpack.c.b16 %v5177, %v5173
    %v5462 = vpack.c.b16 %v5178, %v5174
    %v5463 = vpack.c.b16 %v5179, %v5175
    %v5464 = vpack.c.b16 %v5180, %v5176
    %v5465 = vpack.c.b16 %v5185, %v5181
    %v5466 = vpack.c.b16 %v5186, %v5182
    %v5467 = vpack.c.b16 %v5187, %v5183
    %v5468 = vpack.c.b16 %v5188, %v5184
    %v5469 = vpack.c.b16 %v5193, %v5189
    %v5470 = vpack.c.b16 %v5194, %v5190
    %v5471 = vpack.c.b16 %v5195, %v5191
    %v5472 = vpack.c.b16 %v5196, %v5192
    %v5473 = vpack.c.b16 %v5201, %v5197
    %v5474 = vpack.c.b16 %v5202, %v5198
    %v5475 = vpack.c.b16 %v5203, %v5199
    %v5476 = vpack.c.b16 %v5204, %v5200
    %v5477 = vpack.c.b16 %v5209, %v5205
    %v5478 = vpack.c.b16 %v5210, %v5206
    %v5479 = vpack.c.b16 %v5211, %v5207
    %v5480 = vpack.c.b16 %v5212, %v5208
    %v5481 = vpack.c.b16 %v5217, %v5213
    %v5482 = vpack.c.b16 %v5218, %v5214
    %v5483 = vpack.c.b16 %v5219, %v5215
    %v5484 = vpack.c.b16 %v5220, %v5216
    %v5485 = vpack.c.b16 %v5225, %v5221
    %v5486 = vpack.c.b16 %v5226, %v5222
    %v5487 = vpack.c.b16 %v5227, %v5223
    %v5488 = vpack.c.b16 %v5228, %v5224
    %v5489 = vpack.c.b16 %v5233, %v5229
    %v5490 = vpack.c.b16 %v5234, %v5230
    %v5491 = vpack.c.b16 %v5235, %v5231
    %v5492 = vpack.c.b16 %v5236, %v5232
    %5749 = vmatpush.bf16.msra.mxu0 %v5265
    %5750 = vmatpush.bf16.msra.mxu0 %v5261
    %5751 = vmatpush.bf16.msra.mxu0 %v5257
    %5752 = vmatpush.bf16.msra.mxu0 %v5253
    %5753 = vmatpush.bf16.msra.mxu0 %v5249
    %5754 = vmatpush.bf16.msra.mxu0 %v5245
    %5755 = vmatpush.bf16.msra.mxu0 %v5241
    %5756 = vmatpush.bf16.msra.mxu0 %v5237
    %5757 = vmatmul.bf16.gmra.mxu0 %v4195
    %v5758 = vpop.f32.mrf.mxu0
    %v5759 = vadd.f32 %v4461, %v5758
    %v5760 = vpop.f32.mrf.mxu0
    %5761 = vdwg.mxu0
    %5762 = vmatpush.bf16.msra.mxu0 %v5297
    %5763 = vmatpush.bf16.msra.mxu0 %v5293
    %5764 = vmatpush.bf16.msra.mxu0 %v5289
    %5765 = vmatpush.bf16.msra.mxu0 %v5285
    %5766 = vmatpush.bf16.msra.mxu0 %v5281
    %5767 = vmatpush.bf16.msra.mxu0 %v5277
    %5768 = vmatpush.bf16.msra.mxu0 %v5273
    %5769 = vmatpush.bf16.msra.mxu0 %v5269
    %5770 = vmatmul.bf16.gmra.mxu0 %v4196
    %v5771 = vpop.f32.mrf.mxu0
    %v5772 = vadd.f32 %v5759, %v5771
    %v5773 = vpop.f32.mrf.mxu0
    %5774 = vdwg.mxu0
    %5775 = vmatpush.bf16.msra.mxu0 %v5329
    %5776 = vmatpush.bf16.msra.mxu0 %v5325
    %5777 = vmatpush.bf16.msra.mxu0 %v5321
    %5778 = vmatpush.bf16.msra.mxu0 %v5317
    %5779 = vmatpush.bf16.msra.mxu0 %v5313
    %5780 = vmatpush.bf16.msra.mxu0 %v5309
    %5781 = vmatpush.bf16.msra.mxu0 %v5305
    %5782 = vmatpush.bf16.msra.mxu0 %v5301
    %5783 = vmatmul.bf16.gmra.mxu0 %v4197
    %v5784 = vpop.f32.mrf.mxu0
    %v5785 = vadd.f32 %v5772, %v5784
    %v5786 = vpop.f32.mrf.mxu0
    %5787 = vdwg.mxu0
    %5788 = vmatpush.bf16.msra.mxu0 %v5361
    %5789 = vmatpush.bf16.msra.mxu0 %v5357
    %5790 = vmatpush.bf16.msra.mxu0 %v5353
    %5791 = vmatpush.bf16.msra.mxu0 %v5349
    %5792 = vmatpush.bf16.msra.mxu0 %v5345
    %5793 = vmatpush.bf16.msra.mxu0 %v5341
    %5794 = vmatpush.bf16.msra.mxu0 %v5337
    %5795 = vmatpush.bf16.msra.mxu0 %v5333
    %5796 = vmatmul.bf16.gmra.mxu0 %v4198
    %v5797 = vpop.f32.mrf.mxu0
    %v5798 = vadd.f32 %v5785, %v5797
    %v5799 = vpop.f32.mrf.mxu0
    %5800 = vdwg.mxu0
    %5801 = vmatpush.bf16.msra.mxu0 %v5393
    %5802 = vmatpush.bf16.msra.mxu0 %v5389
    %5803 = vmatpush.bf16.msra.mxu0 %v5385
    %5804 = vmatpush.bf16.msra.mxu0 %v5381
    %5805 = vmatpush.bf16.msra.mxu0 %v5377
    %5806 = vmatpush.bf16.msra.mxu0 %v5373
    %5807 = vmatpush.bf16.msra.mxu0 %v5369
    %5808 = vmatpush.bf16.msra.mxu0 %v5365
    %5809 = vmatmul.bf16.gmra.mxu0 %v4199
    %v5810 = vpop.f32.mrf.mxu0
    %v5811 = vadd.f32 %v5798, %v5810
    %v5812 = vpop.f32.mrf.mxu0
    %5813 = vdwg.mxu0
    %5814 = vmatpush.bf16.msra.mxu0 %v5425
    %5815 = vmatpush.bf16.msra.mxu0 %v5421
    %5816 = vmatpush.bf16.msra.mxu0 %v5417
    %5817 = vmatpush.bf16.msra.mxu0 %v5413
    %5818 = vmatpush.bf16.msra.mxu0 %v5409
    %5819 = vmatpush.bf16.msra.mxu0 %v5405
    %5820 = vmatpush.bf16.msra.mxu0 %v5401
    %5821 = vmatpush.bf16.msra.mxu0 %v5397
    %5822 = vmatmul.bf16.gmra.mxu0 %v4200
    %v5823 = vpop.f32.mrf.mxu0
    %v5824 = vadd.f32 %v5811, %v5823
    %v5825 = vpop.f32.mrf.mxu0
    %5826 = vdwg.mxu0
    %5827 = vmatpush.bf16.msra.mxu0 %v5457
    %5828 = vmatpush.bf16.msra.mxu0 %v5453
    %5829 = vmatpush.bf16.msra.mxu0 %v5449
    %5830 = vmatpush.bf16.msra.mxu0 %v5445
    %5831 = vmatpush.bf16.msra.mxu0 %v5441
    %5832 = vmatpush.bf16.msra.mxu0 %v5437
    %5833 = vmatpush.bf16.msra.mxu0 %v5433
    %5834 = vmatpush.bf16.msra.mxu0 %v5429
    %5835 = vmatmul.bf16.gmra.mxu0 %v4201
    %v5836 = vpop.f32.mrf.mxu0
    %v5837 = vadd.f32 %v5824, %v5836
    %v5838 = vpop.f32.mrf.mxu0
    %5839 = vdwg.mxu0
    %5840 = vmatpush.bf16.msra.mxu0 %v5489
    %5841 = vmatpush.bf16.msra.mxu0 %v5485
    %5842 = vmatpush.bf16.msra.mxu0 %v5481
    %5843 = vmatpush.bf16.msra.mxu0 %v5477
    %5844 = vmatpush.bf16.msra.mxu0 %v5473
    %5845 = vmatpush.bf16.msra.mxu0 %v5469
    %5846 = vmatpush.bf16.msra.mxu0 %v5465
    %5847 = vmatpush.bf16.msra.mxu0 %v5461
    %5848 = vmatmul.bf16.gmra.mxu0 %v4202
    %v5849 = vpop.f32.mrf.mxu0
    %v5850 = vadd.f32 %v5837, %v5849
    %v5851 = vpop.f32.mrf.mxu0
    %5852 = vdwg.mxu0
    %5853 = vmatpush.bf16.msra.mxu0 %v5266
    %5854 = vmatpush.bf16.msra.mxu0 %v5262
    %5855 = vmatpush.bf16.msra.mxu0 %v5258
    %5856 = vmatpush.bf16.msra.mxu0 %v5254
    %5857 = vmatpush.bf16.msra.mxu0 %v5250
    %5858 = vmatpush.bf16.msra.mxu0 %v5246
    %5859 = vmatpush.bf16.msra.mxu0 %v5242
    %5860 = vmatpush.bf16.msra.mxu0 %v5238
    %5861 = vmatmul.bf16.gmra.mxu0 %v4195
    %v5862 = vpop.f32.mrf.mxu0
    %v5863 = vadd.f32 %v4462, %v5862
    %v5864 = vpop.f32.mrf.mxu0
    %5865 = vdwg.mxu0
    %5866 = vmatpush.bf16.msra.mxu0 %v5298
    %5867 = vmatpush.bf16.msra.mxu0 %v5294
    %5868 = vmatpush.bf16.msra.mxu0 %v5290
    %5869 = vmatpush.bf16.msra.mxu0 %v5286
    %5870 = vmatpush.bf16.msra.mxu0 %v5282
    %5871 = vmatpush.bf16.msra.mxu0 %v5278
    %5872 = vmatpush.bf16.msra.mxu0 %v5274
    %5873 = vmatpush.bf16.msra.mxu0 %v5270
    %5874 = vmatmul.bf16.gmra.mxu0 %v4196
    %v5875 = vpop.f32.mrf.mxu0
    %v5876 = vadd.f32 %v5863, %v5875
    %v5877 = vpop.f32.mrf.mxu0
    %5878 = vdwg.mxu0
    %5879 = vmatpush.bf16.msra.mxu0 %v5330
    %5880 = vmatpush.bf16.msra.mxu0 %v5326
    %5881 = vmatpush.bf16.msra.mxu0 %v5322
    %5882 = vmatpush.bf16.msra.mxu0 %v5318
    %5883 = vmatpush.bf16.msra.mxu0 %v5314
    %5884 = vmatpush.bf16.msra.mxu0 %v5310
    %5885 = vmatpush.bf16.msra.mxu0 %v5306
    %5886 = vmatpush.bf16.msra.mxu0 %v5302
    %5887 = vmatmul.bf16.gmra.mxu0 %v4197
    %v5888 = vpop.f32.mrf.mxu0
    %v5889 = vadd.f32 %v5876, %v5888
    %v5890 = vpop.f32.mrf.mxu0
    %5891 = vdwg.mxu0
    %5892 = vmatpush.bf16.msra.mxu0 %v5362
    %5893 = vmatpush.bf16.msra.mxu0 %v5358
    %5894 = vmatpush.bf16.msra.mxu0 %v5354
    %5895 = vmatpush.bf16.msra.mxu0 %v5350
    %5896 = vmatpush.bf16.msra.mxu0 %v5346
    %5897 = vmatpush.bf16.msra.mxu0 %v5342
    %5898 = vmatpush.bf16.msra.mxu0 %v5338
    %5899 = vmatpush.bf16.msra.mxu0 %v5334
    %5900 = vmatmul.bf16.gmra.mxu0 %v4198
    %v5901 = vpop.f32.mrf.mxu0
    %v5902 = vadd.f32 %v5889, %v5901
    %v5903 = vpop.f32.mrf.mxu0
    %5904 = vdwg.mxu0
    %5905 = vmatpush.bf16.msra.mxu0 %v5394
    %5906 = vmatpush.bf16.msra.mxu0 %v5390
    %5907 = vmatpush.bf16.msra.mxu0 %v5386
    %5908 = vmatpush.bf16.msra.mxu0 %v5382
    %5909 = vmatpush.bf16.msra.mxu0 %v5378
    %5910 = vmatpush.bf16.msra.mxu0 %v5374
    %5911 = vmatpush.bf16.msra.mxu0 %v5370
    %5912 = vmatpush.bf16.msra.mxu0 %v5366
    %5913 = vmatmul.bf16.gmra.mxu0 %v4199
    %v5914 = vpop.f32.mrf.mxu0
    %v5915 = vadd.f32 %v5902, %v5914
    %v5916 = vpop.f32.mrf.mxu0
    %5917 = vdwg.mxu0
    %5918 = vmatpush.bf16.msra.mxu0 %v5426
    %5919 = vmatpush.bf16.msra.mxu0 %v5422
    %5920 = vmatpush.bf16.msra.mxu0 %v5418
    %5921 = vmatpush.bf16.msra.mxu0 %v5414
    %5922 = vmatpush.bf16.msra.mxu0 %v5410
    %5923 = vmatpush.bf16.msra.mxu0 %v5406
    %5924 = vmatpush.bf16.msra.mxu0 %v5402
    %5925 = vmatpush.bf16.msra.mxu0 %v5398
    %5926 = vmatmul.bf16.gmra.mxu0 %v4200
    %v5927 = vpop.f32.mrf.mxu0
    %v5928 = vadd.f32 %v5915, %v5927
    %v5929 = vpop.f32.mrf.mxu0
    %5930 = vdwg.mxu0
    %5931 = vmatpush.bf16.msra.mxu0 %v5458
    %5932 = vmatpush.bf16.msra.mxu0 %v5454
    %5933 = vmatpush.bf16.msra.mxu0 %v5450
    %5934 = vmatpush.bf16.msra.mxu0 %v5446
    %5935 = vmatpush.bf16.msra.mxu0 %v5442
    %5936 = vmatpush.bf16.msra.mxu0 %v5438
    %5937 = vmatpush.bf16.msra.mxu0 %v5434
    %5938 = vmatpush.bf16.msra.mxu0 %v5430
    %5939 = vmatmul.bf16.gmra.mxu0 %v4201
    %v5940 = vpop.f32.mrf.mxu0
    %v5941 = vadd.f32 %v5928, %v5940
    %v5942 = vpop.f32.mrf.mxu0
    %5943 = vdwg.mxu0
    %5944 = vmatpush.bf16.msra.mxu0 %v5490
    %5945 = vmatpush.bf16.msra.mxu0 %v5486
    %5946 = vmatpush.bf16.msra.mxu0 %v5482
    %5947 = vmatpush.bf16.msra.mxu0 %v5478
    %5948 = vmatpush.bf16.msra.mxu0 %v5474
    %5949 = vmatpush.bf16.msra.mxu0 %v5470
    %5950 = vmatpush.bf16.msra.mxu0 %v5466
    %5951 = vmatpush.bf16.msra.mxu0 %v5462
    %5952 = vmatmul.bf16.gmra.mxu0 %v4202
    %v5953 = vpop.f32.mrf.mxu0
    %v5954 = vadd.f32 %v5941, %v5953
    %v5955 = vpop.f32.mrf.mxu0
    %5956 = vdwg.mxu0
    %5957 = vmatpush.bf16.msra.mxu0 %v5267
    %5958 = vmatpush.bf16.msra.mxu0 %v5263
    %5959 = vmatpush.bf16.msra.mxu0 %v5259
    %5960 = vmatpush.bf16.msra.mxu0 %v5255
    %5961 = vmatpush.bf16.msra.mxu0 %v5251
    %5962 = vmatpush.bf16.msra.mxu0 %v5247
    %5963 = vmatpush.bf16.msra.mxu0 %v5243
    %5964 = vmatpush.bf16.msra.mxu0 %v5239
    %5965 = vmatmul.bf16.gmra.mxu0 %v4195
    %v5966 = vpop.f32.mrf.mxu0
    %v5967 = vadd.f32 %v4463, %v5966
    %v5968 = vpop.f32.mrf.mxu0
    %5969 = vdwg.mxu0
    %5970 = vmatpush.bf16.msra.mxu0 %v5299
    %5971 = vmatpush.bf16.msra.mxu0 %v5295
    %5972 = vmatpush.bf16.msra.mxu0 %v5291
    %5973 = vmatpush.bf16.msra.mxu0 %v5287
    %5974 = vmatpush.bf16.msra.mxu0 %v5283
    %5975 = vmatpush.bf16.msra.mxu0 %v5279
    %5976 = vmatpush.bf16.msra.mxu0 %v5275
    %5977 = vmatpush.bf16.msra.mxu0 %v5271
    %5978 = vmatmul.bf16.gmra.mxu0 %v4196
    %v5979 = vpop.f32.mrf.mxu0
    %v5980 = vadd.f32 %v5967, %v5979
    %v5981 = vpop.f32.mrf.mxu0
    %5982 = vdwg.mxu0
    %5983 = vmatpush.bf16.msra.mxu0 %v5331
    %5984 = vmatpush.bf16.msra.mxu0 %v5327
    %5985 = vmatpush.bf16.msra.mxu0 %v5323
    %5986 = vmatpush.bf16.msra.mxu0 %v5319
    %5987 = vmatpush.bf16.msra.mxu0 %v5315
    %5988 = vmatpush.bf16.msra.mxu0 %v5311
    %5989 = vmatpush.bf16.msra.mxu0 %v5307
    %5990 = vmatpush.bf16.msra.mxu0 %v5303
    %5991 = vmatmul.bf16.gmra.mxu0 %v4197
    %v5992 = vpop.f32.mrf.mxu0
    %v5993 = vadd.f32 %v5980, %v5992
    %v5994 = vpop.f32.mrf.mxu0
    %5995 = vdwg.mxu0
    %5996 = vmatpush.bf16.msra.mxu0 %v5363
    %5997 = vmatpush.bf16.msra.mxu0 %v5359
    %5998 = vmatpush.bf16.msra.mxu0 %v5355
    %5999 = vmatpush.bf16.msra.mxu0 %v5351
    %6000 = vmatpush.bf16.msra.mxu0 %v5347
    %6001 = vmatpush.bf16.msra.mxu0 %v5343
    %6002 = vmatpush.bf16.msra.mxu0 %v5339
    %6003 = vmatpush.bf16.msra.mxu0 %v5335
    %6004 = vmatmul.bf16.gmra.mxu0 %v4198
    %v6005 = vpop.f32.mrf.mxu0
    %v6006 = vadd.f32 %v5993, %v6005
    %v6007 = vpop.f32.mrf.mxu0
    %6008 = vdwg.mxu0
    %6009 = vmatpush.bf16.msra.mxu0 %v5395
    %6010 = vmatpush.bf16.msra.mxu0 %v5391
    %6011 = vmatpush.bf16.msra.mxu0 %v5387
    %6012 = vmatpush.bf16.msra.mxu0 %v5383
    %6013 = vmatpush.bf16.msra.mxu0 %v5379
    %6014 = vmatpush.bf16.msra.mxu0 %v5375
    %6015 = vmatpush.bf16.msra.mxu0 %v5371
    %6016 = vmatpush.bf16.msra.mxu0 %v5367
    %6017 = vmatmul.bf16.gmra.mxu0 %v4199
    %v6018 = vpop.f32.mrf.mxu0
    %v6019 = vadd.f32 %v6006, %v6018
    %v6020 = vpop.f32.mrf.mxu0
    %6021 = vdwg.mxu0
    %6022 = vmatpush.bf16.msra.mxu0 %v5427
    %6023 = vmatpush.bf16.msra.mxu0 %v5423
    %6024 = vmatpush.bf16.msra.mxu0 %v5419
    %6025 = vmatpush.bf16.msra.mxu0 %v5415
    %6026 = vmatpush.bf16.msra.mxu0 %v5411
    %6027 = vmatpush.bf16.msra.mxu0 %v5407
    %6028 = vmatpush.bf16.msra.mxu0 %v5403
    %6029 = vmatpush.bf16.msra.mxu0 %v5399
    %6030 = vmatmul.bf16.gmra.mxu0 %v4200
    %v6031 = vpop.f32.mrf.mxu0
    %v6032 = vadd.f32 %v6019, %v6031
    %v6033 = vpop.f32.mrf.mxu0
    %6034 = vdwg.mxu0
    %6035 = vmatpush.bf16.msra.mxu0 %v5459
    %6036 = vmatpush.bf16.msra.mxu0 %v5455
    %6037 = vmatpush.bf16.msra.mxu0 %v5451
    %6038 = vmatpush.bf16.msra.mxu0 %v5447
    %6039 = vmatpush.bf16.msra.mxu0 %v5443
    %6040 = vmatpush.bf16.msra.mxu0 %v5439
    %6041 = vmatpush.bf16.msra.mxu0 %v5435
    %6042 = vmatpush.bf16.msra.mxu0 %v5431
    %6043 = vmatmul.bf16.gmra.mxu0 %v4201
    %v6044 = vpop.f32.mrf.mxu0
    %v6045 = vadd.f32 %v6032, %v6044
    %v6046 = vpop.f32.mrf.mxu0
    %6047 = vdwg.mxu0
    %6048 = vmatpush.bf16.msra.mxu0 %v5491
    %6049 = vmatpush.bf16.msra.mxu0 %v5487
    %6050 = vmatpush.bf16.msra.mxu0 %v5483
    %6051 = vmatpush.bf16.msra.mxu0 %v5479
    %6052 = vmatpush.bf16.msra.mxu0 %v5475
    %6053 = vmatpush.bf16.msra.mxu0 %v5471
    %6054 = vmatpush.bf16.msra.mxu0 %v5467
    %6055 = vmatpush.bf16.msra.mxu0 %v5463
    %6056 = vmatmul.bf16.gmra.mxu0 %v4202
    %v6057 = vpop.f32.mrf.mxu0
    %v6058 = vadd.f32 %v6045, %v6057
    %v6059 = vpop.f32.mrf.mxu0
    %6060 = vdwg.mxu0
    %6061 = vmatpush.bf16.msra.mxu0 %v5268
    %6062 = vmatpush.bf16.msra.mxu0 %v5264
    %6063 = vmatpush.bf16.msra.mxu0 %v5260
    %6064 = vmatpush.bf16.msra.mxu0 %v5256
    %6065 = vmatpush.bf16.msra.mxu0 %v5252
    %6066 = vmatpush.bf16.msra.mxu0 %v5248
    %6067 = vmatpush.bf16.msra.mxu0 %v5244
    %6068 = vmatpush.bf16.msra.mxu0 %v5240
    %6069 = vmatmul.bf16.gmra.mxu0 %v4195
    %v6070 = vpop.f32.mrf.mxu0
    %v6071 = vadd.f32 %v4464, %v6070
    %v6072 = vpop.f32.mrf.mxu0
    %6073 = vdwg.mxu0
    %6074 = vmatpush.bf16.msra.mxu0 %v5300
    %6075 = vmatpush.bf16.msra.mxu0 %v5296
    %6076 = vmatpush.bf16.msra.mxu0 %v5292
    %6077 = vmatpush.bf16.msra.mxu0 %v5288
    %6078 = vmatpush.bf16.msra.mxu0 %v5284
    %6079 = vmatpush.bf16.msra.mxu0 %v5280
    %6080 = vmatpush.bf16.msra.mxu0 %v5276
    %6081 = vmatpush.bf16.msra.mxu0 %v5272
    %6082 = vmatmul.bf16.gmra.mxu0 %v4196
    %v6083 = vpop.f32.mrf.mxu0
    %v6084 = vadd.f32 %v6071, %v6083
    %v6085 = vpop.f32.mrf.mxu0
    %6086 = vdwg.mxu0
    %6087 = vmatpush.bf16.msra.mxu0 %v5332
    %6088 = vmatpush.bf16.msra.mxu0 %v5328
    %6089 = vmatpush.bf16.msra.mxu0 %v5324
    %6090 = vmatpush.bf16.msra.mxu0 %v5320
    %6091 = vmatpush.bf16.msra.mxu0 %v5316
    %6092 = vmatpush.bf16.msra.mxu0 %v5312
    %6093 = vmatpush.bf16.msra.mxu0 %v5308
    %6094 = vmatpush.bf16.msra.mxu0 %v5304
    %6095 = vmatmul.bf16.gmra.mxu0 %v4197
    %v6096 = vpop.f32.mrf.mxu0
    %v6097 = vadd.f32 %v6084, %v6096
    %v6098 = vpop.f32.mrf.mxu0
    %6099 = vdwg.mxu0
    %6100 = vmatpush.bf16.msra.mxu0 %v5364
    %6101 = vmatpush.bf16.msra.mxu0 %v5360
    %6102 = vmatpush.bf16.msra.mxu0 %v5356
    %6103 = vmatpush.bf16.msra.mxu0 %v5352
    %6104 = vmatpush.bf16.msra.mxu0 %v5348
    %6105 = vmatpush.bf16.msra.mxu0 %v5344
    %6106 = vmatpush.bf16.msra.mxu0 %v5340
    %6107 = vmatpush.bf16.msra.mxu0 %v5336
    %6108 = vmatmul.bf16.gmra.mxu0 %v4198
    %v6109 = vpop.f32.mrf.mxu0
    %v6110 = vadd.f32 %v6097, %v6109
    %v6111 = vpop.f32.mrf.mxu0
    %6112 = vdwg.mxu0
    %6113 = vmatpush.bf16.msra.mxu0 %v5396
    %6114 = vmatpush.bf16.msra.mxu0 %v5392
    %6115 = vmatpush.bf16.msra.mxu0 %v5388
    %6116 = vmatpush.bf16.msra.mxu0 %v5384
    %6117 = vmatpush.bf16.msra.mxu0 %v5380
    %6118 = vmatpush.bf16.msra.mxu0 %v5376
    %6119 = vmatpush.bf16.msra.mxu0 %v5372
    %6120 = vmatpush.bf16.msra.mxu0 %v5368
    %6121 = vmatmul.bf16.gmra.mxu0 %v4199
    %v6122 = vpop.f32.mrf.mxu0
    %v6123 = vadd.f32 %v6110, %v6122
    %v6124 = vpop.f32.mrf.mxu0
    %6125 = vdwg.mxu0
    %6126 = vmatpush.bf16.msra.mxu0 %v5428
    %6127 = vmatpush.bf16.msra.mxu0 %v5424
    %6128 = vmatpush.bf16.msra.mxu0 %v5420
    %6129 = vmatpush.bf16.msra.mxu0 %v5416
    %6130 = vmatpush.bf16.msra.mxu0 %v5412
    %6131 = vmatpush.bf16.msra.mxu0 %v5408
    %6132 = vmatpush.bf16.msra.mxu0 %v5404
    %6133 = vmatpush.bf16.msra.mxu0 %v5400
    %6134 = vmatmul.bf16.gmra.mxu0 %v4200
    %v6135 = vpop.f32.mrf.mxu0
    %v6136 = vadd.f32 %v6123, %v6135
    %v6137 = vpop.f32.mrf.mxu0
    %6138 = vdwg.mxu0
    %6139 = vmatpush.bf16.msra.mxu0 %v5460
    %6140 = vmatpush.bf16.msra.mxu0 %v5456
    %6141 = vmatpush.bf16.msra.mxu0 %v5452
    %6142 = vmatpush.bf16.msra.mxu0 %v5448
    %6143 = vmatpush.bf16.msra.mxu0 %v5444
    %6144 = vmatpush.bf16.msra.mxu0 %v5440
    %6145 = vmatpush.bf16.msra.mxu0 %v5436
    %6146 = vmatpush.bf16.msra.mxu0 %v5432
    %6147 = vmatmul.bf16.gmra.mxu0 %v4201
    %v6148 = vpop.f32.mrf.mxu0
    %v6149 = vadd.f32 %v6136, %v6148
    %v6150 = vpop.f32.mrf.mxu0
    %6151 = vdwg.mxu0
    %6152 = vmatpush.bf16.msra.mxu0 %v5492
    %6153 = vmatpush.bf16.msra.mxu0 %v5488
    %6154 = vmatpush.bf16.msra.mxu0 %v5484
    %6155 = vmatpush.bf16.msra.mxu0 %v5480
    %6156 = vmatpush.bf16.msra.mxu0 %v5476
    %6157 = vmatpush.bf16.msra.mxu0 %v5472
    %6158 = vmatpush.bf16.msra.mxu0 %v5468
    %6159 = vmatpush.bf16.msra.mxu0 %v5464
    %6160 = vmatmul.bf16.gmra.mxu0 %v4202
    %v6161 = vpop.f32.mrf.mxu0
    %v6162 = vadd.f32 %v6149, %v6161
    %v6163 = vpop.f32.mrf.mxu0
    %6164 = vdwg.mxu0
    %v6165 = vmax.f32 %v5850, 0.0
    %v6166 = vmax.f32 %v5954, 0.0
    %v6167 = vmax.f32 %v6058, 0.0
    %v6168 = vmax.f32 %v6162, 0.0
    %v6169 = vpack.c.bf16 %v6165, %v6165
    %v6170 = vpack.c.bf16 %v6166, %v6166
    %v6171 = vpack.c.bf16 %v6167, %v6167
    %v6172 = vpack.c.bf16 %v6168, %v6168
    %v6173 = vld [vmem:[#allocation11] sm:$0xff]
    %v6174 = vld [vmem:[#allocation11 + $0x8] sm:$0xff]
    %v6175 = vld [vmem:[#allocation11 + $0x10] sm:$0xff]
    %v6176 = vld [vmem:[#allocation11 + $0x18] sm:$0xff]
    %v6177 = vld [vmem:[#allocation11 + $0x20] sm:$0xff]
    %v6178 = vld [vmem:[#allocation11 + $0x28] sm:$0xff]
    %v6179 = vld [vmem:[#allocation11 + $0x30] sm:$0xff]
    %v6180 = vld [vmem:[#allocation11 + $0x38] sm:$0xff]
    %v6181 = vld [vmem:[#allocation11 + $0x40] sm:$0xff]
    %v6182 = vld [vmem:[#allocation11 + $0x48] sm:$0xff]
    %v6183 = vld [vmem:[#allocation11 + $0x50] sm:$0xff]
    %v6184 = vld [vmem:[#allocation11 + $0x58] sm:$0xff]
    %v6185 = vld [vmem:[#allocation11 + $0x60] sm:$0xff]
    %v6186 = vld [vmem:[#allocation11 + $0x68] sm:$0xff]
    %v6187 = vld [vmem:[#allocation11 + $0x70] sm:$0xff]
    %v6188 = vld [vmem:[#allocation11 + $0x78] sm:$0xff]
    %v6189 = vld [vmem:[#allocation11 + $0x80] sm:$0xff]
    %v6190 = vld [vmem:[#allocation11 + $0x88] sm:$0xff]
    %v6191 = vld [vmem:[#allocation11 + $0x90] sm:$0xff]
    %v6192 = vld [vmem:[#allocation11 + $0x98] sm:$0xff]
    %v6193 = vld [vmem:[#allocation11 + $0xa0] sm:$0xff]
    %v6194 = vld [vmem:[#allocation11 + $0xa8] sm:$0xff]
    %v6195 = vld [vmem:[#allocation11 + $0xb0] sm:$0xff]
    %v6196 = vld [vmem:[#allocation11 + $0xb8] sm:$0xff]
    %v6197 = vld [vmem:[#allocation11 + $0xc0] sm:$0xff]
    %v6198 = vld [vmem:[#allocation11 + $0xc8] sm:$0xff]
    %v6199 = vld [vmem:[#allocation11 + $0xd0] sm:$0xff]
    %v6200 = vld [vmem:[#allocation11 + $0xd8] sm:$0xff]
    %v6201 = vld [vmem:[#allocation11 + $0xe0] sm:$0xff]
    %v6202 = vld [vmem:[#allocation11 + $0xe8] sm:$0xff]
    %v6203 = vld [vmem:[#allocation11 + $0xf0] sm:$0xff]
    %v6204 = vld [vmem:[#allocation11 + $0xf8] sm:$0xff]
    %v6205 = vld [vmem:[#allocation11 + $0x100] sm:$0xff]
    %v6206 = vld [vmem:[#allocation11 + $0x108] sm:$0xff]
    %v6207 = vld [vmem:[#allocation11 + $0x110] sm:$0xff]
    %v6208 = vld [vmem:[#allocation11 + $0x118] sm:$0xff]
    %v6209 = vld [vmem:[#allocation11 + $0x120] sm:$0xff]
    %v6210 = vld [vmem:[#allocation11 + $0x128] sm:$0xff]
    %v6211 = vld [vmem:[#allocation11 + $0x130] sm:$0xff]
    %v6212 = vld [vmem:[#allocation11 + $0x138] sm:$0xff]
    %v6213 = vld [vmem:[#allocation11 + $0x140] sm:$0xff]
    %v6214 = vld [vmem:[#allocation11 + $0x148] sm:$0xff]
    %v6215 = vld [vmem:[#allocation11 + $0x150] sm:$0xff]
    %v6216 = vld [vmem:[#allocation11 + $0x158] sm:$0xff]
    %v6217 = vld [vmem:[#allocation11 + $0x160] sm:$0xff]
    %v6218 = vld [vmem:[#allocation11 + $0x168] sm:$0xff]
    %v6219 = vld [vmem:[#allocation11 + $0x170] sm:$0xff]
    %v6220 = vld [vmem:[#allocation11 + $0x178] sm:$0xff]
    %v6221 = vld [vmem:[#allocation11 + $0x180] sm:$0xff]
    %v6222 = vld [vmem:[#allocation11 + $0x188] sm:$0xff]
    %v6223 = vld [vmem:[#allocation11 + $0x190] sm:$0xff]
    %v6224 = vld [vmem:[#allocation11 + $0x198] sm:$0xff]
    %v6225 = vld [vmem:[#allocation11 + $0x1a0] sm:$0xff]
    %v6226 = vld [vmem:[#allocation11 + $0x1a8] sm:$0xff]
    %v6227 = vld [vmem:[#allocation11 + $0x1b0] sm:$0xff]
    %v6228 = vld [vmem:[#allocation11 + $0x1b8] sm:$0xff]
    %v6229 = vld [vmem:[#allocation11 + $0x1c0] sm:$0xff]
    %v6230 = vld [vmem:[#allocation11 + $0x1c8] sm:$0xff]
    %v6231 = vld [vmem:[#allocation11 + $0x1d0] sm:$0xff]
    %v6232 = vld [vmem:[#allocation11 + $0x1d8] sm:$0xff]
    %v6233 = vld [vmem:[#allocation11 + $0x1e0] sm:$0xff]
    %v6234 = vld [vmem:[#allocation11 + $0x1e8] sm:$0xff]
    %v6235 = vld [vmem:[#allocation11 + $0x1f0] sm:$0xff]
    %v6236 = vld [vmem:[#allocation11 + $0x1f8] sm:$0xff]
    %v6237 = vld [vmem:[#allocation13] sm:$0x3]
    %v6239 = vperm.slane %v6237, 0
    %v6240 = vperm.slane %v6237, 1
    %v6307 = vunpack.c.l.b16 %v6173
    %v6308 = vunpack.c.h.b16 %v6173
    %v6309 = vunpack.c.l.b16 %v6174
    %v6310 = vunpack.c.h.b16 %v6174
    %v6311 = vunpack.c.l.b16 %v6175
    %v6312 = vunpack.c.h.b16 %v6175
    %v6313 = vunpack.c.l.b16 %v6176
    %v6314 = vunpack.c.h.b16 %v6176
    %v6315 = vunpack.c.l.b16 %v6177
    %v6316 = vunpack.c.h.b16 %v6177
    %v6317 = vunpack.c.l.b16 %v6178
    %v6318 = vunpack.c.h.b16 %v6178
    %v6319 = vunpack.c.l.b16 %v6179
    %v6320 = vunpack.c.h.b16 %v6179
    %v6321 = vunpack.c.l.b16 %v6180
    %v6322 = vunpack.c.h.b16 %v6180
    %v6323 = vunpack.c.l.b16 %v6181
    %v6324 = vunpack.c.h.b16 %v6181
    %v6325 = vunpack.c.l.b16 %v6182
    %v6326 = vunpack.c.h.b16 %v6182
    %v6327 = vunpack.c.l.b16 %v6183
    %v6328 = vunpack.c.h.b16 %v6183
    %v6329 = vunpack.c.l.b16 %v6184
    %v6330 = vunpack.c.h.b16 %v6184
    %v6331 = vunpack.c.l.b16 %v6185
    %v6332 = vunpack.c.h.b16 %v6185
    %v6333 = vunpack.c.l.b16 %v6186
    %v6334 = vunpack.c.h.b16 %v6186
    %v6335 = vunpack.c.l.b16 %v6187
    %v6336 = vunpack.c.h.b16 %v6187
    %v6337 = vunpack.c.l.b16 %v6188
    %v6338 = vunpack.c.h.b16 %v6188
    %v6339 = vunpack.c.l.b16 %v6189
    %v6340 = vunpack.c.h.b16 %v6189
    %v6341 = vunpack.c.l.b16 %v6190
    %v6342 = vunpack.c.h.b16 %v6190
    %v6343 = vunpack.c.l.b16 %v6191
    %v6344 = vunpack.c.h.b16 %v6191
    %v6345 = vunpack.c.l.b16 %v6192
    %v6346 = vunpack.c.h.b16 %v6192
    %v6347 = vunpack.c.l.b16 %v6193
    %v6348 = vunpack.c.h.b16 %v6193
    %v6349 = vunpack.c.l.b16 %v6194
    %v6350 = vunpack.c.h.b16 %v6194
    %v6351 = vunpack.c.l.b16 %v6195
    %v6352 = vunpack.c.h.b16 %v6195
    %v6353 = vunpack.c.l.b16 %v6196
    %v6354 = vunpack.c.h.b16 %v6196
    %v6355 = vunpack.c.l.b16 %v6197
    %v6356 = vunpack.c.h.b16 %v6197
    %v6357 = vunpack.c.l.b16 %v6198
    %v6358 = vunpack.c.h.b16 %v6198
    %v6359 = vunpack.c.l.b16 %v6199
    %v6360 = vunpack.c.h.b16 %v6199
    %v6361 = vunpack.c.l.b16 %v6200
    %v6362 = vunpack.c.h.b16 %v6200
    %v6363 = vunpack.c.l.b16 %v6201
    %v6364 = vunpack.c.h.b16 %v6201
    %v6365 = vunpack.c.l.b16 %v6202
    %v6366 = vunpack.c.h.b16 %v6202
    %v6367 = vunpack.c.l.b16 %v6203
    %v6368 = vunpack.c.h.b16 %v6203
    %v6369 = vunpack.c.l.b16 %v6204
    %v6370 = vunpack.c.h.b16 %v6204
    %v6371 = vunpack.c.l.b16 %v6205
    %v6372 = vunpack.c.h.b16 %v6205
    %v6373 = vunpack.c.l.b16 %v6206
    %v6374 = vunpack.c.h.b16 %v6206
    %v6375 = vunpack.c.l.b16 %v6207
    %v6376 = vunpack.c.h.b16 %v6207
    %v6377 = vunpack.c.l.b16 %v6208
    %v6378 = vunpack.c.h.b16 %v6208
    %v6379 = vunpack.c.l.b16 %v6209
    %v6380 = vunpack.c.h.b16 %v6209
    %v6381 = vunpack.c.l.b16 %v6210
    %v6382 = vunpack.c.h.b16 %v6210
    %v6383 = vunpack.c.l.b16 %v6211
    %v6384 = vunpack.c.h.b16 %v6211
    %v6385 = vunpack.c.l.b16 %v6212
    %v6386 = vunpack.c.h.b16 %v6212
    %v6387 = vunpack.c.l.b16 %v6213
    %v6388 = vunpack.c.h.b16 %v6213
    %v6389 = vunpack.c.l.b16 %v6214
    %v6390 = vunpack.c.h.b16 %v6214
    %v6391 = vunpack.c.l.b16 %v6215
    %v6392 = vunpack.c.h.b16 %v6215
    %v6393 = vunpack.c.l.b16 %v6216
    %v6394 = vunpack.c.h.b16 %v6216
    %v6395 = vunpack.c.l.b16 %v6217
    %v6396 = vunpack.c.h.b16 %v6217
    %v6397 = vunpack.c.l.b16 %v6218
    %v6398 = vunpack.c.h.b16 %v6218
    %v6399 = vunpack.c.l.b16 %v6219
    %v6400 = vunpack.c.h.b16 %v6219
    %v6401 = vunpack.c.l.b16 %v6220
    %v6402 = vunpack.c.h.b16 %v6220
    %v6403 = vunpack.c.l.b16 %v6221
    %v6404 = vunpack.c.h.b16 %v6221
    %v6405 = vunpack.c.l.b16 %v6222
    %v6406 = vunpack.c.h.b16 %v6222
    %v6407 = vunpack.c.l.b16 %v6223
    %v6408 = vunpack.c.h.b16 %v6223
    %v6409 = vunpack.c.l.b16 %v6224
    %v6410 = vunpack.c.h.b16 %v6224
    %v6411 = vunpack.c.l.b16 %v6225
    %v6412 = vunpack.c.h.b16 %v6225
    %v6413 = vunpack.c.l.b16 %v6226
    %v6414 = vunpack.c.h.b16 %v6226
    %v6415 = vunpack.c.l.b16 %v6227
    %v6416 = vunpack.c.h.b16 %v6227
    %v6417 = vunpack.c.l.b16 %v6228
    %v6418 = vunpack.c.h.b16 %v6228
    %v6419 = vunpack.c.l.b16 %v6229
    %v6420 = vunpack.c.h.b16 %v6229
    %v6421 = vunpack.c.l.b16 %v6230
    %v6422 = vunpack.c.h.b16 %v6230
    %v6423 = vunpack.c.l.b16 %v6231
    %v6424 = vunpack.c.h.b16 %v6231
    %v6425 = vunpack.c.l.b16 %v6232
    %v6426 = vunpack.c.h.b16 %v6232
    %v6427 = vunpack.c.l.b16 %v6233
    %v6428 = vunpack.c.h.b16 %v6233
    %v6429 = vunpack.c.l.b16 %v6234
    %v6430 = vunpack.c.h.b16 %v6234
    %v6431 = vunpack.c.l.b16 %v6235
    %v6432 = vunpack.c.h.b16 %v6235
    %v6433 = vunpack.c.l.b16 %v6236
    %v6434 = vunpack.c.h.b16 %v6236
    %v6435 = vpack.c.b16 %v6309, %v6307
    %v6436 = vpack.c.b16 %v6310, %v6308
    %v6437 = vpack.c.b16 %v6313, %v6311
    %v6438 = vpack.c.b16 %v6314, %v6312
    %v6439 = vpack.c.b16 %v6317, %v6315
    %v6440 = vpack.c.b16 %v6318, %v6316
    %v6441 = vpack.c.b16 %v6321, %v6319
    %v6442 = vpack.c.b16 %v6322, %v6320
    %v6443 = vpack.c.b16 %v6325, %v6323
    %v6444 = vpack.c.b16 %v6326, %v6324
    %v6445 = vpack.c.b16 %v6329, %v6327
    %v6446 = vpack.c.b16 %v6330, %v6328
    %v6447 = vpack.c.b16 %v6333, %v6331
    %v6448 = vpack.c.b16 %v6334, %v6332
    %v6449 = vpack.c.b16 %v6337, %v6335
    %v6450 = vpack.c.b16 %v6338, %v6336
    %v6451 = vpack.c.b16 %v6341, %v6339
    %v6452 = vpack.c.b16 %v6342, %v6340
    %v6453 = vpack.c.b16 %v6345, %v6343
    %v6454 = vpack.c.b16 %v6346, %v6344
    %v6455 = vpack.c.b16 %v6349, %v6347
    %v6456 = vpack.c.b16 %v6350, %v6348
    %v6457 = vpack.c.b16 %v6353, %v6351
    %v6458 = vpack.c.b16 %v6354, %v6352
    %v6459 = vpack.c.b16 %v6357, %v6355
    %v6460 = vpack.c.b16 %v6358, %v6356
    %v6461 = vpack.c.b16 %v6361, %v6359
    %v6462 = vpack.c.b16 %v6362, %v6360
    %v6463 = vpack.c.b16 %v6365, %v6363
    %v6464 = vpack.c.b16 %v6366, %v6364
    %v6465 = vpack.c.b16 %v6369, %v6367
    %v6466 = vpack.c.b16 %v6370, %v6368
    %v6467 = vpack.c.b16 %v6373, %v6371
    %v6468 = vpack.c.b16 %v6374, %v6372
    %v6469 = vpack.c.b16 %v6377, %v6375
    %v6470 = vpack.c.b16 %v6378, %v6376
    %v6471 = vpack.c.b16 %v6381, %v6379
    %v6472 = vpack.c.b16 %v6382, %v6380
    %v6473 = vpack.c.b16 %v6385, %v6383
    %v6474 = vpack.c.b16 %v6386, %v6384
    %v6475 = vpack.c.b16 %v6389, %v6387
    %v6476 = vpack.c.b16 %v6390, %v6388
    %v6477 = vpack.c.b16 %v6393, %v6391
    %v6478 = vpack.c.b16 %v6394, %v6392
    %v6479 = vpack.c.b16 %v6397, %v6395
    %v6480 = vpack.c.b16 %v6398, %v6396
    %v6481 = vpack.c.b16 %v6401, %v6399
    %v6482 = vpack.c.b16 %v6402, %v6400
    %v6483 = vpack.c.b16 %v6405, %v6403
    %v6484 = vpack.c.b16 %v6406, %v6404
    %v6485 = vpack.c.b16 %v6409, %v6407
    %v6486 = vpack.c.b16 %v6410, %v6408
    %v6487 = vpack.c.b16 %v6413, %v6411
    %v6488 = vpack.c.b16 %v6414, %v6412
    %v6489 = vpack.c.b16 %v6417, %v6415
    %v6490 = vpack.c.b16 %v6418, %v6416
    %v6491 = vpack.c.b16 %v6421, %v6419
    %v6492 = vpack.c.b16 %v6422, %v6420
    %v6493 = vpack.c.b16 %v6425, %v6423
    %v6494 = vpack.c.b16 %v6426, %v6424
    %v6495 = vpack.c.b16 %v6429, %v6427
    %v6496 = vpack.c.b16 %v6430, %v6428
    %v6497 = vpack.c.b16 %v6433, %v6431
    %v6498 = vpack.c.b16 %v6434, %v6432
    %6563 = vmatpush.bf16.msra.mxu0 %v6449
    %6564 = vmatpush.bf16.msra.mxu0 %v6447
    %6565 = vmatpush.bf16.msra.mxu0 %v6445
    %6566 = vmatpush.bf16.msra.mxu0 %v6443
    %6567 = vmatpush.bf16.msra.mxu0 %v6441
    %6568 = vmatpush.bf16.msra.mxu0 %v6439
    %6569 = vmatpush.bf16.msra.mxu0 %v6437
    %6570 = vmatpush.bf16.msra.mxu0 %v6435
    %6571 = vmatmul.bf16.gmra.mxu0 %v6169
    %v6572 = vpop.f32.mrf.mxu0
    %v6573 = vadd.f32 %v6239, %v6572
    %v6574 = vpop.f32.mrf.mxu0
    %6575 = vdwg.mxu0
    %6576 = vmatpush.bf16.msra.mxu0 %v6465
    %6577 = vmatpush.bf16.msra.mxu0 %v6463
    %6578 = vmatpush.bf16.msra.mxu0 %v6461
    %6579 = vmatpush.bf16.msra.mxu0 %v6459
    %6580 = vmatpush.bf16.msra.mxu0 %v6457
    %6581 = vmatpush.bf16.msra.mxu0 %v6455
    %6582 = vmatpush.bf16.msra.mxu0 %v6453
    %6583 = vmatpush.bf16.msra.mxu0 %v6451
    %6584 = vmatmul.bf16.gmra.mxu0 %v6170
    %v6585 = vpop.f32.mrf.mxu0
    %v6586 = vadd.f32 %v6573, %v6585
    %v6587 = vpop.f32.mrf.mxu0
    %6588 = vdwg.mxu0
    %6589 = vmatpush.bf16.msra.mxu0 %v6481
    %6590 = vmatpush.bf16.msra.mxu0 %v6479
    %6591 = vmatpush.bf16.msra.mxu0 %v6477
    %6592 = vmatpush.bf16.msra.mxu0 %v6475
    %6593 = vmatpush.bf16.msra.mxu0 %v6473
    %6594 = vmatpush.bf16.msra.mxu0 %v6471
    %6595 = vmatpush.bf16.msra.mxu0 %v6469
    %6596 = vmatpush.bf16.msra.mxu0 %v6467
    %6597 = vmatmul.bf16.gmra.mxu0 %v6171
    %v6598 = vpop.f32.mrf.mxu0
    %v6599 = vadd.f32 %v6586, %v6598
    %v6600 = vpop.f32.mrf.mxu0
    %6601 = vdwg.mxu0
    %6602 = vmatpush.bf16.msra.mxu0 %v6497
    %6603 = vmatpush.bf16.msra.mxu0 %v6495
    %6604 = vmatpush.bf16.msra.mxu0 %v6493
    %6605 = vmatpush.bf16.msra.mxu0 %v6491
    %6606 = vmatpush.bf16.msra.mxu0 %v6489
    %6607 = vmatpush.bf16.msra.mxu0 %v6487
    %6608 = vmatpush.bf16.msra.mxu0 %v6485
    %6609 = vmatpush.bf16.msra.mxu0 %v6483
    %6610 = vmatmul.bf16.gmra.mxu0 %v6172
    %v6611 = vpop.f32.mrf.mxu0
    %v6612 = vadd.f32 %v6599, %v6611
    %v6613 = vpop.f32.mrf.mxu0
    %6614 = vdwg.mxu0
    %6615 = vmatpush.bf16.msra.mxu0 %v6450
    %6616 = vmatpush.bf16.msra.mxu0 %v6448
    %6617 = vmatpush.bf16.msra.mxu0 %v6446
    %6618 = vmatpush.bf16.msra.mxu0 %v6444
    %6619 = vmatpush.bf16.msra.mxu0 %v6442
    %6620 = vmatpush.bf16.msra.mxu0 %v6440
    %6621 = vmatpush.bf16.msra.mxu0 %v6438
    %6622 = vmatpush.bf16.msra.mxu0 %v6436
    %6623 = vmatmul.bf16.gmra.mxu0 %v6169
    %v6624 = vpop.f32.mrf.mxu0
    %v6625 = vadd.f32 %v6240, %v6624
    %v6626 = vpop.f32.mrf.mxu0
    %6627 = vdwg.mxu0
    %6628 = vmatpush.bf16.msra.mxu0 %v6466
    %6629 = vmatpush.bf16.msra.mxu0 %v6464
    %6630 = vmatpush.bf16.msra.mxu0 %v6462
    %6631 = vmatpush.bf16.msra.mxu0 %v6460
    %6632 = vmatpush.bf16.msra.mxu0 %v6458
    %6633 = vmatpush.bf16.msra.mxu0 %v6456
    %6634 = vmatpush.bf16.msra.mxu0 %v6454
    %6635 = vmatpush.bf16.msra.mxu0 %v6452
    %6636 = vmatmul.bf16.gmra.mxu0 %v6170
    %v6637 = vpop.f32.mrf.mxu0
    %v6638 = vadd.f32 %v6625, %v6637
    %v6639 = vpop.f32.mrf.mxu0
    %6640 = vdwg.mxu0
    %6641 = vmatpush.bf16.msra.mxu0 %v6482
    %6642 = vmatpush.bf16.msra.mxu0 %v6480
    %6643 = vmatpush.bf16.msra.mxu0 %v6478
    %6644 = vmatpush.bf16.msra.mxu0 %v6476
    %6645 = vmatpush.bf16.msra.mxu0 %v6474
    %6646 = vmatpush.bf16.msra.mxu0 %v6472
    %6647 = vmatpush.bf16.msra.mxu0 %v6470
    %6648 = vmatpush.bf16.msra.mxu0 %v6468
    %6649 = vmatmul.bf16.gmra.mxu0 %v6171
    %v6650 = vpop.f32.mrf.mxu0
    %v6651 = vadd.f32 %v6638, %v6650
    %v6652 = vpop.f32.mrf.mxu0
    %6653 = vdwg.mxu0
    %6654 = vmatpush.bf16.msra.mxu0 %v6498
    %6655 = vmatpush.bf16.msra.mxu0 %v6496
    %6656 = vmatpush.bf16.msra.mxu0 %v6494
    %6657 = vmatpush.bf16.msra.mxu0 %v6492
    %6658 = vmatpush.bf16.msra.mxu0 %v6490
    %6659 = vmatpush.bf16.msra.mxu0 %v6488
    %6660 = vmatpush.bf16.msra.mxu0 %v6486
    %6661 = vmatpush.bf16.msra.mxu0 %v6484
    %6662 = vmatmul.bf16.gmra.mxu0 %v6172
    %v6663 = vpop.f32.mrf.mxu0
    %v6664 = vadd.f32 %v6651, %v6663
    %v6665 = vpop.f32.mrf.mxu0
    %6666 = vdwg.mxu0
    %v6667 = vmax.f32 %v6612, 0.0
    %v6668 = vmax.f32 %v6664, 0.0
    %v6669 = vpack.c.bf16 %v6667, %v6667
    %v6670 = vpack.c.bf16 %v6668, %v6668
    %v6671 = vld [vmem:[#allocation14] sm:$0xf]
    %v6672 = vld [vmem:[#allocation14 + $0x4] sm:$0xf]
    %v6673 = vld [vmem:[#allocation14 + $0x8] sm:$0xf]
    %v6674 = vld [vmem:[#allocation14 + $0xc] sm:$0xf]
    %v6675 = vld [vmem:[#allocation14 + $0x10] sm:$0xf]
    %v6676 = vld [vmem:[#allocation14 + $0x14] sm:$0xf]
    %v6677 = vld [vmem:[#allocation14 + $0x18] sm:$0xf]
    %v6678 = vld [vmem:[#allocation14 + $0x1c] sm:$0xf]
    %v6679 = vld [vmem:[#allocation14 + $0x20] sm:$0xf]
    %v6680 = vld [vmem:[#allocation14 + $0x24] sm:$0xf]
    %v6681 = vld [vmem:[#allocation14 + $0x28] sm:$0xf]
    %v6682 = vld [vmem:[#allocation14 + $0x2c] sm:$0xf]
    %v6683 = vld [vmem:[#allocation14 + $0x30] sm:$0xf]
    %v6684 = vld [vmem:[#allocation14 + $0x34] sm:$0xf]
    %v6685 = vld [vmem:[#allocation14 + $0x38] sm:$0xf]
    %v6686 = vld [vmem:[#allocation14 + $0x3c] sm:$0xf]
    %v6687 = vld [vmem:[#allocation14 + $0x40] sm:$0xf]
    %v6688 = vld [vmem:[#allocation14 + $0x44] sm:$0xf]
    %v6689 = vld [vmem:[#allocation14 + $0x48] sm:$0xf]
    %v6690 = vld [vmem:[#allocation14 + $0x4c] sm:$0xf]
    %v6691 = vld [vmem:[#allocation14 + $0x50] sm:$0xf]
    %v6692 = vld [vmem:[#allocation14 + $0x54] sm:$0xf]
    %v6693 = vld [vmem:[#allocation14 + $0x58] sm:$0xf]
    %v6694 = vld [vmem:[#allocation14 + $0x5c] sm:$0xf]
    %v6695 = vld [vmem:[#allocation14 + $0x60] sm:$0xf]
    %v6696 = vld [vmem:[#allocation14 + $0x64] sm:$0xf]
    %v6697 = vld [vmem:[#allocation14 + $0x68] sm:$0xf]
    %v6698 = vld [vmem:[#allocation14 + $0x6c] sm:$0xf]
    %v6699 = vld [vmem:[#allocation14 + $0x70] sm:$0xf]
    %v6700 = vld [vmem:[#allocation14 + $0x74] sm:$0xf]
    %v6701 = vld [vmem:[#allocation14 + $0x78] sm:$0xf]
    %v6702 = vld [vmem:[#allocation14 + $0x7c] sm:$0xf]
    %v6703 = vld [vmem:[#allocation16] sm:$0x1]
    %v6705 = vperm.slane %v6703, 0
    %v6739 = vunpack.c.l.b16 %v6671
    %v6740 = vunpack.c.l.b16 %v6672
    %v6741 = vunpack.c.l.b16 %v6673
    %v6742 = vunpack.c.l.b16 %v6674
    %v6743 = vunpack.c.l.b16 %v6675
    %v6744 = vunpack.c.l.b16 %v6676
    %v6745 = vunpack.c.l.b16 %v6677
    %v6746 = vunpack.c.l.b16 %v6678
    %v6747 = vunpack.c.l.b16 %v6679
    %v6748 = vunpack.c.l.b16 %v6680
    %v6749 = vunpack.c.l.b16 %v6681
    %v6750 = vunpack.c.l.b16 %v6682
    %v6751 = vunpack.c.l.b16 %v6683
    %v6752 = vunpack.c.l.b16 %v6684
    %v6753 = vunpack.c.l.b16 %v6685
    %v6754 = vunpack.c.l.b16 %v6686
    %v6755 = vunpack.c.l.b16 %v6687
    %v6756 = vunpack.c.l.b16 %v6688
    %v6757 = vunpack.c.l.b16 %v6689
    %v6758 = vunpack.c.l.b16 %v6690
    %v6759 = vunpack.c.l.b16 %v6691
    %v6760 = vunpack.c.l.b16 %v6692
    %v6761 = vunpack.c.l.b16 %v6693
    %v6762 = vunpack.c.l.b16 %v6694
    %v6763 = vunpack.c.l.b16 %v6695
    %v6764 = vunpack.c.l.b16 %v6696
    %v6765 = vunpack.c.l.b16 %v6697
    %v6766 = vunpack.c.l.b16 %v6698
    %v6767 = vunpack.c.l.b16 %v6699
    %v6768 = vunpack.c.l.b16 %v6700
    %v6769 = vunpack.c.l.b16 %v6701
    %v6770 = vunpack.c.l.b16 %v6702
    %v6771 = vpack.c.b16 %v6740, %v6739
    %v6772 = vpack.c.b16 %v6742, %v6741
    %v6773 = vpack.c.b16 %v6744, %v6743
    %v6774 = vpack.c.b16 %v6746, %v6745
    %v6775 = vpack.c.b16 %v6748, %v6747
    %v6776 = vpack.c.b16 %v6750, %v6749
    %v6777 = vpack.c.b16 %v6752, %v6751
    %v6778 = vpack.c.b16 %v6754, %v6753
    %v6779 = vpack.c.b16 %v6756, %v6755
    %v6780 = vpack.c.b16 %v6758, %v6757
    %v6781 = vpack.c.b16 %v6760, %v6759
    %v6782 = vpack.c.b16 %v6762, %v6761
    %v6783 = vpack.c.b16 %v6764, %v6763
    %v6784 = vpack.c.b16 %v6766, %v6765
    %v6785 = vpack.c.b16 %v6768, %v6767
    %v6786 = vpack.c.b16 %v6770, %v6769
    %6803 = vmatpush.bf16.msra.mxu0 %v6778
    %6804 = vmatpush.bf16.msra.mxu0 %v6777
    %6805 = vmatpush.bf16.msra.mxu0 %v6776
    %6806 = vmatpush.bf16.msra.mxu0 %v6775
    %6807 = vmatpush.bf16.msra.mxu0 %v6774
    %6808 = vmatpush.bf16.msra.mxu0 %v6773
    %6809 = vmatpush.bf16.msra.mxu0 %v6772
    %6810 = vmatpush.bf16.msra.mxu0 %v6771
    %6811 = vmatmul.bf16.gmra.mxu0 %v6669
    %v6812 = vpop.f32.mrf.mxu0
    %v6813 = vadd.f32 %v6705, %v6812
    %v6814 = vpop.f32.mrf.mxu0
    %6815 = vdwg.mxu0
    %6816 = vmatpush.bf16.msra.mxu0 %v6786
    %6817 = vmatpush.bf16.msra.mxu0 %v6785
    %6818 = vmatpush.bf16.msra.mxu0 %v6784
    %6819 = vmatpush.bf16.msra.mxu0 %v6783
    %6820 = vmatpush.bf16.msra.mxu0 %v6782
    %6821 = vmatpush.bf16.msra.mxu0 %v6781
    %6822 = vmatpush.bf16.msra.mxu0 %v6780
    %6823 = vmatpush.bf16.msra.mxu0 %v6779
    %6824 = vmatmul.bf16.gmra.mxu0 %v6670
    %v6825 = vpop.f32.mrf.mxu0
    %v6826 = vadd.f32 %v6813, %v6825
    %v6827 = vpop.f32.mrf.mxu0
    %6828 = vdwg.mxu0
    %v6829 = vmax.f32 %v6826, 0.0
    %v6830 = vpack.c.bf16 %v6829, %v6829
    %v6831 = vld [vmem:[#allocation17] sm:$0xf]
    %v6832 = vld [vmem:[#allocation17 + $0x4] sm:$0xf]
    %v6833 = vld [vmem:[#allocation17 + $0x8] sm:$0xf]
    %v6834 = vld [vmem:[#allocation17 + $0xc] sm:$0xf]
    %v6835 = vld [vmem:[#allocation17 + $0x10] sm:$0xf]
    %v6836 = vld [vmem:[#allocation17 + $0x14] sm:$0xf]
    %v6837 = vld [vmem:[#allocation17 + $0x18] sm:$0xf]
    %v6838 = vld [vmem:[#allocation17 + $0x1c] sm:$0xf]
    %v6839 = vld [vmem:[#allocation17 + $0x20] sm:$0xf]
    %v6840 = vld [vmem:[#allocation17 + $0x24] sm:$0xf]
    %v6841 = vld [vmem:[#allocation17 + $0x28] sm:$0xf]
    %v6842 = vld [vmem:[#allocation17 + $0x2c] sm:$0xf]
    %v6843 = vld [vmem:[#allocation17 + $0x30] sm:$0xf]
    %v6844 = vld [vmem:[#allocation17 + $0x34] sm:$0xf]
    %v6845 = vld [vmem:[#allocation17 + $0x38] sm:$0xf]
    %v6846 = vld [vmem:[#allocation17 + $0x3c] sm:$0xf]
    %v6847 = vld [vmem:[#allocation19] sm:$0x1]
    %v6849 = vperm.slane %v6847, 0
    %v6867 = vunpack.c.l.b16 %v6831
    %v6868 = vunpack.c.l.b16 %v6832
    %v6869 = vunpack.c.l.b16 %v6833
    %v6870 = vunpack.c.l.b16 %v6834
    %v6871 = vunpack.c.l.b16 %v6835
    %v6872 = vunpack.c.l.b16 %v6836
    %v6873 = vunpack.c.l.b16 %v6837
    %v6874 = vunpack.c.l.b16 %v6838
    %v6875 = vunpack.c.l.b16 %v6839
    %v6876 = vunpack.c.l.b16 %v6840
    %v6877 = vunpack.c.l.b16 %v6841
    %v6878 = vunpack.c.l.b16 %v6842
    %v6879 = vunpack.c.l.b16 %v6843
    %v6880 = vunpack.c.l.b16 %v6844
    %v6881 = vunpack.c.l.b16 %v6845
    %v6882 = vunpack.c.l.b16 %v6846
    %v6883 = vpack.c.b16 %v6868, %v6867
    %v6884 = vpack.c.b16 %v6870, %v6869
    %v6885 = vpack.c.b16 %v6872, %v6871
    %v6886 = vpack.c.b16 %v6874, %v6873
    %v6887 = vpack.c.b16 %v6876, %v6875
    %v6888 = vpack.c.b16 %v6878, %v6877
    %v6889 = vpack.c.b16 %v6880, %v6879
    %v6890 = vpack.c.b16 %v6882, %v6881
    %6899 = vmatpush.bf16.msra.mxu0 %v6890
    %6900 = vmatpush.bf16.msra.mxu0 %v6889
    %6901 = vmatpush.bf16.msra.mxu0 %v6888
    %6902 = vmatpush.bf16.msra.mxu0 %v6887
    %6903 = vmatpush.bf16.msra.mxu0 %v6886
    %6904 = vmatpush.bf16.msra.mxu0 %v6885
    %6905 = vmatpush.bf16.msra.mxu0 %v6884
    %6906 = vmatpush.bf16.msra.mxu0 %v6883
    %6907 = vmatmul.bf16.gmra.mxu0 %v6830
    %v6908 = vpop.f32.mrf.mxu0
    %v6909 = vadd.f32 %v6849, %v6908
    %v6910 = vpop.f32.mrf.mxu0
    %6911 = vdwg.mxu0
    %v6912 = vmax.f32 %v6909, 0.0
    %v6913 = vpack.c.bf16 %v6912, %v6912
    %v6914 = vld [vmem:[#allocation20] sm:$0xf]
    %v6915 = vld [vmem:[#allocation20 + $0x4] sm:$0xf]
    %v6916 = vld [vmem:[#allocation20 + $0x8] sm:$0xf]
    %v6917 = vld [vmem:[#allocation20 + $0xc] sm:$0xf]
    %v6918 = vld [vmem:[#allocation20 + $0x10] sm:$0xf]
    %v6919 = vld [vmem:[#allocation20 + $0x14] sm:$0xf]
    %v6920 = vld [vmem:[#allocation20 + $0x18] sm:$0xf]
    %v6921 = vld [vmem:[#allocation20 + $0x1c] sm:$0xf]
    %v6922 = vld [vmem:[#allocation20 + $0x20] sm:$0xf]
    %v6923 = vld [vmem:[#allocation20 + $0x24] sm:$0xf]
    %v6924 = vld [vmem:[#allocation20 + $0x28] sm:$0xf]
    %v6925 = vld [vmem:[#allocation20 + $0x2c] sm:$0xf]
    %v6926 = vld [vmem:[#allocation20 + $0x30] sm:$0xf]
    %v6927 = vld [vmem:[#allocation20 + $0x34] sm:$0xf]
    %v6928 = vld [vmem:[#allocation20 + $0x38] sm:$0xf]
    %v6929 = vld [vmem:[#allocation20 + $0x3c] sm:$0xf]
    %v6930 = vld [vmem:[#allocation22] sm:$0x1]
    %v6932 = vperm.slane %v6930, 0
    %v6950 = vunpack.c.l.b16 %v6914
    %v6951 = vunpack.c.l.b16 %v6915
    %v6952 = vunpack.c.l.b16 %v6916
    %v6953 = vunpack.c.l.b16 %v6917
    %v6954 = vunpack.c.l.b16 %v6918
    %v6955 = vunpack.c.l.b16 %v6919
    %v6956 = vunpack.c.l.b16 %v6920
    %v6957 = vunpack.c.l.b16 %v6921
    %v6958 = vunpack.c.l.b16 %v6922
    %v6959 = vunpack.c.l.b16 %v6923
    %v6960 = vunpack.c.l.b16 %v6924
    %v6961 = vunpack.c.l.b16 %v6925
    %v6962 = vunpack.c.l.b16 %v6926
    %v6963 = vunpack.c.l.b16 %v6927
    %v6964 = vunpack.c.l.b16 %v6928
    %v6965 = vunpack.c.l.b16 %v6929
    %v6966 = vpack.c.b16 %v6951, %v6950
    %v6967 = vpack.c.b16 %v6953, %v6952
    %v6968 = vpack.c.b16 %v6955, %v6954
    %v6969 = vpack.c.b16 %v6957, %v6956
    %v6970 = vpack.c.b16 %v6959, %v6958
    %v6971 = vpack.c.b16 %v6961, %v6960
    %v6972 = vpack.c.b16 %v6963, %v6962
    %v6973 = vpack.c.b16 %v6965, %v6964
    %6982 = vmatpush.bf16.msra.mxu0 %v6973
    %6983 = vmatpush.bf16.msra.mxu0 %v6972
    %6984 = vmatpush.bf16.msra.mxu0 %v6971
    %6985 = vmatpush.bf16.msra.mxu0 %v6970
    %6986 = vmatpush.bf16.msra.mxu0 %v6969
    %6987 = vmatpush.bf16.msra.mxu0 %v6968
    %6988 = vmatpush.bf16.msra.mxu0 %v6967
    %6989 = vmatpush.bf16.msra.mxu0 %v6966
    %6990 = vmatmul.bf16.gmra.mxu0 %v6913
    %v6991 = vpop.f32.mrf.mxu0
    %v6992 = vadd.f32 %v6932, %v6991
    %v6993 = vpop.f32.mrf.mxu0
    %6994 = vdwg.mxu0
    %v6995 = vxor.u32 %v6992, 2147483648
    %v6996 = vmul.f32 %v6995, 1.442695
    %v6997 = vpow.pop %v6996
    %v6998 = vadd.f32 %v6997, 1.0
    %v6999 = vrcp.pop %v6998
    %v7000 = vmul.f32 %v6998, %v6999
    %v7001 = vsub.f32 1.0, %v7000
    %v7002 = vmul.f32 %v6999, %v7001
    %v7003 = vadd.f32 %v6999, %v7002
    %vm7004 = vweird.f32 %v6998
    %vm7005 = vweird.f32 %v6999
    %vm7006 = vmor %vm7004, %vm7005
    %v7007 = vsel %vm7006, %v6999, %v7003
    %v7008 = vand.u32 2147483647, %v6998
    %vm7009 = vcmp.eq.f32.partialorder %v7008, 8.507059e+37
    %v7010 = vand.u32 %v6998, 2147483648
    %v7011 = vor.u32 1.1754944e-38, %v7010
    %v7012 = vsel %vm7009, %v7011, %v7007
    %v7013 = vmul.f32 1.0, %v7012
    %7014 = vst [vmem:[#allocation23] sm:$0xff] %v7013
    // Predicated region
    $region106: #{tpu_custom_call.1} parent=1 // pred_check
      _
    $region107: #{tpu_custom_call.1} parent=1 // pred_check_branch
      %7016 = sbr.rel (0) target = $region109
    $region108: #{tpu_custom_call.1} parent=1 // pred_region
      %7018 = vsyncadd [#allocation4], 0
      %s7020 = sshll.u32 [#allocation23], 4
      %s7021 = int_to_ptr.vmem [resolvable:$true] %s7020
      %s7022 = sshll.u32 %s13, 4
      %s7023 = int_to_ptr.hbm [resolvable:$true] %s7022
      %7025 = dma.vmem_to_hbm [thread:$0]  %s7021, 128, %s7023, [#allocation4]
    $region109: #{tpu_custom_call.1} parent=1 // pred_fallthru
      _
    // Predicated region
    $region110: #{tpu_custom_call.1} parent=1 // pred_check
      _
    $region111: #{tpu_custom_call.1} parent=1 // pred_check_branch
      %7027 = sbr.rel (0) target = $region113
    $region112: #{tpu_custom_call.1} parent=1 // pred_region
      %7029 = dma.done [#allocation4], 128
    $region113: #{tpu_custom_call.1} parent=1 // pred_fallthru
      _
    %7030 = vsyncpa [#allocation3], 1
    %7031 = vsyncpa [#allocation6], 1
    %7032 = vsyncpa [#allocation9], 1
    %7033 = vsyncpa [#allocation12], 1
    %7034 = vsyncpa [#allocation15], 1
    %7035 = vsyncpa [#allocation18], 1
    %7036 = vsyncpa [#allocation21], 1
    %7037 = vsyncpa [#allocation4], 1

</llo_original>
